<compile_context>
chip_gen: v5e
topology: v5e:2x2
jax: 0.10.0
libtpu: 0.0.40
codegen_flags: <defaults>
</compile_context>

<pallas_src>
import functools

import jax
import jax.numpy as jnp
from jax.experimental import pallas as pl
from jax.experimental.pallas import tpu as pltpu

EPS = 1e-6                     # DINOv2 LayerNorm eps
DIM = 384                      # ViT-S embed dim
HEADS = 6
HEAD_DIM = DIM // HEADS        # 64
MLP_HIDDEN = 4 * DIM           # 1536
DEPTH = 12                     # ViT-S depth
PATCH = 14                     # ViT-S/14 patch size
IN_CHANS = 3
PATCH_K = IN_CHANS * PATCH * PATCH        # 588
PATCH_K_PAD = 640                         # padded to a multiple of 128
NUM_CLASSES = 4
HEAD_OUT_PAD = 128                        # lane-dense logits store, sliced to 4 in JAX

_PARALLEL = pltpu.CompilerParams(dimension_semantics=("parallel",))


def _row_tile(m, target=512):
    """Row-tile size.

    Full array when tiny; otherwise aim for >=2 grid steps (both v7x
    TensorCores get work) capped at 512 rows (measured ~85% of HBM roofline).
    Peak VMEM at 512 rows for the fused MLP kernel is ~12 MB, well under the
    32 MB default scoped limit on every generation, so no vmem_limit override
    is needed.
    """
    if m <= 8:
        return m
    if m <= 2 * target:
        return min(target, 8 * pl.cdiv(pl.cdiv(m, 2), 8))
    return target


# ----------------------------------------------------------------------------
# Kernels
# ----------------------------------------------------------------------------
def _linear_kernel(x_ref, w_ref, wb_ref, o_ref):
    acc = jnp.dot(x_ref[...], w_ref[...], preferred_element_type=jnp.float32)
    o_ref[...] = (acc + wb_ref[...]).astype(o_ref.dtype)


def patch_embed(x, w, wb):
    """x:(M,K) bf16 @ w:(K,N) bf16 + wb -> bf16. Rows tiled, weight resident."""
    M, K = x.shape
    _, N = w.shape
    TM = _row_tile(M)
    return pl.pallas_call(
        _linear_kernel,
        out_shape=jax.ShapeDtypeStruct((M, N), jnp.bfloat16),
        grid=(pl.cdiv(M, TM),),
        in_specs=[
            pl.BlockSpec((TM, K), lambda i: (i, 0)),
            pl.BlockSpec((K, N), lambda i: (0, 0)),
            pl.BlockSpec((1, N), lambda i: (0, 0)),
        ],
        out_specs=pl.BlockSpec((TM, N), lambda i: (i, 0)),
        compiler_params=_PARALLEL,
    )(x, w, wb.reshape(1, N))


def _attn_block_kernel(z_ref, g_ref, b_ref, qkv_w_ref, qkv_b_ref,
                       proj_w_ref, proj_b_ref, ls_ref, o_ref,
                       qkv_scr, attn_scr, *, scale):
    """Fused: LN1 -> QKV matmul -> 6-head attention -> proj -> LS -> +residual.

    One batch element per grid step; QKV and attention output stay in VMEM.
    """
    x = z_ref[0].astype(jnp.float32)                       # (T, DIM) residual, f32 math
    mean = jnp.mean(x, axis=-1, keepdims=True)
    var = jnp.mean((x - mean) ** 2, axis=-1, keepdims=True)
    y = (x - mean) * jax.lax.rsqrt(var + EPS)
    y = y * g_ref[...] + b_ref[...]
    qkv = jnp.dot(y.astype(jnp.bfloat16), qkv_w_ref[...],
                  preferred_element_type=jnp.float32) + qkv_b_ref[...]
    qkv_scr[...] = qkv.astype(jnp.bfloat16)                # (T, 3*DIM) kept in VMEM

    # Static 6-head loop; head slices are static 64-lane windows into VMEM
    # scratch (odd-head offsets are lane-masked loads; attention FLOPs are
    # small for ViT-S so this is not the bottleneck).
    for h in range(HEADS):
        q = qkv_scr[:, h * HEAD_DIM:(h + 1) * HEAD_DIM]
        k = qkv_scr[:, DIM + h * HEAD_DIM:DIM + (h + 1) * HEAD_DIM]
        v = qkv_scr[:, 2 * DIM + h * HEAD_DIM:2 * DIM + (h + 1) * HEAD_DIM]
        # q @ k^T without materializing the transpose (contract last dims).
        s = jax.lax.dot_general(q, k, (((1,), (1,)), ((), ())),
                                preferred_element_type=jnp.float32) * scale
        m = jnp.max(s, axis=-1, keepdims=True)
        p = jnp.exp(s - m)
        p = p * pl.reciprocal(jnp.sum(p, axis=-1, keepdims=True), approx=True)
        o = jnp.dot(p.astype(jnp.bfloat16), v, preferred_element_type=jnp.float32)
        attn_scr[:, h * HEAD_DIM:(h + 1) * HEAD_DIM] = o.astype(jnp.bfloat16)

    proj = jnp.dot(attn_scr[...], proj_w_ref[...],
                   preferred_element_type=jnp.float32) + proj_b_ref[...]
    o_ref[0] = (x + proj * ls_ref[...]).astype(o_ref.dtype)


def attention_block(z, g, b, qkv_w, qkv_b, proj_w, proj_b, ls):
    """z: (B, T, DIM) bf16 -> (B, T, DIM) bf16. One grid step per batch element."""
    # TODO(synk): for B==1 on v7x one TensorCore idles; a (B, q-tile) grid would
    # need K/V replication across q-tiles and is not worth it at ViT-S sizes.
    B, T, D = z.shape
    scale = HEAD_DIM ** -0.5
    return pl.pallas_call(
        functools.partial(_attn_block_kernel, scale=scale),
        out_shape=jax.ShapeDtypeStruct((B, T, D), jnp.bfloat16),
        grid=(B,),
        in_specs=[
            pl.BlockSpec((1, T, D), lambda i: (i, 0, 0)),
            pl.BlockSpec((1, D), lambda i: (0, 0)),
            pl.BlockSpec((1, D), lambda i: (0, 0)),
            pl.BlockSpec((D, 3 * D), lambda i: (0, 0)),
            pl.BlockSpec((1, 3 * D), lambda i: (0, 0)),
            pl.BlockSpec((D, D), lambda i: (0, 0)),
            pl.BlockSpec((1, D), lambda i: (0, 0)),
            pl.BlockSpec((1, D), lambda i: (0, 0)),
        ],
        out_specs=pl.BlockSpec((1, T, D), lambda i: (i, 0, 0)),
        scratch_shapes=[
            pltpu.VMEM((T, 3 * D), jnp.bfloat16),   # QKV slab
            pltpu.VMEM((T, D), jnp.bfloat16),       # per-head attention output
        ],
        compiler_params=_PARALLEL,
    )(z, g.reshape(1, D), b.reshape(1, D), qkv_w, qkv_b.reshape(1, 3 * D),
      proj_w, proj_b.reshape(1, D), ls.reshape(1, D))


def _mlp_block_kernel(z_ref, g_ref, b_ref, w1_ref, b1_ref, w2_ref, b2_ref,
                      ls_ref, o_ref):
    """Fused: LN2 -> FC1 -> GELU -> FC2 -> LayerScale -> +residual.

    The (TM, 1536) hidden activation never leaves VMEM.
    """
    x = z_ref[...].astype(jnp.float32)
    mean = jnp.mean(x, axis=-1, keepdims=True)
    var = jnp.mean((x - mean) ** 2, axis=-1, keepdims=True)
    y = (x - mean) * jax.lax.rsqrt(var + EPS)
    y = y * g_ref[...] + b_ref[...]
    h = jnp.dot(y.astype(jnp.bfloat16), w1_ref[...],
                preferred_element_type=jnp.float32) + b1_ref[...]
    # TODO(synk): torch nn.GELU defaults to exact erf GELU; tanh approx used here.
    h = jax.nn.gelu(h, approximate=True)
    o = jnp.dot(h.astype(jnp.bfloat16), w2_ref[...],
                preferred_element_type=jnp.float32) + b2_ref[...]
    o_ref[...] = (x + o * ls_ref[...]).astype(o_ref.dtype)


def mlp_block(z, g, b, w1, wb1, w2, wb2, ls):
    """z: (M, DIM) bf16 -> (M, DIM) bf16. Rows tiled (<=512), weights resident."""
    M, D = z.shape
    H1 = w1.shape[1]
    TM = _row_tile(M)
    return pl.pallas_call(
        _mlp_block_kernel,
        out_shape=jax.ShapeDtypeStruct((M, D), jnp.bfloat16),
        grid=(pl.cdiv(M, TM),),
        in_specs=[
            pl.BlockSpec((TM, D), lambda i: (i, 0)),
            pl.BlockSpec((1, D), lambda i: (0, 0)),
            pl.BlockSpec((1, D), lambda i: (0, 0)),
            pl.BlockSpec((D, H1), lambda i: (0, 0)),
            pl.BlockSpec((1, H1), lambda i: (0, 0)),
            pl.BlockSpec((H1, D), lambda i: (0, 0)),
            pl.BlockSpec((1, D), lambda i: (0, 0)),
            pl.BlockSpec((1, D), lambda i: (0, 0)),
        ],
        out_specs=pl.BlockSpec((TM, D), lambda i: (i, 0)),
        compiler_params=_PARALLEL,
    )(z, g.reshape(1, D), b.reshape(1, D), w1, wb1.reshape(1, H1),
      w2, wb2.reshape(1, D), ls.reshape(1, D))


def _head_kernel(x_ref, g_ref, b_ref, w1_ref, b1_ref, w2_ref, b2_ref, o_ref):
    x = x_ref[...].astype(jnp.float32)
    # transformer.norm is applied once inside transformer(x) (on the CLS token,
    # row-wise == norm-then-slice) and a second time explicitly in forward().
    for _ in range(2):
        mean = jnp.mean(x, axis=-1, keepdims=True)
        var = jnp.mean((x - mean) ** 2, axis=-1, keepdims=True)
        x = (x - mean) * jax.lax.rsqrt(var + EPS)
        x = x * g_ref[...] + b_ref[...]
    h = jnp.dot(x.astype(jnp.bfloat16), w1_ref[...],
                preferred_element_type=jnp.float32) + b1_ref[...]
    h = jnp.maximum(h, 0.0)
    y = jnp.dot(h.astype(jnp.bfloat16), w2_ref[...],
                preferred_element_type=jnp.float32) + b2_ref[...]
    o_ref[...] = y.astype(o_ref.dtype)


def classifier_head(x, g, b, w1, b1, w2, b2):
    """Fused tail: LN -> LN -> Linear(384,256)+ReLU -> Linear(256,128-padded)."""
    B, D = x.shape
    H1 = w1.shape[1]
    N = w2.shape[1]
    return pl.pallas_call(
        _head_kernel,
        out_shape=jax.ShapeDtypeStruct((B, N), jnp.float32),
        grid=(1,),
        in_specs=[
            pl.BlockSpec((B, D), lambda i: (0, 0)),
            pl.BlockSpec((1, D), lambda i: (0, 0)),
            pl.BlockSpec((1, D), lambda i: (0, 0)),
            pl.BlockSpec((D, H1), lambda i: (0, 0)),
            pl.BlockSpec((1, H1), lambda i: (0, 0)),
            pl.BlockSpec((H1, N), lambda i: (0, 0)),
            pl.BlockSpec((1, N), lambda i: (0, 0)),
        ],
        out_specs=pl.BlockSpec((B, N), lambda i: (0, 0)),
    )(x, g.reshape(1, D), b.reshape(1, D), w1, b1.reshape(1, H1), w2, b2.reshape(1, N))


# ----------------------------------------------------------------------------
# Parameter init (synthetic, deterministic)
# ----------------------------------------------------------------------------
def init_params(num_tokens, seed=0):
    key = jax.random.PRNGKey(seed)
    keys = iter(jax.random.split(key, 256))

    def nrm(shape, std=0.02):
        return jax.random.normal(next(keys), shape, jnp.float32) * std

    patch_w = jnp.pad(nrm((PATCH_K, DIM)), ((0, PATCH_K_PAD - PATCH_K), (0, 0)))
    fc2_w = jnp.pad(nrm((256, NUM_CLASSES)), ((0, 0), (0, HEAD_OUT_PAD - NUM_CLASSES)))

    params = {
        "patch_w": patch_w.astype(jnp.bfloat16),      # conv14x14/s14 as matmul, K padded
        "patch_b": jnp.zeros((DIM,), jnp.float32),
        "cls_token": nrm((1, 1, DIM)),
        "pos_embed": nrm((1, num_tokens, DIM)),
        "norm_g": jnp.ones((DIM,), jnp.float32),
        "norm_b": jnp.zeros((DIM,), jnp.float32),
        "cls_fc1_w": nrm((DIM, 256)).astype(jnp.bfloat16),
        "cls_fc1_b": jnp.zeros((256,), jnp.float32),
        "cls_fc2_w": fc2_w.astype(jnp.bfloat16),       # padded to 128 output lanes
        "cls_fc2_b": jnp.zeros((HEAD_OUT_PAD,), jnp.float32),
        "blocks": [],
    }
    for _ in range(DEPTH):
        params["blocks"].append({
            "ln1_g": jnp.ones((DIM,), jnp.float32),
            "ln1_b": jnp.zeros((DIM,), jnp.float32),
            "qkv_w": nrm((DIM, 3 * DIM)).astype(jnp.bfloat16),
            "qkv_b": jnp.zeros((3 * DIM,), jnp.float32),
            "proj_w": nrm((DIM, DIM)).astype(jnp.bfloat16),
            "proj_b": jnp.zeros((DIM,), jnp.float32),
            "ls1": jnp.full((DIM,), 1e-5, jnp.float32),       # LayerScale gamma
            "ln2_g": jnp.ones((DIM,), jnp.float32),
            "ln2_b": jnp.zeros((DIM,), jnp.float32),
            "fc1_w": nrm((DIM, MLP_HIDDEN)).astype(jnp.bfloat16),
            "fc1_b": jnp.zeros((MLP_HIDDEN,), jnp.float32),
            "fc2_w": nrm((MLP_HIDDEN, DIM)).astype(jnp.bfloat16),
            "fc2_b": jnp.zeros((DIM,), jnp.float32),
            "ls2": jnp.full((DIM,), 1e-5, jnp.float32),
        })
    return params


# ----------------------------------------------------------------------------
# Forward pass (mirrors BrainTumorClassifier.forward)
# ----------------------------------------------------------------------------
def brain_tumor_classifier(params, x):
    """x: (B, 3, H, W) NCHW, H and W divisible by 14 -> logits (B, 4)."""
    B, C, H, W = x.shape
    nH, nW = H // PATCH, W // PATCH
    nP = nH * nW
    T = nP + 1
    M = B * T

    # Patch embedding: Conv2d(3, 384, 14, stride=14) as a matmul; bf16 operand,
    # contraction dim padded to 640.
    patches = x.reshape(B, C, nH, PATCH, nW, PATCH)
    patches = patches.transpose(0, 2, 4, 1, 3, 5).reshape(B * nP, PATCH_K)
    patches = jnp.pad(patches, ((0, 0), (0, PATCH_K_PAD - PATCH_K))).astype(jnp.bfloat16)
    tok = patch_embed(patches, params["patch_w"], params["patch_b"]).reshape(B, nP, DIM)

    cls = jnp.broadcast_to(params["cls_token"], (B, 1, DIM)).astype(jnp.bfloat16)
    z = jnp.concatenate([cls, tok], axis=1).astype(jnp.float32) + params["pos_embed"]
    z = z.astype(jnp.bfloat16)     # residual stream stored bf16 in HBM

    for blk in params["blocks"]:
        # --- attention sub-block: one fused kernel, grid=(B,) ---
        z = attention_block(z, blk["ln1_g"], blk["ln1_b"], blk["qkv_w"],
                            blk["qkv_b"], blk["proj_w"], blk["proj_b"], blk["ls1"])
        # --- MLP sub-block: one fused kernel, row-tiled over M ---
        z = mlp_block(z.reshape(M, DIM), blk["ln2_g"], blk["ln2_b"],
                      blk["fc1_w"], blk["fc1_b"], blk["fc2_w"], blk["fc2_b"],
                      blk["ls2"]).reshape(B, T, DIM)

    # transformer(x) returns norm(tokens)[CLS] (head = Identity); the PyTorch
    # module then applies transformer.norm a second time and the classifier.
    # LayerNorm is row-wise, so slice the CLS row first and fuse the whole tail.
    feat = z[:, 0, :]
    logits = classifier_head(feat, params["norm_g"], params["norm_b"],
                             params["cls_fc1_w"], params["cls_fc1_b"],
                             params["cls_fc2_w"], params["cls_fc2_b"])
    return logits[:, :NUM_CLASSES]


if __name__ == "__main__":
    # Small shapes consistent with the module: 3-channel image, spatial 28
    # (divisible by patch size 14) -> 2x2 = 4 patches + 1 CLS = 5 tokens.
    B, H, W = 2, 28, 28
    key = jax.random.PRNGKey(0)
    x = jax.random.normal(key, (B, IN_CHANS, H, W), jnp.float32)

    num_tokens = (H // PATCH) * (W // PATCH) + 1
    params = init_params(num_tokens, seed=0)

    fwd = jax.jit(brain_tumor_classifier)
    logits = jax.block_until_ready(fwd(params, x))
    assert logits.shape == (B, NUM_CLASSES), logits.shape
    assert bool(jnp.all(jnp.isfinite(logits)))
    print("KERNEL_OK")
</pallas_src>

<mosaic_0001>
module attributes {stable_mosaic.version = 11 : i64} {
  func.func @_linear_kernel(%arg0: i32, %arg1: memref<8x640xbf16, #tpu.memory_space<vmem>>, %arg2: memref<640x384xbf16, #tpu.memory_space<vmem>>, %arg3: memref<1x384xf32, #tpu.memory_space<vmem>>, %arg4: memref<8x384xbf16, #tpu.memory_space<vmem>>) attributes {dimension_semantics = [#tpu.dimension_semantics<parallel>], iteration_bounds = array<i64: 1>, scalar_prefetch = 0 : i64, scratch_operands = 0 : i64, tpu.core_type = #tpu.core_type<tc>, window_params = [{transform_indices = @transform_0, window_bounds = array<i64: 8, 640>}, {pipeline_mode = #tpu.pipeline_mode<synchronous>, transform_indices = @transform_1, window_bounds = array<i64: 640, 384>}, {pipeline_mode = #tpu.pipeline_mode<synchronous>, transform_indices = @transform_2, window_bounds = array<i64: 1, 384>}, {transform_indices = @transform_3, window_bounds = array<i64: 8, 384>}]} {
    %c0 = arith.constant 0 : index
    %c0_0 = arith.constant 0 : index
    %0 = vector.load %arg1[%c0, %c0_0] : memref<8x640xbf16, #tpu.memory_space<vmem>>, vector<8x640xbf16>
    %c0_1 = arith.constant 0 : index
    %c0_2 = arith.constant 0 : index
    %1 = vector.load %arg2[%c0_1, %c0_2] : memref<640x384xbf16, #tpu.memory_space<vmem>>, vector<640x384xbf16>
    %cst = arith.constant dense<0.000000e+00> : vector<8x384xf32>
    %2 = tpu.matmul %0, %1, %cst {dimension_numbers = #tpu.dot_dimension_numbers<[1], [0], [0], [1], [0, 0, 1, 1], [], []>} : vector<8x640xbf16>, vector<640x384xbf16>, vector<8x384xf32> -> vector<8x384xf32>
    %c0_3 = arith.constant 0 : index
    %c0_4 = arith.constant 0 : index
    %3 = vector.load %arg3[%c0_3, %c0_4] : memref<1x384xf32, #tpu.memory_space<vmem>>, vector<1x384xf32>
    %4 = vector.broadcast %3 : vector<1x384xf32> to vector<8x384xf32>
    %5 = arith.addf %2, %4 : vector<8x384xf32>
    %6 = arith.truncf %5 : vector<8x384xf32> to vector<8x384xbf16>
    %c0_5 = arith.constant 0 : index
    %c0_6 = arith.constant 0 : index
    %7 = vector.load %arg4[%c0_5, %c0_6] : memref<8x384xbf16, #tpu.memory_space<vmem>>, vector<8x384xbf16>
    tpu.vector_store %arg4[%c0_5, %c0_6], %6 {strides = array<i32>} : memref<8x384xbf16, #tpu.memory_space<vmem>>, vector<8x384xbf16>,
    return
  }
  func.func @transform_0(%arg0: i32) -> (i32, i32) {
    %c0_i32 = arith.constant 0 : i32
    %c0_i32_0 = arith.constant 0 : i32
    return %arg0, %c0_i32 : i32, i32
  }
  func.func @transform_1(%arg0: i32) -> (i32, i32) {
    %c0_i32 = arith.constant 0 : i32
    %c0_i32_0 = arith.constant 0 : i32
    %c0_i32_1 = arith.constant 0 : i32
    return %c0_i32, %c0_i32_0 : i32, i32
  }
  func.func @transform_2(%arg0: i32) -> (i32, i32) {
    %c0_i32 = arith.constant 0 : i32
    %c0_i32_0 = arith.constant 0 : i32
    %c0_i32_1 = arith.constant 0 : i32
    return %c0_i32, %c0_i32_0 : i32, i32
  }
  func.func @transform_3(%arg0: i32) -> (i32, i32) {
    %c0_i32 = arith.constant 0 : i32
    %c0_i32_0 = arith.constant 0 : i32
    return %arg0, %c0_i32 : i32, i32
  }
}

module attributes {stable_mosaic.version = 11 : i64} {
  func.func @_mlp_block_kernel(%arg0: i32, %arg1: memref<8x384xbf16, #tpu.memory_space<vmem>>, %arg2: memref<1x384xf32, #tpu.memory_space<vmem>>, %arg3: memref<1x384xf32, #tpu.memory_space<vmem>>, %arg4: memref<384x1536xbf16, #tpu.memory_space<vmem>>, %arg5: memref<1x1536xf32, #tpu.memory_space<vmem>>, %arg6: memref<1536x384xbf16, #tpu.memory_space<vmem>>, %arg7: memref<1x384xf32, #tpu.memory_space<vmem>>, %arg8: memref<1x384xf32, #tpu.memory_space<vmem>>, %arg9: memref<8x384xbf16, #tpu.memory_space<vmem>>) attributes {dimension_semantics = [#tpu.dimension_semantics<parallel>], iteration_bounds = array<i64: 2>, scalar_prefetch = 0 : i64, scratch_operands = 0 : i64, tpu.core_type = #tpu.core_type<tc>, window_params = [{transform_indices = @transform_0, window_bounds = array<i64: 8, 384>}, {pipeline_mode = #tpu.pipeline_mode<synchronous>, transform_indices = @transform_1, window_bounds = array<i64: 1, 384>}, {pipeline_mode = #tpu.pipeline_mode<synchronous>, transform_indices = @transform_2, window_bounds = array<i64: 1, 384>}, {pipeline_mode = #tpu.pipeline_mode<synchronous>, transform_indices = @transform_3, window_bounds = array<i64: 384, 1536>}, {pipeline_mode = #tpu.pipeline_mode<synchronous>, transform_indices = @transform_4, window_bounds = array<i64: 1, 1536>}, {pipeline_mode = #tpu.pipeline_mode<synchronous>, transform_indices = @transform_5, window_bounds = array<i64: 1536, 384>}, {pipeline_mode = #tpu.pipeline_mode<synchronous>, transform_indices = @transform_6, window_bounds = array<i64: 1, 384>}, {pipeline_mode = #tpu.pipeline_mode<synchronous>, transform_indices = @transform_7, window_bounds = array<i64: 1, 384>}, {transform_indices = @transform_8, window_bounds = array<i64: 8, 384>}]} {
    %c0 = arith.constant 0 : index
    %c0_0 = arith.constant 0 : index
    %0 = vector.load %arg1[%c0, %c0_0] : memref<8x384xbf16, #tpu.memory_space<vmem>>, vector<8x384xbf16>
    %1 = arith.extf %0 : vector<8x384xbf16> to vector<8x384xf32>
    %cst = arith.constant dense<0.000000e+00> : vector<8xf32>
    %2 = vector.multi_reduction <add>, %1, %cst [1] : vector<8x384xf32> to vector<8xf32>
    %3 = vector.shape_cast %2 : vector<8xf32> to vector<8x1xf32>
    %cst_1 = arith.constant 3.840000e+02 : f32
    %4 = vector.broadcast %cst_1 : f32 to vector<8x1xf32>
    %5 = arith.divf %3, %4 : vector<8x1xf32>
    %6 = vector.broadcast %5 : vector<8x1xf32> to vector<8x384xf32>
    %7 = arith.subf %1, %6 : vector<8x384xf32>
    %8 = arith.mulf %7, %7 : vector<8x384xf32>
    %cst_2 = arith.constant dense<0.000000e+00> : vector<8xf32>
    %9 = vector.multi_reduction <add>, %8, %cst_2 [1] : vector<8x384xf32> to vector<8xf32>
    %10 = vector.shape_cast %9 : vector<8xf32> to vector<8x1xf32>
    %cst_3 = arith.constant 3.840000e+02 : f32
    %11 = vector.broadcast %cst_3 : f32 to vector<8x1xf32>
    %12 = arith.divf %10, %11 : vector<8x1xf32>
    %13 = vector.broadcast %5 : vector<8x1xf32> to vector<8x384xf32>
    %14 = arith.subf %1, %13 : vector<8x384xf32>
    %cst_4 = arith.constant 9.99999997E-7 : f32
    %15 = vector.broadcast %cst_4 : f32 to vector<8x1xf32>
    %16 = arith.addf %12, %15 : vector<8x1xf32>
    %17 = math.rsqrt %16 : vector<8x1xf32>
    %18 = vector.broadcast %17 : vector<8x1xf32> to vector<8x384xf32>
    %19 = arith.mulf %14, %18 : vector<8x384xf32>
    %c0_5 = arith.constant 0 : index
    %c0_6 = arith.constant 0 : index
    %20 = vector.load %arg2[%c0_5, %c0_6] : memref<1x384xf32, #tpu.memory_space<vmem>>, vector<1x384xf32>
    %21 = vector.broadcast %20 : vector<1x384xf32> to vector<8x384xf32>
    %22 = arith.mulf %19, %21 : vector<8x384xf32>
    %c0_7 = arith.constant 0 : index
    %c0_8 = arith.constant 0 : index
    %23 = vector.load %arg3[%c0_7, %c0_8] : memref<1x384xf32, #tpu.memory_space<vmem>>, vector<1x384xf32>
    %24 = vector.broadcast %23 : vector<1x384xf32> to vector<8x384xf32>
    %25 = arith.addf %22, %24 : vector<8x384xf32>
    %26 = arith.truncf %25 : vector<8x384xf32> to vector<8x384xbf16>
    %c0_9 = arith.constant 0 : index
    %c0_10 = arith.constant 0 : index
    %27 = vector.load %arg4[%c0_9, %c0_10] : memref<384x1536xbf16, #tpu.memory_space<vmem>>, vector<384x1536xbf16>
    %cst_11 = arith.constant dense<0.000000e+00> : vector<8x1536xf32>
    %28 = tpu.matmul %26, %27, %cst_11 {dimension_numbers = #tpu.dot_dimension_numbers<[1], [0], [0], [1], [0, 0, 1, 1], [], []>} : vector<8x384xbf16>, vector<384x1536xbf16>, vector<8x1536xf32> -> vector<8x1536xf32>
    %c0_12 = arith.constant 0 : index
    %c0_13 = arith.constant 0 : index
    %29 = vector.load %arg5[%c0_12, %c0_13] : memref<1x1536xf32, #tpu.memory_space<vmem>>, vector<1x1536xf32>
    %30 = vector.broadcast %29 : vector<1x1536xf32> to vector<8x1536xf32>
    %31 = arith.addf %28, %30 : vector<8x1536xf32>
    %32 = arith.mulf %31, %31 : vector<8x1536xf32>
    %33 = arith.mulf %31, %32 : vector<8x1536xf32>
    %cst_14 = arith.constant 4.471500e-02 : f32
    %34 = vector.broadcast %cst_14 : f32 to vector<8x1536xf32>
    %35 = arith.mulf %34, %33 : vector<8x1536xf32>
    %36 = arith.addf %31, %35 : vector<8x1536xf32>
    %cst_15 = arith.constant 0.797884583 : f32
    %37 = vector.broadcast %cst_15 : f32 to vector<8x1536xf32>
    %38 = arith.mulf %37, %36 : vector<8x1536xf32>
    %39 = math.tanh %38 : vector<8x1536xf32>
    %cst_16 = arith.constant 1.000000e+00 : f32
    %40 = vector.broadcast %cst_16 : f32 to vector<8x1536xf32>
    %41 = arith.addf %40, %39 : vector<8x1536xf32>
    %cst_17 = arith.constant 5.000000e-01 : f32
    %42 = vector.broadcast %cst_17 : f32 to vector<8x1536xf32>
    %43 = arith.mulf %42, %41 : vector<8x1536xf32>
    %44 = arith.mulf %31, %43 : vector<8x1536xf32>
    %45 = arith.truncf %44 : vector<8x1536xf32> to vector<8x1536xbf16>
    %c0_18 = arith.constant 0 : index
    %c0_19 = arith.constant 0 : index
    %46 = vector.load %arg6[%c0_18, %c0_19] : memref<1536x384xbf16, #tpu.memory_space<vmem>>, vector<1536x384xbf16>
    %cst_20 = arith.constant dense<0.000000e+00> : vector<8x384xf32>
    %47 = tpu.matmul %45, %46, %cst_20 {dimension_numbers = #tpu.dot_dimension_numbers<[1], [0], [0], [1], [0, 0, 1, 1], [], []>} : vector<8x1536xbf16>, vector<1536x384xbf16>, vector<8x384xf32> -> vector<8x384xf32>
    %c0_21 = arith.constant 0 : index
    %c0_22 = arith.constant 0 : index
    %48 = vector.load %arg7[%c0_21, %c0_22] : memref<1x384xf32, #tpu.memory_space<vmem>>, vector<1x384xf32>
    %49 = vector.broadcast %48 : vector<1x384xf32> to vector<8x384xf32>
    %50 = arith.addf %47, %49 : vector<8x384xf32>
    %c0_23 = arith.constant 0 : index
    %c0_24 = arith.constant 0 : index
    %51 = vector.load %arg8[%c0_23, %c0_24] : memref<1x384xf32, #tpu.memory_space<vmem>>, vector<1x384xf32>
    %52 = vector.broadcast %51 : vector<1x384xf32> to vector<8x384xf32>
    %53 = arith.mulf %50, %52 : vector<8x384xf32>
    %54 = arith.addf %1, %53 : vector<8x384xf32>
    %55 = arith.truncf %54 : vector<8x384xf32> to vector<8x384xbf16>
    %c0_25 = arith.constant 0 : index
    %c0_26 = arith.constant 0 : index
    %56 = vector.load %arg9[%c0_25, %c0_26] : memref<8x384xbf16, #tpu.memory_space<vmem>>, vector<8x384xbf16>
    tpu.vector_store %arg9[%c0_25, %c0_26], %55 {strides = array<i32>} : memref<8x384xbf16, #tpu.memory_space<vmem>>, vector<8x384xbf16>,
    return
  }
  func.func @transform_0(%arg0: i32) -> (i32, i32) {
    %c0_i32 = arith.constant 0 : i32
    %c0_i32_0 = arith.constant 0 : i32
    return %arg0, %c0_i32 : i32, i32
  }
  func.func @transform_1(%arg0: i32) -> (i32, i32) {
    %c0_i32 = arith.constant 0 : i32
    %c0_i32_0 = arith.constant 0 : i32
    %c0_i32_1 = arith.constant 0 : i32
    return %c0_i32, %c0_i32_0 : i32, i32
  }
  func.func @transform_2(%arg0: i32) -> (i32, i32) {
    %c0_i32 = arith.constant 0 : i32
    %c0_i32_0 = arith.constant 0 : i32
    %c0_i32_1 = arith.constant 0 : i32
    return %c0_i32, %c0_i32_0 : i32, i32
  }
  func.func @transform_3(%arg0: i32) -> (i32, i32) {
    %c0_i32 = arith.constant 0 : i32
    %c0_i32_0 = arith.constant 0 : i32
    %c0_i32_1 = arith.constant 0 : i32
    return %c0_i32, %c0_i32_0 : i32, i32
  }
  func.func @transform_4(%arg0: i32) -> (i32, i32) {
    %c0_i32 = arith.constant 0 : i32
    %c0_i32_0 = arith.constant 0 : i32
    %c0_i32_1 = arith.constant 0 : i32
    return %c0_i32, %c0_i32_0 : i32, i32
  }
  func.func @transform_5(%arg0: i32) -> (i32, i32) {
    %c0_i32 = arith.constant 0 : i32
    %c0_i32_0 = arith.constant 0 : i32
    %c0_i32_1 = arith.constant 0 : i32
    return %c0_i32, %c0_i32_0 : i32, i32
  }
  func.func @transform_6(%arg0: i32) -> (i32, i32) {
    %c0_i32 = arith.constant 0 : i32
    %c0_i32_0 = arith.constant 0 : i32
    %c0_i32_1 = arith.constant 0 : i32
    return %c0_i32, %c0_i32_0 : i32, i32
  }
  func.func @transform_7(%arg0: i32) -> (i32, i32) {
    %c0_i32 = arith.constant 0 : i32
    %c0_i32_0 = arith.constant 0 : i32
    %c0_i32_1 = arith.constant 0 : i32
    return %c0_i32, %c0_i32_0 : i32, i32
  }
  func.func @transform_8(%arg0: i32) -> (i32, i32) {
    %c0_i32 = arith.constant 0 : i32
    %c0_i32_0 = arith.constant 0 : i32
    return %arg0, %c0_i32 : i32, i32
  }
}

module attributes {stable_mosaic.version = 11 : i64} {
  func.func @_head_kernel(%arg0: i32, %arg1: memref<2x384xbf16, #tpu.memory_space<vmem>>, %arg2: memref<1x384xf32, #tpu.memory_space<vmem>>, %arg3: memref<1x384xf32, #tpu.memory_space<vmem>>, %arg4: memref<384x256xbf16, #tpu.memory_space<vmem>>, %arg5: memref<1x256xf32, #tpu.memory_space<vmem>>, %arg6: memref<256x128xbf16, #tpu.memory_space<vmem>>, %arg7: memref<1x128xf32, #tpu.memory_space<vmem>>, %arg8: memref<2x128xf32, #tpu.memory_space<vmem>>) attributes {dimension_semantics = [#tpu.dimension_semantics<arbitrary>], iteration_bounds = array<i64: 1>, scalar_prefetch = 0 : i64, scratch_operands = 0 : i64, tpu.core_type = #tpu.core_type<tc>, window_params = [{pipeline_mode = #tpu.pipeline_mode<synchronous>, transform_indices = @transform_0, window_bounds = array<i64: 2, 384>}, {pipeline_mode = #tpu.pipeline_mode<synchronous>, transform_indices = @transform_1, window_bounds = array<i64: 1, 384>}, {pipeline_mode = #tpu.pipeline_mode<synchronous>, transform_indices = @transform_2, window_bounds = array<i64: 1, 384>}, {pipeline_mode = #tpu.pipeline_mode<synchronous>, transform_indices = @transform_3, window_bounds = array<i64: 384, 256>}, {pipeline_mode = #tpu.pipeline_mode<synchronous>, transform_indices = @transform_4, window_bounds = array<i64: 1, 256>}, {pipeline_mode = #tpu.pipeline_mode<synchronous>, transform_indices = @transform_5, window_bounds = array<i64: 256, 128>}, {pipeline_mode = #tpu.pipeline_mode<synchronous>, transform_indices = @transform_6, window_bounds = array<i64: 1, 128>}, {pipeline_mode = #tpu.pipeline_mode<synchronous>, transform_indices = @transform_7, window_bounds = array<i64: 2, 128>}]} {
    %c0 = arith.constant 0 : index
    %c0_0 = arith.constant 0 : index
    %0 = vector.load %arg1[%c0, %c0_0] : memref<2x384xbf16, #tpu.memory_space<vmem>>, vector<2x384xbf16>
    %1 = arith.extf %0 : vector<2x384xbf16> to vector<2x384xf32>
    %cst = arith.constant dense<0.000000e+00> : vector<2xf32>
    %2 = vector.multi_reduction <add>, %1, %cst [1] : vector<2x384xf32> to vector<2xf32>
    %3 = vector.shape_cast %2 : vector<2xf32> to vector<2x1xf32>
    %cst_1 = arith.constant 3.840000e+02 : f32
    %4 = vector.broadcast %cst_1 : f32 to vector<2x1xf32>
    %5 = arith.divf %3, %4 : vector<2x1xf32>
    %6 = vector.broadcast %5 : vector<2x1xf32> to vector<2x384xf32>
    %7 = arith.subf %1, %6 : vector<2x384xf32>
    %8 = arith.mulf %7, %7 : vector<2x384xf32>
    %cst_2 = arith.constant dense<0.000000e+00> : vector<2xf32>
    %9 = vector.multi_reduction <add>, %8, %cst_2 [1] : vector<2x384xf32> to vector<2xf32>
    %10 = vector.shape_cast %9 : vector<2xf32> to vector<2x1xf32>
    %cst_3 = arith.constant 3.840000e+02 : f32
    %11 = vector.broadcast %cst_3 : f32 to vector<2x1xf32>
    %12 = arith.divf %10, %11 : vector<2x1xf32>
    %13 = vector.broadcast %5 : vector<2x1xf32> to vector<2x384xf32>
    %14 = arith.subf %1, %13 : vector<2x384xf32>
    %cst_4 = arith.constant 9.99999997E-7 : f32
    %15 = vector.broadcast %cst_4 : f32 to vector<2x1xf32>
    %16 = arith.addf %12, %15 : vector<2x1xf32>
    %17 = math.rsqrt %16 : vector<2x1xf32>
    %18 = vector.broadcast %17 : vector<2x1xf32> to vector<2x384xf32>
    %19 = arith.mulf %14, %18 : vector<2x384xf32>
    %c0_5 = arith.constant 0 : index
    %c0_6 = arith.constant 0 : index
    %20 = vector.load %arg2[%c0_5, %c0_6] : memref<1x384xf32, #tpu.memory_space<vmem>>, vector<1x384xf32>
    %21 = vector.broadcast %20 : vector<1x384xf32> to vector<2x384xf32>
    %22 = arith.mulf %19, %21 : vector<2x384xf32>
    %c0_7 = arith.constant 0 : index
    %c0_8 = arith.constant 0 : index
    %23 = vector.load %arg3[%c0_7, %c0_8] : memref<1x384xf32, #tpu.memory_space<vmem>>, vector<1x384xf32>
    %24 = vector.broadcast %23 : vector<1x384xf32> to vector<2x384xf32>
    %25 = arith.addf %22, %24 : vector<2x384xf32>
    %cst_9 = arith.constant dense<0.000000e+00> : vector<2xf32>
    %26 = vector.multi_reduction <add>, %25, %cst_9 [1] : vector<2x384xf32> to vector<2xf32>
    %27 = vector.shape_cast %26 : vector<2xf32> to vector<2x1xf32>
    %cst_10 = arith.constant 3.840000e+02 : f32
    %28 = vector.broadcast %cst_10 : f32 to vector<2x1xf32>
    %29 = arith.divf %27, %28 : vector<2x1xf32>
    %30 = vector.broadcast %29 : vector<2x1xf32> to vector<2x384xf32>
    %31 = arith.subf %25, %30 : vector<2x384xf32>
    %32 = arith.mulf %31, %31 : vector<2x384xf32>
    %cst_11 = arith.constant dense<0.000000e+00> : vector<2xf32>
    %33 = vector.multi_reduction <add>, %32, %cst_11 [1] : vector<2x384xf32> to vector<2xf32>
    %34 = vector.shape_cast %33 : vector<2xf32> to vector<2x1xf32>
    %cst_12 = arith.constant 3.840000e+02 : f32
    %35 = vector.broadcast %cst_12 : f32 to vector<2x1xf32>
    %36 = arith.divf %34, %35 : vector<2x1xf32>
    %37 = vector.broadcast %29 : vector<2x1xf32> to vector<2x384xf32>
    %38 = arith.subf %25, %37 : vector<2x384xf32>
    %cst_13 = arith.constant 9.99999997E-7 : f32
    %39 = vector.broadcast %cst_13 : f32 to vector<2x1xf32>
    %40 = arith.addf %36, %39 : vector<2x1xf32>
    %41 = math.rsqrt %40 : vector<2x1xf32>
    %42 = vector.broadcast %41 : vector<2x1xf32> to vector<2x384xf32>
    %43 = arith.mulf %38, %42 : vector<2x384xf32>
    %c0_14 = arith.constant 0 : index
    %c0_15 = arith.constant 0 : index
    %44 = vector.load %arg2[%c0_14, %c0_15] : memref<1x384xf32, #tpu.memory_space<vmem>>, vector<1x384xf32>
    %45 = vector.broadcast %44 : vector<1x384xf32> to vector<2x384xf32>
    %46 = arith.mulf %43, %45 : vector<2x384xf32>
    %c0_16 = arith.constant 0 : index
    %c0_17 = arith.constant 0 : index
    %47 = vector.load %arg3[%c0_16, %c0_17] : memref<1x384xf32, #tpu.memory_space<vmem>>, vector<1x384xf32>
    %48 = vector.broadcast %47 : vector<1x384xf32> to vector<2x384xf32>
    %49 = arith.addf %46, %48 : vector<2x384xf32>
    %50 = arith.truncf %49 : vector<2x384xf32> to vector<2x384xbf16>
    %c0_18 = arith.constant 0 : index
    %c0_19 = arith.constant 0 : index
    %51 = vector.load %arg4[%c0_18, %c0_19] : memref<384x256xbf16, #tpu.memory_space<vmem>>, vector<384x256xbf16>
    %cst_20 = arith.constant dense<0.000000e+00> : vector<2x256xf32>
    %52 = tpu.matmul %50, %51, %cst_20 {dimension_numbers = #tpu.dot_dimension_numbers<[1], [0], [0], [1], [0, 0, 1, 1], [], []>} : vector<2x384xbf16>, vector<384x256xbf16>, vector<2x256xf32> -> vector<2x256xf32>
    %c0_21 = arith.constant 0 : index
    %c0_22 = arith.constant 0 : index
    %53 = vector.load %arg5[%c0_21, %c0_22] : memref<1x256xf32, #tpu.memory_space<vmem>>, vector<1x256xf32>
    %54 = vector.broadcast %53 : vector<1x256xf32> to vector<2x256xf32>
    %55 = arith.addf %52, %54 : vector<2x256xf32>
    %cst_23 = arith.constant 0.000000e+00 : f32
    %56 = vector.broadcast %cst_23 : f32 to vector<2x256xf32>
    %57 = arith.maximumf %55, %56 : vector<2x256xf32>
    %58 = arith.truncf %57 : vector<2x256xf32> to vector<2x256xbf16>
    %c0_24 = arith.constant 0 : index
    %c0_25 = arith.constant 0 : index
    %59 = vector.load %arg6[%c0_24, %c0_25] : memref<256x128xbf16, #tpu.memory_space<vmem>>, vector<256x128xbf16>
    %cst_26 = arith.constant dense<0.000000e+00> : vector<2x128xf32>
    %60 = tpu.matmul %58, %59, %cst_26 {dimension_numbers = #tpu.dot_dimension_numbers<[1], [0], [0], [1], [0, 0, 1, 1], [], []>} : vector<2x256xbf16>, vector<256x128xbf16>, vector<2x128xf32> -> vector<2x128xf32>
    %c0_27 = arith.constant 0 : index
    %c0_28 = arith.constant 0 : index
    %61 = vector.load %arg7[%c0_27, %c0_28] : memref<1x128xf32, #tpu.memory_space<vmem>>, vector<1x128xf32>
    %62 = vector.broadcast %61 : vector<1x128xf32> to vector<2x128xf32>
    %63 = arith.addf %60, %62 : vector<2x128xf32>
    %c0_29 = arith.constant 0 : index
    %c0_30 = arith.constant 0 : index
    %64 = vector.load %arg8[%c0_29, %c0_30] : memref<2x128xf32, #tpu.memory_space<vmem>>, vector<2x128xf32>
    tpu.vector_store %arg8[%c0_29, %c0_30], %63 {strides = array<i32>} : memref<2x128xf32, #tpu.memory_space<vmem>>, vector<2x128xf32>,
    return
  }
  func.func @transform_0(%arg0: i32) -> (i32, i32) {
    %c0_i32 = arith.constant 0 : i32
    %c0_i32_0 = arith.constant 0 : i32
    %c0_i32_1 = arith.constant 0 : i32
    return %c0_i32, %c0_i32_0 : i32, i32
  }
  func.func @transform_1(%arg0: i32) -> (i32, i32) {
    %c0_i32 = arith.constant 0 : i32
    %c0_i32_0 = arith.constant 0 : i32
    %c0_i32_1 = arith.constant 0 : i32
    return %c0_i32, %c0_i32_0 : i32, i32
  }
  func.func @transform_2(%arg0: i32) -> (i32, i32) {
    %c0_i32 = arith.constant 0 : i32
    %c0_i32_0 = arith.constant 0 : i32
    %c0_i32_1 = arith.constant 0 : i32
    return %c0_i32, %c0_i32_0 : i32, i32
  }
  func.func @transform_3(%arg0: i32) -> (i32, i32) {
    %c0_i32 = arith.constant 0 : i32
    %c0_i32_0 = arith.constant 0 : i32
    %c0_i32_1 = arith.constant 0 : i32
    return %c0_i32, %c0_i32_0 : i32, i32
  }
  func.func @transform_4(%arg0: i32) -> (i32, i32) {
    %c0_i32 = arith.constant 0 : i32
    %c0_i32_0 = arith.constant 0 : i32
    %c0_i32_1 = arith.constant 0 : i32
    return %c0_i32, %c0_i32_0 : i32, i32
  }
  func.func @transform_5(%arg0: i32) -> (i32, i32) {
    %c0_i32 = arith.constant 0 : i32
    %c0_i32_0 = arith.constant 0 : i32
    %c0_i32_1 = arith.constant 0 : i32
    return %c0_i32, %c0_i32_0 : i32, i32
  }
  func.func @transform_6(%arg0: i32) -> (i32, i32) {
    %c0_i32 = arith.constant 0 : i32
    %c0_i32_0 = arith.constant 0 : i32
    %c0_i32_1 = arith.constant 0 : i32
    return %c0_i32, %c0_i32_0 : i32, i32
  }
  func.func @transform_7(%arg0: i32) -> (i32, i32) {
    %c0_i32 = arith.constant 0 : i32
    %c0_i32_0 = arith.constant 0 : i32
    %c0_i32_1 = arith.constant 0 : i32
    return %c0_i32, %c0_i32_0 : i32, i32
  }
}

module attributes {stable_mosaic.version = 11 : i64} {
  func.func @_attn_block_kernel(%arg0: i32, %arg1: memref<1x5x384xbf16, #tpu.memory_space<vmem>>, %arg2: memref<1x384xf32, #tpu.memory_space<vmem>>, %arg3: memref<1x384xf32, #tpu.memory_space<vmem>>, %arg4: memref<384x1152xbf16, #tpu.memory_space<vmem>>, %arg5: memref<1x1152xf32, #tpu.memory_space<vmem>>, %arg6: memref<384x384xbf16, #tpu.memory_space<vmem>>, %arg7: memref<1x384xf32, #tpu.memory_space<vmem>>, %arg8: memref<1x384xf32, #tpu.memory_space<vmem>>, %arg9: memref<1x5x384xbf16, #tpu.memory_space<vmem>>, %arg10: memref<5x1152xbf16, #tpu.memory_space<vmem>>, %arg11: memref<5x384xbf16, #tpu.memory_space<vmem>>) attributes {dimension_semantics = [#tpu.dimension_semantics<parallel>], iteration_bounds = array<i64: 2>, scalar_prefetch = 0 : i64, scratch_operands = 2 : i64, tpu.core_type = #tpu.core_type<tc>, window_params = [{transform_indices = @transform_0, window_bounds = array<i64: 1, 5, 384>}, {pipeline_mode = #tpu.pipeline_mode<synchronous>, transform_indices = @transform_1, window_bounds = array<i64: 1, 384>}, {pipeline_mode = #tpu.pipeline_mode<synchronous>, transform_indices = @transform_2, window_bounds = array<i64: 1, 384>}, {pipeline_mode = #tpu.pipeline_mode<synchronous>, transform_indices = @transform_3, window_bounds = array<i64: 384, 1152>}, {pipeline_mode = #tpu.pipeline_mode<synchronous>, transform_indices = @transform_4, window_bounds = array<i64: 1, 1152>}, {pipeline_mode = #tpu.pipeline_mode<synchronous>, transform_indices = @transform_5, window_bounds = array<i64: 384, 384>}, {pipeline_mode = #tpu.pipeline_mode<synchronous>, transform_indices = @transform_6, window_bounds = array<i64: 1, 384>}, {pipeline_mode = #tpu.pipeline_mode<synchronous>, transform_indices = @transform_7, window_bounds = array<i64: 1, 384>}, {transform_indices = @transform_8, window_bounds = array<i64: 1, 5, 384>}]} {
    %c0 = arith.constant 0 : index
    %c0_0 = arith.constant 0 : index
    %c0_1 = arith.constant 0 : index
    %0 = vector.load %arg1[%c0, %c0_0, %c0_1] : memref<1x5x384xbf16, #tpu.memory_space<vmem>>, vector<1x5x384xbf16>
    %1 = vector.shape_cast %0 : vector<1x5x384xbf16> to vector<5x384xbf16>
    %2 = arith.extf %1 : vector<5x384xbf16> to vector<5x384xf32>
    %cst = arith.constant dense<0.000000e+00> : vector<5xf32>
    %3 = vector.multi_reduction <add>, %2, %cst [1] : vector<5x384xf32> to vector<5xf32>
    %4 = vector.shape_cast %3 : vector<5xf32> to vector<5x1xf32>
    %cst_2 = arith.constant 3.840000e+02 : f32
    %5 = vector.broadcast %cst_2 : f32 to vector<5x1xf32>
    %6 = arith.divf %4, %5 : vector<5x1xf32>
    %7 = vector.broadcast %6 : vector<5x1xf32> to vector<5x384xf32>
    %8 = arith.subf %2, %7 : vector<5x384xf32>
    %9 = arith.mulf %8, %8 : vector<5x384xf32>
    %cst_3 = arith.constant dense<0.000000e+00> : vector<5xf32>
    %10 = vector.multi_reduction <add>, %9, %cst_3 [1] : vector<5x384xf32> to vector<5xf32>
    %11 = vector.shape_cast %10 : vector<5xf32> to vector<5x1xf32>
    %cst_4 = arith.constant 3.840000e+02 : f32
    %12 = vector.broadcast %cst_4 : f32 to vector<5x1xf32>
    %13 = arith.divf %11, %12 : vector<5x1xf32>
    %14 = vector.broadcast %6 : vector<5x1xf32> to vector<5x384xf32>
    %15 = arith.subf %2, %14 : vector<5x384xf32>
    %cst_5 = arith.constant 9.99999997E-7 : f32
    %16 = vector.broadcast %cst_5 : f32 to vector<5x1xf32>
    %17 = arith.addf %13, %16 : vector<5x1xf32>
    %18 = math.rsqrt %17 : vector<5x1xf32>
    %19 = vector.broadcast %18 : vector<5x1xf32> to vector<5x384xf32>
    %20 = arith.mulf %15, %19 : vector<5x384xf32>
    %c0_6 = arith.constant 0 : index
    %c0_7 = arith.constant 0 : index
    %21 = vector.load %arg2[%c0_6, %c0_7] : memref<1x384xf32, #tpu.memory_space<vmem>>, vector<1x384xf32>
    %22 = vector.broadcast %21 : vector<1x384xf32> to vector<5x384xf32>
    %23 = arith.mulf %20, %22 : vector<5x384xf32>
    %c0_8 = arith.constant 0 : index
    %c0_9 = arith.constant 0 : index
    %24 = vector.load %arg3[%c0_8, %c0_9] : memref<1x384xf32, #tpu.memory_space<vmem>>, vector<1x384xf32>
    %25 = vector.broadcast %24 : vector<1x384xf32> to vector<5x384xf32>
    %26 = arith.addf %23, %25 : vector<5x384xf32>
    %27 = arith.truncf %26 : vector<5x384xf32> to vector<5x384xbf16>
    %c0_10 = arith.constant 0 : index
    %c0_11 = arith.constant 0 : index
    %28 = vector.load %arg4[%c0_10, %c0_11] : memref<384x1152xbf16, #tpu.memory_space<vmem>>, vector<384x1152xbf16>
    %cst_12 = arith.constant dense<0.000000e+00> : vector<5x1152xf32>
    %29 = tpu.matmul %27, %28, %cst_12 {dimension_numbers = #tpu.dot_dimension_numbers<[1], [0], [0], [1], [0, 0, 1, 1], [], []>} : vector<5x384xbf16>, vector<384x1152xbf16>, vector<5x1152xf32> -> vector<5x1152xf32>
    %c0_13 = arith.constant 0 : index
    %c0_14 = arith.constant 0 : index
    %30 = vector.load %arg5[%c0_13, %c0_14] : memref<1x1152xf32, #tpu.memory_space<vmem>>, vector<1x1152xf32>
    %31 = vector.broadcast %30 : vector<1x1152xf32> to vector<5x1152xf32>
    %32 = arith.addf %29, %31 : vector<5x1152xf32>
    %33 = arith.truncf %32 : vector<5x1152xf32> to vector<5x1152xbf16>
    %c0_15 = arith.constant 0 : index
    %c0_16 = arith.constant 0 : index
    %34 = vector.load %arg10[%c0_15, %c0_16] : memref<5x1152xbf16, #tpu.memory_space<vmem>>, vector<5x1152xbf16>
    tpu.vector_store %arg10[%c0_15, %c0_16], %33 {strides = array<i32>} : memref<5x1152xbf16, #tpu.memory_space<vmem>>, vector<5x1152xbf16>,
    %c0_17 = arith.constant 0 : index
    %c0_18 = arith.constant 0 : index
    %35 = vector.load %arg10[%c0_17, %c0_18] : memref<5x1152xbf16, #tpu.memory_space<vmem>>, vector<5x64xbf16>
    %c0_19 = arith.constant 0 : index
    %c384 = arith.constant 384 : index
    %36 = vector.load %arg10[%c0_19, %c384] : memref<5x1152xbf16, #tpu.memory_space<vmem>>, vector<5x64xbf16>
    %c0_20 = arith.constant 0 : index
    %c768 = arith.constant 768 : index
    %37 = vector.load %arg10[%c0_20, %c768] : memref<5x1152xbf16, #tpu.memory_space<vmem>>, vector<5x64xbf16>
    %cst_21 = arith.constant dense<0.000000e+00> : vector<5x5xf32>
    %38 = tpu.matmul %35, %36, %cst_21 {dimension_numbers = #tpu.dot_dimension_numbers<[1], [1], [0], [0], [0, 0, 1, 0], [], []>} : vector<5x64xbf16>, vector<5x64xbf16>, vector<5x5xf32> -> vector<5x5xf32>
    %cst_22 = arith.constant 1.250000e-01 : f32
    %39 = vector.broadcast %cst_22 : f32 to vector<5x5xf32>
    %40 = arith.mulf %38, %39 : vector<5x5xf32>
    %cst_23 = arith.constant dense<0xFF800000> : vector<5xf32>
    %41 = vector.multi_reduction <maximumf>, %40, %cst_23 [1] : vector<5x5xf32> to vector<5xf32>
    %42 = vector.shape_cast %41 : vector<5xf32> to vector<5x1xf32>
    %43 = vector.broadcast %42 : vector<5x1xf32> to vector<5x5xf32>
    %44 = arith.subf %40, %43 : vector<5x5xf32>
    %45 = math.exp %44 : vector<5x5xf32>
    %cst_24 = arith.constant dense<0.000000e+00> : vector<5xf32>
    %46 = vector.multi_reduction <add>, %45, %cst_24 [1] : vector<5x5xf32> to vector<5xf32>
    %47 = vector.shape_cast %46 : vector<5xf32> to vector<5x1xf32>
    %48 = tpu.reciprocal %47 {approx = true} : vector<5x1xf32> -> vector<5x1xf32>
    %49 = vector.broadcast %48 : vector<5x1xf32> to vector<5x5xf32>
    %50 = arith.mulf %45, %49 : vector<5x5xf32>
    %51 = arith.truncf %50 : vector<5x5xf32> to vector<5x5xbf16>
    %cst_25 = arith.constant dense<0.000000e+00> : vector<5x64xf32>
    %52 = tpu.matmul %51, %37, %cst_25 {dimension_numbers = #tpu.dot_dimension_numbers<[1], [0], [0], [1], [0, 0, 1, 1], [], []>} : vector<5x5xbf16>, vector<5x64xbf16>, vector<5x64xf32> -> vector<5x64xf32>
    %53 = arith.truncf %52 : vector<5x64xf32> to vector<5x64xbf16>
    %c0_26 = arith.constant 0 : index
    %c0_27 = arith.constant 0 : index
    %54 = vector.load %arg11[%c0_26, %c0_27] : memref<5x384xbf16, #tpu.memory_space<vmem>>, vector<5x64xbf16>
    tpu.vector_store %arg11[%c0_26, %c0_27], %53 {strides = array<i32>} : memref<5x384xbf16, #tpu.memory_space<vmem>>, vector<5x64xbf16>,
    %c0_28 = arith.constant 0 : index
    %c64 = arith.constant 64 : index
    %55 = vector.load %arg10[%c0_28, %c64] : memref<5x1152xbf16, #tpu.memory_space<vmem>>, vector<5x64xbf16>
    %c0_29 = arith.constant 0 : index
    %c448 = arith.constant 448 : index
    %56 = vector.load %arg10[%c0_29, %c448] : memref<5x1152xbf16, #tpu.memory_space<vmem>>, vector<5x64xbf16>
    %c0_30 = arith.constant 0 : index
    %c832 = arith.constant 832 : index
    %57 = vector.load %arg10[%c0_30, %c832] : memref<5x1152xbf16, #tpu.memory_space<vmem>>, vector<5x64xbf16>
    %cst_31 = arith.constant dense<0.000000e+00> : vector<5x5xf32>
    %58 = tpu.matmul %55, %56, %cst_31 {dimension_numbers = #tpu.dot_dimension_numbers<[1], [1], [0], [0], [0, 0, 1, 0], [], []>} : vector<5x64xbf16>, vector<5x64xbf16>, vector<5x5xf32> -> vector<5x5xf32>
    %cst_32 = arith.constant 1.250000e-01 : f32
    %59 = vector.broadcast %cst_32 : f32 to vector<5x5xf32>
    %60 = arith.mulf %58, %59 : vector<5x5xf32>
    %cst_33 = arith.constant dense<0xFF800000> : vector<5xf32>
    %61 = vector.multi_reduction <maximumf>, %60, %cst_33 [1] : vector<5x5xf32> to vector<5xf32>
    %62 = vector.shape_cast %61 : vector<5xf32> to vector<5x1xf32>
    %63 = vector.broadcast %62 : vector<5x1xf32> to vector<5x5xf32>
    %64 = arith.subf %60, %63 : vector<5x5xf32>
    %65 = math.exp %64 : vector<5x5xf32>
    %cst_34 = arith.constant dense<0.000000e+00> : vector<5xf32>
    %66 = vector.multi_reduction <add>, %65, %cst_34 [1] : vector<5x5xf32> to vector<5xf32>
    %67 = vector.shape_cast %66 : vector<5xf32> to vector<5x1xf32>
    %68 = tpu.reciprocal %67 {approx = true} : vector<5x1xf32> -> vector<5x1xf32>
    %69 = vector.broadcast %68 : vector<5x1xf32> to vector<5x5xf32>
    %70 = arith.mulf %65, %69 : vector<5x5xf32>
    %71 = arith.truncf %70 : vector<5x5xf32> to vector<5x5xbf16>
    %cst_35 = arith.constant dense<0.000000e+00> : vector<5x64xf32>
    %72 = tpu.matmul %71, %57, %cst_35 {dimension_numbers = #tpu.dot_dimension_numbers<[1], [0], [0], [1], [0, 0, 1, 1], [], []>} : vector<5x5xbf16>, vector<5x64xbf16>, vector<5x64xf32> -> vector<5x64xf32>
    %73 = arith.truncf %72 : vector<5x64xf32> to vector<5x64xbf16>
    %c0_36 = arith.constant 0 : index
    %c64_37 = arith.constant 64 : index
    %74 = vector.load %arg11[%c0_36, %c64_37] : memref<5x384xbf16, #tpu.memory_space<vmem>>, vector<5x64xbf16>
    tpu.vector_store %arg11[%c0_36, %c64_37], %73 {strides = array<i32>} : memref<5x384xbf16, #tpu.memory_space<vmem>>, vector<5x64xbf16>,
    %c0_38 = arith.constant 0 : index
    %c128 = arith.constant 128 : index
    %75 = vector.load %arg10[%c0_38, %c128] : memref<5x1152xbf16, #tpu.memory_space<vmem>>, vector<5x64xbf16>
    %c0_39 = arith.constant 0 : index
    %c512 = arith.constant 512 : index
    %76 = vector.load %arg10[%c0_39, %c512] : memref<5x1152xbf16, #tpu.memory_space<vmem>>, vector<5x64xbf16>
    %c0_40 = arith.constant 0 : index
    %c896 = arith.constant 896 : index
    %77 = vector.load %arg10[%c0_40, %c896] : memref<5x1152xbf16, #tpu.memory_space<vmem>>, vector<5x64xbf16>
    %cst_41 = arith.constant dense<0.000000e+00> : vector<5x5xf32>
    %78 = tpu.matmul %75, %76, %cst_41 {dimension_numbers = #tpu.dot_dimension_numbers<[1], [1], [0], [0], [0, 0, 1, 0], [], []>} : vector<5x64xbf16>, vector<5x64xbf16>, vector<5x5xf32> -> vector<5x5xf32>
    %cst_42 = arith.constant 1.250000e-01 : f32
    %79 = vector.broadcast %cst_42 : f32 to vector<5x5xf32>
    %80 = arith.mulf %78, %79 : vector<5x5xf32>
    %cst_43 = arith.constant dense<0xFF800000> : vector<5xf32>
    %81 = vector.multi_reduction <maximumf>, %80, %cst_43 [1] : vector<5x5xf32> to vector<5xf32>
    %82 = vector.shape_cast %81 : vector<5xf32> to vector<5x1xf32>
    %83 = vector.broadcast %82 : vector<5x1xf32> to vector<5x5xf32>
    %84 = arith.subf %80, %83 : vector<5x5xf32>
    %85 = math.exp %84 : vector<5x5xf32>
    %cst_44 = arith.constant dense<0.000000e+00> : vector<5xf32>
    %86 = vector.multi_reduction <add>, %85, %cst_44 [1] : vector<5x5xf32> to vector<5xf32>
    %87 = vector.shape_cast %86 : vector<5xf32> to vector<5x1xf32>
    %88 = tpu.reciprocal %87 {approx = true} : vector<5x1xf32> -> vector<5x1xf32>
    %89 = vector.broadcast %88 : vector<5x1xf32> to vector<5x5xf32>
    %90 = arith.mulf %85, %89 : vector<5x5xf32>
    %91 = arith.truncf %90 : vector<5x5xf32> to vector<5x5xbf16>
    %cst_45 = arith.constant dense<0.000000e+00> : vector<5x64xf32>
    %92 = tpu.matmul %91, %77, %cst_45 {dimension_numbers = #tpu.dot_dimension_numbers<[1], [0], [0], [1], [0, 0, 1, 1], [], []>} : vector<5x5xbf16>, vector<5x64xbf16>, vector<5x64xf32> -> vector<5x64xf32>
    %93 = arith.truncf %92 : vector<5x64xf32> to vector<5x64xbf16>
    %c0_46 = arith.constant 0 : index
    %c128_47 = arith.constant 128 : index
    %94 = vector.load %arg11[%c0_46, %c128_47] : memref<5x384xbf16, #tpu.memory_space<vmem>>, vector<5x64xbf16>
    tpu.vector_store %arg11[%c0_46, %c128_47], %93 {strides = array<i32>} : memref<5x384xbf16, #tpu.memory_space<vmem>>, vector<5x64xbf16>,
    %c0_48 = arith.constant 0 : index
    %c192 = arith.constant 192 : index
    %95 = vector.load %arg10[%c0_48, %c192] : memref<5x1152xbf16, #tpu.memory_space<vmem>>, vector<5x64xbf16>
    %c0_49 = arith.constant 0 : index
    %c576 = arith.constant 576 : index
    %96 = vector.load %arg10[%c0_49, %c576] : memref<5x1152xbf16, #tpu.memory_space<vmem>>, vector<5x64xbf16>
    %c0_50 = arith.constant 0 : index
    %c960 = arith.constant 960 : index
    %97 = vector.load %arg10[%c0_50, %c960] : memref<5x1152xbf16, #tpu.memory_space<vmem>>, vector<5x64xbf16>
    %cst_51 = arith.constant dense<0.000000e+00> : vector<5x5xf32>
    %98 = tpu.matmul %95, %96, %cst_51 {dimension_numbers = #tpu.dot_dimension_numbers<[1], [1], [0], [0], [0, 0, 1, 0], [], []>} : vector<5x64xbf16>, vector<5x64xbf16>, vector<5x5xf32> -> vector<5x5xf32>
    %cst_52 = arith.constant 1.250000e-01 : f32
    %99 = vector.broadcast %cst_52 : f32 to vector<5x5xf32>
    %100 = arith.mulf %98, %99 : vector<5x5xf32>
    %cst_53 = arith.constant dense<0xFF800000> : vector<5xf32>
    %101 = vector.multi_reduction <maximumf>, %100, %cst_53 [1] : vector<5x5xf32> to vector<5xf32>
    %102 = vector.shape_cast %101 : vector<5xf32> to vector<5x1xf32>
    %103 = vector.broadcast %102 : vector<5x1xf32> to vector<5x5xf32>
    %104 = arith.subf %100, %103 : vector<5x5xf32>
    %105 = math.exp %104 : vector<5x5xf32>
    %cst_54 = arith.constant dense<0.000000e+00> : vector<5xf32>
    %106 = vector.multi_reduction <add>, %105, %cst_54 [1] : vector<5x5xf32> to vector<5xf32>
    %107 = vector.shape_cast %106 : vector<5xf32> to vector<5x1xf32>
    %108 = tpu.reciprocal %107 {approx = true} : vector<5x1xf32> -> vector<5x1xf32>
    %109 = vector.broadcast %108 : vector<5x1xf32> to vector<5x5xf32>
    %110 = arith.mulf %105, %109 : vector<5x5xf32>
    %111 = arith.truncf %110 : vector<5x5xf32> to vector<5x5xbf16>
    %cst_55 = arith.constant dense<0.000000e+00> : vector<5x64xf32>
    %112 = tpu.matmul %111, %97, %cst_55 {dimension_numbers = #tpu.dot_dimension_numbers<[1], [0], [0], [1], [0, 0, 1, 1], [], []>} : vector<5x5xbf16>, vector<5x64xbf16>, vector<5x64xf32> -> vector<5x64xf32>
    %113 = arith.truncf %112 : vector<5x64xf32> to vector<5x64xbf16>
    %c0_56 = arith.constant 0 : index
    %c192_57 = arith.constant 192 : index
    %114 = vector.load %arg11[%c0_56, %c192_57] : memref<5x384xbf16, #tpu.memory_space<vmem>>, vector<5x64xbf16>
    tpu.vector_store %arg11[%c0_56, %c192_57], %113 {strides = array<i32>} : memref<5x384xbf16, #tpu.memory_space<vmem>>, vector<5x64xbf16>,
    %c0_58 = arith.constant 0 : index
    %c256 = arith.constant 256 : index
    %115 = vector.load %arg10[%c0_58, %c256] : memref<5x1152xbf16, #tpu.memory_space<vmem>>, vector<5x64xbf16>
    %c0_59 = arith.constant 0 : index
    %c640 = arith.constant 640 : index
    %116 = vector.load %arg10[%c0_59, %c640] : memref<5x1152xbf16, #tpu.memory_space<vmem>>, vector<5x64xbf16>
    %c0_60 = arith.constant 0 : index
    %c1024 = arith.constant 1024 : index
    %117 = vector.load %arg10[%c0_60, %c1024] : memref<5x1152xbf16, #tpu.memory_space<vmem>>, vector<5x64xbf16>
    %cst_61 = arith.constant dense<0.000000e+00> : vector<5x5xf32>
    %118 = tpu.matmul %115, %116, %cst_61 {dimension_numbers = #tpu.dot_dimension_numbers<[1], [1], [0], [0], [0, 0, 1, 0], [], []>} : vector<5x64xbf16>, vector<5x64xbf16>, vector<5x5xf32> -> vector<5x5xf32>
    %cst_62 = arith.constant 1.250000e-01 : f32
    %119 = vector.broadcast %cst_62 : f32 to vector<5x5xf32>
    %120 = arith.mulf %118, %119 : vector<5x5xf32>
    %cst_63 = arith.constant dense<0xFF800000> : vector<5xf32>
    %121 = vector.multi_reduction <maximumf>, %120, %cst_63 [1] : vector<5x5xf32> to vector<5xf32>
    %122 = vector.shape_cast %121 : vector<5xf32> to vector<5x1xf32>
    %123 = vector.broadcast %122 : vector<5x1xf32> to vector<5x5xf32>
    %124 = arith.subf %120, %123 : vector<5x5xf32>
    %125 = math.exp %124 : vector<5x5xf32>
    %cst_64 = arith.constant dense<0.000000e+00> : vector<5xf32>
    %126 = vector.multi_reduction <add>, %125, %cst_64 [1] : vector<5x5xf32> to vector<5xf32>
    %127 = vector.shape_cast %126 : vector<5xf32> to vector<5x1xf32>
    %128 = tpu.reciprocal %127 {approx = true} : vector<5x1xf32> -> vector<5x1xf32>
    %129 = vector.broadcast %128 : vector<5x1xf32> to vector<5x5xf32>
    %130 = arith.mulf %125, %129 : vector<5x5xf32>
    %131 = arith.truncf %130 : vector<5x5xf32> to vector<5x5xbf16>
    %cst_65 = arith.constant dense<0.000000e+00> : vector<5x64xf32>
    %132 = tpu.matmul %131, %117, %cst_65 {dimension_numbers = #tpu.dot_dimension_numbers<[1], [0], [0], [1], [0, 0, 1, 1], [], []>} : vector<5x5xbf16>, vector<5x64xbf16>, vector<5x64xf32> -> vector<5x64xf32>
    %133 = arith.truncf %132 : vector<5x64xf32> to vector<5x64xbf16>
    %c0_66 = arith.constant 0 : index
    %c256_67 = arith.constant 256 : index
    %134 = vector.load %arg11[%c0_66, %c256_67] : memref<5x384xbf16, #tpu.memory_space<vmem>>, vector<5x64xbf16>
    tpu.vector_store %arg11[%c0_66, %c256_67], %133 {strides = array<i32>} : memref<5x384xbf16, #tpu.memory_space<vmem>>, vector<5x64xbf16>,
    %c0_68 = arith.constant 0 : index
    %c320 = arith.constant 320 : index
    %135 = vector.load %arg10[%c0_68, %c320] : memref<5x1152xbf16, #tpu.memory_space<vmem>>, vector<5x64xbf16>
    %c0_69 = arith.constant 0 : index
    %c704 = arith.constant 704 : index
    %136 = vector.load %arg10[%c0_69, %c704] : memref<5x1152xbf16, #tpu.memory_space<vmem>>, vector<5x64xbf16>
    %c0_70 = arith.constant 0 : index
    %c1088 = arith.constant 1088 : index
    %137 = vector.load %arg10[%c0_70, %c1088] : memref<5x1152xbf16, #tpu.memory_space<vmem>>, vector<5x64xbf16>
    %cst_71 = arith.constant dense<0.000000e+00> : vector<5x5xf32>
    %138 = tpu.matmul %135, %136, %cst_71 {dimension_numbers = #tpu.dot_dimension_numbers<[1], [1], [0], [0], [0, 0, 1, 0], [], []>} : vector<5x64xbf16>, vector<5x64xbf16>, vector<5x5xf32> -> vector<5x5xf32>
    %cst_72 = arith.constant 1.250000e-01 : f32
    %139 = vector.broadcast %cst_72 : f32 to vector<5x5xf32>
    %140 = arith.mulf %138, %139 : vector<5x5xf32>
    %cst_73 = arith.constant dense<0xFF800000> : vector<5xf32>
    %141 = vector.multi_reduction <maximumf>, %140, %cst_73 [1] : vector<5x5xf32> to vector<5xf32>
    %142 = vector.shape_cast %141 : vector<5xf32> to vector<5x1xf32>
    %143 = vector.broadcast %142 : vector<5x1xf32> to vector<5x5xf32>
    %144 = arith.subf %140, %143 : vector<5x5xf32>
    %145 = math.exp %144 : vector<5x5xf32>
    %cst_74 = arith.constant dense<0.000000e+00> : vector<5xf32>
    %146 = vector.multi_reduction <add>, %145, %cst_74 [1] : vector<5x5xf32> to vector<5xf32>
    %147 = vector.shape_cast %146 : vector<5xf32> to vector<5x1xf32>
    %148 = tpu.reciprocal %147 {approx = true} : vector<5x1xf32> -> vector<5x1xf32>
    %149 = vector.broadcast %148 : vector<5x1xf32> to vector<5x5xf32>
    %150 = arith.mulf %145, %149 : vector<5x5xf32>
    %151 = arith.truncf %150 : vector<5x5xf32> to vector<5x5xbf16>
    %cst_75 = arith.constant dense<0.000000e+00> : vector<5x64xf32>
    %152 = tpu.matmul %151, %137, %cst_75 {dimension_numbers = #tpu.dot_dimension_numbers<[1], [0], [0], [1], [0, 0, 1, 1], [], []>} : vector<5x5xbf16>, vector<5x64xbf16>, vector<5x64xf32> -> vector<5x64xf32>
    %153 = arith.truncf %152 : vector<5x64xf32> to vector<5x64xbf16>
    %c0_76 = arith.constant 0 : index
    %c320_77 = arith.constant 320 : index
    %154 = vector.load %arg11[%c0_76, %c320_77] : memref<5x384xbf16, #tpu.memory_space<vmem>>, vector<5x64xbf16>
    tpu.vector_store %arg11[%c0_76, %c320_77], %153 {strides = array<i32>} : memref<5x384xbf16, #tpu.memory_space<vmem>>, vector<5x64xbf16>,
    %c0_78 = arith.constant 0 : index
    %c0_79 = arith.constant 0 : index
    %155 = vector.load %arg11[%c0_78, %c0_79] : memref<5x384xbf16, #tpu.memory_space<vmem>>, vector<5x384xbf16>
    %c0_80 = arith.constant 0 : index
    %c0_81 = arith.constant 0 : index
    %156 = vector.load %arg6[%c0_80, %c0_81] : memref<384x384xbf16, #tpu.memory_space<vmem>>, vector<384x384xbf16>
    %cst_82 = arith.constant dense<0.000000e+00> : vector<5x384xf32>
    %157 = tpu.matmul %155, %156, %cst_82 {dimension_numbers = #tpu.dot_dimension_numbers<[1], [0], [0], [1], [0, 0, 1, 1], [], []>} : vector<5x384xbf16>, vector<384x384xbf16>, vector<5x384xf32> -> vector<5x384xf32>
    %c0_83 = arith.constant 0 : index
    %c0_84 = arith.constant 0 : index
    %158 = vector.load %arg7[%c0_83, %c0_84] : memref<1x384xf32, #tpu.memory_space<vmem>>, vector<1x384xf32>
    %159 = vector.broadcast %158 : vector<1x384xf32> to vector<5x384xf32>
    %160 = arith.addf %157, %159 : vector<5x384xf32>
    %c0_85 = arith.constant 0 : index
    %c0_86 = arith.constant 0 : index
    %161 = vector.load %arg8[%c0_85, %c0_86] : memref<1x384xf32, #tpu.memory_space<vmem>>, vector<1x384xf32>
    %162 = vector.broadcast %161 : vector<1x384xf32> to vector<5x384xf32>
    %163 = arith.mulf %160, %162 : vector<5x384xf32>
    %164 = arith.addf %2, %163 : vector<5x384xf32>
    %165 = arith.truncf %164 : vector<5x384xf32> to vector<5x384xbf16>
    %c0_87 = arith.constant 0 : index
    %c0_88 = arith.constant 0 : index
    %c0_89 = arith.constant 0 : index
    %166 = vector.load %arg9[%c0_87, %c0_88, %c0_89] : memref<1x5x384xbf16, #tpu.memory_space<vmem>>, vector<1x5x384xbf16>
    %167 = vector.shape_cast %166 : vector<1x5x384xbf16> to vector<5x384xbf16>
    %168 = vector.shape_cast %165 : vector<5x384xbf16> to vector<1x5x384xbf16>
    tpu.vector_store %arg9[%c0_87, %c0_88, %c0_89], %168 {strides = array<i32>} : memref<1x5x384xbf16, #tpu.memory_space<vmem>>, vector<1x5x384xbf16>,
    return
  }
  func.func @transform_0(%arg0: i32) -> (i32, i32, i32) {
    %c0_i32 = arith.constant 0 : i32
    %c0_i32_0 = arith.constant 0 : i32
    %c0_i32_1 = arith.constant 0 : i32
    return %arg0, %c0_i32, %c0_i32_0 : i32, i32, i32
  }
  func.func @transform_1(%arg0: i32) -> (i32, i32) {
    %c0_i32 = arith.constant 0 : i32
    %c0_i32_0 = arith.constant 0 : i32
    %c0_i32_1 = arith.constant 0 : i32
    return %c0_i32, %c0_i32_0 : i32, i32
  }
  func.func @transform_2(%arg0: i32) -> (i32, i32) {
    %c0_i32 = arith.constant 0 : i32
    %c0_i32_0 = arith.constant 0 : i32
    %c0_i32_1 = arith.constant 0 : i32
    return %c0_i32, %c0_i32_0 : i32, i32
  }
  func.func @transform_3(%arg0: i32) -> (i32, i32) {
    %c0_i32 = arith.constant 0 : i32
    %c0_i32_0 = arith.constant 0 : i32
    %c0_i32_1 = arith.constant 0 : i32
    return %c0_i32, %c0_i32_0 : i32, i32
  }
  func.func @transform_4(%arg0: i32) -> (i32, i32) {
    %c0_i32 = arith.constant 0 : i32
    %c0_i32_0 = arith.constant 0 : i32
    %c0_i32_1 = arith.constant 0 : i32
    return %c0_i32, %c0_i32_0 : i32, i32
  }
  func.func @transform_5(%arg0: i32) -> (i32, i32) {
    %c0_i32 = arith.constant 0 : i32
    %c0_i32_0 = arith.constant 0 : i32
    %c0_i32_1 = arith.constant 0 : i32
    return %c0_i32, %c0_i32_0 : i32, i32
  }
  func.func @transform_6(%arg0: i32) -> (i32, i32) {
    %c0_i32 = arith.constant 0 : i32
    %c0_i32_0 = arith.constant 0 : i32
    %c0_i32_1 = arith.constant 0 : i32
    return %c0_i32, %c0_i32_0 : i32, i32
  }
  func.func @transform_7(%arg0: i32) -> (i32, i32) {
    %c0_i32 = arith.constant 0 : i32
    %c0_i32_0 = arith.constant 0 : i32
    %c0_i32_1 = arith.constant 0 : i32
    return %c0_i32, %c0_i32_0 : i32, i32
  }
  func.func @transform_8(%arg0: i32) -> (i32, i32, i32) {
    %c0_i32 = arith.constant 0 : i32
    %c0_i32_0 = arith.constant 0 : i32
    %c0_i32_1 = arith.constant 0 : i32
    return %arg0, %c0_i32, %c0_i32_0 : i32, i32, i32
  }
}

</mosaic_0001>

<llo_original>
// kernel: brain_tumor_classifier.26
$region0: #{brain_tumor_classifier.26}
  #allocation0 [shape = 'u32[]', space=smem, size = 0x4, offset = 0x4, fixed_abs, tag = 'smem constant byte address 0x4 - core index']
  #allocation1 [shape = 'u32[72,128]{1,0:T(1,128)}', space=vmem, size = 0x9000, scoped, tag = 'internal scratch']
  %s0 = inlined_call_operand.vmem [shape: bf16[8,640], index: 0, kind: input, shape index: {}]
  %s1 = inlined_call_operand.hbm [shape: bf16[640,384], index: 1, kind: input, shape index: {}]
  %s2 = inlined_call_operand.vmem [shape: f32[1,384], index: 2, kind: input, shape index: {}]
  %s3 = inlined_call_operand.vmem [shape: bf16[8,384], index: 3, kind: output, shape index: {}]
  %s4 = sld [smem:[#allocation0]]
  $region26: #{brain_tumor_classifier.26} parent=0
    _
  %s6 = ssub.s32 1, %s4
  %s7 = scalar_select 0, %s6, %s4
  $region1: #{brain_tumor_classifier.26} parent=0
    #allocation2 [shape = 'u8[491520]{0}', space=vmem, size = 0x78000, scoped, tag = 'input window, operand 1, single buffered']
    #allocation3 [shape = 's32[1]{0}', space=sflag, size = 0x4, scoped, tag = 'scoped memory for brain_tumor_classifier.26']
    %8 = vsyncpa [#allocation3], 0
    // Predicated region
    $region2: #{brain_tumor_classifier.26} parent=1 // pred_check
      _
    $region3: #{brain_tumor_classifier.26} parent=1 // pred_check_branch
      %10 = sbr.rel (0) target = $region5
    $region4: #{brain_tumor_classifier.26} parent=1 // pred_region
      _
    $region5: #{brain_tumor_classifier.26} parent=1 // pred_fallthru
      _
    // Predicated region
    $region6: #{brain_tumor_classifier.26} parent=1 // pred_check
      _
    $region7: #{brain_tumor_classifier.26} parent=1 // pred_check_branch
      %12 = sbr.rel (0) target = $region9
    $region8: #{brain_tumor_classifier.26} parent=1 // pred_region
      %14 = vsyncadd [#allocation3], 0
      %s15 = sshll.u32 %s1, 4
      %s16 = int_to_ptr.hbm [resolvable:$true] %s15
      %s17 = sshll.u32 [#allocation2], 4
      %s18 = int_to_ptr.vmem [resolvable:$true] %s17
      %23 = dma.hbm_to_vmem [thread:$0]  %s16, 15360, %s18, [#allocation3], 192, 192, 12
    $region9: #{brain_tumor_classifier.26} parent=1 // pred_fallthru
      _
    // Predicated region
    $region10: #{brain_tumor_classifier.26} parent=1 // pred_check
      _
    $region11: #{brain_tumor_classifier.26} parent=1 // pred_check_branch
      %25 = sbr.rel (0) target = $region13
    $region12: #{brain_tumor_classifier.26} parent=1 // pred_region
      _
    $region13: #{brain_tumor_classifier.26} parent=1 // pred_fallthru
      _
    // Predicated region
    $region14: #{brain_tumor_classifier.26} parent=1 // pred_check
      _
    $region15: #{brain_tumor_classifier.26} parent=1 // pred_check_branch
      %27 = sbr.rel (0) target = $region17
    $region16: #{brain_tumor_classifier.26} parent=1 // pred_region
      %29 = dma.done [#allocation3], 15360
    $region17: #{brain_tumor_classifier.26} parent=1 // pred_fallthru
      _
    %v30 = vld [vmem:[%s0] sm:$0xff]
    %v31 = vld [vmem:[%s0 + $0x8] sm:$0xff]
    %v32 = vld [vmem:[%s0 + $0x10] sm:$0xf]
    %v33 = vld [vmem:[#allocation2] sm:$0xff]
    %v34 = vld [vmem:[#allocation2 + $0x8] sm:$0xf]
    %v35 = vld [vmem:[#allocation2 + $0xc] sm:$0xff]
    %v36 = vld [vmem:[#allocation2 + $0x14] sm:$0xf]
    %v37 = vld [vmem:[#allocation2 + $0x18] sm:$0xff]
    %v38 = vld [vmem:[#allocation2 + $0x20] sm:$0xf]
    %v39 = vld [vmem:[#allocation2 + $0x24] sm:$0xff]
    %v40 = vld [vmem:[#allocation2 + $0x2c] sm:$0xf]
    %v41 = vld [vmem:[#allocation2 + $0x30] sm:$0xff]
    %v42 = vld [vmem:[#allocation2 + $0x38] sm:$0xf]
    %v43 = vld [vmem:[#allocation2 + $0x3c] sm:$0xff]
    %v44 = vld [vmem:[#allocation2 + $0x44] sm:$0xf]
    %v45 = vld [vmem:[#allocation2 + $0x48] sm:$0xff]
    %v46 = vld [vmem:[#allocation2 + $0x50] sm:$0xf]
    %v47 = vld [vmem:[#allocation2 + $0x54] sm:$0xff]
    %v48 = vld [vmem:[#allocation2 + $0x5c] sm:$0xf]
    %v49 = vld [vmem:[#allocation2 + $0x60] sm:$0xff]
    %v50 = vld [vmem:[#allocation2 + $0x68] sm:$0xf]
    %v51 = vld [vmem:[#allocation2 + $0x6c] sm:$0xff]
    %v52 = vld [vmem:[#allocation2 + $0x74] sm:$0xf]
    %v53 = vld [vmem:[#allocation2 + $0x78] sm:$0xff]
    %v54 = vld [vmem:[#allocation2 + $0x80] sm:$0xf]
    %v55 = vld [vmem:[#allocation2 + $0x84] sm:$0xff]
    %v56 = vld [vmem:[#allocation2 + $0x8c] sm:$0xf]
    %v57 = vld [vmem:[#allocation2 + $0x90] sm:$0xff]
    %v58 = vld [vmem:[#allocation2 + $0x98] sm:$0xf]
    %v59 = vld [vmem:[#allocation2 + $0x9c] sm:$0xff]
    %v60 = vld [vmem:[#allocation2 + $0xa4] sm:$0xf]
    %v61 = vld [vmem:[#allocation2 + $0xa8] sm:$0xff]
    %v62 = vld [vmem:[#allocation2 + $0xb0] sm:$0xf]
    %v63 = vld [vmem:[#allocation2 + $0xb4] sm:$0xff]
    %v64 = vld [vmem:[#allocation2 + $0xbc] sm:$0xf]
    %v65 = vld [vmem:[#allocation2 + $0xc0] sm:$0xff]
    %v66 = vld [vmem:[#allocation2 + $0xc8] sm:$0xf]
    %v67 = vld [vmem:[#allocation2 + $0xcc] sm:$0xff]
    %v68 = vld [vmem:[#allocation2 + $0xd4] sm:$0xf]
    %v69 = vld [vmem:[#allocation2 + $0xd8] sm:$0xff]
    %v70 = vld [vmem:[#allocation2 + $0xe0] sm:$0xf]
    %v71 = vld [vmem:[#allocation2 + $0xe4] sm:$0xff]
    %v72 = vld [vmem:[#allocation2 + $0xec] sm:$0xf]
    %v73 = vld [vmem:[#allocation2 + $0xf0] sm:$0xff]
    %v74 = vld [vmem:[#allocation2 + $0xf8] sm:$0xf]
    %v75 = vld [vmem:[#allocation2 + $0xfc] sm:$0xff]
    %v76 = vld [vmem:[#allocation2 + $0x104] sm:$0xf]
    %v77 = vld [vmem:[#allocation2 + $0x108] sm:$0xff]
    %v78 = vld [vmem:[#allocation2 + $0x110] sm:$0xf]
    %v79 = vld [vmem:[#allocation2 + $0x114] sm:$0xff]
    %v80 = vld [vmem:[#allocation2 + $0x11c] sm:$0xf]
    %v81 = vld [vmem:[#allocation2 + $0x120] sm:$0xff]
    %v82 = vld [vmem:[#allocation2 + $0x128] sm:$0xf]
    %v83 = vld [vmem:[#allocation2 + $0x12c] sm:$0xff]
    %v84 = vld [vmem:[#allocation2 + $0x134] sm:$0xf]
    %v85 = vld [vmem:[#allocation2 + $0x138] sm:$0xff]
    %v86 = vld [vmem:[#allocation2 + $0x140] sm:$0xf]
    %v87 = vld [vmem:[#allocation2 + $0x144] sm:$0xff]
    %v88 = vld [vmem:[#allocation2 + $0x14c] sm:$0xf]
    %v89 = vld [vmem:[#allocation2 + $0x150] sm:$0xff]
    %v90 = vld [vmem:[#allocation2 + $0x158] sm:$0xf]
    %v91 = vld [vmem:[#allocation2 + $0x15c] sm:$0xff]
    %v92 = vld [vmem:[#allocation2 + $0x164] sm:$0xf]
    %v93 = vld [vmem:[#allocation2 + $0x168] sm:$0xff]
    %v94 = vld [vmem:[#allocation2 + $0x170] sm:$0xf]
    %v95 = vld [vmem:[#allocation2 + $0x174] sm:$0xff]
    %v96 = vld [vmem:[#allocation2 + $0x17c] sm:$0xf]
    %v97 = vld [vmem:[#allocation2 + $0x180] sm:$0xff]
    %v98 = vld [vmem:[#allocation2 + $0x188] sm:$0xf]
    %v99 = vld [vmem:[#allocation2 + $0x18c] sm:$0xff]
    %v100 = vld [vmem:[#allocation2 + $0x194] sm:$0xf]
    %v101 = vld [vmem:[#allocation2 + $0x198] sm:$0xff]
    %v102 = vld [vmem:[#allocation2 + $0x1a0] sm:$0xf]
    %v103 = vld [vmem:[#allocation2 + $0x1a4] sm:$0xff]
    %v104 = vld [vmem:[#allocation2 + $0x1ac] sm:$0xf]
    %v105 = vld [vmem:[#allocation2 + $0x1b0] sm:$0xff]
    %v106 = vld [vmem:[#allocation2 + $0x1b8] sm:$0xf]
    %v107 = vld [vmem:[#allocation2 + $0x1bc] sm:$0xff]
    %v108 = vld [vmem:[#allocation2 + $0x1c4] sm:$0xf]
    %v109 = vld [vmem:[#allocation2 + $0x1c8] sm:$0xff]
    %v110 = vld [vmem:[#allocation2 + $0x1d0] sm:$0xf]
    %v111 = vld [vmem:[#allocation2 + $0x1d4] sm:$0xff]
    %v112 = vld [vmem:[#allocation2 + $0x1dc] sm:$0xf]
    %v113 = vld [vmem:[#allocation2 + $0x1e0] sm:$0xff]
    %v114 = vld [vmem:[#allocation2 + $0x1e8] sm:$0xf]
    %v115 = vld [vmem:[#allocation2 + $0x1ec] sm:$0xff]
    %v116 = vld [vmem:[#allocation2 + $0x1f4] sm:$0xf]
    %v117 = vld [vmem:[#allocation2 + $0x1f8] sm:$0xff]
    %v118 = vld [vmem:[#allocation2 + $0x200] sm:$0xf]
    %v119 = vld [vmem:[#allocation2 + $0x204] sm:$0xff]
    %v120 = vld [vmem:[#allocation2 + $0x20c] sm:$0xf]
    %v121 = vld [vmem:[#allocation2 + $0x210] sm:$0xff]
    %v122 = vld [vmem:[#allocation2 + $0x218] sm:$0xf]
    %v123 = vld [vmem:[#allocation2 + $0x21c] sm:$0xff]
    %v124 = vld [vmem:[#allocation2 + $0x224] sm:$0xf]
    %v125 = vld [vmem:[#allocation2 + $0x228] sm:$0xff]
    %v126 = vld [vmem:[#allocation2 + $0x230] sm:$0xf]
    %v127 = vld [vmem:[#allocation2 + $0x234] sm:$0xff]
    %v128 = vld [vmem:[#allocation2 + $0x23c] sm:$0xf]
    %v129 = vld [vmem:[#allocation2 + $0x240] sm:$0xff]
    %v130 = vld [vmem:[#allocation2 + $0x248] sm:$0xf]
    %v131 = vld [vmem:[#allocation2 + $0x24c] sm:$0xff]
    %v132 = vld [vmem:[#allocation2 + $0x254] sm:$0xf]
    %v133 = vld [vmem:[#allocation2 + $0x258] sm:$0xff]
    %v134 = vld [vmem:[#allocation2 + $0x260] sm:$0xf]
    %v135 = vld [vmem:[#allocation2 + $0x264] sm:$0xff]
    %v136 = vld [vmem:[#allocation2 + $0x26c] sm:$0xf]
    %v137 = vld [vmem:[#allocation2 + $0x270] sm:$0xff]
    %v138 = vld [vmem:[#allocation2 + $0x278] sm:$0xf]
    %v139 = vld [vmem:[#allocation2 + $0x27c] sm:$0xff]
    %v140 = vld [vmem:[#allocation2 + $0x284] sm:$0xf]
    %v141 = vld [vmem:[#allocation2 + $0x288] sm:$0xff]
    %v142 = vld [vmem:[#allocation2 + $0x290] sm:$0xf]
    %v143 = vld [vmem:[#allocation2 + $0x294] sm:$0xff]
    %v144 = vld [vmem:[#allocation2 + $0x29c] sm:$0xf]
    %v145 = vld [vmem:[#allocation2 + $0x2a0] sm:$0xff]
    %v146 = vld [vmem:[#allocation2 + $0x2a8] sm:$0xf]
    %v147 = vld [vmem:[#allocation2 + $0x2ac] sm:$0xff]
    %v148 = vld [vmem:[#allocation2 + $0x2b4] sm:$0xf]
    %v149 = vld [vmem:[#allocation2 + $0x2b8] sm:$0xff]
    %v150 = vld [vmem:[#allocation2 + $0x2c0] sm:$0xf]
    %v151 = vld [vmem:[#allocation2 + $0x2c4] sm:$0xff]
    %v152 = vld [vmem:[#allocation2 + $0x2cc] sm:$0xf]
    %v153 = vld [vmem:[#allocation2 + $0x2d0] sm:$0xff]
    %v154 = vld [vmem:[#allocation2 + $0x2d8] sm:$0xf]
    %v155 = vld [vmem:[#allocation2 + $0x2dc] sm:$0xff]
    %v156 = vld [vmem:[#allocation2 + $0x2e4] sm:$0xf]
    %v157 = vld [vmem:[#allocation2 + $0x2e8] sm:$0xff]
    %v158 = vld [vmem:[#allocation2 + $0x2f0] sm:$0xf]
    %v159 = vld [vmem:[#allocation2 + $0x2f4] sm:$0xff]
    %v160 = vld [vmem:[#allocation2 + $0x2fc] sm:$0xf]
    %v161 = vld [vmem:[#allocation2 + $0x300] sm:$0xff]
    %v162 = vld [vmem:[#allocation2 + $0x308] sm:$0xf]
    %v163 = vld [vmem:[#allocation2 + $0x30c] sm:$0xff]
    %v164 = vld [vmem:[#allocation2 + $0x314] sm:$0xf]
    %v165 = vld [vmem:[#allocation2 + $0x318] sm:$0xff]
    %v166 = vld [vmem:[#allocation2 + $0x320] sm:$0xf]
    %v167 = vld [vmem:[#allocation2 + $0x324] sm:$0xff]
    %v168 = vld [vmem:[#allocation2 + $0x32c] sm:$0xf]
    %v169 = vld [vmem:[#allocation2 + $0x330] sm:$0xff]
    %v170 = vld [vmem:[#allocation2 + $0x338] sm:$0xf]
    %v171 = vld [vmem:[#allocation2 + $0x33c] sm:$0xff]
    %v172 = vld [vmem:[#allocation2 + $0x344] sm:$0xf]
    %v173 = vld [vmem:[#allocation2 + $0x348] sm:$0xff]
    %v174 = vld [vmem:[#allocation2 + $0x350] sm:$0xf]
    %v175 = vld [vmem:[#allocation2 + $0x354] sm:$0xff]
    %v176 = vld [vmem:[#allocation2 + $0x35c] sm:$0xf]
    %v177 = vld [vmem:[#allocation2 + $0x360] sm:$0xff]
    %v178 = vld [vmem:[#allocation2 + $0x368] sm:$0xf]
    %v179 = vld [vmem:[#allocation2 + $0x36c] sm:$0xff]
    %v180 = vld [vmem:[#allocation2 + $0x374] sm:$0xf]
    %v181 = vld [vmem:[#allocation2 + $0x378] sm:$0xff]
    %v182 = vld [vmem:[#allocation2 + $0x380] sm:$0xf]
    %v183 = vld [vmem:[#allocation2 + $0x384] sm:$0xff]
    %v184 = vld [vmem:[#allocation2 + $0x38c] sm:$0xf]
    %v185 = vld [vmem:[#allocation2 + $0x390] sm:$0xff]
    %v186 = vld [vmem:[#allocation2 + $0x398] sm:$0xf]
    %v187 = vld [vmem:[#allocation2 + $0x39c] sm:$0xff]
    %v188 = vld [vmem:[#allocation2 + $0x3a4] sm:$0xf]
    %v189 = vld [vmem:[#allocation2 + $0x3a8] sm:$0xff]
    %v190 = vld [vmem:[#allocation2 + $0x3b0] sm:$0xf]
    %v191 = vld [vmem:[#allocation2 + $0x3b4] sm:$0xff]
    %v192 = vld [vmem:[#allocation2 + $0x3bc] sm:$0xf]
    %v193 = vld [vmem:[%s2] sm:$0x7]
    %v195 = vperm.slane %v193, 0
    %v196 = vperm.slane %v193, 1
    %v197 = vperm.slane %v193, 2
    %v204 = vunpack.c.l.b16 %v30
    %v205 = vunpack.c.h.b16 %v30
    %v206 = vunpack.c.l.b16 %v31
    %v207 = vunpack.c.h.b16 %v31
    %v208 = vunpack.c.l.b16 %v32
    %v209 = vpack.c.b16 %v204, %v204
    %v210 = vpack.c.b16 %v205, %v205
    %v211 = vpack.c.b16 %v206, %v206
    %v212 = vpack.c.b16 %v207, %v207
    %v213 = vpack.c.b16 %v208, %v208
    %v379 = vunpack.c.l.b16 %v33
    %v380 = vunpack.c.h.b16 %v33
    %v381 = vunpack.c.l.b16 %v34
    %v382 = vunpack.c.l.b16 %v35
    %v383 = vunpack.c.h.b16 %v35
    %v384 = vunpack.c.l.b16 %v36
    %v385 = vunpack.c.l.b16 %v37
    %v386 = vunpack.c.h.b16 %v37
    %v387 = vunpack.c.l.b16 %v38
    %v388 = vunpack.c.l.b16 %v39
    %v389 = vunpack.c.h.b16 %v39
    %v390 = vunpack.c.l.b16 %v40
    %v391 = vunpack.c.l.b16 %v41
    %v392 = vunpack.c.h.b16 %v41
    %v393 = vunpack.c.l.b16 %v42
    %v394 = vunpack.c.l.b16 %v43
    %v395 = vunpack.c.h.b16 %v43
    %v396 = vunpack.c.l.b16 %v44
    %v397 = vunpack.c.l.b16 %v45
    %v398 = vunpack.c.h.b16 %v45
    %v399 = vunpack.c.l.b16 %v46
    %v400 = vunpack.c.l.b16 %v47
    %v401 = vunpack.c.h.b16 %v47
    %v402 = vunpack.c.l.b16 %v48
    %v403 = vunpack.c.l.b16 %v49
    %v404 = vunpack.c.h.b16 %v49
    %v405 = vunpack.c.l.b16 %v50
    %v406 = vunpack.c.l.b16 %v51
    %v407 = vunpack.c.h.b16 %v51
    %v408 = vunpack.c.l.b16 %v52
    %v409 = vunpack.c.l.b16 %v53
    %v410 = vunpack.c.h.b16 %v53
    %v411 = vunpack.c.l.b16 %v54
    %v412 = vunpack.c.l.b16 %v55
    %v413 = vunpack.c.h.b16 %v55
    %v414 = vunpack.c.l.b16 %v56
    %v415 = vunpack.c.l.b16 %v57
    %v416 = vunpack.c.h.b16 %v57
    %v417 = vunpack.c.l.b16 %v58
    %v418 = vunpack.c.l.b16 %v59
    %v419 = vunpack.c.h.b16 %v59
    %v420 = vunpack.c.l.b16 %v60
    %v421 = vunpack.c.l.b16 %v61
    %v422 = vunpack.c.h.b16 %v61
    %v423 = vunpack.c.l.b16 %v62
    %v424 = vunpack.c.l.b16 %v63
    %v425 = vunpack.c.h.b16 %v63
    %v426 = vunpack.c.l.b16 %v64
    %v427 = vunpack.c.l.b16 %v65
    %v428 = vunpack.c.h.b16 %v65
    %v429 = vunpack.c.l.b16 %v66
    %v430 = vunpack.c.l.b16 %v67
    %v431 = vunpack.c.h.b16 %v67
    %v432 = vunpack.c.l.b16 %v68
    %v433 = vunpack.c.l.b16 %v69
    %v434 = vunpack.c.h.b16 %v69
    %v435 = vunpack.c.l.b16 %v70
    %v436 = vunpack.c.l.b16 %v71
    %v437 = vunpack.c.h.b16 %v71
    %v438 = vunpack.c.l.b16 %v72
    %v439 = vunpack.c.l.b16 %v73
    %v440 = vunpack.c.h.b16 %v73
    %v441 = vunpack.c.l.b16 %v74
    %v442 = vunpack.c.l.b16 %v75
    %v443 = vunpack.c.h.b16 %v75
    %v444 = vunpack.c.l.b16 %v76
    %v445 = vunpack.c.l.b16 %v77
    %v446 = vunpack.c.h.b16 %v77
    %v447 = vunpack.c.l.b16 %v78
    %v448 = vunpack.c.l.b16 %v79
    %v449 = vunpack.c.h.b16 %v79
    %v450 = vunpack.c.l.b16 %v80
    %v451 = vunpack.c.l.b16 %v81
    %v452 = vunpack.c.h.b16 %v81
    %v453 = vunpack.c.l.b16 %v82
    %v454 = vunpack.c.l.b16 %v83
    %v455 = vunpack.c.h.b16 %v83
    %v456 = vunpack.c.l.b16 %v84
    %v457 = vunpack.c.l.b16 %v85
    %v458 = vunpack.c.h.b16 %v85
    %v459 = vunpack.c.l.b16 %v86
    %v460 = vunpack.c.l.b16 %v87
    %v461 = vunpack.c.h.b16 %v87
    %v462 = vunpack.c.l.b16 %v88
    %v463 = vunpack.c.l.b16 %v89
    %v464 = vunpack.c.h.b16 %v89
    %v465 = vunpack.c.l.b16 %v90
    %v466 = vunpack.c.l.b16 %v91
    %v467 = vunpack.c.h.b16 %v91
    %v468 = vunpack.c.l.b16 %v92
    %v469 = vunpack.c.l.b16 %v93
    %v470 = vunpack.c.h.b16 %v93
    %v471 = vunpack.c.l.b16 %v94
    %v472 = vunpack.c.l.b16 %v95
    %v473 = vunpack.c.h.b16 %v95
    %v474 = vunpack.c.l.b16 %v96
    %v475 = vunpack.c.l.b16 %v97
    %v476 = vunpack.c.h.b16 %v97
    %v477 = vunpack.c.l.b16 %v98
    %v478 = vunpack.c.l.b16 %v99
    %v479 = vunpack.c.h.b16 %v99
    %v480 = vunpack.c.l.b16 %v100
    %v481 = vunpack.c.l.b16 %v101
    %v482 = vunpack.c.h.b16 %v101
    %v483 = vunpack.c.l.b16 %v102
    %v484 = vunpack.c.l.b16 %v103
    %v485 = vunpack.c.h.b16 %v103
    %v486 = vunpack.c.l.b16 %v104
    %v487 = vunpack.c.l.b16 %v105
    %v488 = vunpack.c.h.b16 %v105
    %v489 = vunpack.c.l.b16 %v106
    %v490 = vunpack.c.l.b16 %v107
    %v491 = vunpack.c.h.b16 %v107
    %v492 = vunpack.c.l.b16 %v108
    %v493 = vunpack.c.l.b16 %v109
    %v494 = vunpack.c.h.b16 %v109
    %v495 = vunpack.c.l.b16 %v110
    %v496 = vunpack.c.l.b16 %v111
    %v497 = vunpack.c.h.b16 %v111
    %v498 = vunpack.c.l.b16 %v112
    %v499 = vunpack.c.l.b16 %v113
    %v500 = vunpack.c.h.b16 %v113
    %v501 = vunpack.c.l.b16 %v114
    %v502 = vunpack.c.l.b16 %v115
    %v503 = vunpack.c.h.b16 %v115
    %v504 = vunpack.c.l.b16 %v116
    %v505 = vunpack.c.l.b16 %v117
    %v506 = vunpack.c.h.b16 %v117
    %v507 = vunpack.c.l.b16 %v118
    %v508 = vunpack.c.l.b16 %v119
    %v509 = vunpack.c.h.b16 %v119
    %v510 = vunpack.c.l.b16 %v120
    %v511 = vunpack.c.l.b16 %v121
    %v512 = vunpack.c.h.b16 %v121
    %v513 = vunpack.c.l.b16 %v122
    %v514 = vunpack.c.l.b16 %v123
    %v515 = vunpack.c.h.b16 %v123
    %v516 = vunpack.c.l.b16 %v124
    %v517 = vunpack.c.l.b16 %v125
    %v518 = vunpack.c.h.b16 %v125
    %v519 = vunpack.c.l.b16 %v126
    %v520 = vunpack.c.l.b16 %v127
    %v521 = vunpack.c.h.b16 %v127
    %v522 = vunpack.c.l.b16 %v128
    %v523 = vunpack.c.l.b16 %v129
    %v524 = vunpack.c.h.b16 %v129
    %v525 = vunpack.c.l.b16 %v130
    %v526 = vunpack.c.l.b16 %v131
    %v527 = vunpack.c.h.b16 %v131
    %v528 = vunpack.c.l.b16 %v132
    %v529 = vunpack.c.l.b16 %v133
    %v530 = vunpack.c.h.b16 %v133
    %v531 = vunpack.c.l.b16 %v134
    %v532 = vunpack.c.l.b16 %v135
    %v533 = vunpack.c.h.b16 %v135
    %v534 = vunpack.c.l.b16 %v136
    %v535 = vunpack.c.l.b16 %v137
    %v536 = vunpack.c.h.b16 %v137
    %v537 = vunpack.c.l.b16 %v138
    %v538 = vunpack.c.l.b16 %v139
    %v539 = vunpack.c.h.b16 %v139
    %v540 = vunpack.c.l.b16 %v140
    %v541 = vunpack.c.l.b16 %v141
    %v542 = vunpack.c.h.b16 %v141
    %v543 = vunpack.c.l.b16 %v142
    %v544 = vunpack.c.l.b16 %v143
    %v545 = vunpack.c.h.b16 %v143
    %v546 = vunpack.c.l.b16 %v144
    %v547 = vunpack.c.l.b16 %v145
    %v548 = vunpack.c.h.b16 %v145
    %v549 = vunpack.c.l.b16 %v146
    %v550 = vunpack.c.l.b16 %v147
    %v551 = vunpack.c.h.b16 %v147
    %v552 = vunpack.c.l.b16 %v148
    %v553 = vunpack.c.l.b16 %v149
    %v554 = vunpack.c.h.b16 %v149
    %v555 = vunpack.c.l.b16 %v150
    %v556 = vunpack.c.l.b16 %v151
    %v557 = vunpack.c.h.b16 %v151
    %v558 = vunpack.c.l.b16 %v152
    %v559 = vunpack.c.l.b16 %v153
    %v560 = vunpack.c.h.b16 %v153
    %v561 = vunpack.c.l.b16 %v154
    %v562 = vunpack.c.l.b16 %v155
    %v563 = vunpack.c.h.b16 %v155
    %v564 = vunpack.c.l.b16 %v156
    %v565 = vunpack.c.l.b16 %v157
    %v566 = vunpack.c.h.b16 %v157
    %v567 = vunpack.c.l.b16 %v158
    %v568 = vunpack.c.l.b16 %v159
    %v569 = vunpack.c.h.b16 %v159
    %v570 = vunpack.c.l.b16 %v160
    %v571 = vunpack.c.l.b16 %v161
    %v572 = vunpack.c.h.b16 %v161
    %v573 = vunpack.c.l.b16 %v162
    %v574 = vunpack.c.l.b16 %v163
    %v575 = vunpack.c.h.b16 %v163
    %v576 = vunpack.c.l.b16 %v164
    %v577 = vunpack.c.l.b16 %v165
    %v578 = vunpack.c.h.b16 %v165
    %v579 = vunpack.c.l.b16 %v166
    %v580 = vunpack.c.l.b16 %v167
    %v581 = vunpack.c.h.b16 %v167
    %v582 = vunpack.c.l.b16 %v168
    %v583 = vunpack.c.l.b16 %v169
    %v584 = vunpack.c.h.b16 %v169
    %v585 = vunpack.c.l.b16 %v170
    %v586 = vunpack.c.l.b16 %v171
    %v587 = vunpack.c.h.b16 %v171
    %v588 = vunpack.c.l.b16 %v172
    %v589 = vunpack.c.l.b16 %v173
    %v590 = vunpack.c.h.b16 %v173
    %v591 = vunpack.c.l.b16 %v174
    %v592 = vunpack.c.l.b16 %v175
    %v593 = vunpack.c.h.b16 %v175
    %v594 = vunpack.c.l.b16 %v176
    %v595 = vunpack.c.l.b16 %v177
    %v596 = vunpack.c.h.b16 %v177
    %v597 = vunpack.c.l.b16 %v178
    %v598 = vunpack.c.l.b16 %v179
    %v599 = vunpack.c.h.b16 %v179
    %v600 = vunpack.c.l.b16 %v180
    %v601 = vunpack.c.l.b16 %v181
    %v602 = vunpack.c.h.b16 %v181
    %v603 = vunpack.c.l.b16 %v182
    %v604 = vunpack.c.l.b16 %v183
    %v605 = vunpack.c.h.b16 %v183
    %v606 = vunpack.c.l.b16 %v184
    %v607 = vunpack.c.l.b16 %v185
    %v608 = vunpack.c.h.b16 %v185
    %v609 = vunpack.c.l.b16 %v186
    %v610 = vunpack.c.l.b16 %v187
    %v611 = vunpack.c.h.b16 %v187
    %v612 = vunpack.c.l.b16 %v188
    %v613 = vunpack.c.l.b16 %v189
    %v614 = vunpack.c.h.b16 %v189
    %v615 = vunpack.c.l.b16 %v190
    %v616 = vunpack.c.l.b16 %v191
    %v617 = vunpack.c.h.b16 %v191
    %v618 = vunpack.c.l.b16 %v192
    %v619 = vpack.c.b16 %v382, %v379
    %v620 = vpack.c.b16 %v383, %v380
    %v621 = vpack.c.b16 %v384, %v381
    %v622 = vpack.c.b16 %v388, %v385
    %v623 = vpack.c.b16 %v389, %v386
    %v624 = vpack.c.b16 %v390, %v387
    %v625 = vpack.c.b16 %v394, %v391
    %v626 = vpack.c.b16 %v395, %v392
    %v627 = vpack.c.b16 %v396, %v393
    %v628 = vpack.c.b16 %v400, %v397
    %v629 = vpack.c.b16 %v401, %v398
    %v630 = vpack.c.b16 %v402, %v399
    %v631 = vpack.c.b16 %v406, %v403
    %v632 = vpack.c.b16 %v407, %v404
    %v633 = vpack.c.b16 %v408, %v405
    %v634 = vpack.c.b16 %v412, %v409
    %v635 = vpack.c.b16 %v413, %v410
    %v636 = vpack.c.b16 %v414, %v411
    %v637 = vpack.c.b16 %v418, %v415
    %v638 = vpack.c.b16 %v419, %v416
    %v639 = vpack.c.b16 %v420, %v417
    %v640 = vpack.c.b16 %v424, %v421
    %v641 = vpack.c.b16 %v425, %v422
    %v642 = vpack.c.b16 %v426, %v423
    %v643 = vpack.c.b16 %v430, %v427
    %v644 = vpack.c.b16 %v431, %v428
    %v645 = vpack.c.b16 %v432, %v429
    %v646 = vpack.c.b16 %v436, %v433
    %v647 = vpack.c.b16 %v437, %v434
    %v648 = vpack.c.b16 %v438, %v435
    %v649 = vpack.c.b16 %v442, %v439
    %v650 = vpack.c.b16 %v443, %v440
    %v651 = vpack.c.b16 %v444, %v441
    %v652 = vpack.c.b16 %v448, %v445
    %v653 = vpack.c.b16 %v449, %v446
    %v654 = vpack.c.b16 %v450, %v447
    %v655 = vpack.c.b16 %v454, %v451
    %v656 = vpack.c.b16 %v455, %v452
    %v657 = vpack.c.b16 %v456, %v453
    %v658 = vpack.c.b16 %v460, %v457
    %v659 = vpack.c.b16 %v461, %v458
    %v660 = vpack.c.b16 %v462, %v459
    %v661 = vpack.c.b16 %v466, %v463
    %v662 = vpack.c.b16 %v467, %v464
    %v663 = vpack.c.b16 %v468, %v465
    %v664 = vpack.c.b16 %v472, %v469
    %v665 = vpack.c.b16 %v473, %v470
    %v666 = vpack.c.b16 %v474, %v471
    %v667 = vpack.c.b16 %v478, %v475
    %v668 = vpack.c.b16 %v479, %v476
    %v669 = vpack.c.b16 %v480, %v477
    %v670 = vpack.c.b16 %v484, %v481
    %v671 = vpack.c.b16 %v485, %v482
    %v672 = vpack.c.b16 %v486, %v483
    %v673 = vpack.c.b16 %v490, %v487
    %v674 = vpack.c.b16 %v491, %v488
    %v675 = vpack.c.b16 %v492, %v489
    %v676 = vpack.c.b16 %v496, %v493
    %v677 = vpack.c.b16 %v497, %v494
    %v678 = vpack.c.b16 %v498, %v495
    %v679 = vpack.c.b16 %v502, %v499
    %v680 = vpack.c.b16 %v503, %v500
    %v681 = vpack.c.b16 %v504, %v501
    %v682 = vpack.c.b16 %v508, %v505
    %v683 = vpack.c.b16 %v509, %v506
    %v684 = vpack.c.b16 %v510, %v507
    %v685 = vpack.c.b16 %v514, %v511
    %v686 = vpack.c.b16 %v515, %v512
    %v687 = vpack.c.b16 %v516, %v513
    %v688 = vpack.c.b16 %v520, %v517
    %v689 = vpack.c.b16 %v521, %v518
    %v690 = vpack.c.b16 %v522, %v519
    %v691 = vpack.c.b16 %v526, %v523
    %v692 = vpack.c.b16 %v527, %v524
    %v693 = vpack.c.b16 %v528, %v525
    %v694 = vpack.c.b16 %v532, %v529
    %v695 = vpack.c.b16 %v533, %v530
    %v696 = vpack.c.b16 %v534, %v531
    %v697 = vpack.c.b16 %v538, %v535
    %v698 = vpack.c.b16 %v539, %v536
    %v699 = vpack.c.b16 %v540, %v537
    %v700 = vpack.c.b16 %v544, %v541
    %v701 = vpack.c.b16 %v545, %v542
    %v702 = vpack.c.b16 %v546, %v543
    %v703 = vpack.c.b16 %v550, %v547
    %v704 = vpack.c.b16 %v551, %v548
    %v705 = vpack.c.b16 %v552, %v549
    %v706 = vpack.c.b16 %v556, %v553
    %v707 = vpack.c.b16 %v557, %v554
    %v708 = vpack.c.b16 %v558, %v555
    %v709 = vpack.c.b16 %v562, %v559
    %v710 = vpack.c.b16 %v563, %v560
    %v711 = vpack.c.b16 %v564, %v561
    %v712 = vpack.c.b16 %v568, %v565
    %v713 = vpack.c.b16 %v569, %v566
    %v714 = vpack.c.b16 %v570, %v567
    %v715 = vpack.c.b16 %v574, %v571
    %v716 = vpack.c.b16 %v575, %v572
    %v717 = vpack.c.b16 %v576, %v573
    %v718 = vpack.c.b16 %v580, %v577
    %v719 = vpack.c.b16 %v581, %v578
    %v720 = vpack.c.b16 %v582, %v579
    %v721 = vpack.c.b16 %v586, %v583
    %v722 = vpack.c.b16 %v587, %v584
    %v723 = vpack.c.b16 %v588, %v585
    %v724 = vpack.c.b16 %v592, %v589
    %v725 = vpack.c.b16 %v593, %v590
    %v726 = vpack.c.b16 %v594, %v591
    %v727 = vpack.c.b16 %v598, %v595
    %v728 = vpack.c.b16 %v599, %v596
    %v729 = vpack.c.b16 %v600, %v597
    %v730 = vpack.c.b16 %v604, %v601
    %v731 = vpack.c.b16 %v605, %v602
    %v732 = vpack.c.b16 %v606, %v603
    %v733 = vpack.c.b16 %v610, %v607
    %v734 = vpack.c.b16 %v611, %v608
    %v735 = vpack.c.b16 %v612, %v609
    %v736 = vpack.c.b16 %v616, %v613
    %v737 = vpack.c.b16 %v617, %v614
    %v738 = vpack.c.b16 %v618, %v615
    %859 = vmatpush.bf16.msra.mxu0 %v640
    %860 = vmatpush.bf16.msra.mxu0 %v637
    %861 = vmatpush.bf16.msra.mxu0 %v634
    %862 = vmatpush.bf16.msra.mxu0 %v631
    %863 = vmatpush.bf16.msra.mxu0 %v628
    %864 = vmatpush.bf16.msra.mxu0 %v625
    %865 = vmatpush.bf16.msra.mxu0 %v622
    %866 = vmatpush.bf16.msra.mxu0 %v619
    %867 = vmatmul.bf16.gmra.mxu0 %v209
    %v868 = vpop.f32.mrf.mxu0
    %v869 = vadd.f32 %v195, %v868
    %v870 = vpop.f32.mrf.mxu0
    %871 = vdwg.mxu0
    %872 = vmatpush.bf16.msra.mxu0 %v664
    %873 = vmatpush.bf16.msra.mxu0 %v661
    %874 = vmatpush.bf16.msra.mxu0 %v658
    %875 = vmatpush.bf16.msra.mxu0 %v655
    %876 = vmatpush.bf16.msra.mxu0 %v652
    %877 = vmatpush.bf16.msra.mxu0 %v649
    %878 = vmatpush.bf16.msra.mxu0 %v646
    %879 = vmatpush.bf16.msra.mxu0 %v643
    %880 = vmatmul.bf16.gmra.mxu0 %v210
    %v881 = vpop.f32.mrf.mxu0
    %v882 = vadd.f32 %v869, %v881
    %v883 = vpop.f32.mrf.mxu0
    %884 = vdwg.mxu0
    %885 = vmatpush.bf16.msra.mxu0 %v688
    %886 = vmatpush.bf16.msra.mxu0 %v685
    %887 = vmatpush.bf16.msra.mxu0 %v682
    %888 = vmatpush.bf16.msra.mxu0 %v679
    %889 = vmatpush.bf16.msra.mxu0 %v676
    %890 = vmatpush.bf16.msra.mxu0 %v673
    %891 = vmatpush.bf16.msra.mxu0 %v670
    %892 = vmatpush.bf16.msra.mxu0 %v667
    %893 = vmatmul.bf16.gmra.mxu0 %v211
    %v894 = vpop.f32.mrf.mxu0
    %v895 = vadd.f32 %v882, %v894
    %v896 = vpop.f32.mrf.mxu0
    %897 = vdwg.mxu0
    %898 = vmatpush.bf16.msra.mxu0 %v712
    %899 = vmatpush.bf16.msra.mxu0 %v709
    %900 = vmatpush.bf16.msra.mxu0 %v706
    %901 = vmatpush.bf16.msra.mxu0 %v703
    %902 = vmatpush.bf16.msra.mxu0 %v700
    %903 = vmatpush.bf16.msra.mxu0 %v697
    %904 = vmatpush.bf16.msra.mxu0 %v694
    %905 = vmatpush.bf16.msra.mxu0 %v691
    %906 = vmatmul.bf16.gmra.mxu0 %v212
    %v907 = vpop.f32.mrf.mxu0
    %v908 = vadd.f32 %v895, %v907
    %v909 = vpop.f32.mrf.mxu0
    %910 = vdwg.mxu0
    %911 = vmatpush.bf16.msra.mxu0 %v736
    %912 = vmatpush.bf16.msra.mxu0 %v733
    %913 = vmatpush.bf16.msra.mxu0 %v730
    %914 = vmatpush.bf16.msra.mxu0 %v727
    %915 = vmatpush.bf16.msra.mxu0 %v724
    %916 = vmatpush.bf16.msra.mxu0 %v721
    %917 = vmatpush.bf16.msra.mxu0 %v718
    %918 = vmatpush.bf16.msra.mxu0 %v715
    %919 = vmatmul.bf16.gmra.mxu0 %v213
    %v920 = vpop.f32.mrf.mxu0
    %v921 = vadd.f32 %v908, %v920
    %v922 = vpop.f32.mrf.mxu0
    %923 = vdwg.mxu0
    %924 = vmatpush.bf16.msra.mxu0 %v641
    %925 = vmatpush.bf16.msra.mxu0 %v638
    %926 = vmatpush.bf16.msra.mxu0 %v635
    %927 = vmatpush.bf16.msra.mxu0 %v632
    %928 = vmatpush.bf16.msra.mxu0 %v629
    %929 = vmatpush.bf16.msra.mxu0 %v626
    %930 = vmatpush.bf16.msra.mxu0 %v623
    %931 = vmatpush.bf16.msra.mxu0 %v620
    %932 = vmatmul.bf16.gmra.mxu0 %v209
    %v933 = vpop.f32.mrf.mxu0
    %v934 = vadd.f32 %v196, %v933
    %v935 = vpop.f32.mrf.mxu0
    %936 = vdwg.mxu0
    %937 = vmatpush.bf16.msra.mxu0 %v665
    %938 = vmatpush.bf16.msra.mxu0 %v662
    %939 = vmatpush.bf16.msra.mxu0 %v659
    %940 = vmatpush.bf16.msra.mxu0 %v656
    %941 = vmatpush.bf16.msra.mxu0 %v653
    %942 = vmatpush.bf16.msra.mxu0 %v650
    %943 = vmatpush.bf16.msra.mxu0 %v647
    %944 = vmatpush.bf16.msra.mxu0 %v644
    %945 = vmatmul.bf16.gmra.mxu0 %v210
    %v946 = vpop.f32.mrf.mxu0
    %v947 = vadd.f32 %v934, %v946
    %v948 = vpop.f32.mrf.mxu0
    %949 = vdwg.mxu0
    %950 = vmatpush.bf16.msra.mxu0 %v689
    %951 = vmatpush.bf16.msra.mxu0 %v686
    %952 = vmatpush.bf16.msra.mxu0 %v683
    %953 = vmatpush.bf16.msra.mxu0 %v680
    %954 = vmatpush.bf16.msra.mxu0 %v677
    %955 = vmatpush.bf16.msra.mxu0 %v674
    %956 = vmatpush.bf16.msra.mxu0 %v671
    %957 = vmatpush.bf16.msra.mxu0 %v668
    %958 = vmatmul.bf16.gmra.mxu0 %v211
    %v959 = vpop.f32.mrf.mxu0
    %v960 = vadd.f32 %v947, %v959
    %v961 = vpop.f32.mrf.mxu0
    %962 = vdwg.mxu0
    %963 = vmatpush.bf16.msra.mxu0 %v713
    %964 = vmatpush.bf16.msra.mxu0 %v710
    %965 = vmatpush.bf16.msra.mxu0 %v707
    %966 = vmatpush.bf16.msra.mxu0 %v704
    %967 = vmatpush.bf16.msra.mxu0 %v701
    %968 = vmatpush.bf16.msra.mxu0 %v698
    %969 = vmatpush.bf16.msra.mxu0 %v695
    %970 = vmatpush.bf16.msra.mxu0 %v692
    %971 = vmatmul.bf16.gmra.mxu0 %v212
    %v972 = vpop.f32.mrf.mxu0
    %v973 = vadd.f32 %v960, %v972
    %v974 = vpop.f32.mrf.mxu0
    %975 = vdwg.mxu0
    %976 = vmatpush.bf16.msra.mxu0 %v737
    %977 = vmatpush.bf16.msra.mxu0 %v734
    %978 = vmatpush.bf16.msra.mxu0 %v731
    %979 = vmatpush.bf16.msra.mxu0 %v728
    %980 = vmatpush.bf16.msra.mxu0 %v725
    %981 = vmatpush.bf16.msra.mxu0 %v722
    %982 = vmatpush.bf16.msra.mxu0 %v719
    %983 = vmatpush.bf16.msra.mxu0 %v716
    %984 = vmatmul.bf16.gmra.mxu0 %v213
    %v985 = vpop.f32.mrf.mxu0
    %v986 = vadd.f32 %v973, %v985
    %v987 = vpop.f32.mrf.mxu0
    %988 = vdwg.mxu0
    %989 = vmatpush.bf16.msra.mxu0 %v642
    %990 = vmatpush.bf16.msra.mxu0 %v639
    %991 = vmatpush.bf16.msra.mxu0 %v636
    %992 = vmatpush.bf16.msra.mxu0 %v633
    %993 = vmatpush.bf16.msra.mxu0 %v630
    %994 = vmatpush.bf16.msra.mxu0 %v627
    %995 = vmatpush.bf16.msra.mxu0 %v624
    %996 = vmatpush.bf16.msra.mxu0 %v621
    %997 = vmatmul.bf16.gmra.mxu0 %v209
    %v998 = vpop.f32.mrf.mxu0
    %v999 = vadd.f32 %v197, %v998
    %v1000 = vpop.f32.mrf.mxu0
    %1001 = vdwg.mxu0
    %1002 = vmatpush.bf16.msra.mxu0 %v666
    %1003 = vmatpush.bf16.msra.mxu0 %v663
    %1004 = vmatpush.bf16.msra.mxu0 %v660
    %1005 = vmatpush.bf16.msra.mxu0 %v657
    %1006 = vmatpush.bf16.msra.mxu0 %v654
    %1007 = vmatpush.bf16.msra.mxu0 %v651
    %1008 = vmatpush.bf16.msra.mxu0 %v648
    %1009 = vmatpush.bf16.msra.mxu0 %v645
    %1010 = vmatmul.bf16.gmra.mxu0 %v210
    %v1011 = vpop.f32.mrf.mxu0
    %v1012 = vadd.f32 %v999, %v1011
    %v1013 = vpop.f32.mrf.mxu0
    %1014 = vdwg.mxu0
    %1015 = vmatpush.bf16.msra.mxu0 %v690
    %1016 = vmatpush.bf16.msra.mxu0 %v687
    %1017 = vmatpush.bf16.msra.mxu0 %v684
    %1018 = vmatpush.bf16.msra.mxu0 %v681
    %1019 = vmatpush.bf16.msra.mxu0 %v678
    %1020 = vmatpush.bf16.msra.mxu0 %v675
    %1021 = vmatpush.bf16.msra.mxu0 %v672
    %1022 = vmatpush.bf16.msra.mxu0 %v669
    %1023 = vmatmul.bf16.gmra.mxu0 %v211
    %v1024 = vpop.f32.mrf.mxu0
    %v1025 = vadd.f32 %v1012, %v1024
    %v1026 = vpop.f32.mrf.mxu0
    %1027 = vdwg.mxu0
    %1028 = vmatpush.bf16.msra.mxu0 %v714
    %1029 = vmatpush.bf16.msra.mxu0 %v711
    %1030 = vmatpush.bf16.msra.mxu0 %v708
    %1031 = vmatpush.bf16.msra.mxu0 %v705
    %1032 = vmatpush.bf16.msra.mxu0 %v702
    %1033 = vmatpush.bf16.msra.mxu0 %v699
    %1034 = vmatpush.bf16.msra.mxu0 %v696
    %1035 = vmatpush.bf16.msra.mxu0 %v693
    %1036 = vmatmul.bf16.gmra.mxu0 %v212
    %v1037 = vpop.f32.mrf.mxu0
    %v1038 = vadd.f32 %v1025, %v1037
    %v1039 = vpop.f32.mrf.mxu0
    %1040 = vdwg.mxu0
    %1041 = vmatpush.bf16.msra.mxu0 %v738
    %1042 = vmatpush.bf16.msra.mxu0 %v735
    %1043 = vmatpush.bf16.msra.mxu0 %v732
    %1044 = vmatpush.bf16.msra.mxu0 %v729
    %1045 = vmatpush.bf16.msra.mxu0 %v726
    %1046 = vmatpush.bf16.msra.mxu0 %v723
    %1047 = vmatpush.bf16.msra.mxu0 %v720
    %1048 = vmatpush.bf16.msra.mxu0 %v717
    %1049 = vmatmul.bf16.gmra.mxu0 %v213
    %v1050 = vpop.f32.mrf.mxu0
    %v1051 = vadd.f32 %v1038, %v1050
    %v1052 = vpop.f32.mrf.mxu0
    %1053 = vdwg.mxu0
    %v1054 = vpack.c.bf16 %v986, %v921
    %v1055 = vpack.c.bf16 %v1051, %v1051
    %1056 = vst [vmem:[%s3] sm:$0xff] %v1054
    %1057 = vst [vmem:[%s3 + $0x8] sm:$0xf] %v1055
    // Predicated region
    $region18: #{brain_tumor_classifier.26} parent=1 // pred_check
      _
    $region19: #{brain_tumor_classifier.26} parent=1 // pred_check_branch
      %1059 = sbr.rel (0) target = $region21
    $region20: #{brain_tumor_classifier.26} parent=1 // pred_region
      _
    $region21: #{brain_tumor_classifier.26} parent=1 // pred_fallthru
      _
    // Predicated region
    $region22: #{brain_tumor_classifier.26} parent=1 // pred_check
      _
    $region23: #{brain_tumor_classifier.26} parent=1 // pred_check_branch
      %1061 = sbr.rel (0) target = $region25
    $region24: #{brain_tumor_classifier.26} parent=1 // pred_region
      _
    $region25: #{brain_tumor_classifier.26} parent=1 // pred_fallthru
      _
    %1062 = vsyncpa [#allocation3], 1

// kernel: brain_tumor_classifier.51
$region0: #{brain_tumor_classifier.51}
  #allocation0 [shape = 'u32[]', space=smem, size = 0x4, offset = 0x4, fixed_abs, tag = 'smem constant byte address 0x4 - core index']
  #allocation1 [shape = 'u32[72,128]{1,0:T(1,128)}', space=vmem, size = 0x9000, scoped, tag = 'internal scratch']
  %s0 = inlined_call_operand.vmem [shape: bf16[2,384], index: 0, kind: input, shape index: {}]
  %s1 = inlined_call_operand.vmem [shape: f32[1,384], index: 1, kind: input, shape index: {}]
  %s2 = inlined_call_operand.vmem [shape: f32[1,384], index: 2, kind: input, shape index: {}]
  %s3 = inlined_call_operand.hbm [shape: bf16[384,256], index: 3, kind: input, shape index: {}]
  %s4 = inlined_call_operand.hbm [shape: f32[1,256], index: 4, kind: input, shape index: {}]
  %s5 = inlined_call_operand.hbm [shape: bf16[256,128], index: 5, kind: input, shape index: {}]
  %s6 = inlined_call_operand.hbm [shape: f32[1,128], index: 6, kind: input, shape index: {}]
  %s7 = inlined_call_operand.hbm [shape: f32[2,128], index: 7, kind: output, shape index: {}]
  %s8 = sld [smem:[#allocation0]]
  $region54: #{brain_tumor_classifier.51} parent=0
    _
  %s10 = ssub.s32 1, %s8
  %s11 = scalar_select 0, %s10, %s8
  $region1: #{brain_tumor_classifier.51} parent=0
    #allocation2 [shape = 'u8[196608]{0}', space=vmem, size = 0x30000, scoped, tag = 'input window, operand 3, single buffered']
    #allocation3 [shape = 's32[1]{0}', space=sflag, size = 0x4, scoped, tag = 'scoped memory for brain_tumor_classifier.51']
    #allocation4 [shape = 's32[1]{0}', space=sflag, size = 0x4, scoped, tag = 'scoped memory for brain_tumor_classifier.51']
    #allocation5 [shape = 'u8[1024]{0}', space=vmem, size = 0x400, scoped, tag = 'input window, operand 4, single buffered']
    #allocation6 [shape = 's32[1]{0}', space=sflag, size = 0x4, scoped, tag = 'scoped memory for brain_tumor_classifier.51']
    #allocation7 [shape = 'u8[65536]{0}', space=vmem, size = 0x10000, scoped, tag = 'input window, operand 5, single buffered']
    #allocation8 [shape = 'u8[512]{0}', space=vmem, size = 0x400, scoped, tag = 'input window, operand 6, single buffered']
    #allocation9 [shape = 's32[1]{0}', space=sflag, size = 0x4, scoped, tag = 'scoped memory for brain_tumor_classifier.51']
    #allocation10 [shape = 'u8[1024]{0}', space=vmem, size = 0x400, scoped, tag = 'output window, operand 0, single buffered']
    %12 = vsyncpa [#allocation3], 0
    %13 = vsyncpa [#allocation6], 0
    %14 = vsyncpa [#allocation9], 0
    %15 = vsyncpa [#allocation4], 0
    // Predicated region
    $region2: #{brain_tumor_classifier.51} parent=1 // pred_check
      _
    $region3: #{brain_tumor_classifier.51} parent=1 // pred_check_branch
      %17 = sbr.rel (0) target = $region5
    $region4: #{brain_tumor_classifier.51} parent=1 // pred_region
      _
    $region5: #{brain_tumor_classifier.51} parent=1 // pred_fallthru
      _
    // Predicated region
    $region6: #{brain_tumor_classifier.51} parent=1 // pred_check
      _
    $region7: #{brain_tumor_classifier.51} parent=1 // pred_check_branch
      %19 = sbr.rel (0) target = $region9
    $region8: #{brain_tumor_classifier.51} parent=1 // pred_region
      _
    $region9: #{brain_tumor_classifier.51} parent=1 // pred_fallthru
      _
    // Predicated region
    $region10: #{brain_tumor_classifier.51} parent=1 // pred_check
      _
    $region11: #{brain_tumor_classifier.51} parent=1 // pred_check_branch
      %21 = sbr.rel (0) target = $region13
    $region12: #{brain_tumor_classifier.51} parent=1 // pred_region
      _
    $region13: #{brain_tumor_classifier.51} parent=1 // pred_fallthru
      _
    // Predicated region
    $region14: #{brain_tumor_classifier.51} parent=1 // pred_check
      _
    $region15: #{brain_tumor_classifier.51} parent=1 // pred_check_branch
      %23 = sbr.rel (0) target = $region17
    $region16: #{brain_tumor_classifier.51} parent=1 // pred_region
      %25 = vsyncadd [#allocation3], 0
      %s26 = sshll.u32 %s3, 4
      %s27 = int_to_ptr.hbm [resolvable:$true] %s26
      %s28 = sshll.u32 [#allocation2], 4
      %s29 = int_to_ptr.vmem [resolvable:$true] %s28
      %34 = dma.hbm_to_vmem [thread:$0]  %s27, 6144, %s29, [#allocation3], 128, 128, 8
    $region17: #{brain_tumor_classifier.51} parent=1 // pred_fallthru
      _
    // Predicated region
    $region18: #{brain_tumor_classifier.51} parent=1 // pred_check
      _
    $region19: #{brain_tumor_classifier.51} parent=1 // pred_check_branch
      %36 = sbr.rel (0) target = $region21
    $region20: #{brain_tumor_classifier.51} parent=1 // pred_region
      %38 = vsyncadd [#allocation6], 0
      %s40 = sshll.u32 %s4, 4
      %s41 = int_to_ptr.hbm [resolvable:$true] %s40
      %s42 = sshll.u32 [#allocation5], 4
      %s43 = int_to_ptr.vmem [resolvable:$true] %s42
      %45 = dma.hbm_to_vmem [thread:$0]  %s41, 32, %s43, [#allocation6]
    $region21: #{brain_tumor_classifier.51} parent=1 // pred_fallthru
      _
    // Predicated region
    $region22: #{brain_tumor_classifier.51} parent=1 // pred_check
      _
    $region23: #{brain_tumor_classifier.51} parent=1 // pred_check_branch
      %47 = sbr.rel (0) target = $region25
    $region24: #{brain_tumor_classifier.51} parent=1 // pred_region
      %49 = vsyncadd [#allocation6], 0
      %s50 = sshll.u32 %s5, 4
      %s51 = int_to_ptr.hbm [resolvable:$true] %s50
      %s52 = sshll.u32 [#allocation7], 4
      %s53 = int_to_ptr.vmem [resolvable:$true] %s52
      %58 = dma.hbm_to_vmem [thread:$0]  %s51, 2048, %s53, [#allocation6], 64, 64, 4
    $region25: #{brain_tumor_classifier.51} parent=1 // pred_fallthru
      _
    // Predicated region
    $region26: #{brain_tumor_classifier.51} parent=1 // pred_check
      _
    $region27: #{brain_tumor_classifier.51} parent=1 // pred_check_branch
      %60 = sbr.rel (0) target = $region29
    $region28: #{brain_tumor_classifier.51} parent=1 // pred_region
      %62 = vsyncadd [#allocation9], 0
      %s64 = sshll.u32 %s6, 4
      %s65 = int_to_ptr.hbm [resolvable:$true] %s64
      %s66 = sshll.u32 [#allocation8], 4
      %s67 = int_to_ptr.vmem [resolvable:$true] %s66
      %69 = dma.hbm_to_vmem [thread:$0]  %s65, 16, %s67, [#allocation9]
    $region29: #{brain_tumor_classifier.51} parent=1 // pred_fallthru
      _
    // Predicated region
    $region30: #{brain_tumor_classifier.51} parent=1 // pred_check
      _
    $region31: #{brain_tumor_classifier.51} parent=1 // pred_check_branch
      %71 = sbr.rel (0) target = $region33
    $region32: #{brain_tumor_classifier.51} parent=1 // pred_region
      %73 = dma.done [#allocation3], 6144
    $region33: #{brain_tumor_classifier.51} parent=1 // pred_fallthru
      _
    // Predicated region
    $region34: #{brain_tumor_classifier.51} parent=1 // pred_check
      _
    $region35: #{brain_tumor_classifier.51} parent=1 // pred_check_branch
      %75 = sbr.rel (0) target = $region37
    $region36: #{brain_tumor_classifier.51} parent=1 // pred_region
      %77 = dma.done [#allocation6], 32
    $region37: #{brain_tumor_classifier.51} parent=1 // pred_fallthru
      _
    // Predicated region
    $region38: #{brain_tumor_classifier.51} parent=1 // pred_check
      _
    $region39: #{brain_tumor_classifier.51} parent=1 // pred_check_branch
      %79 = sbr.rel (0) target = $region41
    $region40: #{brain_tumor_classifier.51} parent=1 // pred_region
      %81 = dma.done [#allocation6], 2048
    $region41: #{brain_tumor_classifier.51} parent=1 // pred_fallthru
      _
    // Predicated region
    $region42: #{brain_tumor_classifier.51} parent=1 // pred_check
      _
    $region43: #{brain_tumor_classifier.51} parent=1 // pred_check_branch
      %83 = sbr.rel (0) target = $region45
    $region44: #{brain_tumor_classifier.51} parent=1 // pred_region
      %85 = dma.done [#allocation9], 16
    $region45: #{brain_tumor_classifier.51} parent=1 // pred_fallthru
      _
    %v86 = vld [vmem:[%s0] sm:$0x7]
    %v87 = vunpack.c.l.bf16 %v86
    %89 = vst [vmem:[#allocation1] ss:$4 sm:$0xff] %v87
    %v90 = vld.sshfl [vmem:[#allocation1] sm:$0xff pattern:$0x73625140]
    %v91 = vld.sshfl [vmem:[#allocation1 + $0x8] sm:$0xff pattern:$0x73625140]
    %v92 = vld.sshfl [vmem:[#allocation1 + $0x10] sm:$0xff pattern:$0x73625140]
    %vm96 = vcmask 1041408
    %v97 = vsel %vm96, %v90, 0.0
    %v98 = vsel %vm96, %v91, 0.0
    %v99 = vadd.f32 %v97, %v98
    %v100 = vsel %vm96, %v92, 0.0
    %v101 = vadd.f32 %v99, %v100
    %102 = vadd.xlane.f32.xlu0 %v101
    %v103 = vpop.xlane.xlu0 %102
    %v104 = vrcp.pop 384.0
    %v105 = vmul.f32 384.0, %v104
    %v106 = vsub.f32 1.0, %v105
    %v107 = vmul.f32 %v104, %v106
    %v108 = vadd.f32 %v104, %v107
    %vm109 = vweird.f32 %v104
    %v110 = vsel %vm109, %v104, %v108
    %v111 = vmul.f32 %v103, %v110
    %v114 = vunpack.c.l.s4 269488144
    %v115 = vunpack.c.0.s8 %v114
    %v116 = vperm.slane %v111, %v115
    %v118 = vsub.f32 %v87, %v116
    %v119 = vmul.f32 %v118, %v118
    %121 = vst [vmem:[#allocation1] ss:$4 sm:$0xff] %v119
    %v122 = vld.sshfl [vmem:[#allocation1] sm:$0xff pattern:$0x73625140]
    %v123 = vld.sshfl [vmem:[#allocation1 + $0x8] sm:$0xff pattern:$0x73625140]
    %v124 = vld.sshfl [vmem:[#allocation1 + $0x10] sm:$0xff pattern:$0x73625140]
    %v128 = vsel %vm96, %v122, 0.0
    %v129 = vsel %vm96, %v123, 0.0
    %v130 = vadd.f32 %v128, %v129
    %v131 = vsel %vm96, %v124, 0.0
    %v132 = vadd.f32 %v130, %v131
    %133 = vadd.xlane.f32.xlu0 %v132
    %v134 = vpop.xlane.xlu0 %133
    %v135 = vmul.f32 %v134, %v110
    %v136 = vadd.f32 %v135, 1e-06
    %v137 = vrsqrt.pop %v136
    %v138 = vmul.f32 %v137, %v136
    %v139 = vmul.f32 %v138, %v137
    %v140 = vmul.f32 0.5, %v139
    %v141 = vsub.f32 1.5, %v140
    %v142 = vmul.f32 %v137, %v141
    %vm143 = vweird.f32 %v136
    %vm144 = vweird.f32 %v137
    %vm145 = vmor %vm143, %vm144
    %v146 = vsel %vm145, %v137, %v142
    %v149 = vunpack.c.l.s4 269488144
    %v150 = vunpack.c.0.s8 %v149
    %v151 = vperm.slane %v146, %v150
    %v153 = vmul.f32 %v118, %v151
    %v154 = vld [vmem:[%s1] sm:$0x7]
    %v156 = vperm.slane %v154, 0
    %v157 = vperm.slane %v154, 1
    %v158 = vperm.slane %v154, 2
    %v159 = vrot.slane %v157, 6
    %v160 = vrot.slane %v158, 4
    %v161 = vsel %vm96, %v156, %v159
    %vm162 = vcmask 1043456
    %v163 = vsel %vm162, %v161, %v160
    %v165 = vmul.f32 %v153, %v163
    %v166 = vld [vmem:[%s2] sm:$0x7]
    %v168 = vperm.slane %v166, 0
    %v169 = vperm.slane %v166, 1
    %v170 = vperm.slane %v166, 2
    %v171 = vrot.slane %v169, 6
    %v172 = vrot.slane %v170, 4
    %v173 = vsel %vm96, %v168, %v171
    %v174 = vsel %vm162, %v173, %v172
    %v176 = vadd.f32 %v165, %v174
    %178 = vst [vmem:[#allocation1] ss:$4 sm:$0xff] %v176
    %v179 = vld.sshfl [vmem:[#allocation1] sm:$0xff pattern:$0x73625140]
    %v180 = vld.sshfl [vmem:[#allocation1 + $0x8] sm:$0xff pattern:$0x73625140]
    %v181 = vld.sshfl [vmem:[#allocation1 + $0x10] sm:$0xff pattern:$0x73625140]
    %v185 = vsel %vm96, %v179, 0.0
    %v186 = vsel %vm96, %v180, 0.0
    %v187 = vadd.f32 %v185, %v186
    %v188 = vsel %vm96, %v181, 0.0
    %v189 = vadd.f32 %v187, %v188
    %190 = vadd.xlane.f32.xlu0 %v189
    %v191 = vpop.xlane.xlu0 %190
    %v192 = vmul.f32 %v191, %v110
    %v195 = vunpack.c.l.s4 269488144
    %v196 = vunpack.c.0.s8 %v195
    %v197 = vperm.slane %v192, %v196
    %v199 = vsub.f32 %v176, %v197
    %v200 = vmul.f32 %v199, %v199
    %202 = vst [vmem:[#allocation1] ss:$4 sm:$0xff] %v200
    %v203 = vld.sshfl [vmem:[#allocation1] sm:$0xff pattern:$0x73625140]
    %v204 = vld.sshfl [vmem:[#allocation1 + $0x8] sm:$0xff pattern:$0x73625140]
    %v205 = vld.sshfl [vmem:[#allocation1 + $0x10] sm:$0xff pattern:$0x73625140]
    %v209 = vsel %vm96, %v203, 0.0
    %v210 = vsel %vm96, %v204, 0.0
    %v211 = vadd.f32 %v209, %v210
    %v212 = vsel %vm96, %v205, 0.0
    %v213 = vadd.f32 %v211, %v212
    %214 = vadd.xlane.f32.xlu0 %v213
    %v215 = vpop.xlane.xlu0 %214
    %v216 = vmul.f32 %v215, %v110
    %v217 = vadd.f32 %v216, 1e-06
    %v218 = vrsqrt.pop %v217
    %v219 = vmul.f32 %v218, %v217
    %v220 = vmul.f32 %v219, %v218
    %v221 = vmul.f32 0.5, %v220
    %v222 = vsub.f32 1.5, %v221
    %v223 = vmul.f32 %v218, %v222
    %vm224 = vweird.f32 %v217
    %vm225 = vweird.f32 %v218
    %vm226 = vmor %vm224, %vm225
    %v227 = vsel %vm226, %v218, %v223
    %v230 = vunpack.c.l.s4 269488144
    %v231 = vunpack.c.0.s8 %v230
    %v232 = vperm.slane %v227, %v231
    %v234 = vmul.f32 %v199, %v232
    %v235 = vmul.f32 %v234, %v163
    %v236 = vadd.f32 %v235, %v174
    %238 = vst [vmem:[#allocation1] ss:$4 sm:$0xff] %v236
    %v239 = vld.sshfl [vmem:[#allocation1] sm:$0xff pattern:$0x73625140]
    %v240 = vld.sshfl [vmem:[#allocation1 + $0x8] sm:$0xff pattern:$0x73625140]
    %v241 = vld.sshfl [vmem:[#allocation1 + $0x10] sm:$0xff pattern:$0x73625140]
    %v245 = vpack.c.bf16 %v239, %v239
    %v246 = vpack.c.bf16 %v240, %v240
    %v247 = vpack.c.bf16 %v241, %v241
    %v248 = vld [vmem:[#allocation2] sm:$0xff]
    %v249 = vld [vmem:[#allocation2 + $0x8] sm:$0xff]
    %v250 = vld [vmem:[#allocation2 + $0x10] sm:$0xff]
    %v251 = vld [vmem:[#allocation2 + $0x18] sm:$0xff]
    %v252 = vld [vmem:[#allocation2 + $0x20] sm:$0xff]
    %v253 = vld [vmem:[#allocation2 + $0x28] sm:$0xff]
    %v254 = vld [vmem:[#allocation2 + $0x30] sm:$0xff]
    %v255 = vld [vmem:[#allocation2 + $0x38] sm:$0xff]
    %v256 = vld [vmem:[#allocation2 + $0x40] sm:$0xff]
    %v257 = vld [vmem:[#allocation2 + $0x48] sm:$0xff]
    %v258 = vld [vmem:[#allocation2 + $0x50] sm:$0xff]
    %v259 = vld [vmem:[#allocation2 + $0x58] sm:$0xff]
    %v260 = vld [vmem:[#allocation2 + $0x60] sm:$0xff]
    %v261 = vld [vmem:[#allocation2 + $0x68] sm:$0xff]
    %v262 = vld [vmem:[#allocation2 + $0x70] sm:$0xff]
    %v263 = vld [vmem:[#allocation2 + $0x78] sm:$0xff]
    %v264 = vld [vmem:[#allocation2 + $0x80] sm:$0xff]
    %v265 = vld [vmem:[#allocation2 + $0x88] sm:$0xff]
    %v266 = vld [vmem:[#allocation2 + $0x90] sm:$0xff]
    %v267 = vld [vmem:[#allocation2 + $0x98] sm:$0xff]
    %v268 = vld [vmem:[#allocation2 + $0xa0] sm:$0xff]
    %v269 = vld [vmem:[#allocation2 + $0xa8] sm:$0xff]
    %v270 = vld [vmem:[#allocation2 + $0xb0] sm:$0xff]
    %v271 = vld [vmem:[#allocation2 + $0xb8] sm:$0xff]
    %v272 = vld [vmem:[#allocation2 + $0xc0] sm:$0xff]
    %v273 = vld [vmem:[#allocation2 + $0xc8] sm:$0xff]
    %v274 = vld [vmem:[#allocation2 + $0xd0] sm:$0xff]
    %v275 = vld [vmem:[#allocation2 + $0xd8] sm:$0xff]
    %v276 = vld [vmem:[#allocation2 + $0xe0] sm:$0xff]
    %v277 = vld [vmem:[#allocation2 + $0xe8] sm:$0xff]
    %v278 = vld [vmem:[#allocation2 + $0xf0] sm:$0xff]
    %v279 = vld [vmem:[#allocation2 + $0xf8] sm:$0xff]
    %v280 = vld [vmem:[#allocation2 + $0x100] sm:$0xff]
    %v281 = vld [vmem:[#allocation2 + $0x108] sm:$0xff]
    %v282 = vld [vmem:[#allocation2 + $0x110] sm:$0xff]
    %v283 = vld [vmem:[#allocation2 + $0x118] sm:$0xff]
    %v284 = vld [vmem:[#allocation2 + $0x120] sm:$0xff]
    %v285 = vld [vmem:[#allocation2 + $0x128] sm:$0xff]
    %v286 = vld [vmem:[#allocation2 + $0x130] sm:$0xff]
    %v287 = vld [vmem:[#allocation2 + $0x138] sm:$0xff]
    %v288 = vld [vmem:[#allocation2 + $0x140] sm:$0xff]
    %v289 = vld [vmem:[#allocation2 + $0x148] sm:$0xff]
    %v290 = vld [vmem:[#allocation2 + $0x150] sm:$0xff]
    %v291 = vld [vmem:[#allocation2 + $0x158] sm:$0xff]
    %v292 = vld [vmem:[#allocation2 + $0x160] sm:$0xff]
    %v293 = vld [vmem:[#allocation2 + $0x168] sm:$0xff]
    %v294 = vld [vmem:[#allocation2 + $0x170] sm:$0xff]
    %v295 = vld [vmem:[#allocation2 + $0x178] sm:$0xff]
    %v296 = vld [vmem:[#allocation5] sm:$0x3]
    %v298 = vperm.slane %v296, 0
    %v299 = vperm.slane %v296, 1
    %v350 = vunpack.c.l.b16 %v248
    %v351 = vunpack.c.h.b16 %v248
    %v352 = vunpack.c.l.b16 %v249
    %v353 = vunpack.c.h.b16 %v249
    %v354 = vunpack.c.l.b16 %v250
    %v355 = vunpack.c.h.b16 %v250
    %v356 = vunpack.c.l.b16 %v251
    %v357 = vunpack.c.h.b16 %v251
    %v358 = vunpack.c.l.b16 %v252
    %v359 = vunpack.c.h.b16 %v252
    %v360 = vunpack.c.l.b16 %v253
    %v361 = vunpack.c.h.b16 %v253
    %v362 = vunpack.c.l.b16 %v254
    %v363 = vunpack.c.h.b16 %v254
    %v364 = vunpack.c.l.b16 %v255
    %v365 = vunpack.c.h.b16 %v255
    %v366 = vunpack.c.l.b16 %v256
    %v367 = vunpack.c.h.b16 %v256
    %v368 = vunpack.c.l.b16 %v257
    %v369 = vunpack.c.h.b16 %v257
    %v370 = vunpack.c.l.b16 %v258
    %v371 = vunpack.c.h.b16 %v258
    %v372 = vunpack.c.l.b16 %v259
    %v373 = vunpack.c.h.b16 %v259
    %v374 = vunpack.c.l.b16 %v260
    %v375 = vunpack.c.h.b16 %v260
    %v376 = vunpack.c.l.b16 %v261
    %v377 = vunpack.c.h.b16 %v261
    %v378 = vunpack.c.l.b16 %v262
    %v379 = vunpack.c.h.b16 %v262
    %v380 = vunpack.c.l.b16 %v263
    %v381 = vunpack.c.h.b16 %v263
    %v382 = vunpack.c.l.b16 %v264
    %v383 = vunpack.c.h.b16 %v264
    %v384 = vunpack.c.l.b16 %v265
    %v385 = vunpack.c.h.b16 %v265
    %v386 = vunpack.c.l.b16 %v266
    %v387 = vunpack.c.h.b16 %v266
    %v388 = vunpack.c.l.b16 %v267
    %v389 = vunpack.c.h.b16 %v267
    %v390 = vunpack.c.l.b16 %v268
    %v391 = vunpack.c.h.b16 %v268
    %v392 = vunpack.c.l.b16 %v269
    %v393 = vunpack.c.h.b16 %v269
    %v394 = vunpack.c.l.b16 %v270
    %v395 = vunpack.c.h.b16 %v270
    %v396 = vunpack.c.l.b16 %v271
    %v397 = vunpack.c.h.b16 %v271
    %v398 = vunpack.c.l.b16 %v272
    %v399 = vunpack.c.h.b16 %v272
    %v400 = vunpack.c.l.b16 %v273
    %v401 = vunpack.c.h.b16 %v273
    %v402 = vunpack.c.l.b16 %v274
    %v403 = vunpack.c.h.b16 %v274
    %v404 = vunpack.c.l.b16 %v275
    %v405 = vunpack.c.h.b16 %v275
    %v406 = vunpack.c.l.b16 %v276
    %v407 = vunpack.c.h.b16 %v276
    %v408 = vunpack.c.l.b16 %v277
    %v409 = vunpack.c.h.b16 %v277
    %v410 = vunpack.c.l.b16 %v278
    %v411 = vunpack.c.h.b16 %v278
    %v412 = vunpack.c.l.b16 %v279
    %v413 = vunpack.c.h.b16 %v279
    %v414 = vunpack.c.l.b16 %v280
    %v415 = vunpack.c.h.b16 %v280
    %v416 = vunpack.c.l.b16 %v281
    %v417 = vunpack.c.h.b16 %v281
    %v418 = vunpack.c.l.b16 %v282
    %v419 = vunpack.c.h.b16 %v282
    %v420 = vunpack.c.l.b16 %v283
    %v421 = vunpack.c.h.b16 %v283
    %v422 = vunpack.c.l.b16 %v284
    %v423 = vunpack.c.h.b16 %v284
    %v424 = vunpack.c.l.b16 %v285
    %v425 = vunpack.c.h.b16 %v285
    %v426 = vunpack.c.l.b16 %v286
    %v427 = vunpack.c.h.b16 %v286
    %v428 = vunpack.c.l.b16 %v287
    %v429 = vunpack.c.h.b16 %v287
    %v430 = vunpack.c.l.b16 %v288
    %v431 = vunpack.c.h.b16 %v288
    %v432 = vunpack.c.l.b16 %v289
    %v433 = vunpack.c.h.b16 %v289
    %v434 = vunpack.c.l.b16 %v290
    %v435 = vunpack.c.h.b16 %v290
    %v436 = vunpack.c.l.b16 %v291
    %v437 = vunpack.c.h.b16 %v291
    %v438 = vunpack.c.l.b16 %v292
    %v439 = vunpack.c.h.b16 %v292
    %v440 = vunpack.c.l.b16 %v293
    %v441 = vunpack.c.h.b16 %v293
    %v442 = vunpack.c.l.b16 %v294
    %v443 = vunpack.c.h.b16 %v294
    %v444 = vunpack.c.l.b16 %v295
    %v445 = vunpack.c.h.b16 %v295
    %v446 = vpack.c.b16 %v352, %v350
    %v447 = vpack.c.b16 %v353, %v351
    %v448 = vpack.c.b16 %v356, %v354
    %v449 = vpack.c.b16 %v357, %v355
    %v450 = vpack.c.b16 %v360, %v358
    %v451 = vpack.c.b16 %v361, %v359
    %v452 = vpack.c.b16 %v364, %v362
    %v453 = vpack.c.b16 %v365, %v363
    %v454 = vpack.c.b16 %v368, %v366
    %v455 = vpack.c.b16 %v369, %v367
    %v456 = vpack.c.b16 %v372, %v370
    %v457 = vpack.c.b16 %v373, %v371
    %v458 = vpack.c.b16 %v376, %v374
    %v459 = vpack.c.b16 %v377, %v375
    %v460 = vpack.c.b16 %v380, %v378
    %v461 = vpack.c.b16 %v381, %v379
    %v462 = vpack.c.b16 %v384, %v382
    %v463 = vpack.c.b16 %v385, %v383
    %v464 = vpack.c.b16 %v388, %v386
    %v465 = vpack.c.b16 %v389, %v387
    %v466 = vpack.c.b16 %v392, %v390
    %v467 = vpack.c.b16 %v393, %v391
    %v468 = vpack.c.b16 %v396, %v394
    %v469 = vpack.c.b16 %v397, %v395
    %v470 = vpack.c.b16 %v400, %v398
    %v471 = vpack.c.b16 %v401, %v399
    %v472 = vpack.c.b16 %v404, %v402
    %v473 = vpack.c.b16 %v405, %v403
    %v474 = vpack.c.b16 %v408, %v406
    %v475 = vpack.c.b16 %v409, %v407
    %v476 = vpack.c.b16 %v412, %v410
    %v477 = vpack.c.b16 %v413, %v411
    %v478 = vpack.c.b16 %v416, %v414
    %v479 = vpack.c.b16 %v417, %v415
    %v480 = vpack.c.b16 %v420, %v418
    %v481 = vpack.c.b16 %v421, %v419
    %v482 = vpack.c.b16 %v424, %v422
    %v483 = vpack.c.b16 %v425, %v423
    %v484 = vpack.c.b16 %v428, %v426
    %v485 = vpack.c.b16 %v429, %v427
    %v486 = vpack.c.b16 %v432, %v430
    %v487 = vpack.c.b16 %v433, %v431
    %v488 = vpack.c.b16 %v436, %v434
    %v489 = vpack.c.b16 %v437, %v435
    %v490 = vpack.c.b16 %v440, %v438
    %v491 = vpack.c.b16 %v441, %v439
    %v492 = vpack.c.b16 %v444, %v442
    %v493 = vpack.c.b16 %v445, %v443
    %542 = vmatpush.bf16.msra.mxu0 %v460
    %543 = vmatpush.bf16.msra.mxu0 %v458
    %544 = vmatpush.bf16.msra.mxu0 %v456
    %545 = vmatpush.bf16.msra.mxu0 %v454
    %546 = vmatpush.bf16.msra.mxu0 %v452
    %547 = vmatpush.bf16.msra.mxu0 %v450
    %548 = vmatpush.bf16.msra.mxu0 %v448
    %549 = vmatpush.bf16.msra.mxu0 %v446
    %550 = vmatmul.bf16.gmra.mxu0 %v245
    %v551 = vpop.f32.mrf.mxu0
    %v552 = vadd.f32 %v298, %v551
    %v553 = vpop.f32.mrf.mxu0
    %554 = vdwg.mxu0
    %555 = vmatpush.bf16.msra.mxu0 %v476
    %556 = vmatpush.bf16.msra.mxu0 %v474
    %557 = vmatpush.bf16.msra.mxu0 %v472
    %558 = vmatpush.bf16.msra.mxu0 %v470
    %559 = vmatpush.bf16.msra.mxu0 %v468
    %560 = vmatpush.bf16.msra.mxu0 %v466
    %561 = vmatpush.bf16.msra.mxu0 %v464
    %562 = vmatpush.bf16.msra.mxu0 %v462
    %563 = vmatmul.bf16.gmra.mxu0 %v246
    %v564 = vpop.f32.mrf.mxu0
    %v565 = vadd.f32 %v552, %v564
    %v566 = vpop.f32.mrf.mxu0
    %567 = vdwg.mxu0
    %568 = vmatpush.bf16.msra.mxu0 %v492
    %569 = vmatpush.bf16.msra.mxu0 %v490
    %570 = vmatpush.bf16.msra.mxu0 %v488
    %571 = vmatpush.bf16.msra.mxu0 %v486
    %572 = vmatpush.bf16.msra.mxu0 %v484
    %573 = vmatpush.bf16.msra.mxu0 %v482
    %574 = vmatpush.bf16.msra.mxu0 %v480
    %575 = vmatpush.bf16.msra.mxu0 %v478
    %576 = vmatmul.bf16.gmra.mxu0 %v247
    %v577 = vpop.f32.mrf.mxu0
    %v578 = vadd.f32 %v565, %v577
    %v579 = vpop.f32.mrf.mxu0
    %580 = vdwg.mxu0
    %581 = vmatpush.bf16.msra.mxu0 %v461
    %582 = vmatpush.bf16.msra.mxu0 %v459
    %583 = vmatpush.bf16.msra.mxu0 %v457
    %584 = vmatpush.bf16.msra.mxu0 %v455
    %585 = vmatpush.bf16.msra.mxu0 %v453
    %586 = vmatpush.bf16.msra.mxu0 %v451
    %587 = vmatpush.bf16.msra.mxu0 %v449
    %588 = vmatpush.bf16.msra.mxu0 %v447
    %589 = vmatmul.bf16.gmra.mxu0 %v245
    %v590 = vpop.f32.mrf.mxu0
    %v591 = vadd.f32 %v299, %v590
    %v592 = vpop.f32.mrf.mxu0
    %593 = vdwg.mxu0
    %594 = vmatpush.bf16.msra.mxu0 %v477
    %595 = vmatpush.bf16.msra.mxu0 %v475
    %596 = vmatpush.bf16.msra.mxu0 %v473
    %597 = vmatpush.bf16.msra.mxu0 %v471
    %598 = vmatpush.bf16.msra.mxu0 %v469
    %599 = vmatpush.bf16.msra.mxu0 %v467
    %600 = vmatpush.bf16.msra.mxu0 %v465
    %601 = vmatpush.bf16.msra.mxu0 %v463
    %602 = vmatmul.bf16.gmra.mxu0 %v246
    %v603 = vpop.f32.mrf.mxu0
    %v604 = vadd.f32 %v591, %v603
    %v605 = vpop.f32.mrf.mxu0
    %606 = vdwg.mxu0
    %607 = vmatpush.bf16.msra.mxu0 %v493
    %608 = vmatpush.bf16.msra.mxu0 %v491
    %609 = vmatpush.bf16.msra.mxu0 %v489
    %610 = vmatpush.bf16.msra.mxu0 %v487
    %611 = vmatpush.bf16.msra.mxu0 %v485
    %612 = vmatpush.bf16.msra.mxu0 %v483
    %613 = vmatpush.bf16.msra.mxu0 %v481
    %614 = vmatpush.bf16.msra.mxu0 %v479
    %615 = vmatmul.bf16.gmra.mxu0 %v247
    %v616 = vpop.f32.mrf.mxu0
    %v617 = vadd.f32 %v604, %v616
    %v618 = vpop.f32.mrf.mxu0
    %619 = vdwg.mxu0
    %v620 = vmax.f32 %v578, 0.0
    %v621 = vmax.f32 %v617, 0.0
    %v622 = vpack.c.bf16 %v620, %v620
    %v623 = vpack.c.bf16 %v621, %v621
    %v624 = vld [vmem:[#allocation7] sm:$0xf]
    %v625 = vld [vmem:[#allocation7 + $0x4] sm:$0xf]
    %v626 = vld [vmem:[#allocation7 + $0x8] sm:$0xf]
    %v627 = vld [vmem:[#allocation7 + $0xc] sm:$0xf]
    %v628 = vld [vmem:[#allocation7 + $0x10] sm:$0xf]
    %v629 = vld [vmem:[#allocation7 + $0x14] sm:$0xf]
    %v630 = vld [vmem:[#allocation7 + $0x18] sm:$0xf]
    %v631 = vld [vmem:[#allocation7 + $0x1c] sm:$0xf]
    %v632 = vld [vmem:[#allocation7 + $0x20] sm:$0xf]
    %v633 = vld [vmem:[#allocation7 + $0x24] sm:$0xf]
    %v634 = vld [vmem:[#allocation7 + $0x28] sm:$0xf]
    %v635 = vld [vmem:[#allocation7 + $0x2c] sm:$0xf]
    %v636 = vld [vmem:[#allocation7 + $0x30] sm:$0xf]
    %v637 = vld [vmem:[#allocation7 + $0x34] sm:$0xf]
    %v638 = vld [vmem:[#allocation7 + $0x38] sm:$0xf]
    %v639 = vld [vmem:[#allocation7 + $0x3c] sm:$0xf]
    %v640 = vld [vmem:[#allocation7 + $0x40] sm:$0xf]
    %v641 = vld [vmem:[#allocation7 + $0x44] sm:$0xf]
    %v642 = vld [vmem:[#allocation7 + $0x48] sm:$0xf]
    %v643 = vld [vmem:[#allocation7 + $0x4c] sm:$0xf]
    %v644 = vld [vmem:[#allocation7 + $0x50] sm:$0xf]
    %v645 = vld [vmem:[#allocation7 + $0x54] sm:$0xf]
    %v646 = vld [vmem:[#allocation7 + $0x58] sm:$0xf]
    %v647 = vld [vmem:[#allocation7 + $0x5c] sm:$0xf]
    %v648 = vld [vmem:[#allocation7 + $0x60] sm:$0xf]
    %v649 = vld [vmem:[#allocation7 + $0x64] sm:$0xf]
    %v650 = vld [vmem:[#allocation7 + $0x68] sm:$0xf]
    %v651 = vld [vmem:[#allocation7 + $0x6c] sm:$0xf]
    %v652 = vld [vmem:[#allocation7 + $0x70] sm:$0xf]
    %v653 = vld [vmem:[#allocation7 + $0x74] sm:$0xf]
    %v654 = vld [vmem:[#allocation7 + $0x78] sm:$0xf]
    %v655 = vld [vmem:[#allocation7 + $0x7c] sm:$0xf]
    %v656 = vld [vmem:[#allocation8] sm:$0x1]
    %v658 = vperm.slane %v656, 0
    %v692 = vunpack.c.l.b16 %v624
    %v693 = vunpack.c.l.b16 %v625
    %v694 = vunpack.c.l.b16 %v626
    %v695 = vunpack.c.l.b16 %v627
    %v696 = vunpack.c.l.b16 %v628
    %v697 = vunpack.c.l.b16 %v629
    %v698 = vunpack.c.l.b16 %v630
    %v699 = vunpack.c.l.b16 %v631
    %v700 = vunpack.c.l.b16 %v632
    %v701 = vunpack.c.l.b16 %v633
    %v702 = vunpack.c.l.b16 %v634
    %v703 = vunpack.c.l.b16 %v635
    %v704 = vunpack.c.l.b16 %v636
    %v705 = vunpack.c.l.b16 %v637
    %v706 = vunpack.c.l.b16 %v638
    %v707 = vunpack.c.l.b16 %v639
    %v708 = vunpack.c.l.b16 %v640
    %v709 = vunpack.c.l.b16 %v641
    %v710 = vunpack.c.l.b16 %v642
    %v711 = vunpack.c.l.b16 %v643
    %v712 = vunpack.c.l.b16 %v644
    %v713 = vunpack.c.l.b16 %v645
    %v714 = vunpack.c.l.b16 %v646
    %v715 = vunpack.c.l.b16 %v647
    %v716 = vunpack.c.l.b16 %v648
    %v717 = vunpack.c.l.b16 %v649
    %v718 = vunpack.c.l.b16 %v650
    %v719 = vunpack.c.l.b16 %v651
    %v720 = vunpack.c.l.b16 %v652
    %v721 = vunpack.c.l.b16 %v653
    %v722 = vunpack.c.l.b16 %v654
    %v723 = vunpack.c.l.b16 %v655
    %v724 = vpack.c.b16 %v693, %v692
    %v725 = vpack.c.b16 %v695, %v694
    %v726 = vpack.c.b16 %v697, %v696
    %v727 = vpack.c.b16 %v699, %v698
    %v728 = vpack.c.b16 %v701, %v700
    %v729 = vpack.c.b16 %v703, %v702
    %v730 = vpack.c.b16 %v705, %v704
    %v731 = vpack.c.b16 %v707, %v706
    %v732 = vpack.c.b16 %v709, %v708
    %v733 = vpack.c.b16 %v711, %v710
    %v734 = vpack.c.b16 %v713, %v712
    %v735 = vpack.c.b16 %v715, %v714
    %v736 = vpack.c.b16 %v717, %v716
    %v737 = vpack.c.b16 %v719, %v718
    %v738 = vpack.c.b16 %v721, %v720
    %v739 = vpack.c.b16 %v723, %v722
    %756 = vmatpush.bf16.msra.mxu0 %v731
    %757 = vmatpush.bf16.msra.mxu0 %v730
    %758 = vmatpush.bf16.msra.mxu0 %v729
    %759 = vmatpush.bf16.msra.mxu0 %v728
    %760 = vmatpush.bf16.msra.mxu0 %v727
    %761 = vmatpush.bf16.msra.mxu0 %v726
    %762 = vmatpush.bf16.msra.mxu0 %v725
    %763 = vmatpush.bf16.msra.mxu0 %v724
    %764 = vmatmul.bf16.gmra.mxu0 %v622
    %v765 = vpop.f32.mrf.mxu0
    %v766 = vadd.f32 %v658, %v765
    %v767 = vpop.f32.mrf.mxu0
    %768 = vdwg.mxu0
    %769 = vmatpush.bf16.msra.mxu0 %v739
    %770 = vmatpush.bf16.msra.mxu0 %v738
    %771 = vmatpush.bf16.msra.mxu0 %v737
    %772 = vmatpush.bf16.msra.mxu0 %v736
    %773 = vmatpush.bf16.msra.mxu0 %v735
    %774 = vmatpush.bf16.msra.mxu0 %v734
    %775 = vmatpush.bf16.msra.mxu0 %v733
    %776 = vmatpush.bf16.msra.mxu0 %v732
    %777 = vmatmul.bf16.gmra.mxu0 %v623
    %v778 = vpop.f32.mrf.mxu0
    %v779 = vadd.f32 %v766, %v778
    %v780 = vpop.f32.mrf.mxu0
    %781 = vdwg.mxu0
    %782 = vst [vmem:[#allocation10] sm:$0x3] %v779
    // Predicated region
    $region46: #{brain_tumor_classifier.51} parent=1 // pred_check
      _
    $region47: #{brain_tumor_classifier.51} parent=1 // pred_check_branch
      %784 = sbr.rel (0) target = $region49
    $region48: #{brain_tumor_classifier.51} parent=1 // pred_region
      %786 = vsyncadd [#allocation4], 0
      %s788 = sshll.u32 [#allocation10], 4
      %s789 = int_to_ptr.vmem [resolvable:$true] %s788
      %s790 = sshll.u32 %s7, 4
      %s791 = int_to_ptr.hbm [resolvable:$true] %s790
      %793 = dma.vmem_to_hbm [thread:$0]  %s789, 32, %s791, [#allocation4]
    $region49: #{brain_tumor_classifier.51} parent=1 // pred_fallthru
      _
    // Predicated region
    $region50: #{brain_tumor_classifier.51} parent=1 // pred_check
      _
    $region51: #{brain_tumor_classifier.51} parent=1 // pred_check_branch
      %795 = sbr.rel (0) target = $region53
    $region52: #{brain_tumor_classifier.51} parent=1 // pred_region
      %797 = dma.done [#allocation4], 32
    $region53: #{brain_tumor_classifier.51} parent=1 // pred_fallthru
      _
    %798 = vsyncpa [#allocation3], 1
    %799 = vsyncpa [#allocation6], 1
    %800 = vsyncpa [#allocation9], 1
    %801 = vsyncpa [#allocation4], 1

// kernel: brain_tumor_classifier.27
$region0: #{brain_tumor_classifier.27}
  #allocation0 [shape = 'u32[]', space=smem, size = 0x4, offset = 0x4, fixed_abs, tag = 'smem constant byte address 0x4 - core index']
  #allocation1 [shape = 'u32[72,128]{1,0:T(1,128)}', space=vmem, size = 0x9000, scoped, tag = 'internal scratch']
  #allocation2 [shape = 'bf16[5,1152]{1,0:T(8,128)(2,1)}', space=vmem, size = 0x4800, scoped, tag = 'scratch operand']
  #allocation3 [shape = 'bf16[5,384]{1,0:T(8,128)(2,1)}', space=vmem, size = 0x1800, scoped, tag = 'scratch operand']
  %s0 = inlined_call_operand.vmem [shape: bf16[2,5,384], index: 0, kind: input, shape index: {}]
  %s1 = inlined_call_operand.vmem [shape: f32[1,384], index: 1, kind: input, shape index: {}]
  %s2 = inlined_call_operand.vmem [shape: f32[1,384], index: 2, kind: input, shape index: {}]
  %s3 = inlined_call_operand.hbm [shape: bf16[384,1152], index: 3, kind: input, shape index: {}]
  %s4 = inlined_call_operand.vmem [shape: f32[1,1152], index: 4, kind: input, shape index: {}]
  %s5 = inlined_call_operand.hbm [shape: bf16[384,384], index: 5, kind: input, shape index: {}]
  %s6 = inlined_call_operand.vmem [shape: f32[1,384], index: 6, kind: input, shape index: {}]
  %s7 = inlined_call_operand.vmem [shape: f32[1,384], index: 7, kind: input, shape index: {}]
  %s8 = inlined_call_operand.vmem [shape: bf16[2,5,384], index: 8, kind: output, shape index: {}]
  %s9 = sld [smem:[#allocation0]]
  $region73: #{brain_tumor_classifier.27} parent=0
    _
  %s11 = ssub.s32 1, %s9
  %s12 = scalar_select 0, %s11, %s9
  $region1: #{brain_tumor_classifier.27} parent=0
    #allocation4 [shape = 'u8[884736]{0}', space=vmem, size = 0xd8000, scoped, tag = 'input window, operand 3, single buffered']
    #allocation5 [shape = 's32[2]{0}', space=sflag, size = 0x8, scoped, tag = 'scoped memory for brain_tumor_classifier.27']
    #allocation6 [shape = 'u8[294912]{0}', space=vmem, size = 0x48000, scoped, tag = 'input window, operand 5, single buffered']
    #allocation7 [shape = 's32[1]{0}', space=sflag, size = 0x4, scoped, tag = 'scoped memory for brain_tumor_classifier.27']
    %13 = vsyncpa [#allocation5], 0
    %14 = vsyncpa [#allocation7], 0
    loop: start=0, step=1, limit=4
    $region2: #{brain_tumor_classifier.27} parent=1 // loop_pre_header
      _
    $region3: #{brain_tumor_classifier.27} parent=1 // loop_header
      %s16 = sphi 0, %s20
      %p17 = scmp.ge.s32.totalorder %s16, 4
      %s26 = sphi 0, %s28
      %s29 = sphi 0, %s26
      %s30 = sphi 0, %s29
      %s46 = sphi 0, %s30
      %s50 = sphi 0, %s50
      %s52 = sphi 0, %s50
      %s53 = sphi 0, %s52
      %s67 = sphi 0, %s53
      %s71 = sphi 0, %s71
      %s73 = sphi 0, %s71
      %s74 = sphi 0, %s73
      %s88 = sphi 0, %s74
      %s92 = sphi 0, %s92
      %s94 = sphi 0, %s92
      %s95 = sphi 0, %s94
      %s109 = sphi 0, %s95
      %s113 = sphi 0, %s113
      %s115 = sphi 0, %s113
      %s116 = sphi 0, %s115
      %s130 = sphi 0, %s116
      %s134 = sphi 0, %s134
      %s136 = sphi 0, %s134
      %s137 = sphi 0, %s136
      %s151 = sphi 0, %s137
      %s155 = sphi 0, %s155
      %s157 = sphi 0, %s155
      %s158 = sphi 0, %s157
      %s172 = sphi 0, %s158
      %s176 = sphi 0, %s176
      %s178 = sphi 0, %s176
      %s179 = sphi 0, %s178
      %s193 = sphi 0, %s179
      %s199 = sphi 0, %s201
      %s202 = sphi 0, %s199
      %s203 = sphi 0, %s202
      %s219 = sphi 0, %s203
    $region4: #{brain_tumor_classifier.27} parent=1 // loop_header_branch
      %19 = sbr.rel (%p17) target = $region8
    $region5: #{brain_tumor_classifier.27} parent=1 // loop_body
      %s21 = ssub.s32 %s16, 1
      %s22 = ssub.s32 %s16, 2
      %s23 = sadd.s32 %s16, 1
      %s24 = ssub.s32 %s16, %s23
      %p25 = scmp.eq.s32.totalorder %s24, 0
      %s27 = sadd.s32 %s26, 1
      %s28 = scalar_select %p25, %s26, %s27
      %p31 = pneg %p25
      %p32 = scmp.eq.s32.totalorder %s16, 1
      %p33 = por %p31, %p32
      %p34 = scmp.ne.s32.totalorder %s26, %s29
      %p35 = scmp.eq.s32.totalorder %s16, 0
      %p36 = por %p34, %p35
      %p37 = scmp.ne.s32.totalorder %s26, %s29
      %p38 = scmp.eq.s32.totalorder %s21, 1
      %p39 = por %p37, %p38
      %p40 = scmp.ne.s32.totalorder %s29, %s30
      %p41 = scmp.eq.s32.totalorder %s21, 0
      %p42 = por %p40, %p41
      %p43 = scmp.ne.s32.totalorder %s29, %s30
      %p44 = scmp.eq.s32.totalorder %s22, 1
      %p45 = por %p43, %p44
      %p47 = scmp.ne.s32.totalorder %s30, %s46
      %p48 = scmp.eq.s32.totalorder %s22, 0
      %p49 = por %p47, %p48
      %s51 = sadd.s32 %s50, 1
      %p54 = scmp.eq.s32.totalorder %s16, 1
      %p55 = scmp.ne.s32.totalorder %s50, %s52
      %p56 = scmp.eq.s32.totalorder %s16, 0
      %p57 = por %p55, %p56
      %p58 = scmp.ne.s32.totalorder %s50, %s52
      %p59 = scmp.eq.s32.totalorder %s21, 1
      %p60 = por %p58, %p59
      %p61 = scmp.ne.s32.totalorder %s52, %s53
      %p62 = scmp.eq.s32.totalorder %s21, 0
      %p63 = por %p61, %p62
      %p64 = scmp.ne.s32.totalorder %s52, %s53
      %p65 = scmp.eq.s32.totalorder %s22, 1
      %p66 = por %p64, %p65
      %p68 = scmp.ne.s32.totalorder %s53, %s67
      %p69 = scmp.eq.s32.totalorder %s22, 0
      %p70 = por %p68, %p69
      %s72 = sadd.s32 %s71, 1
      %p75 = scmp.eq.s32.totalorder %s16, 1
      %p76 = scmp.ne.s32.totalorder %s71, %s73
      %p77 = scmp.eq.s32.totalorder %s16, 0
      %p78 = por %p76, %p77
      %p79 = scmp.ne.s32.totalorder %s71, %s73
      %p80 = scmp.eq.s32.totalorder %s21, 1
      %p81 = por %p79, %p80
      %p82 = scmp.ne.s32.totalorder %s73, %s74
      %p83 = scmp.eq.s32.totalorder %s21, 0
      %p84 = por %p82, %p83
      %p85 = scmp.ne.s32.totalorder %s73, %s74
      %p86 = scmp.eq.s32.totalorder %s22, 1
      %p87 = por %p85, %p86
      %p89 = scmp.ne.s32.totalorder %s74, %s88
      %p90 = scmp.eq.s32.totalorder %s22, 0
      %p91 = por %p89, %p90
      %s93 = sadd.s32 %s92, 1
      %p96 = scmp.eq.s32.totalorder %s16, 1
      %p97 = scmp.ne.s32.totalorder %s92, %s94
      %p98 = scmp.eq.s32.totalorder %s16, 0
      %p99 = por %p97, %p98
      %p100 = scmp.ne.s32.totalorder %s92, %s94
      %p101 = scmp.eq.s32.totalorder %s21, 1
      %p102 = por %p100, %p101
      %p103 = scmp.ne.s32.totalorder %s94, %s95
      %p104 = scmp.eq.s32.totalorder %s21, 0
      %p105 = por %p103, %p104
      %p106 = scmp.ne.s32.totalorder %s94, %s95
      %p107 = scmp.eq.s32.totalorder %s22, 1
      %p108 = por %p106, %p107
      %p110 = scmp.ne.s32.totalorder %s95, %s109
      %p111 = scmp.eq.s32.totalorder %s22, 0
      %p112 = por %p110, %p111
      %s114 = sadd.s32 %s113, 1
      %p117 = scmp.eq.s32.totalorder %s16, 1
      %p118 = scmp.ne.s32.totalorder %s113, %s115
      %p119 = scmp.eq.s32.totalorder %s16, 0
      %p120 = por %p118, %p119
      %p121 = scmp.ne.s32.totalorder %s113, %s115
      %p122 = scmp.eq.s32.totalorder %s21, 1
      %p123 = por %p121, %p122
      %p124 = scmp.ne.s32.totalorder %s115, %s116
      %p125 = scmp.eq.s32.totalorder %s21, 0
      %p126 = por %p124, %p125
      %p127 = scmp.ne.s32.totalorder %s115, %s116
      %p128 = scmp.eq.s32.totalorder %s22, 1
      %p129 = por %p127, %p128
      %p131 = scmp.ne.s32.totalorder %s116, %s130
      %p132 = scmp.eq.s32.totalorder %s22, 0
      %p133 = por %p131, %p132
      %s135 = sadd.s32 %s134, 1
      %p138 = scmp.eq.s32.totalorder %s16, 1
      %p139 = scmp.ne.s32.totalorder %s134, %s136
      %p140 = scmp.eq.s32.totalorder %s16, 0
      %p141 = por %p139, %p140
      %p142 = scmp.ne.s32.totalorder %s134, %s136
      %p143 = scmp.eq.s32.totalorder %s21, 1
      %p144 = por %p142, %p143
      %p145 = scmp.ne.s32.totalorder %s136, %s137
      %p146 = scmp.eq.s32.totalorder %s21, 0
      %p147 = por %p145, %p146
      %p148 = scmp.ne.s32.totalorder %s136, %s137
      %p149 = scmp.eq.s32.totalorder %s22, 1
      %p150 = por %p148, %p149
      %p152 = scmp.ne.s32.totalorder %s137, %s151
      %p153 = scmp.eq.s32.totalorder %s22, 0
      %p154 = por %p152, %p153
      %s156 = sadd.s32 %s155, 1
      %p159 = scmp.eq.s32.totalorder %s16, 1
      %p160 = scmp.ne.s32.totalorder %s155, %s157
      %p161 = scmp.eq.s32.totalorder %s16, 0
      %p162 = por %p160, %p161
      %p163 = scmp.ne.s32.totalorder %s155, %s157
      %p164 = scmp.eq.s32.totalorder %s21, 1
      %p165 = por %p163, %p164
      %p166 = scmp.ne.s32.totalorder %s157, %s158
      %p167 = scmp.eq.s32.totalorder %s21, 0
      %p168 = por %p166, %p167
      %p169 = scmp.ne.s32.totalorder %s157, %s158
      %p170 = scmp.eq.s32.totalorder %s22, 1
      %p171 = por %p169, %p170
      %p173 = scmp.ne.s32.totalorder %s158, %s172
      %p174 = scmp.eq.s32.totalorder %s22, 0
      %p175 = por %p173, %p174
      %s177 = sadd.s32 %s176, 1
      %p180 = scmp.eq.s32.totalorder %s16, 1
      %p181 = scmp.ne.s32.totalorder %s176, %s178
      %p182 = scmp.eq.s32.totalorder %s16, 0
      %p183 = por %p181, %p182
      %p184 = scmp.ne.s32.totalorder %s176, %s178
      %p185 = scmp.eq.s32.totalorder %s21, 1
      %p186 = por %p184, %p185
      %p187 = scmp.ne.s32.totalorder %s178, %s179
      %p188 = scmp.eq.s32.totalorder %s21, 0
      %p189 = por %p187, %p188
      %p190 = scmp.ne.s32.totalorder %s178, %s179
      %p191 = scmp.eq.s32.totalorder %s22, 1
      %p192 = por %p190, %p191
      %p194 = scmp.ne.s32.totalorder %s179, %s193
      %p195 = scmp.eq.s32.totalorder %s22, 0
      %p196 = por %p194, %p195
      %s197 = ssub.s32 %s16, %s23
      %p198 = scmp.eq.s32.totalorder %s197, 0
      %s200 = sadd.s32 %s199, 1
      %s201 = scalar_select %p198, %s199, %s200
      %p204 = pneg %p198
      %p205 = scmp.eq.s32.totalorder %s16, 1
      %p206 = por %p204, %p205
      %p207 = scmp.ne.s32.totalorder %s199, %s202
      %p208 = scmp.eq.s32.totalorder %s16, 0
      %p209 = por %p207, %p208
      %p210 = scmp.ne.s32.totalorder %s199, %s202
      %p211 = scmp.eq.s32.totalorder %s21, 1
      %p212 = por %p210, %p211
      %p213 = scmp.ne.s32.totalorder %s202, %s203
      %p214 = scmp.eq.s32.totalorder %s21, 0
      %p215 = por %p213, %p214
      %p216 = scmp.ne.s32.totalorder %s202, %s203
      %p217 = scmp.eq.s32.totalorder %s22, 1
      %p218 = por %p216, %p217
      %p220 = scmp.ne.s32.totalorder %s203, %s219
      %p221 = scmp.eq.s32.totalorder %s22, 0
      %p222 = por %p220, %p221
      %p223 = scmp.le.s32.totalorder 1, %s16
      %p224 = scmp.lt.s32.totalorder %s16, 3
      %p225 = pnand %p223, %p224
      %p226 = pneg %p225
      // Predicated region
      $region9: #{brain_tumor_classifier.27} parent=5 // pred_check
        _
      $region10: #{brain_tumor_classifier.27} parent=5 // pred_check_branch
        %228 = sbr.rel (%p225) target = $region12
      $region11: #{brain_tumor_classifier.27} parent=5 // pred_region
        %s229 = ssub.s32 %s16, 1
        // Predicated region
        $region13: #{brain_tumor_classifier.27} parent=11 // pred_check
          %p230 = pneg %p63
        $region14: #{brain_tumor_classifier.27} parent=11 // pred_check_branch
          %232 = sbr.rel (%p230) target = $region16
        $region15: #{brain_tumor_classifier.27} parent=11 // pred_region
          _
        $region16: #{brain_tumor_classifier.27} parent=11 // pred_fallthru
          _
        // Predicated region
        $region17: #{brain_tumor_classifier.27} parent=11 // pred_check
          %p233 = pneg %p84
        $region18: #{brain_tumor_classifier.27} parent=11 // pred_check_branch
          %235 = sbr.rel (%p233) target = $region20
        $region19: #{brain_tumor_classifier.27} parent=11 // pred_region
          _
        $region20: #{brain_tumor_classifier.27} parent=11 // pred_fallthru
          _
        // Predicated region
        $region21: #{brain_tumor_classifier.27} parent=11 // pred_check
          %p236 = pneg %p105
        $region22: #{brain_tumor_classifier.27} parent=11 // pred_check_branch
          %238 = sbr.rel (%p236) target = $region24
        $region23: #{brain_tumor_classifier.27} parent=11 // pred_region
          %240 = vsyncadd [#allocation5], 0
          %s241 = sshll.u32 %s3, 4
          %s242 = int_to_ptr.hbm [resolvable:$true] %s241
          %s243 = sshll.u32 [#allocation4], 4
          %s244 = int_to_ptr.vmem [resolvable:$true] %s243
          %249 = dma.hbm_to_vmem [thread:$0]  %s242, 27648, %s244, [#allocation5], 576, 576, 36
        $region24: #{brain_tumor_classifier.27} parent=11 // pred_fallthru
          _
        // Predicated region
        $region25: #{brain_tumor_classifier.27} parent=11 // pred_check
          %p250 = pneg %p126
        $region26: #{brain_tumor_classifier.27} parent=11 // pred_check_branch
          %252 = sbr.rel (%p250) target = $region28
        $region27: #{brain_tumor_classifier.27} parent=11 // pred_region
          _
        $region28: #{brain_tumor_classifier.27} parent=11 // pred_fallthru
          _
        // Predicated region
        $region29: #{brain_tumor_classifier.27} parent=11 // pred_check
          %p253 = pneg %p147
        $region30: #{brain_tumor_classifier.27} parent=11 // pred_check_branch
          %255 = sbr.rel (%p253) target = $region32
        $region31: #{brain_tumor_classifier.27} parent=11 // pred_region
          %257 = vsyncadd [#allocation7], 0
          %s258 = sshll.u32 %s5, 4
          %s259 = int_to_ptr.hbm [resolvable:$true] %s258
          %s260 = sshll.u32 [#allocation6], 4
          %s261 = int_to_ptr.vmem [resolvable:$true] %s260
          %266 = dma.hbm_to_vmem [thread:$0]  %s259, 9216, %s261, [#allocation7], 192, 192, 12
        $region32: #{brain_tumor_classifier.27} parent=11 // pred_fallthru
          _
        // Predicated region
        $region33: #{brain_tumor_classifier.27} parent=11 // pred_check
          %p267 = pneg %p168
        $region34: #{brain_tumor_classifier.27} parent=11 // pred_check_branch
          %269 = sbr.rel (%p267) target = $region36
        $region35: #{brain_tumor_classifier.27} parent=11 // pred_region
          _
        $region36: #{brain_tumor_classifier.27} parent=11 // pred_fallthru
          _
        // Predicated region
        $region37: #{brain_tumor_classifier.27} parent=11 // pred_check
          %p270 = pneg %p189
        $region38: #{brain_tumor_classifier.27} parent=11 // pred_check_branch
          %272 = sbr.rel (%p270) target = $region40
        $region39: #{brain_tumor_classifier.27} parent=11 // pred_region
          _
        $region40: #{brain_tumor_classifier.27} parent=11 // pred_fallthru
          _
      $region12: #{brain_tumor_classifier.27} parent=5 // pred_fallthru
        _
      %p273 = scmp.lt.s32.totalorder %s16, 2
      // Predicated region
      $region41: #{brain_tumor_classifier.27} parent=5 // pred_check
        %p274 = pneg %p273
      $region42: #{brain_tumor_classifier.27} parent=5 // pred_check_branch
        %276 = sbr.rel (%p274) target = $region44
      $region43: #{brain_tumor_classifier.27} parent=5 // pred_region
        // Predicated region
        $region45: #{brain_tumor_classifier.27} parent=43 // pred_check
          %p277 = pneg %p36
        $region46: #{brain_tumor_classifier.27} parent=43 // pred_check_branch
          %279 = sbr.rel (%p277) target = $region48
        $region47: #{brain_tumor_classifier.27} parent=43 // pred_region
          %p280 = scmp.lt.s32.totalorder %s16, 1
          %s281 = scalar_select %p280, %s16, 1
          %s282 = smul.addr %s281, 3
          %s283 = smul.addr %s282, 4
          %s284 = scalar_lea.vmem %s0, %s283
        $region48: #{brain_tumor_classifier.27} parent=43 // pred_fallthru
          _
      $region44: #{brain_tumor_classifier.27} parent=5 // pred_fallthru
        _
      %p285 = scmp.le.s32.totalorder 1, %s16
      %p286 = scmp.lt.s32.totalorder %s16, 3
      %p287 = pnand %p285, %p286
      %p288 = pneg %p287
      // Predicated region
      $region49: #{brain_tumor_classifier.27} parent=5 // pred_check
        _
      $region50: #{brain_tumor_classifier.27} parent=5 // pred_check_branch
        %290 = sbr.rel (%p287) target = $region52
      $region51: #{brain_tumor_classifier.27} parent=5 // pred_region
        %s291 = ssub.s32 %s16, 1
        // Predicated region
        $region53: #{brain_tumor_classifier.27} parent=51 // pred_check
          %p292 = pneg %p105
        $region54: #{brain_tumor_classifier.27} parent=51 // pred_check_branch
          %294 = sbr.rel (%p292) target = $region56
        $region55: #{brain_tumor_classifier.27} parent=51 // pred_region
          %296 = dma.done [#allocation5], 27648
        $region56: #{brain_tumor_classifier.27} parent=51 // pred_fallthru
          _
        // Predicated region
        $region57: #{brain_tumor_classifier.27} parent=51 // pred_check
          %p297 = pneg %p147
        $region58: #{brain_tumor_classifier.27} parent=51 // pred_check_branch
          %299 = sbr.rel (%p297) target = $region60
        $region59: #{brain_tumor_classifier.27} parent=51 // pred_region
          %301 = dma.done [#allocation7], 9216
        $region60: #{brain_tumor_classifier.27} parent=51 // pred_fallthru
          _
        %p302 = scmp.lt.s32.totalorder %s21, 1
        %s303 = scalar_select %p302, %s21, 1
        %s304 = smul.addr %s303, 3
        %s305 = smul.addr %s304, 4
        %s306 = scalar_lea.vmem %s0, %s305
        %p307 = pneg %p42
        %p308 = pneg %p39
        %p309 = pneg %p63
        %p310 = pneg %p60
        %p311 = pneg %p84
        %p312 = pneg %p81
        %p313 = pneg %p105
        %p314 = pneg %p102
        %p315 = pneg %p126
        %p316 = pneg %p123
        %p317 = pneg %p147
        %p318 = pneg %p144
        %p319 = pneg %p168
        %p320 = pneg %p165
        %p321 = pneg %p189
        %p322 = pneg %p186
        %p323 = pneg %p215
        %p324 = pneg %p212
        %p325 = scmp.lt.s32.totalorder %s21, 1
        %s326 = scalar_select %p325, %s21, 1
        %s327 = smul.addr %s326, 3
        %s328 = smul.addr %s327, 4
        %s329 = scalar_lea.vmem %s8, %s328
        %p330 = scmp.lt.s32.totalorder %s21, 1
        %s331 = scalar_select %p330, %s21, 1
        %s332 = smul.addr %s331, 3
        %s333 = smul.addr %s332, 4
        %s334 = scalar_lea.vmem %s0, %s333
        %p335 = scmp.lt.s32.totalorder %s21, 1
        %s336 = scalar_select %p335, %s21, 1
        %s337 = smul.addr %s336, 3
        %s338 = smul.addr %s337, 4
        %s339 = scalar_lea.vmem %s8, %s338
        %v341 = vld [vmem:[%s334] sm:$0x77]
        %v342 = vld [vmem:[%s334 + $0x8] sm:$0x7]
        %v343 = vunpack.c.l.bf16 %v341
        %v344 = vunpack.c.h.bf16 %v341
        %v345 = vunpack.c.l.bf16 %v342
        %vm346 = vcmask 1044480
        %v347 = vsel %vm346, %v343, 0.0
        %v348 = vsel %vm346, %v344, 0.0
        %v349 = vadd.f32 %v347, %v348
        %v350 = vsel %vm346, %v345, 0.0
        %v351 = vadd.f32 %v349, %v350
        %352 = vadd.xlane.f32.xlu0 %v351
        %v353 = vpop.xlane.xlu0 %352
        %v354 = vrcp.pop 384.0
        %v355 = vmul.f32 384.0, %v354
        %v356 = vsub.f32 1.0, %v355
        %v357 = vmul.f32 %v354, %v356
        %v358 = vadd.f32 %v354, %v357
        %vm359 = vweird.f32 %v354
        %v360 = vsel %vm359, %v354, %v358
        %v361 = vmul.f32 %v353, %v360
        %v362 = vsub.f32 %v343, %v361
        %v363 = vsub.f32 %v344, %v361
        %v364 = vsub.f32 %v345, %v361
        %v365 = vmul.f32 %v362, %v362
        %v366 = vmul.f32 %v363, %v363
        %v367 = vmul.f32 %v364, %v364
        %v368 = vsel %vm346, %v365, 0.0
        %v369 = vsel %vm346, %v366, 0.0
        %v370 = vadd.f32 %v368, %v369
        %v371 = vsel %vm346, %v367, 0.0
        %v372 = vadd.f32 %v370, %v371
        %373 = vadd.xlane.f32.xlu0 %v372
        %v374 = vpop.xlane.xlu0 %373
        %v375 = vmul.f32 %v374, %v360
        %v376 = vadd.f32 %v375, 1e-06
        %v377 = vrsqrt.pop %v376
        %v378 = vmul.f32 %v377, %v376
        %v379 = vmul.f32 %v378, %v377
        %v380 = vmul.f32 0.5, %v379
        %v381 = vsub.f32 1.5, %v380
        %v382 = vmul.f32 %v377, %v381
        %vm383 = vweird.f32 %v376
        %vm384 = vweird.f32 %v377
        %vm385 = vmor %vm383, %vm384
        %v386 = vsel %vm385, %v377, %v382
        %v387 = vmul.f32 %v362, %v386
        %v388 = vmul.f32 %v363, %v386
        %v389 = vmul.f32 %v364, %v386
        %v390 = vld [vmem:[%s1] sm:$0x7]
        %v392 = vperm.slane %v390, 0
        %v393 = vperm.slane %v390, 1
        %v394 = vperm.slane %v390, 2
        %v398 = vmul.f32 %v387, %v392
        %v399 = vmul.f32 %v388, %v393
        %v400 = vmul.f32 %v389, %v394
        %v401 = vld [vmem:[%s2] sm:$0x7]
        %v403 = vperm.slane %v401, 0
        %v404 = vperm.slane %v401, 1
        %v405 = vperm.slane %v401, 2
        %v409 = vadd.f32 %v398, %v403
        %v410 = vadd.f32 %v399, %v404
        %v411 = vadd.f32 %v400, %v405
        %v412 = vpack.c.bf16 %v409, %v409
        %v413 = vpack.c.bf16 %v410, %v410
        %v414 = vpack.c.bf16 %v411, %v411
        %v415 = vld [vmem:[#allocation4] sm:$0xff]
        %v416 = vld [vmem:[#allocation4 + $0x8] sm:$0xff]
        %v417 = vld [vmem:[#allocation4 + $0x10] sm:$0xff]
        %v418 = vld [vmem:[#allocation4 + $0x18] sm:$0xff]
        %v419 = vld [vmem:[#allocation4 + $0x20] sm:$0xf]
        %v420 = vld [vmem:[#allocation4 + $0x24] sm:$0xff]
        %v421 = vld [vmem:[#allocation4 + $0x2c] sm:$0xff]
        %v422 = vld [vmem:[#allocation4 + $0x34] sm:$0xff]
        %v423 = vld [vmem:[#allocation4 + $0x3c] sm:$0xff]
        %v424 = vld [vmem:[#allocation4 + $0x44] sm:$0xf]
        %v425 = vld [vmem:[#allocation4 + $0x48] sm:$0xff]
        %v426 = vld [vmem:[#allocation4 + $0x50] sm:$0xff]
        %v427 = vld [vmem:[#allocation4 + $0x58] sm:$0xff]
        %v428 = vld [vmem:[#allocation4 + $0x60] sm:$0xff]
        %v429 = vld [vmem:[#allocation4 + $0x68] sm:$0xf]
        %v430 = vld [vmem:[#allocation4 + $0x6c] sm:$0xff]
        %v431 = vld [vmem:[#allocation4 + $0x74] sm:$0xff]
        %v432 = vld [vmem:[#allocation4 + $0x7c] sm:$0xff]
        %v433 = vld [vmem:[#allocation4 + $0x84] sm:$0xff]
        %v434 = vld [vmem:[#allocation4 + $0x8c] sm:$0xf]
        %v435 = vld [vmem:[#allocation4 + $0x90] sm:$0xff]
        %v436 = vld [vmem:[#allocation4 + $0x98] sm:$0xff]
        %v437 = vld [vmem:[#allocation4 + $0xa0] sm:$0xff]
        %v438 = vld [vmem:[#allocation4 + $0xa8] sm:$0xff]
        %v439 = vld [vmem:[#allocation4 + $0xb0] sm:$0xf]
        %v440 = vld [vmem:[#allocation4 + $0xb4] sm:$0xff]
        %v441 = vld [vmem:[#allocation4 + $0xbc] sm:$0xff]
        %v442 = vld [vmem:[#allocation4 + $0xc4] sm:$0xff]
        %v443 = vld [vmem:[#allocation4 + $0xcc] sm:$0xff]
        %v444 = vld [vmem:[#allocation4 + $0xd4] sm:$0xf]
        %v445 = vld [vmem:[#allocation4 + $0xd8] sm:$0xff]
        %v446 = vld [vmem:[#allocation4 + $0xe0] sm:$0xff]
        %v447 = vld [vmem:[#allocation4 + $0xe8] sm:$0xff]
        %v448 = vld [vmem:[#allocation4 + $0xf0] sm:$0xff]
        %v449 = vld [vmem:[#allocation4 + $0xf8] sm:$0xf]
        %v450 = vld [vmem:[#allocation4 + $0xfc] sm:$0xff]
        %v451 = vld [vmem:[#allocation4 + $0x104] sm:$0xff]
        %v452 = vld [vmem:[#allocation4 + $0x10c] sm:$0xff]
        %v453 = vld [vmem:[#allocation4 + $0x114] sm:$0xff]
        %v454 = vld [vmem:[#allocation4 + $0x11c] sm:$0xf]
        %v455 = vld [vmem:[#allocation4 + $0x120] sm:$0xff]
        %v456 = vld [vmem:[#allocation4 + $0x128] sm:$0xff]
        %v457 = vld [vmem:[#allocation4 + $0x130] sm:$0xff]
        %v458 = vld [vmem:[#allocation4 + $0x138] sm:$0xff]
        %v459 = vld [vmem:[#allocation4 + $0x140] sm:$0xf]
        %v460 = vld [vmem:[#allocation4 + $0x144] sm:$0xff]
        %v461 = vld [vmem:[#allocation4 + $0x14c] sm:$0xff]
        %v462 = vld [vmem:[#allocation4 + $0x154] sm:$0xff]
        %v463 = vld [vmem:[#allocation4 + $0x15c] sm:$0xff]
        %v464 = vld [vmem:[#allocation4 + $0x164] sm:$0xf]
        %v465 = vld [vmem:[#allocation4 + $0x168] sm:$0xff]
        %v466 = vld [vmem:[#allocation4 + $0x170] sm:$0xff]
        %v467 = vld [vmem:[#allocation4 + $0x178] sm:$0xff]
        %v468 = vld [vmem:[#allocation4 + $0x180] sm:$0xff]
        %v469 = vld [vmem:[#allocation4 + $0x188] sm:$0xf]
        %v470 = vld [vmem:[#allocation4 + $0x18c] sm:$0xff]
        %v471 = vld [vmem:[#allocation4 + $0x194] sm:$0xff]
        %v472 = vld [vmem:[#allocation4 + $0x19c] sm:$0xff]
        %v473 = vld [vmem:[#allocation4 + $0x1a4] sm:$0xff]
        %v474 = vld [vmem:[#allocation4 + $0x1ac] sm:$0xf]
        %v475 = vld [vmem:[#allocation4 + $0x1b0] sm:$0xff]
        %v476 = vld [vmem:[#allocation4 + $0x1b8] sm:$0xff]
        %v477 = vld [vmem:[#allocation4 + $0x1c0] sm:$0xff]
        %v478 = vld [vmem:[#allocation4 + $0x1c8] sm:$0xff]
        %v479 = vld [vmem:[#allocation4 + $0x1d0] sm:$0xf]
        %v480 = vld [vmem:[#allocation4 + $0x1d4] sm:$0xff]
        %v481 = vld [vmem:[#allocation4 + $0x1dc] sm:$0xff]
        %v482 = vld [vmem:[#allocation4 + $0x1e4] sm:$0xff]
        %v483 = vld [vmem:[#allocation4 + $0x1ec] sm:$0xff]
        %v484 = vld [vmem:[#allocation4 + $0x1f4] sm:$0xf]
        %v485 = vld [vmem:[#allocation4 + $0x1f8] sm:$0xff]
        %v486 = vld [vmem:[#allocation4 + $0x200] sm:$0xff]
        %v487 = vld [vmem:[#allocation4 + $0x208] sm:$0xff]
        %v488 = vld [vmem:[#allocation4 + $0x210] sm:$0xff]
        %v489 = vld [vmem:[#allocation4 + $0x218] sm:$0xf]
        %v490 = vld [vmem:[#allocation4 + $0x21c] sm:$0xff]
        %v491 = vld [vmem:[#allocation4 + $0x224] sm:$0xff]
        %v492 = vld [vmem:[#allocation4 + $0x22c] sm:$0xff]
        %v493 = vld [vmem:[#allocation4 + $0x234] sm:$0xff]
        %v494 = vld [vmem:[#allocation4 + $0x23c] sm:$0xf]
        %v495 = vld [vmem:[#allocation4 + $0x240] sm:$0xff]
        %v496 = vld [vmem:[#allocation4 + $0x248] sm:$0xff]
        %v497 = vld [vmem:[#allocation4 + $0x250] sm:$0xff]
        %v498 = vld [vmem:[#allocation4 + $0x258] sm:$0xff]
        %v499 = vld [vmem:[#allocation4 + $0x260] sm:$0xf]
        %v500 = vld [vmem:[#allocation4 + $0x264] sm:$0xff]
        %v501 = vld [vmem:[#allocation4 + $0x26c] sm:$0xff]
        %v502 = vld [vmem:[#allocation4 + $0x274] sm:$0xff]
        %v503 = vld [vmem:[#allocation4 + $0x27c] sm:$0xff]
        %v504 = vld [vmem:[#allocation4 + $0x284] sm:$0xf]
        %v505 = vld [vmem:[#allocation4 + $0x288] sm:$0xff]
        %v506 = vld [vmem:[#allocation4 + $0x290] sm:$0xff]
        %v507 = vld [vmem:[#allocation4 + $0x298] sm:$0xff]
        %v508 = vld [vmem:[#allocation4 + $0x2a0] sm:$0xff]
        %v509 = vld [vmem:[#allocation4 + $0x2a8] sm:$0xf]
        %v510 = vld [vmem:[#allocation4 + $0x2ac] sm:$0xff]
        %v511 = vld [vmem:[#allocation4 + $0x2b4] sm:$0xff]
        %v512 = vld [vmem:[#allocation4 + $0x2bc] sm:$0xff]
        %v513 = vld [vmem:[#allocation4 + $0x2c4] sm:$0xff]
        %v514 = vld [vmem:[#allocation4 + $0x2cc] sm:$0xf]
        %v515 = vld [vmem:[#allocation4 + $0x2d0] sm:$0xff]
        %v516 = vld [vmem:[#allocation4 + $0x2d8] sm:$0xff]
        %v517 = vld [vmem:[#allocation4 + $0x2e0] sm:$0xff]
        %v518 = vld [vmem:[#allocation4 + $0x2e8] sm:$0xff]
        %v519 = vld [vmem:[#allocation4 + $0x2f0] sm:$0xf]
        %v520 = vld [vmem:[#allocation4 + $0x2f4] sm:$0xff]
        %v521 = vld [vmem:[#allocation4 + $0x2fc] sm:$0xff]
        %v522 = vld [vmem:[#allocation4 + $0x304] sm:$0xff]
        %v523 = vld [vmem:[#allocation4 + $0x30c] sm:$0xff]
        %v524 = vld [vmem:[#allocation4 + $0x314] sm:$0xf]
        %v525 = vld [vmem:[#allocation4 + $0x318] sm:$0xff]
        %v526 = vld [vmem:[#allocation4 + $0x320] sm:$0xff]
        %v527 = vld [vmem:[#allocation4 + $0x328] sm:$0xff]
        %v528 = vld [vmem:[#allocation4 + $0x330] sm:$0xff]
        %v529 = vld [vmem:[#allocation4 + $0x338] sm:$0xf]
        %v530 = vld [vmem:[#allocation4 + $0x33c] sm:$0xff]
        %v531 = vld [vmem:[#allocation4 + $0x344] sm:$0xff]
        %v532 = vld [vmem:[#allocation4 + $0x34c] sm:$0xff]
        %v533 = vld [vmem:[#allocation4 + $0x354] sm:$0xff]
        %v534 = vld [vmem:[#allocation4 + $0x35c] sm:$0xf]
        %v535 = vld [vmem:[#allocation4 + $0x360] sm:$0xff]
        %v536 = vld [vmem:[#allocation4 + $0x368] sm:$0xff]
        %v537 = vld [vmem:[#allocation4 + $0x370] sm:$0xff]
        %v538 = vld [vmem:[#allocation4 + $0x378] sm:$0xff]
        %v539 = vld [vmem:[#allocation4 + $0x380] sm:$0xf]
        %v540 = vld [vmem:[#allocation4 + $0x384] sm:$0xff]
        %v541 = vld [vmem:[#allocation4 + $0x38c] sm:$0xff]
        %v542 = vld [vmem:[#allocation4 + $0x394] sm:$0xff]
        %v543 = vld [vmem:[#allocation4 + $0x39c] sm:$0xff]
        %v544 = vld [vmem:[#allocation4 + $0x3a4] sm:$0xf]
        %v545 = vld [vmem:[#allocation4 + $0x3a8] sm:$0xff]
        %v546 = vld [vmem:[#allocation4 + $0x3b0] sm:$0xff]
        %v547 = vld [vmem:[#allocation4 + $0x3b8] sm:$0xff]
        %v548 = vld [vmem:[#allocation4 + $0x3c0] sm:$0xff]
        %v549 = vld [vmem:[#allocation4 + $0x3c8] sm:$0xf]
        %v550 = vld [vmem:[#allocation4 + $0x3cc] sm:$0xff]
        %v551 = vld [vmem:[#allocation4 + $0x3d4] sm:$0xff]
        %v552 = vld [vmem:[#allocation4 + $0x3dc] sm:$0xff]
        %v553 = vld [vmem:[#allocation4 + $0x3e4] sm:$0xff]
        %v554 = vld [vmem:[#allocation4 + $0x3ec] sm:$0xf]
        %v555 = vld [vmem:[#allocation4 + $0x3f0] sm:$0xff]
        %v556 = vld [vmem:[#allocation4 + $0x3f8] sm:$0xff]
        %v557 = vld [vmem:[#allocation4 + $0x400] sm:$0xff]
        %v558 = vld [vmem:[#allocation4 + $0x408] sm:$0xff]
        %v559 = vld [vmem:[#allocation4 + $0x410] sm:$0xf]
        %v560 = vld [vmem:[#allocation4 + $0x414] sm:$0xff]
        %v561 = vld [vmem:[#allocation4 + $0x41c] sm:$0xff]
        %v562 = vld [vmem:[#allocation4 + $0x424] sm:$0xff]
        %v563 = vld [vmem:[#allocation4 + $0x42c] sm:$0xff]
        %v564 = vld [vmem:[#allocation4 + $0x434] sm:$0xf]
        %v565 = vld [vmem:[#allocation4 + $0x438] sm:$0xff]
        %v566 = vld [vmem:[#allocation4 + $0x440] sm:$0xff]
        %v567 = vld [vmem:[#allocation4 + $0x448] sm:$0xff]
        %v568 = vld [vmem:[#allocation4 + $0x450] sm:$0xff]
        %v569 = vld [vmem:[#allocation4 + $0x458] sm:$0xf]
        %v570 = vld [vmem:[#allocation4 + $0x45c] sm:$0xff]
        %v571 = vld [vmem:[#allocation4 + $0x464] sm:$0xff]
        %v572 = vld [vmem:[#allocation4 + $0x46c] sm:$0xff]
        %v573 = vld [vmem:[#allocation4 + $0x474] sm:$0xff]
        %v574 = vld [vmem:[#allocation4 + $0x47c] sm:$0xf]
        %v575 = vld [vmem:[#allocation4 + $0x480] sm:$0xff]
        %v576 = vld [vmem:[#allocation4 + $0x488] sm:$0xff]
        %v577 = vld [vmem:[#allocation4 + $0x490] sm:$0xff]
        %v578 = vld [vmem:[#allocation4 + $0x498] sm:$0xff]
        %v579 = vld [vmem:[#allocation4 + $0x4a0] sm:$0xf]
        %v580 = vld [vmem:[#allocation4 + $0x4a4] sm:$0xff]
        %v581 = vld [vmem:[#allocation4 + $0x4ac] sm:$0xff]
        %v582 = vld [vmem:[#allocation4 + $0x4b4] sm:$0xff]
        %v583 = vld [vmem:[#allocation4 + $0x4bc] sm:$0xff]
        %v584 = vld [vmem:[#allocation4 + $0x4c4] sm:$0xf]
        %v585 = vld [vmem:[#allocation4 + $0x4c8] sm:$0xff]
        %v586 = vld [vmem:[#allocation4 + $0x4d0] sm:$0xff]
        %v587 = vld [vmem:[#allocation4 + $0x4d8] sm:$0xff]
        %v588 = vld [vmem:[#allocation4 + $0x4e0] sm:$0xff]
        %v589 = vld [vmem:[#allocation4 + $0x4e8] sm:$0xf]
        %v590 = vld [vmem:[#allocation4 + $0x4ec] sm:$0xff]
        %v591 = vld [vmem:[#allocation4 + $0x4f4] sm:$0xff]
        %v592 = vld [vmem:[#allocation4 + $0x4fc] sm:$0xff]
        %v593 = vld [vmem:[#allocation4 + $0x504] sm:$0xff]
        %v594 = vld [vmem:[#allocation4 + $0x50c] sm:$0xf]
        %v595 = vld [vmem:[#allocation4 + $0x510] sm:$0xff]
        %v596 = vld [vmem:[#allocation4 + $0x518] sm:$0xff]
        %v597 = vld [vmem:[#allocation4 + $0x520] sm:$0xff]
        %v598 = vld [vmem:[#allocation4 + $0x528] sm:$0xff]
        %v599 = vld [vmem:[#allocation4 + $0x530] sm:$0xf]
        %v600 = vld [vmem:[#allocation4 + $0x534] sm:$0xff]
        %v601 = vld [vmem:[#allocation4 + $0x53c] sm:$0xff]
        %v602 = vld [vmem:[#allocation4 + $0x544] sm:$0xff]
        %v603 = vld [vmem:[#allocation4 + $0x54c] sm:$0xff]
        %v604 = vld [vmem:[#allocation4 + $0x554] sm:$0xf]
        %v605 = vld [vmem:[#allocation4 + $0x558] sm:$0xff]
        %v606 = vld [vmem:[#allocation4 + $0x560] sm:$0xff]
        %v607 = vld [vmem:[#allocation4 + $0x568] sm:$0xff]
        %v608 = vld [vmem:[#allocation4 + $0x570] sm:$0xff]
        %v609 = vld [vmem:[#allocation4 + $0x578] sm:$0xf]
        %v610 = vld [vmem:[#allocation4 + $0x57c] sm:$0xff]
        %v611 = vld [vmem:[#allocation4 + $0x584] sm:$0xff]
        %v612 = vld [vmem:[#allocation4 + $0x58c] sm:$0xff]
        %v613 = vld [vmem:[#allocation4 + $0x594] sm:$0xff]
        %v614 = vld [vmem:[#allocation4 + $0x59c] sm:$0xf]
        %v615 = vld [vmem:[#allocation4 + $0x5a0] sm:$0xff]
        %v616 = vld [vmem:[#allocation4 + $0x5a8] sm:$0xff]
        %v617 = vld [vmem:[#allocation4 + $0x5b0] sm:$0xff]
        %v618 = vld [vmem:[#allocation4 + $0x5b8] sm:$0xff]
        %v619 = vld [vmem:[#allocation4 + $0x5c0] sm:$0xf]
        %v620 = vld [vmem:[#allocation4 + $0x5c4] sm:$0xff]
        %v621 = vld [vmem:[#allocation4 + $0x5cc] sm:$0xff]
        %v622 = vld [vmem:[#allocation4 + $0x5d4] sm:$0xff]
        %v623 = vld [vmem:[#allocation4 + $0x5dc] sm:$0xff]
        %v624 = vld [vmem:[#allocation4 + $0x5e4] sm:$0xf]
        %v625 = vld [vmem:[#allocation4 + $0x5e8] sm:$0xff]
        %v626 = vld [vmem:[#allocation4 + $0x5f0] sm:$0xff]
        %v627 = vld [vmem:[#allocation4 + $0x5f8] sm:$0xff]
        %v628 = vld [vmem:[#allocation4 + $0x600] sm:$0xff]
        %v629 = vld [vmem:[#allocation4 + $0x608] sm:$0xf]
        %v630 = vld [vmem:[#allocation4 + $0x60c] sm:$0xff]
        %v631 = vld [vmem:[#allocation4 + $0x614] sm:$0xff]
        %v632 = vld [vmem:[#allocation4 + $0x61c] sm:$0xff]
        %v633 = vld [vmem:[#allocation4 + $0x624] sm:$0xff]
        %v634 = vld [vmem:[#allocation4 + $0x62c] sm:$0xf]
        %v635 = vld [vmem:[#allocation4 + $0x630] sm:$0xff]
        %v636 = vld [vmem:[#allocation4 + $0x638] sm:$0xff]
        %v637 = vld [vmem:[#allocation4 + $0x640] sm:$0xff]
        %v638 = vld [vmem:[#allocation4 + $0x648] sm:$0xff]
        %v639 = vld [vmem:[#allocation4 + $0x650] sm:$0xf]
        %v640 = vld [vmem:[#allocation4 + $0x654] sm:$0xff]
        %v641 = vld [vmem:[#allocation4 + $0x65c] sm:$0xff]
        %v642 = vld [vmem:[#allocation4 + $0x664] sm:$0xff]
        %v643 = vld [vmem:[#allocation4 + $0x66c] sm:$0xff]
        %v644 = vld [vmem:[#allocation4 + $0x674] sm:$0xf]
        %v645 = vld [vmem:[#allocation4 + $0x678] sm:$0xff]
        %v646 = vld [vmem:[#allocation4 + $0x680] sm:$0xff]
        %v647 = vld [vmem:[#allocation4 + $0x688] sm:$0xff]
        %v648 = vld [vmem:[#allocation4 + $0x690] sm:$0xff]
        %v649 = vld [vmem:[#allocation4 + $0x698] sm:$0xf]
        %v650 = vld [vmem:[#allocation4 + $0x69c] sm:$0xff]
        %v651 = vld [vmem:[#allocation4 + $0x6a4] sm:$0xff]
        %v652 = vld [vmem:[#allocation4 + $0x6ac] sm:$0xff]
        %v653 = vld [vmem:[#allocation4 + $0x6b4] sm:$0xff]
        %v654 = vld [vmem:[#allocation4 + $0x6bc] sm:$0xf]
        %v655 = vld [vmem:[%s4] sm:$0xff]
        %v656 = vld [vmem:[%s4 + $0x8] sm:$0x1]
        %v659 = vperm.slane %v655, 0
        %v660 = vperm.slane %v655, 1
        %v661 = vperm.slane %v655, 2
        %v662 = vperm.slane %v655, 3
        %v663 = vperm.slane %v655, 4
        %v664 = vperm.slane %v655, 5
        %v665 = vperm.slane %v655, 6
        %v666 = vperm.slane %v655, 7
        %v667 = vperm.slane %v656, 0
        %v917 = vunpack.c.l.b16 %v415
        %v918 = vunpack.c.h.b16 %v415
        %v919 = vunpack.c.l.b16 %v416
        %v920 = vunpack.c.h.b16 %v416
        %v921 = vunpack.c.l.b16 %v417
        %v922 = vunpack.c.h.b16 %v417
        %v923 = vunpack.c.l.b16 %v418
        %v924 = vunpack.c.h.b16 %v418
        %v925 = vunpack.c.l.b16 %v419
        %v926 = vunpack.c.l.b16 %v420
        %v927 = vunpack.c.h.b16 %v420
        %v928 = vunpack.c.l.b16 %v421
        %v929 = vunpack.c.h.b16 %v421
        %v930 = vunpack.c.l.b16 %v422
        %v931 = vunpack.c.h.b16 %v422
        %v932 = vunpack.c.l.b16 %v423
        %v933 = vunpack.c.h.b16 %v423
        %v934 = vunpack.c.l.b16 %v424
        %v935 = vunpack.c.l.b16 %v425
        %v936 = vunpack.c.h.b16 %v425
        %v937 = vunpack.c.l.b16 %v426
        %v938 = vunpack.c.h.b16 %v426
        %v939 = vunpack.c.l.b16 %v427
        %v940 = vunpack.c.h.b16 %v427
        %v941 = vunpack.c.l.b16 %v428
        %v942 = vunpack.c.h.b16 %v428
        %v943 = vunpack.c.l.b16 %v429
        %v944 = vunpack.c.l.b16 %v430
        %v945 = vunpack.c.h.b16 %v430
        %v946 = vunpack.c.l.b16 %v431
        %v947 = vunpack.c.h.b16 %v431
        %v948 = vunpack.c.l.b16 %v432
        %v949 = vunpack.c.h.b16 %v432
        %v950 = vunpack.c.l.b16 %v433
        %v951 = vunpack.c.h.b16 %v433
        %v952 = vunpack.c.l.b16 %v434
        %v953 = vunpack.c.l.b16 %v435
        %v954 = vunpack.c.h.b16 %v435
        %v955 = vunpack.c.l.b16 %v436
        %v956 = vunpack.c.h.b16 %v436
        %v957 = vunpack.c.l.b16 %v437
        %v958 = vunpack.c.h.b16 %v437
        %v959 = vunpack.c.l.b16 %v438
        %v960 = vunpack.c.h.b16 %v438
        %v961 = vunpack.c.l.b16 %v439
        %v962 = vunpack.c.l.b16 %v440
        %v963 = vunpack.c.h.b16 %v440
        %v964 = vunpack.c.l.b16 %v441
        %v965 = vunpack.c.h.b16 %v441
        %v966 = vunpack.c.l.b16 %v442
        %v967 = vunpack.c.h.b16 %v442
        %v968 = vunpack.c.l.b16 %v443
        %v969 = vunpack.c.h.b16 %v443
        %v970 = vunpack.c.l.b16 %v444
        %v971 = vunpack.c.l.b16 %v445
        %v972 = vunpack.c.h.b16 %v445
        %v973 = vunpack.c.l.b16 %v446
        %v974 = vunpack.c.h.b16 %v446
        %v975 = vunpack.c.l.b16 %v447
        %v976 = vunpack.c.h.b16 %v447
        %v977 = vunpack.c.l.b16 %v448
        %v978 = vunpack.c.h.b16 %v448
        %v979 = vunpack.c.l.b16 %v449
        %v980 = vunpack.c.l.b16 %v450
        %v981 = vunpack.c.h.b16 %v450
        %v982 = vunpack.c.l.b16 %v451
        %v983 = vunpack.c.h.b16 %v451
        %v984 = vunpack.c.l.b16 %v452
        %v985 = vunpack.c.h.b16 %v452
        %v986 = vunpack.c.l.b16 %v453
        %v987 = vunpack.c.h.b16 %v453
        %v988 = vunpack.c.l.b16 %v454
        %v989 = vunpack.c.l.b16 %v455
        %v990 = vunpack.c.h.b16 %v455
        %v991 = vunpack.c.l.b16 %v456
        %v992 = vunpack.c.h.b16 %v456
        %v993 = vunpack.c.l.b16 %v457
        %v994 = vunpack.c.h.b16 %v457
        %v995 = vunpack.c.l.b16 %v458
        %v996 = vunpack.c.h.b16 %v458
        %v997 = vunpack.c.l.b16 %v459
        %v998 = vunpack.c.l.b16 %v460
        %v999 = vunpack.c.h.b16 %v460
        %v1000 = vunpack.c.l.b16 %v461
        %v1001 = vunpack.c.h.b16 %v461
        %v1002 = vunpack.c.l.b16 %v462
        %v1003 = vunpack.c.h.b16 %v462
        %v1004 = vunpack.c.l.b16 %v463
        %v1005 = vunpack.c.h.b16 %v463
        %v1006 = vunpack.c.l.b16 %v464
        %v1007 = vunpack.c.l.b16 %v465
        %v1008 = vunpack.c.h.b16 %v465
        %v1009 = vunpack.c.l.b16 %v466
        %v1010 = vunpack.c.h.b16 %v466
        %v1011 = vunpack.c.l.b16 %v467
        %v1012 = vunpack.c.h.b16 %v467
        %v1013 = vunpack.c.l.b16 %v468
        %v1014 = vunpack.c.h.b16 %v468
        %v1015 = vunpack.c.l.b16 %v469
        %v1016 = vunpack.c.l.b16 %v470
        %v1017 = vunpack.c.h.b16 %v470
        %v1018 = vunpack.c.l.b16 %v471
        %v1019 = vunpack.c.h.b16 %v471
        %v1020 = vunpack.c.l.b16 %v472
        %v1021 = vunpack.c.h.b16 %v472
        %v1022 = vunpack.c.l.b16 %v473
        %v1023 = vunpack.c.h.b16 %v473
        %v1024 = vunpack.c.l.b16 %v474
        %v1025 = vunpack.c.l.b16 %v475
        %v1026 = vunpack.c.h.b16 %v475
        %v1027 = vunpack.c.l.b16 %v476
        %v1028 = vunpack.c.h.b16 %v476
        %v1029 = vunpack.c.l.b16 %v477
        %v1030 = vunpack.c.h.b16 %v477
        %v1031 = vunpack.c.l.b16 %v478
        %v1032 = vunpack.c.h.b16 %v478
        %v1033 = vunpack.c.l.b16 %v479
        %v1034 = vunpack.c.l.b16 %v480
        %v1035 = vunpack.c.h.b16 %v480
        %v1036 = vunpack.c.l.b16 %v481
        %v1037 = vunpack.c.h.b16 %v481
        %v1038 = vunpack.c.l.b16 %v482
        %v1039 = vunpack.c.h.b16 %v482
        %v1040 = vunpack.c.l.b16 %v483
        %v1041 = vunpack.c.h.b16 %v483
        %v1042 = vunpack.c.l.b16 %v484
        %v1043 = vunpack.c.l.b16 %v485
        %v1044 = vunpack.c.h.b16 %v485
        %v1045 = vunpack.c.l.b16 %v486
        %v1046 = vunpack.c.h.b16 %v486
        %v1047 = vunpack.c.l.b16 %v487
        %v1048 = vunpack.c.h.b16 %v487
        %v1049 = vunpack.c.l.b16 %v488
        %v1050 = vunpack.c.h.b16 %v488
        %v1051 = vunpack.c.l.b16 %v489
        %v1052 = vunpack.c.l.b16 %v490
        %v1053 = vunpack.c.h.b16 %v490
        %v1054 = vunpack.c.l.b16 %v491
        %v1055 = vunpack.c.h.b16 %v491
        %v1056 = vunpack.c.l.b16 %v492
        %v1057 = vunpack.c.h.b16 %v492
        %v1058 = vunpack.c.l.b16 %v493
        %v1059 = vunpack.c.h.b16 %v493
        %v1060 = vunpack.c.l.b16 %v494
        %v1061 = vunpack.c.l.b16 %v495
        %v1062 = vunpack.c.h.b16 %v495
        %v1063 = vunpack.c.l.b16 %v496
        %v1064 = vunpack.c.h.b16 %v496
        %v1065 = vunpack.c.l.b16 %v497
        %v1066 = vunpack.c.h.b16 %v497
        %v1067 = vunpack.c.l.b16 %v498
        %v1068 = vunpack.c.h.b16 %v498
        %v1069 = vunpack.c.l.b16 %v499
        %v1070 = vunpack.c.l.b16 %v500
        %v1071 = vunpack.c.h.b16 %v500
        %v1072 = vunpack.c.l.b16 %v501
        %v1073 = vunpack.c.h.b16 %v501
        %v1074 = vunpack.c.l.b16 %v502
        %v1075 = vunpack.c.h.b16 %v502
        %v1076 = vunpack.c.l.b16 %v503
        %v1077 = vunpack.c.h.b16 %v503
        %v1078 = vunpack.c.l.b16 %v504
        %v1079 = vunpack.c.l.b16 %v505
        %v1080 = vunpack.c.h.b16 %v505
        %v1081 = vunpack.c.l.b16 %v506
        %v1082 = vunpack.c.h.b16 %v506
        %v1083 = vunpack.c.l.b16 %v507
        %v1084 = vunpack.c.h.b16 %v507
        %v1085 = vunpack.c.l.b16 %v508
        %v1086 = vunpack.c.h.b16 %v508
        %v1087 = vunpack.c.l.b16 %v509
        %v1088 = vunpack.c.l.b16 %v510
        %v1089 = vunpack.c.h.b16 %v510
        %v1090 = vunpack.c.l.b16 %v511
        %v1091 = vunpack.c.h.b16 %v511
        %v1092 = vunpack.c.l.b16 %v512
        %v1093 = vunpack.c.h.b16 %v512
        %v1094 = vunpack.c.l.b16 %v513
        %v1095 = vunpack.c.h.b16 %v513
        %v1096 = vunpack.c.l.b16 %v514
        %v1097 = vunpack.c.l.b16 %v515
        %v1098 = vunpack.c.h.b16 %v515
        %v1099 = vunpack.c.l.b16 %v516
        %v1100 = vunpack.c.h.b16 %v516
        %v1101 = vunpack.c.l.b16 %v517
        %v1102 = vunpack.c.h.b16 %v517
        %v1103 = vunpack.c.l.b16 %v518
        %v1104 = vunpack.c.h.b16 %v518
        %v1105 = vunpack.c.l.b16 %v519
        %v1106 = vunpack.c.l.b16 %v520
        %v1107 = vunpack.c.h.b16 %v520
        %v1108 = vunpack.c.l.b16 %v521
        %v1109 = vunpack.c.h.b16 %v521
        %v1110 = vunpack.c.l.b16 %v522
        %v1111 = vunpack.c.h.b16 %v522
        %v1112 = vunpack.c.l.b16 %v523
        %v1113 = vunpack.c.h.b16 %v523
        %v1114 = vunpack.c.l.b16 %v524
        %v1115 = vunpack.c.l.b16 %v525
        %v1116 = vunpack.c.h.b16 %v525
        %v1117 = vunpack.c.l.b16 %v526
        %v1118 = vunpack.c.h.b16 %v526
        %v1119 = vunpack.c.l.b16 %v527
        %v1120 = vunpack.c.h.b16 %v527
        %v1121 = vunpack.c.l.b16 %v528
        %v1122 = vunpack.c.h.b16 %v528
        %v1123 = vunpack.c.l.b16 %v529
        %v1124 = vunpack.c.l.b16 %v530
        %v1125 = vunpack.c.h.b16 %v530
        %v1126 = vunpack.c.l.b16 %v531
        %v1127 = vunpack.c.h.b16 %v531
        %v1128 = vunpack.c.l.b16 %v532
        %v1129 = vunpack.c.h.b16 %v532
        %v1130 = vunpack.c.l.b16 %v533
        %v1131 = vunpack.c.h.b16 %v533
        %v1132 = vunpack.c.l.b16 %v534
        %v1133 = vunpack.c.l.b16 %v535
        %v1134 = vunpack.c.h.b16 %v535
        %v1135 = vunpack.c.l.b16 %v536
        %v1136 = vunpack.c.h.b16 %v536
        %v1137 = vunpack.c.l.b16 %v537
        %v1138 = vunpack.c.h.b16 %v537
        %v1139 = vunpack.c.l.b16 %v538
        %v1140 = vunpack.c.h.b16 %v538
        %v1141 = vunpack.c.l.b16 %v539
        %v1142 = vunpack.c.l.b16 %v540
        %v1143 = vunpack.c.h.b16 %v540
        %v1144 = vunpack.c.l.b16 %v541
        %v1145 = vunpack.c.h.b16 %v541
        %v1146 = vunpack.c.l.b16 %v542
        %v1147 = vunpack.c.h.b16 %v542
        %v1148 = vunpack.c.l.b16 %v543
        %v1149 = vunpack.c.h.b16 %v543
        %v1150 = vunpack.c.l.b16 %v544
        %v1151 = vunpack.c.l.b16 %v545
        %v1152 = vunpack.c.h.b16 %v545
        %v1153 = vunpack.c.l.b16 %v546
        %v1154 = vunpack.c.h.b16 %v546
        %v1155 = vunpack.c.l.b16 %v547
        %v1156 = vunpack.c.h.b16 %v547
        %v1157 = vunpack.c.l.b16 %v548
        %v1158 = vunpack.c.h.b16 %v548
        %v1159 = vunpack.c.l.b16 %v549
        %v1160 = vunpack.c.l.b16 %v550
        %v1161 = vunpack.c.h.b16 %v550
        %v1162 = vunpack.c.l.b16 %v551
        %v1163 = vunpack.c.h.b16 %v551
        %v1164 = vunpack.c.l.b16 %v552
        %v1165 = vunpack.c.h.b16 %v552
        %v1166 = vunpack.c.l.b16 %v553
        %v1167 = vunpack.c.h.b16 %v553
        %v1168 = vunpack.c.l.b16 %v554
        %v1169 = vunpack.c.l.b16 %v555
        %v1170 = vunpack.c.h.b16 %v555
        %v1171 = vunpack.c.l.b16 %v556
        %v1172 = vunpack.c.h.b16 %v556
        %v1173 = vunpack.c.l.b16 %v557
        %v1174 = vunpack.c.h.b16 %v557
        %v1175 = vunpack.c.l.b16 %v558
        %v1176 = vunpack.c.h.b16 %v558
        %v1177 = vunpack.c.l.b16 %v559
        %v1178 = vunpack.c.l.b16 %v560
        %v1179 = vunpack.c.h.b16 %v560
        %v1180 = vunpack.c.l.b16 %v561
        %v1181 = vunpack.c.h.b16 %v561
        %v1182 = vunpack.c.l.b16 %v562
        %v1183 = vunpack.c.h.b16 %v562
        %v1184 = vunpack.c.l.b16 %v563
        %v1185 = vunpack.c.h.b16 %v563
        %v1186 = vunpack.c.l.b16 %v564
        %v1187 = vunpack.c.l.b16 %v565
        %v1188 = vunpack.c.h.b16 %v565
        %v1189 = vunpack.c.l.b16 %v566
        %v1190 = vunpack.c.h.b16 %v566
        %v1191 = vunpack.c.l.b16 %v567
        %v1192 = vunpack.c.h.b16 %v567
        %v1193 = vunpack.c.l.b16 %v568
        %v1194 = vunpack.c.h.b16 %v568
        %v1195 = vunpack.c.l.b16 %v569
        %v1196 = vunpack.c.l.b16 %v570
        %v1197 = vunpack.c.h.b16 %v570
        %v1198 = vunpack.c.l.b16 %v571
        %v1199 = vunpack.c.h.b16 %v571
        %v1200 = vunpack.c.l.b16 %v572
        %v1201 = vunpack.c.h.b16 %v572
        %v1202 = vunpack.c.l.b16 %v573
        %v1203 = vunpack.c.h.b16 %v573
        %v1204 = vunpack.c.l.b16 %v574
        %v1205 = vunpack.c.l.b16 %v575
        %v1206 = vunpack.c.h.b16 %v575
        %v1207 = vunpack.c.l.b16 %v576
        %v1208 = vunpack.c.h.b16 %v576
        %v1209 = vunpack.c.l.b16 %v577
        %v1210 = vunpack.c.h.b16 %v577
        %v1211 = vunpack.c.l.b16 %v578
        %v1212 = vunpack.c.h.b16 %v578
        %v1213 = vunpack.c.l.b16 %v579
        %v1214 = vunpack.c.l.b16 %v580
        %v1215 = vunpack.c.h.b16 %v580
        %v1216 = vunpack.c.l.b16 %v581
        %v1217 = vunpack.c.h.b16 %v581
        %v1218 = vunpack.c.l.b16 %v582
        %v1219 = vunpack.c.h.b16 %v582
        %v1220 = vunpack.c.l.b16 %v583
        %v1221 = vunpack.c.h.b16 %v583
        %v1222 = vunpack.c.l.b16 %v584
        %v1223 = vunpack.c.l.b16 %v585
        %v1224 = vunpack.c.h.b16 %v585
        %v1225 = vunpack.c.l.b16 %v586
        %v1226 = vunpack.c.h.b16 %v586
        %v1227 = vunpack.c.l.b16 %v587
        %v1228 = vunpack.c.h.b16 %v587
        %v1229 = vunpack.c.l.b16 %v588
        %v1230 = vunpack.c.h.b16 %v588
        %v1231 = vunpack.c.l.b16 %v589
        %v1232 = vunpack.c.l.b16 %v590
        %v1233 = vunpack.c.h.b16 %v590
        %v1234 = vunpack.c.l.b16 %v591
        %v1235 = vunpack.c.h.b16 %v591
        %v1236 = vunpack.c.l.b16 %v592
        %v1237 = vunpack.c.h.b16 %v592
        %v1238 = vunpack.c.l.b16 %v593
        %v1239 = vunpack.c.h.b16 %v593
        %v1240 = vunpack.c.l.b16 %v594
        %v1241 = vunpack.c.l.b16 %v595
        %v1242 = vunpack.c.h.b16 %v595
        %v1243 = vunpack.c.l.b16 %v596
        %v1244 = vunpack.c.h.b16 %v596
        %v1245 = vunpack.c.l.b16 %v597
        %v1246 = vunpack.c.h.b16 %v597
        %v1247 = vunpack.c.l.b16 %v598
        %v1248 = vunpack.c.h.b16 %v598
        %v1249 = vunpack.c.l.b16 %v599
        %v1250 = vunpack.c.l.b16 %v600
        %v1251 = vunpack.c.h.b16 %v600
        %v1252 = vunpack.c.l.b16 %v601
        %v1253 = vunpack.c.h.b16 %v601
        %v1254 = vunpack.c.l.b16 %v602
        %v1255 = vunpack.c.h.b16 %v602
        %v1256 = vunpack.c.l.b16 %v603
        %v1257 = vunpack.c.h.b16 %v603
        %v1258 = vunpack.c.l.b16 %v604
        %v1259 = vunpack.c.l.b16 %v605
        %v1260 = vunpack.c.h.b16 %v605
        %v1261 = vunpack.c.l.b16 %v606
        %v1262 = vunpack.c.h.b16 %v606
        %v1263 = vunpack.c.l.b16 %v607
        %v1264 = vunpack.c.h.b16 %v607
        %v1265 = vunpack.c.l.b16 %v608
        %v1266 = vunpack.c.h.b16 %v608
        %v1267 = vunpack.c.l.b16 %v609
        %v1268 = vunpack.c.l.b16 %v610
        %v1269 = vunpack.c.h.b16 %v610
        %v1270 = vunpack.c.l.b16 %v611
        %v1271 = vunpack.c.h.b16 %v611
        %v1272 = vunpack.c.l.b16 %v612
        %v1273 = vunpack.c.h.b16 %v612
        %v1274 = vunpack.c.l.b16 %v613
        %v1275 = vunpack.c.h.b16 %v613
        %v1276 = vunpack.c.l.b16 %v614
        %v1277 = vunpack.c.l.b16 %v615
        %v1278 = vunpack.c.h.b16 %v615
        %v1279 = vunpack.c.l.b16 %v616
        %v1280 = vunpack.c.h.b16 %v616
        %v1281 = vunpack.c.l.b16 %v617
        %v1282 = vunpack.c.h.b16 %v617
        %v1283 = vunpack.c.l.b16 %v618
        %v1284 = vunpack.c.h.b16 %v618
        %v1285 = vunpack.c.l.b16 %v619
        %v1286 = vunpack.c.l.b16 %v620
        %v1287 = vunpack.c.h.b16 %v620
        %v1288 = vunpack.c.l.b16 %v621
        %v1289 = vunpack.c.h.b16 %v621
        %v1290 = vunpack.c.l.b16 %v622
        %v1291 = vunpack.c.h.b16 %v622
        %v1292 = vunpack.c.l.b16 %v623
        %v1293 = vunpack.c.h.b16 %v623
        %v1294 = vunpack.c.l.b16 %v624
        %v1295 = vunpack.c.l.b16 %v625
        %v1296 = vunpack.c.h.b16 %v625
        %v1297 = vunpack.c.l.b16 %v626
        %v1298 = vunpack.c.h.b16 %v626
        %v1299 = vunpack.c.l.b16 %v627
        %v1300 = vunpack.c.h.b16 %v627
        %v1301 = vunpack.c.l.b16 %v628
        %v1302 = vunpack.c.h.b16 %v628
        %v1303 = vunpack.c.l.b16 %v629
        %v1304 = vunpack.c.l.b16 %v630
        %v1305 = vunpack.c.h.b16 %v630
        %v1306 = vunpack.c.l.b16 %v631
        %v1307 = vunpack.c.h.b16 %v631
        %v1308 = vunpack.c.l.b16 %v632
        %v1309 = vunpack.c.h.b16 %v632
        %v1310 = vunpack.c.l.b16 %v633
        %v1311 = vunpack.c.h.b16 %v633
        %v1312 = vunpack.c.l.b16 %v634
        %v1313 = vunpack.c.l.b16 %v635
        %v1314 = vunpack.c.h.b16 %v635
        %v1315 = vunpack.c.l.b16 %v636
        %v1316 = vunpack.c.h.b16 %v636
        %v1317 = vunpack.c.l.b16 %v637
        %v1318 = vunpack.c.h.b16 %v637
        %v1319 = vunpack.c.l.b16 %v638
        %v1320 = vunpack.c.h.b16 %v638
        %v1321 = vunpack.c.l.b16 %v639
        %v1322 = vunpack.c.l.b16 %v640
        %v1323 = vunpack.c.h.b16 %v640
        %v1324 = vunpack.c.l.b16 %v641
        %v1325 = vunpack.c.h.b16 %v641
        %v1326 = vunpack.c.l.b16 %v642
        %v1327 = vunpack.c.h.b16 %v642
        %v1328 = vunpack.c.l.b16 %v643
        %v1329 = vunpack.c.h.b16 %v643
        %v1330 = vunpack.c.l.b16 %v644
        %v1331 = vunpack.c.l.b16 %v645
        %v1332 = vunpack.c.h.b16 %v645
        %v1333 = vunpack.c.l.b16 %v646
        %v1334 = vunpack.c.h.b16 %v646
        %v1335 = vunpack.c.l.b16 %v647
        %v1336 = vunpack.c.h.b16 %v647
        %v1337 = vunpack.c.l.b16 %v648
        %v1338 = vunpack.c.h.b16 %v648
        %v1339 = vunpack.c.l.b16 %v649
        %v1340 = vunpack.c.l.b16 %v650
        %v1341 = vunpack.c.h.b16 %v650
        %v1342 = vunpack.c.l.b16 %v651
        %v1343 = vunpack.c.h.b16 %v651
        %v1344 = vunpack.c.l.b16 %v652
        %v1345 = vunpack.c.h.b16 %v652
        %v1346 = vunpack.c.l.b16 %v653
        %v1347 = vunpack.c.h.b16 %v653
        %v1348 = vunpack.c.l.b16 %v654
        %v1349 = vpack.c.b16 %v926, %v917
        %v1350 = vpack.c.b16 %v927, %v918
        %v1351 = vpack.c.b16 %v928, %v919
        %v1352 = vpack.c.b16 %v929, %v920
        %v1353 = vpack.c.b16 %v930, %v921
        %v1354 = vpack.c.b16 %v931, %v922
        %v1355 = vpack.c.b16 %v932, %v923
        %v1356 = vpack.c.b16 %v933, %v924
        %v1357 = vpack.c.b16 %v934, %v925
        %v1358 = vpack.c.b16 %v944, %v935
        %v1359 = vpack.c.b16 %v945, %v936
        %v1360 = vpack.c.b16 %v946, %v937
        %v1361 = vpack.c.b16 %v947, %v938
        %v1362 = vpack.c.b16 %v948, %v939
        %v1363 = vpack.c.b16 %v949, %v940
        %v1364 = vpack.c.b16 %v950, %v941
        %v1365 = vpack.c.b16 %v951, %v942
        %v1366 = vpack.c.b16 %v952, %v943
        %v1367 = vpack.c.b16 %v962, %v953
        %v1368 = vpack.c.b16 %v963, %v954
        %v1369 = vpack.c.b16 %v964, %v955
        %v1370 = vpack.c.b16 %v965, %v956
        %v1371 = vpack.c.b16 %v966, %v957
        %v1372 = vpack.c.b16 %v967, %v958
        %v1373 = vpack.c.b16 %v968, %v959
        %v1374 = vpack.c.b16 %v969, %v960
        %v1375 = vpack.c.b16 %v970, %v961
        %v1376 = vpack.c.b16 %v980, %v971
        %v1377 = vpack.c.b16 %v981, %v972
        %v1378 = vpack.c.b16 %v982, %v973
        %v1379 = vpack.c.b16 %v983, %v974
        %v1380 = vpack.c.b16 %v984, %v975
        %v1381 = vpack.c.b16 %v985, %v976
        %v1382 = vpack.c.b16 %v986, %v977
        %v1383 = vpack.c.b16 %v987, %v978
        %v1384 = vpack.c.b16 %v988, %v979
        %v1385 = vpack.c.b16 %v998, %v989
        %v1386 = vpack.c.b16 %v999, %v990
        %v1387 = vpack.c.b16 %v1000, %v991
        %v1388 = vpack.c.b16 %v1001, %v992
        %v1389 = vpack.c.b16 %v1002, %v993
        %v1390 = vpack.c.b16 %v1003, %v994
        %v1391 = vpack.c.b16 %v1004, %v995
        %v1392 = vpack.c.b16 %v1005, %v996
        %v1393 = vpack.c.b16 %v1006, %v997
        %v1394 = vpack.c.b16 %v1016, %v1007
        %v1395 = vpack.c.b16 %v1017, %v1008
        %v1396 = vpack.c.b16 %v1018, %v1009
        %v1397 = vpack.c.b16 %v1019, %v1010
        %v1398 = vpack.c.b16 %v1020, %v1011
        %v1399 = vpack.c.b16 %v1021, %v1012
        %v1400 = vpack.c.b16 %v1022, %v1013
        %v1401 = vpack.c.b16 %v1023, %v1014
        %v1402 = vpack.c.b16 %v1024, %v1015
        %v1403 = vpack.c.b16 %v1034, %v1025
        %v1404 = vpack.c.b16 %v1035, %v1026
        %v1405 = vpack.c.b16 %v1036, %v1027
        %v1406 = vpack.c.b16 %v1037, %v1028
        %v1407 = vpack.c.b16 %v1038, %v1029
        %v1408 = vpack.c.b16 %v1039, %v1030
        %v1409 = vpack.c.b16 %v1040, %v1031
        %v1410 = vpack.c.b16 %v1041, %v1032
        %v1411 = vpack.c.b16 %v1042, %v1033
        %v1412 = vpack.c.b16 %v1052, %v1043
        %v1413 = vpack.c.b16 %v1053, %v1044
        %v1414 = vpack.c.b16 %v1054, %v1045
        %v1415 = vpack.c.b16 %v1055, %v1046
        %v1416 = vpack.c.b16 %v1056, %v1047
        %v1417 = vpack.c.b16 %v1057, %v1048
        %v1418 = vpack.c.b16 %v1058, %v1049
        %v1419 = vpack.c.b16 %v1059, %v1050
        %v1420 = vpack.c.b16 %v1060, %v1051
        %v1421 = vpack.c.b16 %v1070, %v1061
        %v1422 = vpack.c.b16 %v1071, %v1062
        %v1423 = vpack.c.b16 %v1072, %v1063
        %v1424 = vpack.c.b16 %v1073, %v1064
        %v1425 = vpack.c.b16 %v1074, %v1065
        %v1426 = vpack.c.b16 %v1075, %v1066
        %v1427 = vpack.c.b16 %v1076, %v1067
        %v1428 = vpack.c.b16 %v1077, %v1068
        %v1429 = vpack.c.b16 %v1078, %v1069
        %v1430 = vpack.c.b16 %v1088, %v1079
        %v1431 = vpack.c.b16 %v1089, %v1080
        %v1432 = vpack.c.b16 %v1090, %v1081
        %v1433 = vpack.c.b16 %v1091, %v1082
        %v1434 = vpack.c.b16 %v1092, %v1083
        %v1435 = vpack.c.b16 %v1093, %v1084
        %v1436 = vpack.c.b16 %v1094, %v1085
        %v1437 = vpack.c.b16 %v1095, %v1086
        %v1438 = vpack.c.b16 %v1096, %v1087
        %v1439 = vpack.c.b16 %v1106, %v1097
        %v1440 = vpack.c.b16 %v1107, %v1098
        %v1441 = vpack.c.b16 %v1108, %v1099
        %v1442 = vpack.c.b16 %v1109, %v1100
        %v1443 = vpack.c.b16 %v1110, %v1101
        %v1444 = vpack.c.b16 %v1111, %v1102
        %v1445 = vpack.c.b16 %v1112, %v1103
        %v1446 = vpack.c.b16 %v1113, %v1104
        %v1447 = vpack.c.b16 %v1114, %v1105
        %v1448 = vpack.c.b16 %v1124, %v1115
        %v1449 = vpack.c.b16 %v1125, %v1116
        %v1450 = vpack.c.b16 %v1126, %v1117
        %v1451 = vpack.c.b16 %v1127, %v1118
        %v1452 = vpack.c.b16 %v1128, %v1119
        %v1453 = vpack.c.b16 %v1129, %v1120
        %v1454 = vpack.c.b16 %v1130, %v1121
        %v1455 = vpack.c.b16 %v1131, %v1122
        %v1456 = vpack.c.b16 %v1132, %v1123
        %v1457 = vpack.c.b16 %v1142, %v1133
        %v1458 = vpack.c.b16 %v1143, %v1134
        %v1459 = vpack.c.b16 %v1144, %v1135
        %v1460 = vpack.c.b16 %v1145, %v1136
        %v1461 = vpack.c.b16 %v1146, %v1137
        %v1462 = vpack.c.b16 %v1147, %v1138
        %v1463 = vpack.c.b16 %v1148, %v1139
        %v1464 = vpack.c.b16 %v1149, %v1140
        %v1465 = vpack.c.b16 %v1150, %v1141
        %v1466 = vpack.c.b16 %v1160, %v1151
        %v1467 = vpack.c.b16 %v1161, %v1152
        %v1468 = vpack.c.b16 %v1162, %v1153
        %v1469 = vpack.c.b16 %v1163, %v1154
        %v1470 = vpack.c.b16 %v1164, %v1155
        %v1471 = vpack.c.b16 %v1165, %v1156
        %v1472 = vpack.c.b16 %v1166, %v1157
        %v1473 = vpack.c.b16 %v1167, %v1158
        %v1474 = vpack.c.b16 %v1168, %v1159
        %v1475 = vpack.c.b16 %v1178, %v1169
        %v1476 = vpack.c.b16 %v1179, %v1170
        %v1477 = vpack.c.b16 %v1180, %v1171
        %v1478 = vpack.c.b16 %v1181, %v1172
        %v1479 = vpack.c.b16 %v1182, %v1173
        %v1480 = vpack.c.b16 %v1183, %v1174
        %v1481 = vpack.c.b16 %v1184, %v1175
        %v1482 = vpack.c.b16 %v1185, %v1176
        %v1483 = vpack.c.b16 %v1186, %v1177
        %v1484 = vpack.c.b16 %v1196, %v1187
        %v1485 = vpack.c.b16 %v1197, %v1188
        %v1486 = vpack.c.b16 %v1198, %v1189
        %v1487 = vpack.c.b16 %v1199, %v1190
        %v1488 = vpack.c.b16 %v1200, %v1191
        %v1489 = vpack.c.b16 %v1201, %v1192
        %v1490 = vpack.c.b16 %v1202, %v1193
        %v1491 = vpack.c.b16 %v1203, %v1194
        %v1492 = vpack.c.b16 %v1204, %v1195
        %v1493 = vpack.c.b16 %v1214, %v1205
        %v1494 = vpack.c.b16 %v1215, %v1206
        %v1495 = vpack.c.b16 %v1216, %v1207
        %v1496 = vpack.c.b16 %v1217, %v1208
        %v1497 = vpack.c.b16 %v1218, %v1209
        %v1498 = vpack.c.b16 %v1219, %v1210
        %v1499 = vpack.c.b16 %v1220, %v1211
        %v1500 = vpack.c.b16 %v1221, %v1212
        %v1501 = vpack.c.b16 %v1222, %v1213
        %v1502 = vpack.c.b16 %v1232, %v1223
        %v1503 = vpack.c.b16 %v1233, %v1224
        %v1504 = vpack.c.b16 %v1234, %v1225
        %v1505 = vpack.c.b16 %v1235, %v1226
        %v1506 = vpack.c.b16 %v1236, %v1227
        %v1507 = vpack.c.b16 %v1237, %v1228
        %v1508 = vpack.c.b16 %v1238, %v1229
        %v1509 = vpack.c.b16 %v1239, %v1230
        %v1510 = vpack.c.b16 %v1240, %v1231
        %v1511 = vpack.c.b16 %v1250, %v1241
        %v1512 = vpack.c.b16 %v1251, %v1242
        %v1513 = vpack.c.b16 %v1252, %v1243
        %v1514 = vpack.c.b16 %v1253, %v1244
        %v1515 = vpack.c.b16 %v1254, %v1245
        %v1516 = vpack.c.b16 %v1255, %v1246
        %v1517 = vpack.c.b16 %v1256, %v1247
        %v1518 = vpack.c.b16 %v1257, %v1248
        %v1519 = vpack.c.b16 %v1258, %v1249
        %v1520 = vpack.c.b16 %v1268, %v1259
        %v1521 = vpack.c.b16 %v1269, %v1260
        %v1522 = vpack.c.b16 %v1270, %v1261
        %v1523 = vpack.c.b16 %v1271, %v1262
        %v1524 = vpack.c.b16 %v1272, %v1263
        %v1525 = vpack.c.b16 %v1273, %v1264
        %v1526 = vpack.c.b16 %v1274, %v1265
        %v1527 = vpack.c.b16 %v1275, %v1266
        %v1528 = vpack.c.b16 %v1276, %v1267
        %v1529 = vpack.c.b16 %v1286, %v1277
        %v1530 = vpack.c.b16 %v1287, %v1278
        %v1531 = vpack.c.b16 %v1288, %v1279
        %v1532 = vpack.c.b16 %v1289, %v1280
        %v1533 = vpack.c.b16 %v1290, %v1281
        %v1534 = vpack.c.b16 %v1291, %v1282
        %v1535 = vpack.c.b16 %v1292, %v1283
        %v1536 = vpack.c.b16 %v1293, %v1284
        %v1537 = vpack.c.b16 %v1294, %v1285
        %v1538 = vpack.c.b16 %v1304, %v1295
        %v1539 = vpack.c.b16 %v1305, %v1296
        %v1540 = vpack.c.b16 %v1306, %v1297
        %v1541 = vpack.c.b16 %v1307, %v1298
        %v1542 = vpack.c.b16 %v1308, %v1299
        %v1543 = vpack.c.b16 %v1309, %v1300
        %v1544 = vpack.c.b16 %v1310, %v1301
        %v1545 = vpack.c.b16 %v1311, %v1302
        %v1546 = vpack.c.b16 %v1312, %v1303
        %v1547 = vpack.c.b16 %v1322, %v1313
        %v1548 = vpack.c.b16 %v1323, %v1314
        %v1549 = vpack.c.b16 %v1324, %v1315
        %v1550 = vpack.c.b16 %v1325, %v1316
        %v1551 = vpack.c.b16 %v1326, %v1317
        %v1552 = vpack.c.b16 %v1327, %v1318
        %v1553 = vpack.c.b16 %v1328, %v1319
        %v1554 = vpack.c.b16 %v1329, %v1320
        %v1555 = vpack.c.b16 %v1330, %v1321
        %v1556 = vpack.c.b16 %v1340, %v1331
        %v1557 = vpack.c.b16 %v1341, %v1332
        %v1558 = vpack.c.b16 %v1342, %v1333
        %v1559 = vpack.c.b16 %v1343, %v1334
        %v1560 = vpack.c.b16 %v1344, %v1335
        %v1561 = vpack.c.b16 %v1345, %v1336
        %v1562 = vpack.c.b16 %v1346, %v1337
        %v1563 = vpack.c.b16 %v1347, %v1338
        %v1564 = vpack.c.b16 %v1348, %v1339
        %1781 = vmatpush.bf16.msra.mxu0 %v1412
        %1782 = vmatpush.bf16.msra.mxu0 %v1403
        %1783 = vmatpush.bf16.msra.mxu0 %v1394
        %1784 = vmatpush.bf16.msra.mxu0 %v1385
        %1785 = vmatpush.bf16.msra.mxu0 %v1376
        %1786 = vmatpush.bf16.msra.mxu0 %v1367
        %1787 = vmatpush.bf16.msra.mxu0 %v1358
        %1788 = vmatpush.bf16.msra.mxu0 %v1349
        %1789 = vmatmul.bf16.gmra.mxu0 %v412
        %v1790 = vpop.f32.mrf.mxu0
        %v1791 = vadd.f32 %v659, %v1790
        %v1792 = vpop.f32.mrf.mxu0
        %1793 = vdwg.mxu0
        %1794 = vmatpush.bf16.msra.mxu0 %v1484
        %1795 = vmatpush.bf16.msra.mxu0 %v1475
        %1796 = vmatpush.bf16.msra.mxu0 %v1466
        %1797 = vmatpush.bf16.msra.mxu0 %v1457
        %1798 = vmatpush.bf16.msra.mxu0 %v1448
        %1799 = vmatpush.bf16.msra.mxu0 %v1439
        %1800 = vmatpush.bf16.msra.mxu0 %v1430
        %1801 = vmatpush.bf16.msra.mxu0 %v1421
        %1802 = vmatmul.bf16.gmra.mxu0 %v413
        %v1803 = vpop.f32.mrf.mxu0
        %v1804 = vadd.f32 %v1791, %v1803
        %v1805 = vpop.f32.mrf.mxu0
        %1806 = vdwg.mxu0
        %1807 = vmatpush.bf16.msra.mxu0 %v1556
        %1808 = vmatpush.bf16.msra.mxu0 %v1547
        %1809 = vmatpush.bf16.msra.mxu0 %v1538
        %1810 = vmatpush.bf16.msra.mxu0 %v1529
        %1811 = vmatpush.bf16.msra.mxu0 %v1520
        %1812 = vmatpush.bf16.msra.mxu0 %v1511
        %1813 = vmatpush.bf16.msra.mxu0 %v1502
        %1814 = vmatpush.bf16.msra.mxu0 %v1493
        %1815 = vmatmul.bf16.gmra.mxu0 %v414
        %v1816 = vpop.f32.mrf.mxu0
        %v1817 = vadd.f32 %v1804, %v1816
        %v1818 = vpop.f32.mrf.mxu0
        %1819 = vdwg.mxu0
        %1820 = vmatpush.bf16.msra.mxu0 %v1413
        %1821 = vmatpush.bf16.msra.mxu0 %v1404
        %1822 = vmatpush.bf16.msra.mxu0 %v1395
        %1823 = vmatpush.bf16.msra.mxu0 %v1386
        %1824 = vmatpush.bf16.msra.mxu0 %v1377
        %1825 = vmatpush.bf16.msra.mxu0 %v1368
        %1826 = vmatpush.bf16.msra.mxu0 %v1359
        %1827 = vmatpush.bf16.msra.mxu0 %v1350
        %1828 = vmatmul.bf16.gmra.mxu0 %v412
        %v1829 = vpop.f32.mrf.mxu0
        %v1830 = vadd.f32 %v660, %v1829
        %v1831 = vpop.f32.mrf.mxu0
        %1832 = vdwg.mxu0
        %1833 = vmatpush.bf16.msra.mxu0 %v1485
        %1834 = vmatpush.bf16.msra.mxu0 %v1476
        %1835 = vmatpush.bf16.msra.mxu0 %v1467
        %1836 = vmatpush.bf16.msra.mxu0 %v1458
        %1837 = vmatpush.bf16.msra.mxu0 %v1449
        %1838 = vmatpush.bf16.msra.mxu0 %v1440
        %1839 = vmatpush.bf16.msra.mxu0 %v1431
        %1840 = vmatpush.bf16.msra.mxu0 %v1422
        %1841 = vmatmul.bf16.gmra.mxu0 %v413
        %v1842 = vpop.f32.mrf.mxu0
        %v1843 = vadd.f32 %v1830, %v1842
        %v1844 = vpop.f32.mrf.mxu0
        %1845 = vdwg.mxu0
        %1846 = vmatpush.bf16.msra.mxu0 %v1557
        %1847 = vmatpush.bf16.msra.mxu0 %v1548
        %1848 = vmatpush.bf16.msra.mxu0 %v1539
        %1849 = vmatpush.bf16.msra.mxu0 %v1530
        %1850 = vmatpush.bf16.msra.mxu0 %v1521
        %1851 = vmatpush.bf16.msra.mxu0 %v1512
        %1852 = vmatpush.bf16.msra.mxu0 %v1503
        %1853 = vmatpush.bf16.msra.mxu0 %v1494
        %1854 = vmatmul.bf16.gmra.mxu0 %v414
        %v1855 = vpop.f32.mrf.mxu0
        %v1856 = vadd.f32 %v1843, %v1855
        %v1857 = vpop.f32.mrf.mxu0
        %1858 = vdwg.mxu0
        %1859 = vmatpush.bf16.msra.mxu0 %v1414
        %1860 = vmatpush.bf16.msra.mxu0 %v1405
        %1861 = vmatpush.bf16.msra.mxu0 %v1396
        %1862 = vmatpush.bf16.msra.mxu0 %v1387
        %1863 = vmatpush.bf16.msra.mxu0 %v1378
        %1864 = vmatpush.bf16.msra.mxu0 %v1369
        %1865 = vmatpush.bf16.msra.mxu0 %v1360
        %1866 = vmatpush.bf16.msra.mxu0 %v1351
        %1867 = vmatmul.bf16.gmra.mxu0 %v412
        %v1868 = vpop.f32.mrf.mxu0
        %v1869 = vadd.f32 %v661, %v1868
        %v1870 = vpop.f32.mrf.mxu0
        %1871 = vdwg.mxu0
        %1872 = vmatpush.bf16.msra.mxu0 %v1486
        %1873 = vmatpush.bf16.msra.mxu0 %v1477
        %1874 = vmatpush.bf16.msra.mxu0 %v1468
        %1875 = vmatpush.bf16.msra.mxu0 %v1459
        %1876 = vmatpush.bf16.msra.mxu0 %v1450
        %1877 = vmatpush.bf16.msra.mxu0 %v1441
        %1878 = vmatpush.bf16.msra.mxu0 %v1432
        %1879 = vmatpush.bf16.msra.mxu0 %v1423
        %1880 = vmatmul.bf16.gmra.mxu0 %v413
        %v1881 = vpop.f32.mrf.mxu0
        %v1882 = vadd.f32 %v1869, %v1881
        %v1883 = vpop.f32.mrf.mxu0
        %1884 = vdwg.mxu0
        %1885 = vmatpush.bf16.msra.mxu0 %v1558
        %1886 = vmatpush.bf16.msra.mxu0 %v1549
        %1887 = vmatpush.bf16.msra.mxu0 %v1540
        %1888 = vmatpush.bf16.msra.mxu0 %v1531
        %1889 = vmatpush.bf16.msra.mxu0 %v1522
        %1890 = vmatpush.bf16.msra.mxu0 %v1513
        %1891 = vmatpush.bf16.msra.mxu0 %v1504
        %1892 = vmatpush.bf16.msra.mxu0 %v1495
        %1893 = vmatmul.bf16.gmra.mxu0 %v414
        %v1894 = vpop.f32.mrf.mxu0
        %v1895 = vadd.f32 %v1882, %v1894
        %v1896 = vpop.f32.mrf.mxu0
        %1897 = vdwg.mxu0
        %1898 = vmatpush.bf16.msra.mxu0 %v1415
        %1899 = vmatpush.bf16.msra.mxu0 %v1406
        %1900 = vmatpush.bf16.msra.mxu0 %v1397
        %1901 = vmatpush.bf16.msra.mxu0 %v1388
        %1902 = vmatpush.bf16.msra.mxu0 %v1379
        %1903 = vmatpush.bf16.msra.mxu0 %v1370
        %1904 = vmatpush.bf16.msra.mxu0 %v1361
        %1905 = vmatpush.bf16.msra.mxu0 %v1352
        %1906 = vmatmul.bf16.gmra.mxu0 %v412
        %v1907 = vpop.f32.mrf.mxu0
        %v1908 = vadd.f32 %v662, %v1907
        %v1909 = vpop.f32.mrf.mxu0
        %1910 = vdwg.mxu0
        %1911 = vmatpush.bf16.msra.mxu0 %v1487
        %1912 = vmatpush.bf16.msra.mxu0 %v1478
        %1913 = vmatpush.bf16.msra.mxu0 %v1469
        %1914 = vmatpush.bf16.msra.mxu0 %v1460
        %1915 = vmatpush.bf16.msra.mxu0 %v1451
        %1916 = vmatpush.bf16.msra.mxu0 %v1442
        %1917 = vmatpush.bf16.msra.mxu0 %v1433
        %1918 = vmatpush.bf16.msra.mxu0 %v1424
        %1919 = vmatmul.bf16.gmra.mxu0 %v413
        %v1920 = vpop.f32.mrf.mxu0
        %v1921 = vadd.f32 %v1908, %v1920
        %v1922 = vpop.f32.mrf.mxu0
        %1923 = vdwg.mxu0
        %1924 = vmatpush.bf16.msra.mxu0 %v1559
        %1925 = vmatpush.bf16.msra.mxu0 %v1550
        %1926 = vmatpush.bf16.msra.mxu0 %v1541
        %1927 = vmatpush.bf16.msra.mxu0 %v1532
        %1928 = vmatpush.bf16.msra.mxu0 %v1523
        %1929 = vmatpush.bf16.msra.mxu0 %v1514
        %1930 = vmatpush.bf16.msra.mxu0 %v1505
        %1931 = vmatpush.bf16.msra.mxu0 %v1496
        %1932 = vmatmul.bf16.gmra.mxu0 %v414
        %v1933 = vpop.f32.mrf.mxu0
        %v1934 = vadd.f32 %v1921, %v1933
        %v1935 = vpop.f32.mrf.mxu0
        %1936 = vdwg.mxu0
        %1937 = vmatpush.bf16.msra.mxu0 %v1416
        %1938 = vmatpush.bf16.msra.mxu0 %v1407
        %1939 = vmatpush.bf16.msra.mxu0 %v1398
        %1940 = vmatpush.bf16.msra.mxu0 %v1389
        %1941 = vmatpush.bf16.msra.mxu0 %v1380
        %1942 = vmatpush.bf16.msra.mxu0 %v1371
        %1943 = vmatpush.bf16.msra.mxu0 %v1362
        %1944 = vmatpush.bf16.msra.mxu0 %v1353
        %1945 = vmatmul.bf16.gmra.mxu0 %v412
        %v1946 = vpop.f32.mrf.mxu0
        %v1947 = vadd.f32 %v663, %v1946
        %v1948 = vpop.f32.mrf.mxu0
        %1949 = vdwg.mxu0
        %1950 = vmatpush.bf16.msra.mxu0 %v1488
        %1951 = vmatpush.bf16.msra.mxu0 %v1479
        %1952 = vmatpush.bf16.msra.mxu0 %v1470
        %1953 = vmatpush.bf16.msra.mxu0 %v1461
        %1954 = vmatpush.bf16.msra.mxu0 %v1452
        %1955 = vmatpush.bf16.msra.mxu0 %v1443
        %1956 = vmatpush.bf16.msra.mxu0 %v1434
        %1957 = vmatpush.bf16.msra.mxu0 %v1425
        %1958 = vmatmul.bf16.gmra.mxu0 %v413
        %v1959 = vpop.f32.mrf.mxu0
        %v1960 = vadd.f32 %v1947, %v1959
        %v1961 = vpop.f32.mrf.mxu0
        %1962 = vdwg.mxu0
        %1963 = vmatpush.bf16.msra.mxu0 %v1560
        %1964 = vmatpush.bf16.msra.mxu0 %v1551
        %1965 = vmatpush.bf16.msra.mxu0 %v1542
        %1966 = vmatpush.bf16.msra.mxu0 %v1533
        %1967 = vmatpush.bf16.msra.mxu0 %v1524
        %1968 = vmatpush.bf16.msra.mxu0 %v1515
        %1969 = vmatpush.bf16.msra.mxu0 %v1506
        %1970 = vmatpush.bf16.msra.mxu0 %v1497
        %1971 = vmatmul.bf16.gmra.mxu0 %v414
        %v1972 = vpop.f32.mrf.mxu0
        %v1973 = vadd.f32 %v1960, %v1972
        %v1974 = vpop.f32.mrf.mxu0
        %1975 = vdwg.mxu0
        %1976 = vmatpush.bf16.msra.mxu0 %v1417
        %1977 = vmatpush.bf16.msra.mxu0 %v1408
        %1978 = vmatpush.bf16.msra.mxu0 %v1399
        %1979 = vmatpush.bf16.msra.mxu0 %v1390
        %1980 = vmatpush.bf16.msra.mxu0 %v1381
        %1981 = vmatpush.bf16.msra.mxu0 %v1372
        %1982 = vmatpush.bf16.msra.mxu0 %v1363
        %1983 = vmatpush.bf16.msra.mxu0 %v1354
        %1984 = vmatmul.bf16.gmra.mxu0 %v412
        %v1985 = vpop.f32.mrf.mxu0
        %v1986 = vadd.f32 %v664, %v1985
        %v1987 = vpop.f32.mrf.mxu0
        %1988 = vdwg.mxu0
        %1989 = vmatpush.bf16.msra.mxu0 %v1489
        %1990 = vmatpush.bf16.msra.mxu0 %v1480
        %1991 = vmatpush.bf16.msra.mxu0 %v1471
        %1992 = vmatpush.bf16.msra.mxu0 %v1462
        %1993 = vmatpush.bf16.msra.mxu0 %v1453
        %1994 = vmatpush.bf16.msra.mxu0 %v1444
        %1995 = vmatpush.bf16.msra.mxu0 %v1435
        %1996 = vmatpush.bf16.msra.mxu0 %v1426
        %1997 = vmatmul.bf16.gmra.mxu0 %v413
        %v1998 = vpop.f32.mrf.mxu0
        %v1999 = vadd.f32 %v1986, %v1998
        %v2000 = vpop.f32.mrf.mxu0
        %2001 = vdwg.mxu0
        %2002 = vmatpush.bf16.msra.mxu0 %v1561
        %2003 = vmatpush.bf16.msra.mxu0 %v1552
        %2004 = vmatpush.bf16.msra.mxu0 %v1543
        %2005 = vmatpush.bf16.msra.mxu0 %v1534
        %2006 = vmatpush.bf16.msra.mxu0 %v1525
        %2007 = vmatpush.bf16.msra.mxu0 %v1516
        %2008 = vmatpush.bf16.msra.mxu0 %v1507
        %2009 = vmatpush.bf16.msra.mxu0 %v1498
        %2010 = vmatmul.bf16.gmra.mxu0 %v414
        %v2011 = vpop.f32.mrf.mxu0
        %v2012 = vadd.f32 %v1999, %v2011
        %v2013 = vpop.f32.mrf.mxu0
        %2014 = vdwg.mxu0
        %2015 = vmatpush.bf16.msra.mxu0 %v1418
        %2016 = vmatpush.bf16.msra.mxu0 %v1409
        %2017 = vmatpush.bf16.msra.mxu0 %v1400
        %2018 = vmatpush.bf16.msra.mxu0 %v1391
        %2019 = vmatpush.bf16.msra.mxu0 %v1382
        %2020 = vmatpush.bf16.msra.mxu0 %v1373
        %2021 = vmatpush.bf16.msra.mxu0 %v1364
        %2022 = vmatpush.bf16.msra.mxu0 %v1355
        %2023 = vmatmul.bf16.gmra.mxu0 %v412
        %v2024 = vpop.f32.mrf.mxu0
        %v2025 = vadd.f32 %v665, %v2024
        %v2026 = vpop.f32.mrf.mxu0
        %2027 = vdwg.mxu0
        %2028 = vmatpush.bf16.msra.mxu0 %v1490
        %2029 = vmatpush.bf16.msra.mxu0 %v1481
        %2030 = vmatpush.bf16.msra.mxu0 %v1472
        %2031 = vmatpush.bf16.msra.mxu0 %v1463
        %2032 = vmatpush.bf16.msra.mxu0 %v1454
        %2033 = vmatpush.bf16.msra.mxu0 %v1445
        %2034 = vmatpush.bf16.msra.mxu0 %v1436
        %2035 = vmatpush.bf16.msra.mxu0 %v1427
        %2036 = vmatmul.bf16.gmra.mxu0 %v413
        %v2037 = vpop.f32.mrf.mxu0
        %v2038 = vadd.f32 %v2025, %v2037
        %v2039 = vpop.f32.mrf.mxu0
        %2040 = vdwg.mxu0
        %2041 = vmatpush.bf16.msra.mxu0 %v1562
        %2042 = vmatpush.bf16.msra.mxu0 %v1553
        %2043 = vmatpush.bf16.msra.mxu0 %v1544
        %2044 = vmatpush.bf16.msra.mxu0 %v1535
        %2045 = vmatpush.bf16.msra.mxu0 %v1526
        %2046 = vmatpush.bf16.msra.mxu0 %v1517
        %2047 = vmatpush.bf16.msra.mxu0 %v1508
        %2048 = vmatpush.bf16.msra.mxu0 %v1499
        %2049 = vmatmul.bf16.gmra.mxu0 %v414
        %v2050 = vpop.f32.mrf.mxu0
        %v2051 = vadd.f32 %v2038, %v2050
        %v2052 = vpop.f32.mrf.mxu0
        %2053 = vdwg.mxu0
        %2054 = vmatpush.bf16.msra.mxu0 %v1419
        %2055 = vmatpush.bf16.msra.mxu0 %v1410
        %2056 = vmatpush.bf16.msra.mxu0 %v1401
        %2057 = vmatpush.bf16.msra.mxu0 %v1392
        %2058 = vmatpush.bf16.msra.mxu0 %v1383
        %2059 = vmatpush.bf16.msra.mxu0 %v1374
        %2060 = vmatpush.bf16.msra.mxu0 %v1365
        %2061 = vmatpush.bf16.msra.mxu0 %v1356
        %2062 = vmatmul.bf16.gmra.mxu0 %v412
        %v2063 = vpop.f32.mrf.mxu0
        %v2064 = vadd.f32 %v666, %v2063
        %v2065 = vpop.f32.mrf.mxu0
        %2066 = vdwg.mxu0
        %2067 = vmatpush.bf16.msra.mxu0 %v1491
        %2068 = vmatpush.bf16.msra.mxu0 %v1482
        %2069 = vmatpush.bf16.msra.mxu0 %v1473
        %2070 = vmatpush.bf16.msra.mxu0 %v1464
        %2071 = vmatpush.bf16.msra.mxu0 %v1455
        %2072 = vmatpush.bf16.msra.mxu0 %v1446
        %2073 = vmatpush.bf16.msra.mxu0 %v1437
        %2074 = vmatpush.bf16.msra.mxu0 %v1428
        %2075 = vmatmul.bf16.gmra.mxu0 %v413
        %v2076 = vpop.f32.mrf.mxu0
        %v2077 = vadd.f32 %v2064, %v2076
        %v2078 = vpop.f32.mrf.mxu0
        %2079 = vdwg.mxu0
        %2080 = vmatpush.bf16.msra.mxu0 %v1563
        %2081 = vmatpush.bf16.msra.mxu0 %v1554
        %2082 = vmatpush.bf16.msra.mxu0 %v1545
        %2083 = vmatpush.bf16.msra.mxu0 %v1536
        %2084 = vmatpush.bf16.msra.mxu0 %v1527
        %2085 = vmatpush.bf16.msra.mxu0 %v1518
        %2086 = vmatpush.bf16.msra.mxu0 %v1509
        %2087 = vmatpush.bf16.msra.mxu0 %v1500
        %2088 = vmatmul.bf16.gmra.mxu0 %v414
        %v2089 = vpop.f32.mrf.mxu0
        %v2090 = vadd.f32 %v2077, %v2089
        %v2091 = vpop.f32.mrf.mxu0
        %2092 = vdwg.mxu0
        %2093 = vmatpush.bf16.msra.mxu0 %v1420
        %2094 = vmatpush.bf16.msra.mxu0 %v1411
        %2095 = vmatpush.bf16.msra.mxu0 %v1402
        %2096 = vmatpush.bf16.msra.mxu0 %v1393
        %2097 = vmatpush.bf16.msra.mxu0 %v1384
        %2098 = vmatpush.bf16.msra.mxu0 %v1375
        %2099 = vmatpush.bf16.msra.mxu0 %v1366
        %2100 = vmatpush.bf16.msra.mxu0 %v1357
        %2101 = vmatmul.bf16.gmra.mxu0 %v412
        %v2102 = vpop.f32.mrf.mxu0
        %v2103 = vadd.f32 %v667, %v2102
        %v2104 = vpop.f32.mrf.mxu0
        %2105 = vdwg.mxu0
        %2106 = vmatpush.bf16.msra.mxu0 %v1492
        %2107 = vmatpush.bf16.msra.mxu0 %v1483
        %2108 = vmatpush.bf16.msra.mxu0 %v1474
        %2109 = vmatpush.bf16.msra.mxu0 %v1465
        %2110 = vmatpush.bf16.msra.mxu0 %v1456
        %2111 = vmatpush.bf16.msra.mxu0 %v1447
        %2112 = vmatpush.bf16.msra.mxu0 %v1438
        %2113 = vmatpush.bf16.msra.mxu0 %v1429
        %2114 = vmatmul.bf16.gmra.mxu0 %v413
        %v2115 = vpop.f32.mrf.mxu0
        %v2116 = vadd.f32 %v2103, %v2115
        %v2117 = vpop.f32.mrf.mxu0
        %2118 = vdwg.mxu0
        %2119 = vmatpush.bf16.msra.mxu0 %v1564
        %2120 = vmatpush.bf16.msra.mxu0 %v1555
        %2121 = vmatpush.bf16.msra.mxu0 %v1546
        %2122 = vmatpush.bf16.msra.mxu0 %v1537
        %2123 = vmatpush.bf16.msra.mxu0 %v1528
        %2124 = vmatpush.bf16.msra.mxu0 %v1519
        %2125 = vmatpush.bf16.msra.mxu0 %v1510
        %2126 = vmatpush.bf16.msra.mxu0 %v1501
        %2127 = vmatmul.bf16.gmra.mxu0 %v414
        %v2128 = vpop.f32.mrf.mxu0
        %v2129 = vadd.f32 %v2116, %v2128
        %v2130 = vpop.f32.mrf.mxu0
        %2131 = vdwg.mxu0
        %v2132 = vpack.c.bf16 %v1856, %v1817
        %v2133 = vpack.c.bf16 %v1934, %v1895
        %v2134 = vpack.c.bf16 %v2012, %v1973
        %v2135 = vpack.c.bf16 %v2090, %v2051
        %v2136 = vpack.c.bf16 %v2129, %v2129
        %vm2137 = vcmask 1042432
        %vm2138 = vsmask.f32 2304
        %vm2139 = vmand %vm2137, %vm2138
        %vm2140 = vcmask 1046532
        %vm2141 = vsmask.f32 6400
        %vm2142 = vmand %vm2140, %vm2141
        %vm2143 = vmor %vm2142, %vm2139
        %v2144 = vld [vmem:[#allocation2] sm:$0x77]
        %v2145 = vsel %vm2143, %v2132, %v2144
        %2146 = vst [vmem:[#allocation2] sm:$0x77] %v2145
        %v2147 = vld [vmem:[#allocation2 + $0x8] sm:$0x77]
        %v2148 = vsel %vm2143, %v2133, %v2147
        %2149 = vst [vmem:[#allocation2 + $0x8] sm:$0x77] %v2148
        %v2150 = vld [vmem:[#allocation2 + $0x10] sm:$0x77]
        %v2151 = vsel %vm2143, %v2134, %v2150
        %2152 = vst [vmem:[#allocation2 + $0x10] sm:$0x77] %v2151
        %v2153 = vld [vmem:[#allocation2 + $0x18] sm:$0x77]
        %v2154 = vsel %vm2143, %v2135, %v2153
        %2155 = vst [vmem:[#allocation2 + $0x18] sm:$0x77] %v2154
        %v2156 = vld [vmem:[#allocation2 + $0x20] sm:$0x7]
        %v2157 = vsel %vm2139, %v2136, %v2156
        %2158 = vst [vmem:[#allocation2 + $0x20] sm:$0x7] %v2157
        %v2159 = vld [vmem:[#allocation2] sm:$0x7]
        %v2160 = vld [vmem:[#allocation2 + $0xc] sm:$0x7]
        %v2161 = vld [vmem:[#allocation2 + $0x18] sm:$0x7]
        %vm2162 = vcmask 523264
        %v2164 = vsel %vm2162, %v2159, 0
        %v2167 = vsel %vm2162, %v2160, 0
        %2169 = vmatpush.bf16.xpose.msra.mxu0 0
        %2170 = vmatpush.bf16.xpose.msra.mxu0 0
        %2171 = vmatpush.bf16.xpose.msra.mxu0 0
        %2172 = vmatpush.bf16.xpose.msra.mxu0 0
        %2173 = vmatpush.bf16.xpose.msra.mxu0 0
        %2174 = vmatpush.bf16.xpose.msra.mxu0 0
        %2175 = vmatpush.bf16.xpose.msra.mxu0 0
        %2176 = vmatpush.bf16.xpose.msra.mxu0 %v2167
        %2177 = vmatmul.bf16.gmra.mxu0 %v2164
        %v2178 = vpop.f32.mrf.mxu0
        %v2179 = vadd.f32 0.0, %v2178
        %v2180 = vpop.f32.mrf.mxu0
        %2181 = vdwg.mxu0
        %v2182 = vmul.f32 %v2179, 0.125
        %vm2183 = vcmask 36864
        %v2184 = vsel %vm2183, %v2182, -inf
        %2185 = vmax.xlane.f32.xlu0 %v2184
        %v2186 = vpop.xlane.xlu0 %2185
        %v2187 = vsub.f32 %v2182, %v2186
        %v2188 = vmul.f32 %v2187, 1.442695
        %v2189 = vpow.pop %v2188
        %v2190 = vsel %vm2183, %v2189, 0.0
        %2191 = vadd.xlane.f32.xlu0 %v2190
        %v2192 = vpop.xlane.xlu0 %2191
        %v2193 = vrcp.pop %v2192
        %v2194 = vmul.f32 %v2189, %v2193
        %v2195 = vpack.c.bf16 %v2194, %v2194
        %vm2196 = vcmask 39936
        %v2198 = vsel %vm2196, %v2195, 0
        %vm2200 = vcmask 1041408
        %vm2201 = vcmask 1042432
        %v2202 = vsel %vm2200, 4294967295, 65535
        %v2203 = vsel %vm2201, %v2202, 0
        %v2205 = vand.u32 %v2161, %v2203
        %2207 = vmatpush.bf16.msra.mxu0 0
        %2208 = vmatpush.bf16.msra.mxu0 0
        %2209 = vmatpush.bf16.msra.mxu0 0
        %2210 = vmatpush.bf16.msra.mxu0 0
        %2211 = vmatpush.bf16.msra.mxu0 0
        %2212 = vmatpush.bf16.msra.mxu0 0
        %2213 = vmatpush.bf16.msra.mxu0 0
        %2214 = vmatpush.bf16.msra.mxu0 %v2205
        %2215 = vmatmul.bf16.gmra.mxu0 %v2198
        %v2216 = vpop.f32.mrf.mxu0
        %v2217 = vadd.f32 0.0, %v2216
        %v2218 = vpop.f32.mrf.mxu0
        %2219 = vdwg.mxu0
        %v2220 = vpack.c.bf16 %v2217, %v2217
        %vm2221 = vcmask 518144
        %vm2222 = vmand %vm2221, %vm2138
        %v2223 = vld [vmem:[#allocation3] sm:$0x7]
        %v2224 = vsel %vm2222, %v2220, %v2223
        %2225 = vst [vmem:[#allocation3] sm:$0x7] %v2224
        %v2226 = vld [vmem:[#allocation2] sm:$0x7]
        %v2227 = vld [vmem:[#allocation2 + $0xc] sm:$0x7]
        %v2228 = vld [vmem:[#allocation2 + $0x18] sm:$0x7]
        %v2230 = vunpack.c.l.b16 %v2226
        %v2231 = vpack.c.b16 %v2230, %v2230
        %2232 = vrot.lane.b32.xlu0 %v2231, 64
        %v2233 = vpop.permute.xlu0 %2232
        %v2235 = vunpack.c.l.b16 %v2227
        %v2236 = vpack.c.b16 %v2235, %v2235
        %2237 = vrot.lane.b32.xlu0 %v2236, 64
        %v2238 = vpop.permute.xlu0 %2237
        %v2240 = vsel %vm2162, %v2233, 0
        %v2243 = vsel %vm2162, %v2238, 0
        %2245 = vmatpush.bf16.xpose.msra.mxu0 0
        %2246 = vmatpush.bf16.xpose.msra.mxu0 0
        %2247 = vmatpush.bf16.xpose.msra.mxu0 0
        %2248 = vmatpush.bf16.xpose.msra.mxu0 0
        %2249 = vmatpush.bf16.xpose.msra.mxu0 0
        %2250 = vmatpush.bf16.xpose.msra.mxu0 0
        %2251 = vmatpush.bf16.xpose.msra.mxu0 0
        %2252 = vmatpush.bf16.xpose.msra.mxu0 %v2243
        %2253 = vmatmul.bf16.gmra.mxu0 %v2240
        %v2254 = vpop.f32.mrf.mxu0
        %v2255 = vadd.f32 0.0, %v2254
        %v2256 = vpop.f32.mrf.mxu0
        %2257 = vdwg.mxu0
        %v2258 = vmul.f32 %v2255, 0.125
        %v2259 = vsel %vm2183, %v2258, -inf
        %2260 = vmax.xlane.f32.xlu0 %v2259
        %v2261 = vpop.xlane.xlu0 %2260
        %v2262 = vsub.f32 %v2258, %v2261
        %v2263 = vmul.f32 %v2262, 1.442695
        %v2264 = vpow.pop %v2263
        %v2265 = vsel %vm2183, %v2264, 0.0
        %2266 = vadd.xlane.f32.xlu0 %v2265
        %v2267 = vpop.xlane.xlu0 %2266
        %v2268 = vrcp.pop %v2267
        %v2269 = vmul.f32 %v2264, %v2268
        %v2270 = vpack.c.bf16 %v2269, %v2269
        %v2272 = vunpack.c.l.b16 %v2228
        %v2273 = vpack.c.b16 %v2272, %v2272
        %2274 = vrot.lane.b32.xlu0 %v2273, 64
        %v2275 = vpop.permute.xlu0 %2274
        %v2277 = vsel %vm2196, %v2270, 0
        %v2280 = vand.u32 %v2275, %v2203
        %2282 = vmatpush.bf16.msra.mxu0 0
        %2283 = vmatpush.bf16.msra.mxu0 0
        %2284 = vmatpush.bf16.msra.mxu0 0
        %2285 = vmatpush.bf16.msra.mxu0 0
        %2286 = vmatpush.bf16.msra.mxu0 0
        %2287 = vmatpush.bf16.msra.mxu0 0
        %2288 = vmatpush.bf16.msra.mxu0 0
        %2289 = vmatpush.bf16.msra.mxu0 %v2280
        %2290 = vmatmul.bf16.gmra.mxu0 %v2277
        %v2291 = vpop.f32.mrf.mxu0
        %v2292 = vadd.f32 0.0, %v2291
        %v2293 = vpop.f32.mrf.mxu0
        %2294 = vdwg.mxu0
        %v2295 = vpack.c.bf16 %v2292, %v2292
        %2297 = vrot.lane.b32.xlu0 %v2295, 64
        %v2298 = vpop.permute.xlu0 %2297
        %vm2300 = vcmask 1042944
        %vm2301 = vmand %vm2300, %vm2138
        %v2302 = vld [vmem:[#allocation3] sm:$0x7]
        %v2303 = vsel %vm2301, %v2298, %v2302
        %2304 = vst [vmem:[#allocation3] sm:$0x7] %v2303
        %v2305 = vld [vmem:[#allocation2 + $0x4] sm:$0x7]
        %v2306 = vld [vmem:[#allocation2 + $0x10] sm:$0x7]
        %v2307 = vld [vmem:[#allocation2 + $0x1c] sm:$0x7]
        %v2309 = vsel %vm2162, %v2305, 0
        %v2312 = vsel %vm2162, %v2306, 0
        %2314 = vmatpush.bf16.xpose.msra.mxu0 0
        %2315 = vmatpush.bf16.xpose.msra.mxu0 0
        %2316 = vmatpush.bf16.xpose.msra.mxu0 0
        %2317 = vmatpush.bf16.xpose.msra.mxu0 0
        %2318 = vmatpush.bf16.xpose.msra.mxu0 0
        %2319 = vmatpush.bf16.xpose.msra.mxu0 0
        %2320 = vmatpush.bf16.xpose.msra.mxu0 0
        %2321 = vmatpush.bf16.xpose.msra.mxu0 %v2312
        %2322 = vmatmul.bf16.gmra.mxu0 %v2309
        %v2323 = vpop.f32.mrf.mxu0
        %v2324 = vadd.f32 0.0, %v2323
        %v2325 = vpop.f32.mrf.mxu0
        %2326 = vdwg.mxu0
        %v2327 = vmul.f32 %v2324, 0.125
        %v2328 = vsel %vm2183, %v2327, -inf
        %2329 = vmax.xlane.f32.xlu0 %v2328
        %v2330 = vpop.xlane.xlu0 %2329
        %v2331 = vsub.f32 %v2327, %v2330
        %v2332 = vmul.f32 %v2331, 1.442695
        %v2333 = vpow.pop %v2332
        %v2334 = vsel %vm2183, %v2333, 0.0
        %2335 = vadd.xlane.f32.xlu0 %v2334
        %v2336 = vpop.xlane.xlu0 %2335
        %v2337 = vrcp.pop %v2336
        %v2338 = vmul.f32 %v2333, %v2337
        %v2339 = vpack.c.bf16 %v2338, %v2338
        %v2341 = vsel %vm2196, %v2339, 0
        %v2344 = vand.u32 %v2307, %v2203
        %2346 = vmatpush.bf16.msra.mxu0 0
        %2347 = vmatpush.bf16.msra.mxu0 0
        %2348 = vmatpush.bf16.msra.mxu0 0
        %2349 = vmatpush.bf16.msra.mxu0 0
        %2350 = vmatpush.bf16.msra.mxu0 0
        %2351 = vmatpush.bf16.msra.mxu0 0
        %2352 = vmatpush.bf16.msra.mxu0 0
        %2353 = vmatpush.bf16.msra.mxu0 %v2344
        %2354 = vmatmul.bf16.gmra.mxu0 %v2341
        %v2355 = vpop.f32.mrf.mxu0
        %v2356 = vadd.f32 0.0, %v2355
        %v2357 = vpop.f32.mrf.mxu0
        %2358 = vdwg.mxu0
        %v2359 = vpack.c.bf16 %v2356, %v2356
        %v2360 = vld [vmem:[#allocation3 + $0x4] sm:$0x7]
        %v2361 = vsel %vm2222, %v2359, %v2360
        %2362 = vst [vmem:[#allocation3 + $0x4] sm:$0x7] %v2361
        %v2363 = vld [vmem:[#allocation2 + $0x4] sm:$0x7]
        %v2364 = vld [vmem:[#allocation2 + $0x10] sm:$0x7]
        %v2365 = vld [vmem:[#allocation2 + $0x1c] sm:$0x7]
        %v2367 = vunpack.c.l.b16 %v2363
        %v2368 = vpack.c.b16 %v2367, %v2367
        %2369 = vrot.lane.b32.xlu0 %v2368, 64
        %v2370 = vpop.permute.xlu0 %2369
        %v2372 = vunpack.c.l.b16 %v2364
        %v2373 = vpack.c.b16 %v2372, %v2372
        %2374 = vrot.lane.b32.xlu0 %v2373, 64
        %v2375 = vpop.permute.xlu0 %2374
        %v2377 = vsel %vm2162, %v2370, 0
        %v2380 = vsel %vm2162, %v2375, 0
        %2382 = vmatpush.bf16.xpose.msra.mxu0 0
        %2383 = vmatpush.bf16.xpose.msra.mxu0 0
        %2384 = vmatpush.bf16.xpose.msra.mxu0 0
        %2385 = vmatpush.bf16.xpose.msra.mxu0 0
        %2386 = vmatpush.bf16.xpose.msra.mxu0 0
        %2387 = vmatpush.bf16.xpose.msra.mxu0 0
        %2388 = vmatpush.bf16.xpose.msra.mxu0 0
        %2389 = vmatpush.bf16.xpose.msra.mxu0 %v2380
        %2390 = vmatmul.bf16.gmra.mxu0 %v2377
        %v2391 = vpop.f32.mrf.mxu0
        %v2392 = vadd.f32 0.0, %v2391
        %v2393 = vpop.f32.mrf.mxu0
        %2394 = vdwg.mxu0
        %v2395 = vmul.f32 %v2392, 0.125
        %v2396 = vsel %vm2183, %v2395, -inf
        %2397 = vmax.xlane.f32.xlu0 %v2396
        %v2398 = vpop.xlane.xlu0 %2397
        %v2399 = vsub.f32 %v2395, %v2398
        %v2400 = vmul.f32 %v2399, 1.442695
        %v2401 = vpow.pop %v2400
        %v2402 = vsel %vm2183, %v2401, 0.0
        %2403 = vadd.xlane.f32.xlu0 %v2402
        %v2404 = vpop.xlane.xlu0 %2403
        %v2405 = vrcp.pop %v2404
        %v2406 = vmul.f32 %v2401, %v2405
        %v2407 = vpack.c.bf16 %v2406, %v2406
        %v2409 = vunpack.c.l.b16 %v2365
        %v2410 = vpack.c.b16 %v2409, %v2409
        %2411 = vrot.lane.b32.xlu0 %v2410, 64
        %v2412 = vpop.permute.xlu0 %2411
        %v2414 = vsel %vm2196, %v2407, 0
        %v2417 = vand.u32 %v2412, %v2203
        %2419 = vmatpush.bf16.msra.mxu0 0
        %2420 = vmatpush.bf16.msra.mxu0 0
        %2421 = vmatpush.bf16.msra.mxu0 0
        %2422 = vmatpush.bf16.msra.mxu0 0
        %2423 = vmatpush.bf16.msra.mxu0 0
        %2424 = vmatpush.bf16.msra.mxu0 0
        %2425 = vmatpush.bf16.msra.mxu0 0
        %2426 = vmatpush.bf16.msra.mxu0 %v2417
        %2427 = vmatmul.bf16.gmra.mxu0 %v2414
        %v2428 = vpop.f32.mrf.mxu0
        %v2429 = vadd.f32 0.0, %v2428
        %v2430 = vpop.f32.mrf.mxu0
        %2431 = vdwg.mxu0
        %v2432 = vpack.c.bf16 %v2429, %v2429
        %2434 = vrot.lane.b32.xlu0 %v2432, 64
        %v2435 = vpop.permute.xlu0 %2434
        %v2437 = vld [vmem:[#allocation3 + $0x4] sm:$0x7]
        %v2438 = vsel %vm2301, %v2435, %v2437
        %2439 = vst [vmem:[#allocation3 + $0x4] sm:$0x7] %v2438
        %v2440 = vld [vmem:[#allocation2 + $0x8] sm:$0x7]
        %v2441 = vld [vmem:[#allocation2 + $0x14] sm:$0x7]
        %v2442 = vld [vmem:[#allocation2 + $0x20] sm:$0x7]
        %v2444 = vsel %vm2162, %v2440, 0
        %v2447 = vsel %vm2162, %v2441, 0
        %2449 = vmatpush.bf16.xpose.msra.mxu0 0
        %2450 = vmatpush.bf16.xpose.msra.mxu0 0
        %2451 = vmatpush.bf16.xpose.msra.mxu0 0
        %2452 = vmatpush.bf16.xpose.msra.mxu0 0
        %2453 = vmatpush.bf16.xpose.msra.mxu0 0
        %2454 = vmatpush.bf16.xpose.msra.mxu0 0
        %2455 = vmatpush.bf16.xpose.msra.mxu0 0
        %2456 = vmatpush.bf16.xpose.msra.mxu0 %v2447
        %2457 = vmatmul.bf16.gmra.mxu0 %v2444
        %v2458 = vpop.f32.mrf.mxu0
        %v2459 = vadd.f32 0.0, %v2458
        %v2460 = vpop.f32.mrf.mxu0
        %2461 = vdwg.mxu0
        %v2462 = vmul.f32 %v2459, 0.125
        %v2463 = vsel %vm2183, %v2462, -inf
        %2464 = vmax.xlane.f32.xlu0 %v2463
        %v2465 = vpop.xlane.xlu0 %2464
        %v2466 = vsub.f32 %v2462, %v2465
        %v2467 = vmul.f32 %v2466, 1.442695
        %v2468 = vpow.pop %v2467
        %v2469 = vsel %vm2183, %v2468, 0.0
        %2470 = vadd.xlane.f32.xlu0 %v2469
        %v2471 = vpop.xlane.xlu0 %2470
        %v2472 = vrcp.pop %v2471
        %v2473 = vmul.f32 %v2468, %v2472
        %v2474 = vpack.c.bf16 %v2473, %v2473
        %v2476 = vsel %vm2196, %v2474, 0
        %v2479 = vand.u32 %v2442, %v2203
        %2481 = vmatpush.bf16.msra.mxu0 0
        %2482 = vmatpush.bf16.msra.mxu0 0
        %2483 = vmatpush.bf16.msra.mxu0 0
        %2484 = vmatpush.bf16.msra.mxu0 0
        %2485 = vmatpush.bf16.msra.mxu0 0
        %2486 = vmatpush.bf16.msra.mxu0 0
        %2487 = vmatpush.bf16.msra.mxu0 0
        %2488 = vmatpush.bf16.msra.mxu0 %v2479
        %2489 = vmatmul.bf16.gmra.mxu0 %v2476
        %v2490 = vpop.f32.mrf.mxu0
        %v2491 = vadd.f32 0.0, %v2490
        %v2492 = vpop.f32.mrf.mxu0
        %2493 = vdwg.mxu0
        %v2494 = vpack.c.bf16 %v2491, %v2491
        %v2495 = vld [vmem:[#allocation3 + $0x8] sm:$0x7]
        %v2496 = vsel %vm2222, %v2494, %v2495
        %2497 = vst [vmem:[#allocation3 + $0x8] sm:$0x7] %v2496
        %v2498 = vld [vmem:[#allocation2 + $0x8] sm:$0x7]
        %v2499 = vld [vmem:[#allocation2 + $0x14] sm:$0x7]
        %v2500 = vld [vmem:[#allocation2 + $0x20] sm:$0x7]
        %v2502 = vunpack.c.l.b16 %v2498
        %v2503 = vpack.c.b16 %v2502, %v2502
        %2504 = vrot.lane.b32.xlu0 %v2503, 64
        %v2505 = vpop.permute.xlu0 %2504
        %v2507 = vunpack.c.l.b16 %v2499
        %v2508 = vpack.c.b16 %v2507, %v2507
        %2509 = vrot.lane.b32.xlu0 %v2508, 64
        %v2510 = vpop.permute.xlu0 %2509
        %v2512 = vsel %vm2162, %v2505, 0
        %v2515 = vsel %vm2162, %v2510, 0
        %2517 = vmatpush.bf16.xpose.msra.mxu0 0
        %2518 = vmatpush.bf16.xpose.msra.mxu0 0
        %2519 = vmatpush.bf16.xpose.msra.mxu0 0
        %2520 = vmatpush.bf16.xpose.msra.mxu0 0
        %2521 = vmatpush.bf16.xpose.msra.mxu0 0
        %2522 = vmatpush.bf16.xpose.msra.mxu0 0
        %2523 = vmatpush.bf16.xpose.msra.mxu0 0
        %2524 = vmatpush.bf16.xpose.msra.mxu0 %v2515
        %2525 = vmatmul.bf16.gmra.mxu0 %v2512
        %v2526 = vpop.f32.mrf.mxu0
        %v2527 = vadd.f32 0.0, %v2526
        %v2528 = vpop.f32.mrf.mxu0
        %2529 = vdwg.mxu0
        %v2530 = vmul.f32 %v2527, 0.125
        %v2531 = vsel %vm2183, %v2530, -inf
        %2532 = vmax.xlane.f32.xlu0 %v2531
        %v2533 = vpop.xlane.xlu0 %2532
        %v2534 = vsub.f32 %v2530, %v2533
        %v2535 = vmul.f32 %v2534, 1.442695
        %v2536 = vpow.pop %v2535
        %v2537 = vsel %vm2183, %v2536, 0.0
        %2538 = vadd.xlane.f32.xlu0 %v2537
        %v2539 = vpop.xlane.xlu0 %2538
        %v2540 = vrcp.pop %v2539
        %v2541 = vmul.f32 %v2536, %v2540
        %v2542 = vpack.c.bf16 %v2541, %v2541
        %v2544 = vunpack.c.l.b16 %v2500
        %v2545 = vpack.c.b16 %v2544, %v2544
        %2546 = vrot.lane.b32.xlu0 %v2545, 64
        %v2547 = vpop.permute.xlu0 %2546
        %v2549 = vsel %vm2196, %v2542, 0
        %v2552 = vand.u32 %v2547, %v2203
        %2554 = vmatpush.bf16.msra.mxu0 0
        %2555 = vmatpush.bf16.msra.mxu0 0
        %2556 = vmatpush.bf16.msra.mxu0 0
        %2557 = vmatpush.bf16.msra.mxu0 0
        %2558 = vmatpush.bf16.msra.mxu0 0
        %2559 = vmatpush.bf16.msra.mxu0 0
        %2560 = vmatpush.bf16.msra.mxu0 0
        %2561 = vmatpush.bf16.msra.mxu0 %v2552
        %2562 = vmatmul.bf16.gmra.mxu0 %v2549
        %v2563 = vpop.f32.mrf.mxu0
        %v2564 = vadd.f32 0.0, %v2563
        %v2565 = vpop.f32.mrf.mxu0
        %2566 = vdwg.mxu0
        %v2567 = vpack.c.bf16 %v2564, %v2564
        %2569 = vrot.lane.b32.xlu0 %v2567, 64
        %v2570 = vpop.permute.xlu0 %2569
        %v2572 = vld [vmem:[#allocation3 + $0x8] sm:$0x7]
        %v2573 = vsel %vm2301, %v2570, %v2572
        %2574 = vst [vmem:[#allocation3 + $0x8] sm:$0x7] %v2573
        %v2575 = vld [vmem:[#allocation3] sm:$0x77]
        %v2576 = vld [vmem:[#allocation3 + $0x8] sm:$0x7]
        %v2577 = vld [vmem:[#allocation6] sm:$0xff]
        %v2578 = vld [vmem:[#allocation6 + $0x8] sm:$0xf]
        %v2579 = vld [vmem:[#allocation6 + $0xc] sm:$0xff]
        %v2580 = vld [vmem:[#allocation6 + $0x14] sm:$0xf]
        %v2581 = vld [vmem:[#allocation6 + $0x18] sm:$0xff]
        %v2582 = vld [vmem:[#allocation6 + $0x20] sm:$0xf]
        %v2583 = vld [vmem:[#allocation6 + $0x24] sm:$0xff]
        %v2584 = vld [vmem:[#allocation6 + $0x2c] sm:$0xf]
        %v2585 = vld [vmem:[#allocation6 + $0x30] sm:$0xff]
        %v2586 = vld [vmem:[#allocation6 + $0x38] sm:$0xf]
        %v2587 = vld [vmem:[#allocation6 + $0x3c] sm:$0xff]
        %v2588 = vld [vmem:[#allocation6 + $0x44] sm:$0xf]
        %v2589 = vld [vmem:[#allocation6 + $0x48] sm:$0xff]
        %v2590 = vld [vmem:[#allocation6 + $0x50] sm:$0xf]
        %v2591 = vld [vmem:[#allocation6 + $0x54] sm:$0xff]
        %v2592 = vld [vmem:[#allocation6 + $0x5c] sm:$0xf]
        %v2593 = vld [vmem:[#allocation6 + $0x60] sm:$0xff]
        %v2594 = vld [vmem:[#allocation6 + $0x68] sm:$0xf]
        %v2595 = vld [vmem:[#allocation6 + $0x6c] sm:$0xff]
        %v2596 = vld [vmem:[#allocation6 + $0x74] sm:$0xf]
        %v2597 = vld [vmem:[#allocation6 + $0x78] sm:$0xff]
        %v2598 = vld [vmem:[#allocation6 + $0x80] sm:$0xf]
        %v2599 = vld [vmem:[#allocation6 + $0x84] sm:$0xff]
        %v2600 = vld [vmem:[#allocation6 + $0x8c] sm:$0xf]
        %v2601 = vld [vmem:[#allocation6 + $0x90] sm:$0xff]
        %v2602 = vld [vmem:[#allocation6 + $0x98] sm:$0xf]
        %v2603 = vld [vmem:[#allocation6 + $0x9c] sm:$0xff]
        %v2604 = vld [vmem:[#allocation6 + $0xa4] sm:$0xf]
        %v2605 = vld [vmem:[#allocation6 + $0xa8] sm:$0xff]
        %v2606 = vld [vmem:[#allocation6 + $0xb0] sm:$0xf]
        %v2607 = vld [vmem:[#allocation6 + $0xb4] sm:$0xff]
        %v2608 = vld [vmem:[#allocation6 + $0xbc] sm:$0xf]
        %v2609 = vld [vmem:[#allocation6 + $0xc0] sm:$0xff]
        %v2610 = vld [vmem:[#allocation6 + $0xc8] sm:$0xf]
        %v2611 = vld [vmem:[#allocation6 + $0xcc] sm:$0xff]
        %v2612 = vld [vmem:[#allocation6 + $0xd4] sm:$0xf]
        %v2613 = vld [vmem:[#allocation6 + $0xd8] sm:$0xff]
        %v2614 = vld [vmem:[#allocation6 + $0xe0] sm:$0xf]
        %v2615 = vld [vmem:[#allocation6 + $0xe4] sm:$0xff]
        %v2616 = vld [vmem:[#allocation6 + $0xec] sm:$0xf]
        %v2617 = vld [vmem:[#allocation6 + $0xf0] sm:$0xff]
        %v2618 = vld [vmem:[#allocation6 + $0xf8] sm:$0xf]
        %v2619 = vld [vmem:[#allocation6 + $0xfc] sm:$0xff]
        %v2620 = vld [vmem:[#allocation6 + $0x104] sm:$0xf]
        %v2621 = vld [vmem:[#allocation6 + $0x108] sm:$0xff]
        %v2622 = vld [vmem:[#allocation6 + $0x110] sm:$0xf]
        %v2623 = vld [vmem:[#allocation6 + $0x114] sm:$0xff]
        %v2624 = vld [vmem:[#allocation6 + $0x11c] sm:$0xf]
        %v2625 = vld [vmem:[#allocation6 + $0x120] sm:$0xff]
        %v2626 = vld [vmem:[#allocation6 + $0x128] sm:$0xf]
        %v2627 = vld [vmem:[#allocation6 + $0x12c] sm:$0xff]
        %v2628 = vld [vmem:[#allocation6 + $0x134] sm:$0xf]
        %v2629 = vld [vmem:[#allocation6 + $0x138] sm:$0xff]
        %v2630 = vld [vmem:[#allocation6 + $0x140] sm:$0xf]
        %v2631 = vld [vmem:[#allocation6 + $0x144] sm:$0xff]
        %v2632 = vld [vmem:[#allocation6 + $0x14c] sm:$0xf]
        %v2633 = vld [vmem:[#allocation6 + $0x150] sm:$0xff]
        %v2634 = vld [vmem:[#allocation6 + $0x158] sm:$0xf]
        %v2635 = vld [vmem:[#allocation6 + $0x15c] sm:$0xff]
        %v2636 = vld [vmem:[#allocation6 + $0x164] sm:$0xf]
        %v2637 = vld [vmem:[#allocation6 + $0x168] sm:$0xff]
        %v2638 = vld [vmem:[#allocation6 + $0x170] sm:$0xf]
        %v2639 = vld [vmem:[#allocation6 + $0x174] sm:$0xff]
        %v2640 = vld [vmem:[#allocation6 + $0x17c] sm:$0xf]
        %v2641 = vld [vmem:[#allocation6 + $0x180] sm:$0xff]
        %v2642 = vld [vmem:[#allocation6 + $0x188] sm:$0xf]
        %v2643 = vld [vmem:[#allocation6 + $0x18c] sm:$0xff]
        %v2644 = vld [vmem:[#allocation6 + $0x194] sm:$0xf]
        %v2645 = vld [vmem:[#allocation6 + $0x198] sm:$0xff]
        %v2646 = vld [vmem:[#allocation6 + $0x1a0] sm:$0xf]
        %v2647 = vld [vmem:[#allocation6 + $0x1a4] sm:$0xff]
        %v2648 = vld [vmem:[#allocation6 + $0x1ac] sm:$0xf]
        %v2649 = vld [vmem:[#allocation6 + $0x1b0] sm:$0xff]
        %v2650 = vld [vmem:[#allocation6 + $0x1b8] sm:$0xf]
        %v2651 = vld [vmem:[#allocation6 + $0x1bc] sm:$0xff]
        %v2652 = vld [vmem:[#allocation6 + $0x1c4] sm:$0xf]
        %v2653 = vld [vmem:[#allocation6 + $0x1c8] sm:$0xff]
        %v2654 = vld [vmem:[#allocation6 + $0x1d0] sm:$0xf]
        %v2655 = vld [vmem:[#allocation6 + $0x1d4] sm:$0xff]
        %v2656 = vld [vmem:[#allocation6 + $0x1dc] sm:$0xf]
        %v2657 = vld [vmem:[#allocation6 + $0x1e0] sm:$0xff]
        %v2658 = vld [vmem:[#allocation6 + $0x1e8] sm:$0xf]
        %v2659 = vld [vmem:[#allocation6 + $0x1ec] sm:$0xff]
        %v2660 = vld [vmem:[#allocation6 + $0x1f4] sm:$0xf]
        %v2661 = vld [vmem:[#allocation6 + $0x1f8] sm:$0xff]
        %v2662 = vld [vmem:[#allocation6 + $0x200] sm:$0xf]
        %v2663 = vld [vmem:[#allocation6 + $0x204] sm:$0xff]
        %v2664 = vld [vmem:[#allocation6 + $0x20c] sm:$0xf]
        %v2665 = vld [vmem:[#allocation6 + $0x210] sm:$0xff]
        %v2666 = vld [vmem:[#allocation6 + $0x218] sm:$0xf]
        %v2667 = vld [vmem:[#allocation6 + $0x21c] sm:$0xff]
        %v2668 = vld [vmem:[#allocation6 + $0x224] sm:$0xf]
        %v2669 = vld [vmem:[#allocation6 + $0x228] sm:$0xff]
        %v2670 = vld [vmem:[#allocation6 + $0x230] sm:$0xf]
        %v2671 = vld [vmem:[#allocation6 + $0x234] sm:$0xff]
        %v2672 = vld [vmem:[#allocation6 + $0x23c] sm:$0xf]
        %v2673 = vld [vmem:[%s6] sm:$0x7]
        %v2675 = vperm.slane %v2673, 0
        %v2676 = vperm.slane %v2673, 1
        %v2677 = vperm.slane %v2673, 2
        %v2683 = vunpack.c.l.b16 %v2575
        %v2684 = vunpack.c.h.b16 %v2575
        %v2685 = vunpack.c.l.b16 %v2576
        %v2686 = vpack.c.b16 %v2683, %v2683
        %v2687 = vpack.c.b16 %v2684, %v2684
        %v2688 = vpack.c.b16 %v2685, %v2685
        %v2788 = vunpack.c.l.b16 %v2577
        %v2789 = vunpack.c.h.b16 %v2577
        %v2790 = vunpack.c.l.b16 %v2578
        %v2791 = vunpack.c.l.b16 %v2579
        %v2792 = vunpack.c.h.b16 %v2579
        %v2793 = vunpack.c.l.b16 %v2580
        %v2794 = vunpack.c.l.b16 %v2581
        %v2795 = vunpack.c.h.b16 %v2581
        %v2796 = vunpack.c.l.b16 %v2582
        %v2797 = vunpack.c.l.b16 %v2583
        %v2798 = vunpack.c.h.b16 %v2583
        %v2799 = vunpack.c.l.b16 %v2584
        %v2800 = vunpack.c.l.b16 %v2585
        %v2801 = vunpack.c.h.b16 %v2585
        %v2802 = vunpack.c.l.b16 %v2586
        %v2803 = vunpack.c.l.b16 %v2587
        %v2804 = vunpack.c.h.b16 %v2587
        %v2805 = vunpack.c.l.b16 %v2588
        %v2806 = vunpack.c.l.b16 %v2589
        %v2807 = vunpack.c.h.b16 %v2589
        %v2808 = vunpack.c.l.b16 %v2590
        %v2809 = vunpack.c.l.b16 %v2591
        %v2810 = vunpack.c.h.b16 %v2591
        %v2811 = vunpack.c.l.b16 %v2592
        %v2812 = vunpack.c.l.b16 %v2593
        %v2813 = vunpack.c.h.b16 %v2593
        %v2814 = vunpack.c.l.b16 %v2594
        %v2815 = vunpack.c.l.b16 %v2595
        %v2816 = vunpack.c.h.b16 %v2595
        %v2817 = vunpack.c.l.b16 %v2596
        %v2818 = vunpack.c.l.b16 %v2597
        %v2819 = vunpack.c.h.b16 %v2597
        %v2820 = vunpack.c.l.b16 %v2598
        %v2821 = vunpack.c.l.b16 %v2599
        %v2822 = vunpack.c.h.b16 %v2599
        %v2823 = vunpack.c.l.b16 %v2600
        %v2824 = vunpack.c.l.b16 %v2601
        %v2825 = vunpack.c.h.b16 %v2601
        %v2826 = vunpack.c.l.b16 %v2602
        %v2827 = vunpack.c.l.b16 %v2603
        %v2828 = vunpack.c.h.b16 %v2603
        %v2829 = vunpack.c.l.b16 %v2604
        %v2830 = vunpack.c.l.b16 %v2605
        %v2831 = vunpack.c.h.b16 %v2605
        %v2832 = vunpack.c.l.b16 %v2606
        %v2833 = vunpack.c.l.b16 %v2607
        %v2834 = vunpack.c.h.b16 %v2607
        %v2835 = vunpack.c.l.b16 %v2608
        %v2836 = vunpack.c.l.b16 %v2609
        %v2837 = vunpack.c.h.b16 %v2609
        %v2838 = vunpack.c.l.b16 %v2610
        %v2839 = vunpack.c.l.b16 %v2611
        %v2840 = vunpack.c.h.b16 %v2611
        %v2841 = vunpack.c.l.b16 %v2612
        %v2842 = vunpack.c.l.b16 %v2613
        %v2843 = vunpack.c.h.b16 %v2613
        %v2844 = vunpack.c.l.b16 %v2614
        %v2845 = vunpack.c.l.b16 %v2615
        %v2846 = vunpack.c.h.b16 %v2615
        %v2847 = vunpack.c.l.b16 %v2616
        %v2848 = vunpack.c.l.b16 %v2617
        %v2849 = vunpack.c.h.b16 %v2617
        %v2850 = vunpack.c.l.b16 %v2618
        %v2851 = vunpack.c.l.b16 %v2619
        %v2852 = vunpack.c.h.b16 %v2619
        %v2853 = vunpack.c.l.b16 %v2620
        %v2854 = vunpack.c.l.b16 %v2621
        %v2855 = vunpack.c.h.b16 %v2621
        %v2856 = vunpack.c.l.b16 %v2622
        %v2857 = vunpack.c.l.b16 %v2623
        %v2858 = vunpack.c.h.b16 %v2623
        %v2859 = vunpack.c.l.b16 %v2624
        %v2860 = vunpack.c.l.b16 %v2625
        %v2861 = vunpack.c.h.b16 %v2625
        %v2862 = vunpack.c.l.b16 %v2626
        %v2863 = vunpack.c.l.b16 %v2627
        %v2864 = vunpack.c.h.b16 %v2627
        %v2865 = vunpack.c.l.b16 %v2628
        %v2866 = vunpack.c.l.b16 %v2629
        %v2867 = vunpack.c.h.b16 %v2629
        %v2868 = vunpack.c.l.b16 %v2630
        %v2869 = vunpack.c.l.b16 %v2631
        %v2870 = vunpack.c.h.b16 %v2631
        %v2871 = vunpack.c.l.b16 %v2632
        %v2872 = vunpack.c.l.b16 %v2633
        %v2873 = vunpack.c.h.b16 %v2633
        %v2874 = vunpack.c.l.b16 %v2634
        %v2875 = vunpack.c.l.b16 %v2635
        %v2876 = vunpack.c.h.b16 %v2635
        %v2877 = vunpack.c.l.b16 %v2636
        %v2878 = vunpack.c.l.b16 %v2637
        %v2879 = vunpack.c.h.b16 %v2637
        %v2880 = vunpack.c.l.b16 %v2638
        %v2881 = vunpack.c.l.b16 %v2639
        %v2882 = vunpack.c.h.b16 %v2639
        %v2883 = vunpack.c.l.b16 %v2640
        %v2884 = vunpack.c.l.b16 %v2641
        %v2885 = vunpack.c.h.b16 %v2641
        %v2886 = vunpack.c.l.b16 %v2642
        %v2887 = vunpack.c.l.b16 %v2643
        %v2888 = vunpack.c.h.b16 %v2643
        %v2889 = vunpack.c.l.b16 %v2644
        %v2890 = vunpack.c.l.b16 %v2645
        %v2891 = vunpack.c.h.b16 %v2645
        %v2892 = vunpack.c.l.b16 %v2646
        %v2893 = vunpack.c.l.b16 %v2647
        %v2894 = vunpack.c.h.b16 %v2647
        %v2895 = vunpack.c.l.b16 %v2648
        %v2896 = vunpack.c.l.b16 %v2649
        %v2897 = vunpack.c.h.b16 %v2649
        %v2898 = vunpack.c.l.b16 %v2650
        %v2899 = vunpack.c.l.b16 %v2651
        %v2900 = vunpack.c.h.b16 %v2651
        %v2901 = vunpack.c.l.b16 %v2652
        %v2902 = vunpack.c.l.b16 %v2653
        %v2903 = vunpack.c.h.b16 %v2653
        %v2904 = vunpack.c.l.b16 %v2654
        %v2905 = vunpack.c.l.b16 %v2655
        %v2906 = vunpack.c.h.b16 %v2655
        %v2907 = vunpack.c.l.b16 %v2656
        %v2908 = vunpack.c.l.b16 %v2657
        %v2909 = vunpack.c.h.b16 %v2657
        %v2910 = vunpack.c.l.b16 %v2658
        %v2911 = vunpack.c.l.b16 %v2659
        %v2912 = vunpack.c.h.b16 %v2659
        %v2913 = vunpack.c.l.b16 %v2660
        %v2914 = vunpack.c.l.b16 %v2661
        %v2915 = vunpack.c.h.b16 %v2661
        %v2916 = vunpack.c.l.b16 %v2662
        %v2917 = vunpack.c.l.b16 %v2663
        %v2918 = vunpack.c.h.b16 %v2663
        %v2919 = vunpack.c.l.b16 %v2664
        %v2920 = vunpack.c.l.b16 %v2665
        %v2921 = vunpack.c.h.b16 %v2665
        %v2922 = vunpack.c.l.b16 %v2666
        %v2923 = vunpack.c.l.b16 %v2667
        %v2924 = vunpack.c.h.b16 %v2667
        %v2925 = vunpack.c.l.b16 %v2668
        %v2926 = vunpack.c.l.b16 %v2669
        %v2927 = vunpack.c.h.b16 %v2669
        %v2928 = vunpack.c.l.b16 %v2670
        %v2929 = vunpack.c.l.b16 %v2671
        %v2930 = vunpack.c.h.b16 %v2671
        %v2931 = vunpack.c.l.b16 %v2672
        %v2932 = vpack.c.b16 %v2791, %v2788
        %v2933 = vpack.c.b16 %v2792, %v2789
        %v2934 = vpack.c.b16 %v2793, %v2790
        %v2935 = vpack.c.b16 %v2797, %v2794
        %v2936 = vpack.c.b16 %v2798, %v2795
        %v2937 = vpack.c.b16 %v2799, %v2796
        %v2938 = vpack.c.b16 %v2803, %v2800
        %v2939 = vpack.c.b16 %v2804, %v2801
        %v2940 = vpack.c.b16 %v2805, %v2802
        %v2941 = vpack.c.b16 %v2809, %v2806
        %v2942 = vpack.c.b16 %v2810, %v2807
        %v2943 = vpack.c.b16 %v2811, %v2808
        %v2944 = vpack.c.b16 %v2815, %v2812
        %v2945 = vpack.c.b16 %v2816, %v2813
        %v2946 = vpack.c.b16 %v2817, %v2814
        %v2947 = vpack.c.b16 %v2821, %v2818
        %v2948 = vpack.c.b16 %v2822, %v2819
        %v2949 = vpack.c.b16 %v2823, %v2820
        %v2950 = vpack.c.b16 %v2827, %v2824
        %v2951 = vpack.c.b16 %v2828, %v2825
        %v2952 = vpack.c.b16 %v2829, %v2826
        %v2953 = vpack.c.b16 %v2833, %v2830
        %v2954 = vpack.c.b16 %v2834, %v2831
        %v2955 = vpack.c.b16 %v2835, %v2832
        %v2956 = vpack.c.b16 %v2839, %v2836
        %v2957 = vpack.c.b16 %v2840, %v2837
        %v2958 = vpack.c.b16 %v2841, %v2838
        %v2959 = vpack.c.b16 %v2845, %v2842
        %v2960 = vpack.c.b16 %v2846, %v2843
        %v2961 = vpack.c.b16 %v2847, %v2844
        %v2962 = vpack.c.b16 %v2851, %v2848
        %v2963 = vpack.c.b16 %v2852, %v2849
        %v2964 = vpack.c.b16 %v2853, %v2850
        %v2965 = vpack.c.b16 %v2857, %v2854
        %v2966 = vpack.c.b16 %v2858, %v2855
        %v2967 = vpack.c.b16 %v2859, %v2856
        %v2968 = vpack.c.b16 %v2863, %v2860
        %v2969 = vpack.c.b16 %v2864, %v2861
        %v2970 = vpack.c.b16 %v2865, %v2862
        %v2971 = vpack.c.b16 %v2869, %v2866
        %v2972 = vpack.c.b16 %v2870, %v2867
        %v2973 = vpack.c.b16 %v2871, %v2868
        %v2974 = vpack.c.b16 %v2875, %v2872
        %v2975 = vpack.c.b16 %v2876, %v2873
        %v2976 = vpack.c.b16 %v2877, %v2874
        %v2977 = vpack.c.b16 %v2881, %v2878
        %v2978 = vpack.c.b16 %v2882, %v2879
        %v2979 = vpack.c.b16 %v2883, %v2880
        %v2980 = vpack.c.b16 %v2887, %v2884
        %v2981 = vpack.c.b16 %v2888, %v2885
        %v2982 = vpack.c.b16 %v2889, %v2886
        %v2983 = vpack.c.b16 %v2893, %v2890
        %v2984 = vpack.c.b16 %v2894, %v2891
        %v2985 = vpack.c.b16 %v2895, %v2892
        %v2986 = vpack.c.b16 %v2899, %v2896
        %v2987 = vpack.c.b16 %v2900, %v2897
        %v2988 = vpack.c.b16 %v2901, %v2898
        %v2989 = vpack.c.b16 %v2905, %v2902
        %v2990 = vpack.c.b16 %v2906, %v2903
        %v2991 = vpack.c.b16 %v2907, %v2904
        %v2992 = vpack.c.b16 %v2911, %v2908
        %v2993 = vpack.c.b16 %v2912, %v2909
        %v2994 = vpack.c.b16 %v2913, %v2910
        %v2995 = vpack.c.b16 %v2917, %v2914
        %v2996 = vpack.c.b16 %v2918, %v2915
        %v2997 = vpack.c.b16 %v2919, %v2916
        %v2998 = vpack.c.b16 %v2923, %v2920
        %v2999 = vpack.c.b16 %v2924, %v2921
        %v3000 = vpack.c.b16 %v2925, %v2922
        %v3001 = vpack.c.b16 %v2929, %v2926
        %v3002 = vpack.c.b16 %v2930, %v2927
        %v3003 = vpack.c.b16 %v2931, %v2928
        %3076 = vmatpush.bf16.msra.mxu0 %v2953
        %3077 = vmatpush.bf16.msra.mxu0 %v2950
        %3078 = vmatpush.bf16.msra.mxu0 %v2947
        %3079 = vmatpush.bf16.msra.mxu0 %v2944
        %3080 = vmatpush.bf16.msra.mxu0 %v2941
        %3081 = vmatpush.bf16.msra.mxu0 %v2938
        %3082 = vmatpush.bf16.msra.mxu0 %v2935
        %3083 = vmatpush.bf16.msra.mxu0 %v2932
        %3084 = vmatmul.bf16.gmra.mxu0 %v2686
        %v3085 = vpop.f32.mrf.mxu0
        %v3086 = vadd.f32 %v2675, %v3085
        %v3087 = vpop.f32.mrf.mxu0
        %3088 = vdwg.mxu0
        %3089 = vmatpush.bf16.msra.mxu0 %v2977
        %3090 = vmatpush.bf16.msra.mxu0 %v2974
        %3091 = vmatpush.bf16.msra.mxu0 %v2971
        %3092 = vmatpush.bf16.msra.mxu0 %v2968
        %3093 = vmatpush.bf16.msra.mxu0 %v2965
        %3094 = vmatpush.bf16.msra.mxu0 %v2962
        %3095 = vmatpush.bf16.msra.mxu0 %v2959
        %3096 = vmatpush.bf16.msra.mxu0 %v2956
        %3097 = vmatmul.bf16.gmra.mxu0 %v2687
        %v3098 = vpop.f32.mrf.mxu0
        %v3099 = vadd.f32 %v3086, %v3098
        %v3100 = vpop.f32.mrf.mxu0
        %3101 = vdwg.mxu0
        %3102 = vmatpush.bf16.msra.mxu0 %v3001
        %3103 = vmatpush.bf16.msra.mxu0 %v2998
        %3104 = vmatpush.bf16.msra.mxu0 %v2995
        %3105 = vmatpush.bf16.msra.mxu0 %v2992
        %3106 = vmatpush.bf16.msra.mxu0 %v2989
        %3107 = vmatpush.bf16.msra.mxu0 %v2986
        %3108 = vmatpush.bf16.msra.mxu0 %v2983
        %3109 = vmatpush.bf16.msra.mxu0 %v2980
        %3110 = vmatmul.bf16.gmra.mxu0 %v2688
        %v3111 = vpop.f32.mrf.mxu0
        %v3112 = vadd.f32 %v3099, %v3111
        %v3113 = vpop.f32.mrf.mxu0
        %3114 = vdwg.mxu0
        %3115 = vmatpush.bf16.msra.mxu0 %v2954
        %3116 = vmatpush.bf16.msra.mxu0 %v2951
        %3117 = vmatpush.bf16.msra.mxu0 %v2948
        %3118 = vmatpush.bf16.msra.mxu0 %v2945
        %3119 = vmatpush.bf16.msra.mxu0 %v2942
        %3120 = vmatpush.bf16.msra.mxu0 %v2939
        %3121 = vmatpush.bf16.msra.mxu0 %v2936
        %3122 = vmatpush.bf16.msra.mxu0 %v2933
        %3123 = vmatmul.bf16.gmra.mxu0 %v2686
        %v3124 = vpop.f32.mrf.mxu0
        %v3125 = vadd.f32 %v2676, %v3124
        %v3126 = vpop.f32.mrf.mxu0
        %3127 = vdwg.mxu0
        %3128 = vmatpush.bf16.msra.mxu0 %v2978
        %3129 = vmatpush.bf16.msra.mxu0 %v2975
        %3130 = vmatpush.bf16.msra.mxu0 %v2972
        %3131 = vmatpush.bf16.msra.mxu0 %v2969
        %3132 = vmatpush.bf16.msra.mxu0 %v2966
        %3133 = vmatpush.bf16.msra.mxu0 %v2963
        %3134 = vmatpush.bf16.msra.mxu0 %v2960
        %3135 = vmatpush.bf16.msra.mxu0 %v2957
        %3136 = vmatmul.bf16.gmra.mxu0 %v2687
        %v3137 = vpop.f32.mrf.mxu0
        %v3138 = vadd.f32 %v3125, %v3137
        %v3139 = vpop.f32.mrf.mxu0
        %3140 = vdwg.mxu0
        %3141 = vmatpush.bf16.msra.mxu0 %v3002
        %3142 = vmatpush.bf16.msra.mxu0 %v2999
        %3143 = vmatpush.bf16.msra.mxu0 %v2996
        %3144 = vmatpush.bf16.msra.mxu0 %v2993
        %3145 = vmatpush.bf16.msra.mxu0 %v2990
        %3146 = vmatpush.bf16.msra.mxu0 %v2987
        %3147 = vmatpush.bf16.msra.mxu0 %v2984
        %3148 = vmatpush.bf16.msra.mxu0 %v2981
        %3149 = vmatmul.bf16.gmra.mxu0 %v2688
        %v3150 = vpop.f32.mrf.mxu0
        %v3151 = vadd.f32 %v3138, %v3150
        %v3152 = vpop.f32.mrf.mxu0
        %3153 = vdwg.mxu0
        %3154 = vmatpush.bf16.msra.mxu0 %v2955
        %3155 = vmatpush.bf16.msra.mxu0 %v2952
        %3156 = vmatpush.bf16.msra.mxu0 %v2949
        %3157 = vmatpush.bf16.msra.mxu0 %v2946
        %3158 = vmatpush.bf16.msra.mxu0 %v2943
        %3159 = vmatpush.bf16.msra.mxu0 %v2940
        %3160 = vmatpush.bf16.msra.mxu0 %v2937
        %3161 = vmatpush.bf16.msra.mxu0 %v2934
        %3162 = vmatmul.bf16.gmra.mxu0 %v2686
        %v3163 = vpop.f32.mrf.mxu0
        %v3164 = vadd.f32 %v2677, %v3163
        %v3165 = vpop.f32.mrf.mxu0
        %3166 = vdwg.mxu0
        %3167 = vmatpush.bf16.msra.mxu0 %v2979
        %3168 = vmatpush.bf16.msra.mxu0 %v2976
        %3169 = vmatpush.bf16.msra.mxu0 %v2973
        %3170 = vmatpush.bf16.msra.mxu0 %v2970
        %3171 = vmatpush.bf16.msra.mxu0 %v2967
        %3172 = vmatpush.bf16.msra.mxu0 %v2964
        %3173 = vmatpush.bf16.msra.mxu0 %v2961
        %3174 = vmatpush.bf16.msra.mxu0 %v2958
        %3175 = vmatmul.bf16.gmra.mxu0 %v2687
        %v3176 = vpop.f32.mrf.mxu0
        %v3177 = vadd.f32 %v3164, %v3176
        %v3178 = vpop.f32.mrf.mxu0
        %3179 = vdwg.mxu0
        %3180 = vmatpush.bf16.msra.mxu0 %v3003
        %3181 = vmatpush.bf16.msra.mxu0 %v3000
        %3182 = vmatpush.bf16.msra.mxu0 %v2997
        %3183 = vmatpush.bf16.msra.mxu0 %v2994
        %3184 = vmatpush.bf16.msra.mxu0 %v2991
        %3185 = vmatpush.bf16.msra.mxu0 %v2988
        %3186 = vmatpush.bf16.msra.mxu0 %v2985
        %3187 = vmatpush.bf16.msra.mxu0 %v2982
        %3188 = vmatmul.bf16.gmra.mxu0 %v2688
        %v3189 = vpop.f32.mrf.mxu0
        %v3190 = vadd.f32 %v3177, %v3189
        %v3191 = vpop.f32.mrf.mxu0
        %3192 = vdwg.mxu0
        %v3193 = vld [vmem:[%s7] sm:$0x7]
        %v3195 = vperm.slane %v3193, 0
        %v3196 = vperm.slane %v3193, 1
        %v3197 = vperm.slane %v3193, 2
        %v3201 = vmul.f32 %v3112, %v3195
        %v3202 = vmul.f32 %v3151, %v3196
        %v3203 = vmul.f32 %v3190, %v3197
        %v3204 = vadd.f32 %v343, %v3201
        %v3205 = vadd.f32 %v344, %v3202
        %v3206 = vadd.f32 %v345, %v3203
        %v3207 = vpack.c.bf16 %v3205, %v3204
        %v3208 = vpack.c.bf16 %v3206, %v3206
        %v3209 = vld [vmem:[%s339] sm:$0x77]
        %v3210 = vsel %vm2143, %v3207, %v3209
        %3211 = vst [vmem:[%s339] sm:$0x77] %v3210
        %v3212 = vld [vmem:[%s339 + $0x8] sm:$0x7]
        %v3213 = vsel %vm2139, %v3208, %v3212
        %3214 = vst [vmem:[%s339 + $0x8] sm:$0x7] %v3213
        %p3215 = scmp.lt.s32.totalorder %s21, 1
        %s3216 = scalar_select %p3215, %s21, 1
        %s3217 = smul.addr %s3216, 3
        %s3218 = smul.addr %s3217, 4
        %s3219 = scalar_lea.vmem %s8, %s3218
        // Predicated region
        $region61: #{brain_tumor_classifier.27} parent=51 // pred_check
          %p3220 = pneg %p212
        $region62: #{brain_tumor_classifier.27} parent=51 // pred_check_branch
          %3222 = sbr.rel (%p3220) target = $region64
        $region63: #{brain_tumor_classifier.27} parent=51 // pred_region
          _
        $region64: #{brain_tumor_classifier.27} parent=51 // pred_fallthru
          _
      $region52: #{brain_tumor_classifier.27} parent=5 // pred_fallthru
        _
      %p3223 = scmp.le.s32.totalorder 2, %s16
      // Predicated region
      $region65: #{brain_tumor_classifier.27} parent=5 // pred_check
        %p3224 = pneg %p3223
      $region66: #{brain_tumor_classifier.27} parent=5 // pred_check_branch
        %3226 = sbr.rel (%p3224) target = $region68
      $region67: #{brain_tumor_classifier.27} parent=5 // pred_region
        %s3227 = ssub.s32 %s16, 2
        // Predicated region
        $region69: #{brain_tumor_classifier.27} parent=67 // pred_check
          %p3228 = pneg %p218
        $region70: #{brain_tumor_classifier.27} parent=67 // pred_check_branch
          %3230 = sbr.rel (%p3228) target = $region72
        $region71: #{brain_tumor_classifier.27} parent=67 // pred_region
          %p3231 = scmp.lt.s32.totalorder %s22, 1
          %s3232 = scalar_select %p3231, %s22, 1
          %s3233 = smul.addr %s3232, 3
          %s3234 = smul.addr %s3233, 4
          %s3235 = scalar_lea.vmem %s8, %s3234
        $region72: #{brain_tumor_classifier.27} parent=67 // pred_fallthru
          _
      $region68: #{brain_tumor_classifier.27} parent=5 // pred_fallthru
        _
    $region6: #{brain_tumor_classifier.27} parent=1 // loop_footer
      %s20 = sadd.s32 1, %s16
    $region7: #{brain_tumor_classifier.27} parent=1 // loop_footer_branch
      %15 = sbr.rel target = $region3
    $region8: #{brain_tumor_classifier.27} parent=1 // loop_exit
      _
    %3236 = vsyncpa [#allocation5], 1
    %s3237 = scalar_lea.sflag [#allocation5], 1
    %3238 = vsyncpa %s3237, 1
    %3239 = vsyncpa [#allocation7], 1

// kernel: brain_tumor_classifier.28
$region0: #{brain_tumor_classifier.28}
  #allocation0 [shape = 'u32[]', space=smem, size = 0x4, offset = 0x4, fixed_abs, tag = 'smem constant byte address 0x4 - core index']
  #allocation1 [shape = 'u32[72,128]{1,0:T(1,128)}', space=vmem, size = 0x9000, scoped, tag = 'internal scratch']
  %s0 = inlined_call_operand.vmem [shape: bf16[10,384], index: 0, kind: input, shape index: {}]
  %s1 = inlined_call_operand.vmem [shape: f32[1,384], index: 1, kind: input, shape index: {}]
  %s2 = inlined_call_operand.vmem [shape: f32[1,384], index: 2, kind: input, shape index: {}]
  %s3 = inlined_call_operand.hbm [shape: bf16[384,1536], index: 3, kind: input, shape index: {}]
  %s4 = inlined_call_operand.vmem [shape: f32[1,1536], index: 4, kind: input, shape index: {}]
  %s5 = inlined_call_operand.hbm [shape: bf16[1536,384], index: 5, kind: input, shape index: {}]
  %s6 = inlined_call_operand.vmem [shape: f32[1,384], index: 6, kind: input, shape index: {}]
  %s7 = inlined_call_operand.vmem [shape: f32[1,384], index: 7, kind: input, shape index: {}]
  %s8 = inlined_call_operand.vmem [shape: bf16[10,384], index: 8, kind: output, shape index: {}]
  %s9 = sld [smem:[#allocation0]]
  $region73: #{brain_tumor_classifier.28} parent=0
    _
  %s11 = ssub.s32 1, %s9
  %s12 = scalar_select 0, %s11, %s9
  $region1: #{brain_tumor_classifier.28} parent=0
    #allocation2 [shape = 'u8[1179648]{0}', space=vmem, size = 0x120000, scoped, tag = 'input window, operand 3, single buffered']
    #allocation3 [shape = 's32[2]{0}', space=sflag, size = 0x8, scoped, tag = 'scoped memory for brain_tumor_classifier.28']
    #allocation4 [shape = 'u8[1179648]{0}', space=vmem, size = 0x120000, scoped, tag = 'input window, operand 5, single buffered']
    #allocation5 [shape = 's32[1]{0}', space=sflag, size = 0x4, scoped, tag = 'scoped memory for brain_tumor_classifier.28']
    %13 = vsyncpa [#allocation3], 0
    %14 = vsyncpa [#allocation5], 0
    loop: start=0, step=1, limit=4
    $region2: #{brain_tumor_classifier.28} parent=1 // loop_pre_header
      _
    $region3: #{brain_tumor_classifier.28} parent=1 // loop_header
      %s16 = sphi 0, %s20
      %p17 = scmp.ge.s32.totalorder %s16, 4
      %s26 = sphi 0, %s28
      %s29 = sphi 0, %s26
      %s30 = sphi 0, %s29
      %s46 = sphi 0, %s30
      %s50 = sphi 0, %s50
      %s52 = sphi 0, %s50
      %s53 = sphi 0, %s52
      %s67 = sphi 0, %s53
      %s71 = sphi 0, %s71
      %s73 = sphi 0, %s71
      %s74 = sphi 0, %s73
      %s88 = sphi 0, %s74
      %s92 = sphi 0, %s92
      %s94 = sphi 0, %s92
      %s95 = sphi 0, %s94
      %s109 = sphi 0, %s95
      %s113 = sphi 0, %s113
      %s115 = sphi 0, %s113
      %s116 = sphi 0, %s115
      %s130 = sphi 0, %s116
      %s134 = sphi 0, %s134
      %s136 = sphi 0, %s134
      %s137 = sphi 0, %s136
      %s151 = sphi 0, %s137
      %s155 = sphi 0, %s155
      %s157 = sphi 0, %s155
      %s158 = sphi 0, %s157
      %s172 = sphi 0, %s158
      %s176 = sphi 0, %s176
      %s178 = sphi 0, %s176
      %s179 = sphi 0, %s178
      %s193 = sphi 0, %s179
      %s199 = sphi 0, %s201
      %s202 = sphi 0, %s199
      %s203 = sphi 0, %s202
      %s219 = sphi 0, %s203
    $region4: #{brain_tumor_classifier.28} parent=1 // loop_header_branch
      %19 = sbr.rel (%p17) target = $region8
    $region5: #{brain_tumor_classifier.28} parent=1 // loop_body
      %s21 = ssub.s32 %s16, 1
      %s22 = ssub.s32 %s16, 2
      %s23 = sadd.s32 %s16, 1
      %s24 = ssub.s32 %s16, %s23
      %p25 = scmp.eq.s32.totalorder %s24, 0
      %s27 = sadd.s32 %s26, 1
      %s28 = scalar_select %p25, %s26, %s27
      %p31 = pneg %p25
      %p32 = scmp.eq.s32.totalorder %s16, 1
      %p33 = por %p31, %p32
      %p34 = scmp.ne.s32.totalorder %s26, %s29
      %p35 = scmp.eq.s32.totalorder %s16, 0
      %p36 = por %p34, %p35
      %p37 = scmp.ne.s32.totalorder %s26, %s29
      %p38 = scmp.eq.s32.totalorder %s21, 1
      %p39 = por %p37, %p38
      %p40 = scmp.ne.s32.totalorder %s29, %s30
      %p41 = scmp.eq.s32.totalorder %s21, 0
      %p42 = por %p40, %p41
      %p43 = scmp.ne.s32.totalorder %s29, %s30
      %p44 = scmp.eq.s32.totalorder %s22, 1
      %p45 = por %p43, %p44
      %p47 = scmp.ne.s32.totalorder %s30, %s46
      %p48 = scmp.eq.s32.totalorder %s22, 0
      %p49 = por %p47, %p48
      %s51 = sadd.s32 %s50, 1
      %p54 = scmp.eq.s32.totalorder %s16, 1
      %p55 = scmp.ne.s32.totalorder %s50, %s52
      %p56 = scmp.eq.s32.totalorder %s16, 0
      %p57 = por %p55, %p56
      %p58 = scmp.ne.s32.totalorder %s50, %s52
      %p59 = scmp.eq.s32.totalorder %s21, 1
      %p60 = por %p58, %p59
      %p61 = scmp.ne.s32.totalorder %s52, %s53
      %p62 = scmp.eq.s32.totalorder %s21, 0
      %p63 = por %p61, %p62
      %p64 = scmp.ne.s32.totalorder %s52, %s53
      %p65 = scmp.eq.s32.totalorder %s22, 1
      %p66 = por %p64, %p65
      %p68 = scmp.ne.s32.totalorder %s53, %s67
      %p69 = scmp.eq.s32.totalorder %s22, 0
      %p70 = por %p68, %p69
      %s72 = sadd.s32 %s71, 1
      %p75 = scmp.eq.s32.totalorder %s16, 1
      %p76 = scmp.ne.s32.totalorder %s71, %s73
      %p77 = scmp.eq.s32.totalorder %s16, 0
      %p78 = por %p76, %p77
      %p79 = scmp.ne.s32.totalorder %s71, %s73
      %p80 = scmp.eq.s32.totalorder %s21, 1
      %p81 = por %p79, %p80
      %p82 = scmp.ne.s32.totalorder %s73, %s74
      %p83 = scmp.eq.s32.totalorder %s21, 0
      %p84 = por %p82, %p83
      %p85 = scmp.ne.s32.totalorder %s73, %s74
      %p86 = scmp.eq.s32.totalorder %s22, 1
      %p87 = por %p85, %p86
      %p89 = scmp.ne.s32.totalorder %s74, %s88
      %p90 = scmp.eq.s32.totalorder %s22, 0
      %p91 = por %p89, %p90
      %s93 = sadd.s32 %s92, 1
      %p96 = scmp.eq.s32.totalorder %s16, 1
      %p97 = scmp.ne.s32.totalorder %s92, %s94
      %p98 = scmp.eq.s32.totalorder %s16, 0
      %p99 = por %p97, %p98
      %p100 = scmp.ne.s32.totalorder %s92, %s94
      %p101 = scmp.eq.s32.totalorder %s21, 1
      %p102 = por %p100, %p101
      %p103 = scmp.ne.s32.totalorder %s94, %s95
      %p104 = scmp.eq.s32.totalorder %s21, 0
      %p105 = por %p103, %p104
      %p106 = scmp.ne.s32.totalorder %s94, %s95
      %p107 = scmp.eq.s32.totalorder %s22, 1
      %p108 = por %p106, %p107
      %p110 = scmp.ne.s32.totalorder %s95, %s109
      %p111 = scmp.eq.s32.totalorder %s22, 0
      %p112 = por %p110, %p111
      %s114 = sadd.s32 %s113, 1
      %p117 = scmp.eq.s32.totalorder %s16, 1
      %p118 = scmp.ne.s32.totalorder %s113, %s115
      %p119 = scmp.eq.s32.totalorder %s16, 0
      %p120 = por %p118, %p119
      %p121 = scmp.ne.s32.totalorder %s113, %s115
      %p122 = scmp.eq.s32.totalorder %s21, 1
      %p123 = por %p121, %p122
      %p124 = scmp.ne.s32.totalorder %s115, %s116
      %p125 = scmp.eq.s32.totalorder %s21, 0
      %p126 = por %p124, %p125
      %p127 = scmp.ne.s32.totalorder %s115, %s116
      %p128 = scmp.eq.s32.totalorder %s22, 1
      %p129 = por %p127, %p128
      %p131 = scmp.ne.s32.totalorder %s116, %s130
      %p132 = scmp.eq.s32.totalorder %s22, 0
      %p133 = por %p131, %p132
      %s135 = sadd.s32 %s134, 1
      %p138 = scmp.eq.s32.totalorder %s16, 1
      %p139 = scmp.ne.s32.totalorder %s134, %s136
      %p140 = scmp.eq.s32.totalorder %s16, 0
      %p141 = por %p139, %p140
      %p142 = scmp.ne.s32.totalorder %s134, %s136
      %p143 = scmp.eq.s32.totalorder %s21, 1
      %p144 = por %p142, %p143
      %p145 = scmp.ne.s32.totalorder %s136, %s137
      %p146 = scmp.eq.s32.totalorder %s21, 0
      %p147 = por %p145, %p146
      %p148 = scmp.ne.s32.totalorder %s136, %s137
      %p149 = scmp.eq.s32.totalorder %s22, 1
      %p150 = por %p148, %p149
      %p152 = scmp.ne.s32.totalorder %s137, %s151
      %p153 = scmp.eq.s32.totalorder %s22, 0
      %p154 = por %p152, %p153
      %s156 = sadd.s32 %s155, 1
      %p159 = scmp.eq.s32.totalorder %s16, 1
      %p160 = scmp.ne.s32.totalorder %s155, %s157
      %p161 = scmp.eq.s32.totalorder %s16, 0
      %p162 = por %p160, %p161
      %p163 = scmp.ne.s32.totalorder %s155, %s157
      %p164 = scmp.eq.s32.totalorder %s21, 1
      %p165 = por %p163, %p164
      %p166 = scmp.ne.s32.totalorder %s157, %s158
      %p167 = scmp.eq.s32.totalorder %s21, 0
      %p168 = por %p166, %p167
      %p169 = scmp.ne.s32.totalorder %s157, %s158
      %p170 = scmp.eq.s32.totalorder %s22, 1
      %p171 = por %p169, %p170
      %p173 = scmp.ne.s32.totalorder %s158, %s172
      %p174 = scmp.eq.s32.totalorder %s22, 0
      %p175 = por %p173, %p174
      %s177 = sadd.s32 %s176, 1
      %p180 = scmp.eq.s32.totalorder %s16, 1
      %p181 = scmp.ne.s32.totalorder %s176, %s178
      %p182 = scmp.eq.s32.totalorder %s16, 0
      %p183 = por %p181, %p182
      %p184 = scmp.ne.s32.totalorder %s176, %s178
      %p185 = scmp.eq.s32.totalorder %s21, 1
      %p186 = por %p184, %p185
      %p187 = scmp.ne.s32.totalorder %s178, %s179
      %p188 = scmp.eq.s32.totalorder %s21, 0
      %p189 = por %p187, %p188
      %p190 = scmp.ne.s32.totalorder %s178, %s179
      %p191 = scmp.eq.s32.totalorder %s22, 1
      %p192 = por %p190, %p191
      %p194 = scmp.ne.s32.totalorder %s179, %s193
      %p195 = scmp.eq.s32.totalorder %s22, 0
      %p196 = por %p194, %p195
      %s197 = ssub.s32 %s16, %s23
      %p198 = scmp.eq.s32.totalorder %s197, 0
      %s200 = sadd.s32 %s199, 1
      %s201 = scalar_select %p198, %s199, %s200
      %p204 = pneg %p198
      %p205 = scmp.eq.s32.totalorder %s16, 1
      %p206 = por %p204, %p205
      %p207 = scmp.ne.s32.totalorder %s199, %s202
      %p208 = scmp.eq.s32.totalorder %s16, 0
      %p209 = por %p207, %p208
      %p210 = scmp.ne.s32.totalorder %s199, %s202
      %p211 = scmp.eq.s32.totalorder %s21, 1
      %p212 = por %p210, %p211
      %p213 = scmp.ne.s32.totalorder %s202, %s203
      %p214 = scmp.eq.s32.totalorder %s21, 0
      %p215 = por %p213, %p214
      %p216 = scmp.ne.s32.totalorder %s202, %s203
      %p217 = scmp.eq.s32.totalorder %s22, 1
      %p218 = por %p216, %p217
      %p220 = scmp.ne.s32.totalorder %s203, %s219
      %p221 = scmp.eq.s32.totalorder %s22, 0
      %p222 = por %p220, %p221
      %p223 = scmp.le.s32.totalorder 1, %s16
      %p224 = scmp.lt.s32.totalorder %s16, 3
      %p225 = pnand %p223, %p224
      %p226 = pneg %p225
      // Predicated region
      $region9: #{brain_tumor_classifier.28} parent=5 // pred_check
        _
      $region10: #{brain_tumor_classifier.28} parent=5 // pred_check_branch
        %228 = sbr.rel (%p225) target = $region12
      $region11: #{brain_tumor_classifier.28} parent=5 // pred_region
        %s229 = ssub.s32 %s16, 1
        // Predicated region
        $region13: #{brain_tumor_classifier.28} parent=11 // pred_check
          %p230 = pneg %p63
        $region14: #{brain_tumor_classifier.28} parent=11 // pred_check_branch
          %232 = sbr.rel (%p230) target = $region16
        $region15: #{brain_tumor_classifier.28} parent=11 // pred_region
          _
        $region16: #{brain_tumor_classifier.28} parent=11 // pred_fallthru
          _
        // Predicated region
        $region17: #{brain_tumor_classifier.28} parent=11 // pred_check
          %p233 = pneg %p84
        $region18: #{brain_tumor_classifier.28} parent=11 // pred_check_branch
          %235 = sbr.rel (%p233) target = $region20
        $region19: #{brain_tumor_classifier.28} parent=11 // pred_region
          _
        $region20: #{brain_tumor_classifier.28} parent=11 // pred_fallthru
          _
        // Predicated region
        $region21: #{brain_tumor_classifier.28} parent=11 // pred_check
          %p236 = pneg %p105
        $region22: #{brain_tumor_classifier.28} parent=11 // pred_check_branch
          %238 = sbr.rel (%p236) target = $region24
        $region23: #{brain_tumor_classifier.28} parent=11 // pred_region
          %240 = vsyncadd [#allocation3], 0
          %s241 = sshll.u32 %s3, 4
          %s242 = int_to_ptr.hbm [resolvable:$true] %s241
          %s243 = sshll.u32 [#allocation2], 4
          %s244 = int_to_ptr.vmem [resolvable:$true] %s243
          %249 = dma.hbm_to_vmem [thread:$0]  %s242, 36864, %s244, [#allocation3], 768, 768, 48
        $region24: #{brain_tumor_classifier.28} parent=11 // pred_fallthru
          _
        // Predicated region
        $region25: #{brain_tumor_classifier.28} parent=11 // pred_check
          %p250 = pneg %p126
        $region26: #{brain_tumor_classifier.28} parent=11 // pred_check_branch
          %252 = sbr.rel (%p250) target = $region28
        $region27: #{brain_tumor_classifier.28} parent=11 // pred_region
          _
        $region28: #{brain_tumor_classifier.28} parent=11 // pred_fallthru
          _
        // Predicated region
        $region29: #{brain_tumor_classifier.28} parent=11 // pred_check
          %p253 = pneg %p147
        $region30: #{brain_tumor_classifier.28} parent=11 // pred_check_branch
          %255 = sbr.rel (%p253) target = $region32
        $region31: #{brain_tumor_classifier.28} parent=11 // pred_region
          %257 = vsyncadd [#allocation5], 0
          %s258 = sshll.u32 %s5, 4
          %s259 = int_to_ptr.hbm [resolvable:$true] %s258
          %s260 = sshll.u32 [#allocation4], 4
          %s261 = int_to_ptr.vmem [resolvable:$true] %s260
          %266 = dma.hbm_to_vmem [thread:$0]  %s259, 36864, %s261, [#allocation5], 192, 192, 12
        $region32: #{brain_tumor_classifier.28} parent=11 // pred_fallthru
          _
        // Predicated region
        $region33: #{brain_tumor_classifier.28} parent=11 // pred_check
          %p267 = pneg %p168
        $region34: #{brain_tumor_classifier.28} parent=11 // pred_check_branch
          %269 = sbr.rel (%p267) target = $region36
        $region35: #{brain_tumor_classifier.28} parent=11 // pred_region
          _
        $region36: #{brain_tumor_classifier.28} parent=11 // pred_fallthru
          _
        // Predicated region
        $region37: #{brain_tumor_classifier.28} parent=11 // pred_check
          %p270 = pneg %p189
        $region38: #{brain_tumor_classifier.28} parent=11 // pred_check_branch
          %272 = sbr.rel (%p270) target = $region40
        $region39: #{brain_tumor_classifier.28} parent=11 // pred_region
          _
        $region40: #{brain_tumor_classifier.28} parent=11 // pred_fallthru
          _
      $region12: #{brain_tumor_classifier.28} parent=5 // pred_fallthru
        _
      %p273 = scmp.lt.s32.totalorder %s16, 2
      // Predicated region
      $region41: #{brain_tumor_classifier.28} parent=5 // pred_check
        %p274 = pneg %p273
      $region42: #{brain_tumor_classifier.28} parent=5 // pred_check_branch
        %276 = sbr.rel (%p274) target = $region44
      $region43: #{brain_tumor_classifier.28} parent=5 // pred_region
        // Predicated region
        $region45: #{brain_tumor_classifier.28} parent=43 // pred_check
          %p277 = pneg %p36
        $region46: #{brain_tumor_classifier.28} parent=43 // pred_check_branch
          %279 = sbr.rel (%p277) target = $region48
        $region47: #{brain_tumor_classifier.28} parent=43 // pred_region
          %p280 = scmp.lt.s32.totalorder %s16, 1
          %s281 = scalar_select %p280, %s16, 1
          %s282 = smul.addr %s281, 3
          %s283 = smul.addr %s282, 4
          %s284 = scalar_lea.vmem %s0, %s283
        $region48: #{brain_tumor_classifier.28} parent=43 // pred_fallthru
          _
      $region44: #{brain_tumor_classifier.28} parent=5 // pred_fallthru
        _
      %p285 = scmp.le.s32.totalorder 1, %s16
      %p286 = scmp.lt.s32.totalorder %s16, 3
      %p287 = pnand %p285, %p286
      %p288 = pneg %p287
      // Predicated region
      $region49: #{brain_tumor_classifier.28} parent=5 // pred_check
        _
      $region50: #{brain_tumor_classifier.28} parent=5 // pred_check_branch
        %290 = sbr.rel (%p287) target = $region52
      $region51: #{brain_tumor_classifier.28} parent=5 // pred_region
        %s291 = ssub.s32 %s16, 1
        // Predicated region
        $region53: #{brain_tumor_classifier.28} parent=51 // pred_check
          %p292 = pneg %p105
        $region54: #{brain_tumor_classifier.28} parent=51 // pred_check_branch
          %294 = sbr.rel (%p292) target = $region56
        $region55: #{brain_tumor_classifier.28} parent=51 // pred_region
          %296 = dma.done [#allocation3], 36864
        $region56: #{brain_tumor_classifier.28} parent=51 // pred_fallthru
          _
        // Predicated region
        $region57: #{brain_tumor_classifier.28} parent=51 // pred_check
          %p297 = pneg %p147
        $region58: #{brain_tumor_classifier.28} parent=51 // pred_check_branch
          %299 = sbr.rel (%p297) target = $region60
        $region59: #{brain_tumor_classifier.28} parent=51 // pred_region
          %301 = dma.done [#allocation5], 36864
        $region60: #{brain_tumor_classifier.28} parent=51 // pred_fallthru
          _
        %p302 = scmp.lt.s32.totalorder %s21, 1
        %s303 = scalar_select %p302, %s21, 1
        %s304 = smul.addr %s303, 3
        %s305 = smul.addr %s304, 4
        %s306 = scalar_lea.vmem %s0, %s305
        %p307 = pneg %p42
        %p308 = pneg %p39
        %p309 = pneg %p63
        %p310 = pneg %p60
        %p311 = pneg %p84
        %p312 = pneg %p81
        %p313 = pneg %p105
        %p314 = pneg %p102
        %p315 = pneg %p126
        %p316 = pneg %p123
        %p317 = pneg %p147
        %p318 = pneg %p144
        %p319 = pneg %p168
        %p320 = pneg %p165
        %p321 = pneg %p189
        %p322 = pneg %p186
        %p323 = pneg %p215
        %p324 = pneg %p212
        %p325 = scmp.lt.s32.totalorder %s21, 1
        %s326 = scalar_select %p325, %s21, 1
        %s327 = smul.addr %s326, 3
        %s328 = smul.addr %s327, 4
        %s329 = scalar_lea.vmem %s8, %s328
        %p330 = scmp.lt.s32.totalorder %s21, 1
        %s331 = scalar_select %p330, %s21, 1
        %s332 = smul.addr %s331, 3
        %s333 = smul.addr %s332, 4
        %s334 = scalar_lea.vmem %s0, %s333
        %p335 = scmp.lt.s32.totalorder %s21, 1
        %s336 = scalar_select %p335, %s21, 1
        %s337 = smul.addr %s336, 3
        %s338 = smul.addr %s337, 4
        %s339 = scalar_lea.vmem %s8, %s338
        %v340 = vld [vmem:[%s334] sm:$0xff]
        %v341 = vld [vmem:[%s334 + $0x8] sm:$0xf]
        %v342 = vunpack.c.l.bf16 %v340
        %v343 = vunpack.c.h.bf16 %v340
        %v344 = vunpack.c.l.bf16 %v341
        %v345 = vadd.f32 %v342, %v343
        %v346 = vadd.f32 %v345, %v344
        %347 = vadd.xlane.f32.xlu0 %v346
        %v348 = vpop.xlane.xlu0 %347
        %v349 = vrcp.pop 384.0
        %v350 = vmul.f32 384.0, %v349
        %v351 = vsub.f32 1.0, %v350
        %v352 = vmul.f32 %v349, %v351
        %v353 = vadd.f32 %v349, %v352
        %vm354 = vweird.f32 %v349
        %v355 = vsel %vm354, %v349, %v353
        %v356 = vmul.f32 %v348, %v355
        %v357 = vsub.f32 %v342, %v356
        %v358 = vsub.f32 %v343, %v356
        %v359 = vsub.f32 %v344, %v356
        %v360 = vmul.f32 %v357, %v357
        %v361 = vmul.f32 %v358, %v358
        %v362 = vmul.f32 %v359, %v359
        %v363 = vadd.f32 %v360, %v361
        %v364 = vadd.f32 %v363, %v362
        %365 = vadd.xlane.f32.xlu0 %v364
        %v366 = vpop.xlane.xlu0 %365
        %v367 = vmul.f32 %v366, %v355
        %v368 = vadd.f32 %v367, 1e-06
        %v369 = vrsqrt.pop %v368
        %v370 = vmul.f32 %v369, %v368
        %v371 = vmul.f32 %v370, %v369
        %v372 = vmul.f32 0.5, %v371
        %v373 = vsub.f32 1.5, %v372
        %v374 = vmul.f32 %v369, %v373
        %vm375 = vweird.f32 %v368
        %vm376 = vweird.f32 %v369
        %vm377 = vmor %vm375, %vm376
        %v378 = vsel %vm377, %v369, %v374
        %v379 = vmul.f32 %v357, %v378
        %v380 = vmul.f32 %v358, %v378
        %v381 = vmul.f32 %v359, %v378
        %v382 = vld [vmem:[%s1] sm:$0x7]
        %v384 = vperm.slane %v382, 0
        %v385 = vperm.slane %v382, 1
        %v386 = vperm.slane %v382, 2
        %v390 = vmul.f32 %v379, %v384
        %v391 = vmul.f32 %v380, %v385
        %v392 = vmul.f32 %v381, %v386
        %v393 = vld [vmem:[%s2] sm:$0x7]
        %v395 = vperm.slane %v393, 0
        %v396 = vperm.slane %v393, 1
        %v397 = vperm.slane %v393, 2
        %v401 = vadd.f32 %v390, %v395
        %v402 = vadd.f32 %v391, %v396
        %v403 = vadd.f32 %v392, %v397
        %v404 = vpack.c.bf16 %v401, %v401
        %v405 = vpack.c.bf16 %v402, %v402
        %v406 = vpack.c.bf16 %v403, %v403
        %v407 = vld [vmem:[#allocation2] sm:$0xff]
        %v408 = vld [vmem:[#allocation2 + $0x8] sm:$0xff]
        %v409 = vld [vmem:[#allocation2 + $0x10] sm:$0xff]
        %v410 = vld [vmem:[#allocation2 + $0x18] sm:$0xff]
        %v411 = vld [vmem:[#allocation2 + $0x20] sm:$0xff]
        %v412 = vld [vmem:[#allocation2 + $0x28] sm:$0xff]
        %v413 = vld [vmem:[#allocation2 + $0x30] sm:$0xff]
        %v414 = vld [vmem:[#allocation2 + $0x38] sm:$0xff]
        %v415 = vld [vmem:[#allocation2 + $0x40] sm:$0xff]
        %v416 = vld [vmem:[#allocation2 + $0x48] sm:$0xff]
        %v417 = vld [vmem:[#allocation2 + $0x50] sm:$0xff]
        %v418 = vld [vmem:[#allocation2 + $0x58] sm:$0xff]
        %v419 = vld [vmem:[#allocation2 + $0x60] sm:$0xff]
        %v420 = vld [vmem:[#allocation2 + $0x68] sm:$0xff]
        %v421 = vld [vmem:[#allocation2 + $0x70] sm:$0xff]
        %v422 = vld [vmem:[#allocation2 + $0x78] sm:$0xff]
        %v423 = vld [vmem:[#allocation2 + $0x80] sm:$0xff]
        %v424 = vld [vmem:[#allocation2 + $0x88] sm:$0xff]
        %v425 = vld [vmem:[#allocation2 + $0x90] sm:$0xff]
        %v426 = vld [vmem:[#allocation2 + $0x98] sm:$0xff]
        %v427 = vld [vmem:[#allocation2 + $0xa0] sm:$0xff]
        %v428 = vld [vmem:[#allocation2 + $0xa8] sm:$0xff]
        %v429 = vld [vmem:[#allocation2 + $0xb0] sm:$0xff]
        %v430 = vld [vmem:[#allocation2 + $0xb8] sm:$0xff]
        %v431 = vld [vmem:[#allocation2 + $0xc0] sm:$0xff]
        %v432 = vld [vmem:[#allocation2 + $0xc8] sm:$0xff]
        %v433 = vld [vmem:[#allocation2 + $0xd0] sm:$0xff]
        %v434 = vld [vmem:[#allocation2 + $0xd8] sm:$0xff]
        %v435 = vld [vmem:[#allocation2 + $0xe0] sm:$0xff]
        %v436 = vld [vmem:[#allocation2 + $0xe8] sm:$0xff]
        %v437 = vld [vmem:[#allocation2 + $0xf0] sm:$0xff]
        %v438 = vld [vmem:[#allocation2 + $0xf8] sm:$0xff]
        %v439 = vld [vmem:[#allocation2 + $0x100] sm:$0xff]
        %v440 = vld [vmem:[#allocation2 + $0x108] sm:$0xff]
        %v441 = vld [vmem:[#allocation2 + $0x110] sm:$0xff]
        %v442 = vld [vmem:[#allocation2 + $0x118] sm:$0xff]
        %v443 = vld [vmem:[#allocation2 + $0x120] sm:$0xff]
        %v444 = vld [vmem:[#allocation2 + $0x128] sm:$0xff]
        %v445 = vld [vmem:[#allocation2 + $0x130] sm:$0xff]
        %v446 = vld [vmem:[#allocation2 + $0x138] sm:$0xff]
        %v447 = vld [vmem:[#allocation2 + $0x140] sm:$0xff]
        %v448 = vld [vmem:[#allocation2 + $0x148] sm:$0xff]
        %v449 = vld [vmem:[#allocation2 + $0x150] sm:$0xff]
        %v450 = vld [vmem:[#allocation2 + $0x158] sm:$0xff]
        %v451 = vld [vmem:[#allocation2 + $0x160] sm:$0xff]
        %v452 = vld [vmem:[#allocation2 + $0x168] sm:$0xff]
        %v453 = vld [vmem:[#allocation2 + $0x170] sm:$0xff]
        %v454 = vld [vmem:[#allocation2 + $0x178] sm:$0xff]
        %v455 = vld [vmem:[#allocation2 + $0x180] sm:$0xff]
        %v456 = vld [vmem:[#allocation2 + $0x188] sm:$0xff]
        %v457 = vld [vmem:[#allocation2 + $0x190] sm:$0xff]
        %v458 = vld [vmem:[#allocation2 + $0x198] sm:$0xff]
        %v459 = vld [vmem:[#allocation2 + $0x1a0] sm:$0xff]
        %v460 = vld [vmem:[#allocation2 + $0x1a8] sm:$0xff]
        %v461 = vld [vmem:[#allocation2 + $0x1b0] sm:$0xff]
        %v462 = vld [vmem:[#allocation2 + $0x1b8] sm:$0xff]
        %v463 = vld [vmem:[#allocation2 + $0x1c0] sm:$0xff]
        %v464 = vld [vmem:[#allocation2 + $0x1c8] sm:$0xff]
        %v465 = vld [vmem:[#allocation2 + $0x1d0] sm:$0xff]
        %v466 = vld [vmem:[#allocation2 + $0x1d8] sm:$0xff]
        %v467 = vld [vmem:[#allocation2 + $0x1e0] sm:$0xff]
        %v468 = vld [vmem:[#allocation2 + $0x1e8] sm:$0xff]
        %v469 = vld [vmem:[#allocation2 + $0x1f0] sm:$0xff]
        %v470 = vld [vmem:[#allocation2 + $0x1f8] sm:$0xff]
        %v471 = vld [vmem:[#allocation2 + $0x200] sm:$0xff]
        %v472 = vld [vmem:[#allocation2 + $0x208] sm:$0xff]
        %v473 = vld [vmem:[#allocation2 + $0x210] sm:$0xff]
        %v474 = vld [vmem:[#allocation2 + $0x218] sm:$0xff]
        %v475 = vld [vmem:[#allocation2 + $0x220] sm:$0xff]
        %v476 = vld [vmem:[#allocation2 + $0x228] sm:$0xff]
        %v477 = vld [vmem:[#allocation2 + $0x230] sm:$0xff]
        %v478 = vld [vmem:[#allocation2 + $0x238] sm:$0xff]
        %v479 = vld [vmem:[#allocation2 + $0x240] sm:$0xff]
        %v480 = vld [vmem:[#allocation2 + $0x248] sm:$0xff]
        %v481 = vld [vmem:[#allocation2 + $0x250] sm:$0xff]
        %v482 = vld [vmem:[#allocation2 + $0x258] sm:$0xff]
        %v483 = vld [vmem:[#allocation2 + $0x260] sm:$0xff]
        %v484 = vld [vmem:[#allocation2 + $0x268] sm:$0xff]
        %v485 = vld [vmem:[#allocation2 + $0x270] sm:$0xff]
        %v486 = vld [vmem:[#allocation2 + $0x278] sm:$0xff]
        %v487 = vld [vmem:[#allocation2 + $0x280] sm:$0xff]
        %v488 = vld [vmem:[#allocation2 + $0x288] sm:$0xff]
        %v489 = vld [vmem:[#allocation2 + $0x290] sm:$0xff]
        %v490 = vld [vmem:[#allocation2 + $0x298] sm:$0xff]
        %v491 = vld [vmem:[#allocation2 + $0x2a0] sm:$0xff]
        %v492 = vld [vmem:[#allocation2 + $0x2a8] sm:$0xff]
        %v493 = vld [vmem:[#allocation2 + $0x2b0] sm:$0xff]
        %v494 = vld [vmem:[#allocation2 + $0x2b8] sm:$0xff]
        %v495 = vld [vmem:[#allocation2 + $0x2c0] sm:$0xff]
        %v496 = vld [vmem:[#allocation2 + $0x2c8] sm:$0xff]
        %v497 = vld [vmem:[#allocation2 + $0x2d0] sm:$0xff]
        %v498 = vld [vmem:[#allocation2 + $0x2d8] sm:$0xff]
        %v499 = vld [vmem:[#allocation2 + $0x2e0] sm:$0xff]
        %v500 = vld [vmem:[#allocation2 + $0x2e8] sm:$0xff]
        %v501 = vld [vmem:[#allocation2 + $0x2f0] sm:$0xff]
        %v502 = vld [vmem:[#allocation2 + $0x2f8] sm:$0xff]
        %v503 = vld [vmem:[#allocation2 + $0x300] sm:$0xff]
        %v504 = vld [vmem:[#allocation2 + $0x308] sm:$0xff]
        %v505 = vld [vmem:[#allocation2 + $0x310] sm:$0xff]
        %v506 = vld [vmem:[#allocation2 + $0x318] sm:$0xff]
        %v507 = vld [vmem:[#allocation2 + $0x320] sm:$0xff]
        %v508 = vld [vmem:[#allocation2 + $0x328] sm:$0xff]
        %v509 = vld [vmem:[#allocation2 + $0x330] sm:$0xff]
        %v510 = vld [vmem:[#allocation2 + $0x338] sm:$0xff]
        %v511 = vld [vmem:[#allocation2 + $0x340] sm:$0xff]
        %v512 = vld [vmem:[#allocation2 + $0x348] sm:$0xff]
        %v513 = vld [vmem:[#allocation2 + $0x350] sm:$0xff]
        %v514 = vld [vmem:[#allocation2 + $0x358] sm:$0xff]
        %v515 = vld [vmem:[#allocation2 + $0x360] sm:$0xff]
        %v516 = vld [vmem:[#allocation2 + $0x368] sm:$0xff]
        %v517 = vld [vmem:[#allocation2 + $0x370] sm:$0xff]
        %v518 = vld [vmem:[#allocation2 + $0x378] sm:$0xff]
        %v519 = vld [vmem:[#allocation2 + $0x380] sm:$0xff]
        %v520 = vld [vmem:[#allocation2 + $0x388] sm:$0xff]
        %v521 = vld [vmem:[#allocation2 + $0x390] sm:$0xff]
        %v522 = vld [vmem:[#allocation2 + $0x398] sm:$0xff]
        %v523 = vld [vmem:[#allocation2 + $0x3a0] sm:$0xff]
        %v524 = vld [vmem:[#allocation2 + $0x3a8] sm:$0xff]
        %v525 = vld [vmem:[#allocation2 + $0x3b0] sm:$0xff]
        %v526 = vld [vmem:[#allocation2 + $0x3b8] sm:$0xff]
        %v527 = vld [vmem:[#allocation2 + $0x3c0] sm:$0xff]
        %v528 = vld [vmem:[#allocation2 + $0x3c8] sm:$0xff]
        %v529 = vld [vmem:[#allocation2 + $0x3d0] sm:$0xff]
        %v530 = vld [vmem:[#allocation2 + $0x3d8] sm:$0xff]
        %v531 = vld [vmem:[#allocation2 + $0x3e0] sm:$0xff]
        %v532 = vld [vmem:[#allocation2 + $0x3e8] sm:$0xff]
        %v533 = vld [vmem:[#allocation2 + $0x3f0] sm:$0xff]
        %v534 = vld [vmem:[#allocation2 + $0x3f8] sm:$0xff]
        %v535 = vld [vmem:[#allocation2 + $0x400] sm:$0xff]
        %v536 = vld [vmem:[#allocation2 + $0x408] sm:$0xff]
        %v537 = vld [vmem:[#allocation2 + $0x410] sm:$0xff]
        %v538 = vld [vmem:[#allocation2 + $0x418] sm:$0xff]
        %v539 = vld [vmem:[#allocation2 + $0x420] sm:$0xff]
        %v540 = vld [vmem:[#allocation2 + $0x428] sm:$0xff]
        %v541 = vld [vmem:[#allocation2 + $0x430] sm:$0xff]
        %v542 = vld [vmem:[#allocation2 + $0x438] sm:$0xff]
        %v543 = vld [vmem:[#allocation2 + $0x440] sm:$0xff]
        %v544 = vld [vmem:[#allocation2 + $0x448] sm:$0xff]
        %v545 = vld [vmem:[#allocation2 + $0x450] sm:$0xff]
        %v546 = vld [vmem:[#allocation2 + $0x458] sm:$0xff]
        %v547 = vld [vmem:[#allocation2 + $0x460] sm:$0xff]
        %v548 = vld [vmem:[#allocation2 + $0x468] sm:$0xff]
        %v549 = vld [vmem:[#allocation2 + $0x470] sm:$0xff]
        %v550 = vld [vmem:[#allocation2 + $0x478] sm:$0xff]
        %v551 = vld [vmem:[#allocation2 + $0x480] sm:$0xff]
        %v552 = vld [vmem:[#allocation2 + $0x488] sm:$0xff]
        %v553 = vld [vmem:[#allocation2 + $0x490] sm:$0xff]
        %v554 = vld [vmem:[#allocation2 + $0x498] sm:$0xff]
        %v555 = vld [vmem:[#allocation2 + $0x4a0] sm:$0xff]
        %v556 = vld [vmem:[#allocation2 + $0x4a8] sm:$0xff]
        %v557 = vld [vmem:[#allocation2 + $0x4b0] sm:$0xff]
        %v558 = vld [vmem:[#allocation2 + $0x4b8] sm:$0xff]
        %v559 = vld [vmem:[#allocation2 + $0x4c0] sm:$0xff]
        %v560 = vld [vmem:[#allocation2 + $0x4c8] sm:$0xff]
        %v561 = vld [vmem:[#allocation2 + $0x4d0] sm:$0xff]
        %v562 = vld [vmem:[#allocation2 + $0x4d8] sm:$0xff]
        %v563 = vld [vmem:[#allocation2 + $0x4e0] sm:$0xff]
        %v564 = vld [vmem:[#allocation2 + $0x4e8] sm:$0xff]
        %v565 = vld [vmem:[#allocation2 + $0x4f0] sm:$0xff]
        %v566 = vld [vmem:[#allocation2 + $0x4f8] sm:$0xff]
        %v567 = vld [vmem:[#allocation2 + $0x500] sm:$0xff]
        %v568 = vld [vmem:[#allocation2 + $0x508] sm:$0xff]
        %v569 = vld [vmem:[#allocation2 + $0x510] sm:$0xff]
        %v570 = vld [vmem:[#allocation2 + $0x518] sm:$0xff]
        %v571 = vld [vmem:[#allocation2 + $0x520] sm:$0xff]
        %v572 = vld [vmem:[#allocation2 + $0x528] sm:$0xff]
        %v573 = vld [vmem:[#allocation2 + $0x530] sm:$0xff]
        %v574 = vld [vmem:[#allocation2 + $0x538] sm:$0xff]
        %v575 = vld [vmem:[#allocation2 + $0x540] sm:$0xff]
        %v576 = vld [vmem:[#allocation2 + $0x548] sm:$0xff]
        %v577 = vld [vmem:[#allocation2 + $0x550] sm:$0xff]
        %v578 = vld [vmem:[#allocation2 + $0x558] sm:$0xff]
        %v579 = vld [vmem:[#allocation2 + $0x560] sm:$0xff]
        %v580 = vld [vmem:[#allocation2 + $0x568] sm:$0xff]
        %v581 = vld [vmem:[#allocation2 + $0x570] sm:$0xff]
        %v582 = vld [vmem:[#allocation2 + $0x578] sm:$0xff]
        %v583 = vld [vmem:[#allocation2 + $0x580] sm:$0xff]
        %v584 = vld [vmem:[#allocation2 + $0x588] sm:$0xff]
        %v585 = vld [vmem:[#allocation2 + $0x590] sm:$0xff]
        %v586 = vld [vmem:[#allocation2 + $0x598] sm:$0xff]
        %v587 = vld [vmem:[#allocation2 + $0x5a0] sm:$0xff]
        %v588 = vld [vmem:[#allocation2 + $0x5a8] sm:$0xff]
        %v589 = vld [vmem:[#allocation2 + $0x5b0] sm:$0xff]
        %v590 = vld [vmem:[#allocation2 + $0x5b8] sm:$0xff]
        %v591 = vld [vmem:[#allocation2 + $0x5c0] sm:$0xff]
        %v592 = vld [vmem:[#allocation2 + $0x5c8] sm:$0xff]
        %v593 = vld [vmem:[#allocation2 + $0x5d0] sm:$0xff]
        %v594 = vld [vmem:[#allocation2 + $0x5d8] sm:$0xff]
        %v595 = vld [vmem:[#allocation2 + $0x5e0] sm:$0xff]
        %v596 = vld [vmem:[#allocation2 + $0x5e8] sm:$0xff]
        %v597 = vld [vmem:[#allocation2 + $0x5f0] sm:$0xff]
        %v598 = vld [vmem:[#allocation2 + $0x5f8] sm:$0xff]
        %v599 = vld [vmem:[#allocation2 + $0x600] sm:$0xff]
        %v600 = vld [vmem:[#allocation2 + $0x608] sm:$0xff]
        %v601 = vld [vmem:[#allocation2 + $0x610] sm:$0xff]
        %v602 = vld [vmem:[#allocation2 + $0x618] sm:$0xff]
        %v603 = vld [vmem:[#allocation2 + $0x620] sm:$0xff]
        %v604 = vld [vmem:[#allocation2 + $0x628] sm:$0xff]
        %v605 = vld [vmem:[#allocation2 + $0x630] sm:$0xff]
        %v606 = vld [vmem:[#allocation2 + $0x638] sm:$0xff]
        %v607 = vld [vmem:[#allocation2 + $0x640] sm:$0xff]
        %v608 = vld [vmem:[#allocation2 + $0x648] sm:$0xff]
        %v609 = vld [vmem:[#allocation2 + $0x650] sm:$0xff]
        %v610 = vld [vmem:[#allocation2 + $0x658] sm:$0xff]
        %v611 = vld [vmem:[#allocation2 + $0x660] sm:$0xff]
        %v612 = vld [vmem:[#allocation2 + $0x668] sm:$0xff]
        %v613 = vld [vmem:[#allocation2 + $0x670] sm:$0xff]
        %v614 = vld [vmem:[#allocation2 + $0x678] sm:$0xff]
        %v615 = vld [vmem:[#allocation2 + $0x680] sm:$0xff]
        %v616 = vld [vmem:[#allocation2 + $0x688] sm:$0xff]
        %v617 = vld [vmem:[#allocation2 + $0x690] sm:$0xff]
        %v618 = vld [vmem:[#allocation2 + $0x698] sm:$0xff]
        %v619 = vld [vmem:[#allocation2 + $0x6a0] sm:$0xff]
        %v620 = vld [vmem:[#allocation2 + $0x6a8] sm:$0xff]
        %v621 = vld [vmem:[#allocation2 + $0x6b0] sm:$0xff]
        %v622 = vld [vmem:[#allocation2 + $0x6b8] sm:$0xff]
        %v623 = vld [vmem:[#allocation2 + $0x6c0] sm:$0xff]
        %v624 = vld [vmem:[#allocation2 + $0x6c8] sm:$0xff]
        %v625 = vld [vmem:[#allocation2 + $0x6d0] sm:$0xff]
        %v626 = vld [vmem:[#allocation2 + $0x6d8] sm:$0xff]
        %v627 = vld [vmem:[#allocation2 + $0x6e0] sm:$0xff]
        %v628 = vld [vmem:[#allocation2 + $0x6e8] sm:$0xff]
        %v629 = vld [vmem:[#allocation2 + $0x6f0] sm:$0xff]
        %v630 = vld [vmem:[#allocation2 + $0x6f8] sm:$0xff]
        %v631 = vld [vmem:[#allocation2 + $0x700] sm:$0xff]
        %v632 = vld [vmem:[#allocation2 + $0x708] sm:$0xff]
        %v633 = vld [vmem:[#allocation2 + $0x710] sm:$0xff]
        %v634 = vld [vmem:[#allocation2 + $0x718] sm:$0xff]
        %v635 = vld [vmem:[#allocation2 + $0x720] sm:$0xff]
        %v636 = vld [vmem:[#allocation2 + $0x728] sm:$0xff]
        %v637 = vld [vmem:[#allocation2 + $0x730] sm:$0xff]
        %v638 = vld [vmem:[#allocation2 + $0x738] sm:$0xff]
        %v639 = vld [vmem:[#allocation2 + $0x740] sm:$0xff]
        %v640 = vld [vmem:[#allocation2 + $0x748] sm:$0xff]
        %v641 = vld [vmem:[#allocation2 + $0x750] sm:$0xff]
        %v642 = vld [vmem:[#allocation2 + $0x758] sm:$0xff]
        %v643 = vld [vmem:[#allocation2 + $0x760] sm:$0xff]
        %v644 = vld [vmem:[#allocation2 + $0x768] sm:$0xff]
        %v645 = vld [vmem:[#allocation2 + $0x770] sm:$0xff]
        %v646 = vld [vmem:[#allocation2 + $0x778] sm:$0xff]
        %v647 = vld [vmem:[#allocation2 + $0x780] sm:$0xff]
        %v648 = vld [vmem:[#allocation2 + $0x788] sm:$0xff]
        %v649 = vld [vmem:[#allocation2 + $0x790] sm:$0xff]
        %v650 = vld [vmem:[#allocation2 + $0x798] sm:$0xff]
        %v651 = vld [vmem:[#allocation2 + $0x7a0] sm:$0xff]
        %v652 = vld [vmem:[#allocation2 + $0x7a8] sm:$0xff]
        %v653 = vld [vmem:[#allocation2 + $0x7b0] sm:$0xff]
        %v654 = vld [vmem:[#allocation2 + $0x7b8] sm:$0xff]
        %v655 = vld [vmem:[#allocation2 + $0x7c0] sm:$0xff]
        %v656 = vld [vmem:[#allocation2 + $0x7c8] sm:$0xff]
        %v657 = vld [vmem:[#allocation2 + $0x7d0] sm:$0xff]
        %v658 = vld [vmem:[#allocation2 + $0x7d8] sm:$0xff]
        %v659 = vld [vmem:[#allocation2 + $0x7e0] sm:$0xff]
        %v660 = vld [vmem:[#allocation2 + $0x7e8] sm:$0xff]
        %v661 = vld [vmem:[#allocation2 + $0x7f0] sm:$0xff]
        %v662 = vld [vmem:[#allocation2 + $0x7f8] sm:$0xff]
        %v663 = vld [vmem:[#allocation2 + $0x800] sm:$0xff]
        %v664 = vld [vmem:[#allocation2 + $0x808] sm:$0xff]
        %v665 = vld [vmem:[#allocation2 + $0x810] sm:$0xff]
        %v666 = vld [vmem:[#allocation2 + $0x818] sm:$0xff]
        %v667 = vld [vmem:[#allocation2 + $0x820] sm:$0xff]
        %v668 = vld [vmem:[#allocation2 + $0x828] sm:$0xff]
        %v669 = vld [vmem:[#allocation2 + $0x830] sm:$0xff]
        %v670 = vld [vmem:[#allocation2 + $0x838] sm:$0xff]
        %v671 = vld [vmem:[#allocation2 + $0x840] sm:$0xff]
        %v672 = vld [vmem:[#allocation2 + $0x848] sm:$0xff]
        %v673 = vld [vmem:[#allocation2 + $0x850] sm:$0xff]
        %v674 = vld [vmem:[#allocation2 + $0x858] sm:$0xff]
        %v675 = vld [vmem:[#allocation2 + $0x860] sm:$0xff]
        %v676 = vld [vmem:[#allocation2 + $0x868] sm:$0xff]
        %v677 = vld [vmem:[#allocation2 + $0x870] sm:$0xff]
        %v678 = vld [vmem:[#allocation2 + $0x878] sm:$0xff]
        %v679 = vld [vmem:[#allocation2 + $0x880] sm:$0xff]
        %v680 = vld [vmem:[#allocation2 + $0x888] sm:$0xff]
        %v681 = vld [vmem:[#allocation2 + $0x890] sm:$0xff]
        %v682 = vld [vmem:[#allocation2 + $0x898] sm:$0xff]
        %v683 = vld [vmem:[#allocation2 + $0x8a0] sm:$0xff]
        %v684 = vld [vmem:[#allocation2 + $0x8a8] sm:$0xff]
        %v685 = vld [vmem:[#allocation2 + $0x8b0] sm:$0xff]
        %v686 = vld [vmem:[#allocation2 + $0x8b8] sm:$0xff]
        %v687 = vld [vmem:[#allocation2 + $0x8c0] sm:$0xff]
        %v688 = vld [vmem:[#allocation2 + $0x8c8] sm:$0xff]
        %v689 = vld [vmem:[#allocation2 + $0x8d0] sm:$0xff]
        %v690 = vld [vmem:[#allocation2 + $0x8d8] sm:$0xff]
        %v691 = vld [vmem:[#allocation2 + $0x8e0] sm:$0xff]
        %v692 = vld [vmem:[#allocation2 + $0x8e8] sm:$0xff]
        %v693 = vld [vmem:[#allocation2 + $0x8f0] sm:$0xff]
        %v694 = vld [vmem:[#allocation2 + $0x8f8] sm:$0xff]
        %v695 = vld [vmem:[%s4] sm:$0xff]
        %v696 = vld [vmem:[%s4 + $0x8] sm:$0xf]
        %v699 = vperm.slane %v695, 0
        %v700 = vperm.slane %v695, 1
        %v701 = vperm.slane %v695, 2
        %v702 = vperm.slane %v695, 3
        %v703 = vperm.slane %v695, 4
        %v704 = vperm.slane %v695, 5
        %v705 = vperm.slane %v695, 6
        %v706 = vperm.slane %v695, 7
        %v707 = vperm.slane %v696, 0
        %v708 = vperm.slane %v696, 1
        %v709 = vperm.slane %v696, 2
        %v710 = vperm.slane %v696, 3
        %v1011 = vunpack.c.l.b16 %v407
        %v1012 = vunpack.c.h.b16 %v407
        %v1013 = vunpack.c.l.b16 %v408
        %v1014 = vunpack.c.h.b16 %v408
        %v1015 = vunpack.c.l.b16 %v409
        %v1016 = vunpack.c.h.b16 %v409
        %v1017 = vunpack.c.l.b16 %v410
        %v1018 = vunpack.c.h.b16 %v410
        %v1019 = vunpack.c.l.b16 %v411
        %v1020 = vunpack.c.h.b16 %v411
        %v1021 = vunpack.c.l.b16 %v412
        %v1022 = vunpack.c.h.b16 %v412
        %v1023 = vunpack.c.l.b16 %v413
        %v1024 = vunpack.c.h.b16 %v413
        %v1025 = vunpack.c.l.b16 %v414
        %v1026 = vunpack.c.h.b16 %v414
        %v1027 = vunpack.c.l.b16 %v415
        %v1028 = vunpack.c.h.b16 %v415
        %v1029 = vunpack.c.l.b16 %v416
        %v1030 = vunpack.c.h.b16 %v416
        %v1031 = vunpack.c.l.b16 %v417
        %v1032 = vunpack.c.h.b16 %v417
        %v1033 = vunpack.c.l.b16 %v418
        %v1034 = vunpack.c.h.b16 %v418
        %v1035 = vunpack.c.l.b16 %v419
        %v1036 = vunpack.c.h.b16 %v419
        %v1037 = vunpack.c.l.b16 %v420
        %v1038 = vunpack.c.h.b16 %v420
        %v1039 = vunpack.c.l.b16 %v421
        %v1040 = vunpack.c.h.b16 %v421
        %v1041 = vunpack.c.l.b16 %v422
        %v1042 = vunpack.c.h.b16 %v422
        %v1043 = vunpack.c.l.b16 %v423
        %v1044 = vunpack.c.h.b16 %v423
        %v1045 = vunpack.c.l.b16 %v424
        %v1046 = vunpack.c.h.b16 %v424
        %v1047 = vunpack.c.l.b16 %v425
        %v1048 = vunpack.c.h.b16 %v425
        %v1049 = vunpack.c.l.b16 %v426
        %v1050 = vunpack.c.h.b16 %v426
        %v1051 = vunpack.c.l.b16 %v427
        %v1052 = vunpack.c.h.b16 %v427
        %v1053 = vunpack.c.l.b16 %v428
        %v1054 = vunpack.c.h.b16 %v428
        %v1055 = vunpack.c.l.b16 %v429
        %v1056 = vunpack.c.h.b16 %v429
        %v1057 = vunpack.c.l.b16 %v430
        %v1058 = vunpack.c.h.b16 %v430
        %v1059 = vunpack.c.l.b16 %v431
        %v1060 = vunpack.c.h.b16 %v431
        %v1061 = vunpack.c.l.b16 %v432
        %v1062 = vunpack.c.h.b16 %v432
        %v1063 = vunpack.c.l.b16 %v433
        %v1064 = vunpack.c.h.b16 %v433
        %v1065 = vunpack.c.l.b16 %v434
        %v1066 = vunpack.c.h.b16 %v434
        %v1067 = vunpack.c.l.b16 %v435
        %v1068 = vunpack.c.h.b16 %v435
        %v1069 = vunpack.c.l.b16 %v436
        %v1070 = vunpack.c.h.b16 %v436
        %v1071 = vunpack.c.l.b16 %v437
        %v1072 = vunpack.c.h.b16 %v437
        %v1073 = vunpack.c.l.b16 %v438
        %v1074 = vunpack.c.h.b16 %v438
        %v1075 = vunpack.c.l.b16 %v439
        %v1076 = vunpack.c.h.b16 %v439
        %v1077 = vunpack.c.l.b16 %v440
        %v1078 = vunpack.c.h.b16 %v440
        %v1079 = vunpack.c.l.b16 %v441
        %v1080 = vunpack.c.h.b16 %v441
        %v1081 = vunpack.c.l.b16 %v442
        %v1082 = vunpack.c.h.b16 %v442
        %v1083 = vunpack.c.l.b16 %v443
        %v1084 = vunpack.c.h.b16 %v443
        %v1085 = vunpack.c.l.b16 %v444
        %v1086 = vunpack.c.h.b16 %v444
        %v1087 = vunpack.c.l.b16 %v445
        %v1088 = vunpack.c.h.b16 %v445
        %v1089 = vunpack.c.l.b16 %v446
        %v1090 = vunpack.c.h.b16 %v446
        %v1091 = vunpack.c.l.b16 %v447
        %v1092 = vunpack.c.h.b16 %v447
        %v1093 = vunpack.c.l.b16 %v448
        %v1094 = vunpack.c.h.b16 %v448
        %v1095 = vunpack.c.l.b16 %v449
        %v1096 = vunpack.c.h.b16 %v449
        %v1097 = vunpack.c.l.b16 %v450
        %v1098 = vunpack.c.h.b16 %v450
        %v1099 = vunpack.c.l.b16 %v451
        %v1100 = vunpack.c.h.b16 %v451
        %v1101 = vunpack.c.l.b16 %v452
        %v1102 = vunpack.c.h.b16 %v452
        %v1103 = vunpack.c.l.b16 %v453
        %v1104 = vunpack.c.h.b16 %v453
        %v1105 = vunpack.c.l.b16 %v454
        %v1106 = vunpack.c.h.b16 %v454
        %v1107 = vunpack.c.l.b16 %v455
        %v1108 = vunpack.c.h.b16 %v455
        %v1109 = vunpack.c.l.b16 %v456
        %v1110 = vunpack.c.h.b16 %v456
        %v1111 = vunpack.c.l.b16 %v457
        %v1112 = vunpack.c.h.b16 %v457
        %v1113 = vunpack.c.l.b16 %v458
        %v1114 = vunpack.c.h.b16 %v458
        %v1115 = vunpack.c.l.b16 %v459
        %v1116 = vunpack.c.h.b16 %v459
        %v1117 = vunpack.c.l.b16 %v460
        %v1118 = vunpack.c.h.b16 %v460
        %v1119 = vunpack.c.l.b16 %v461
        %v1120 = vunpack.c.h.b16 %v461
        %v1121 = vunpack.c.l.b16 %v462
        %v1122 = vunpack.c.h.b16 %v462
        %v1123 = vunpack.c.l.b16 %v463
        %v1124 = vunpack.c.h.b16 %v463
        %v1125 = vunpack.c.l.b16 %v464
        %v1126 = vunpack.c.h.b16 %v464
        %v1127 = vunpack.c.l.b16 %v465
        %v1128 = vunpack.c.h.b16 %v465
        %v1129 = vunpack.c.l.b16 %v466
        %v1130 = vunpack.c.h.b16 %v466
        %v1131 = vunpack.c.l.b16 %v467
        %v1132 = vunpack.c.h.b16 %v467
        %v1133 = vunpack.c.l.b16 %v468
        %v1134 = vunpack.c.h.b16 %v468
        %v1135 = vunpack.c.l.b16 %v469
        %v1136 = vunpack.c.h.b16 %v469
        %v1137 = vunpack.c.l.b16 %v470
        %v1138 = vunpack.c.h.b16 %v470
        %v1139 = vunpack.c.l.b16 %v471
        %v1140 = vunpack.c.h.b16 %v471
        %v1141 = vunpack.c.l.b16 %v472
        %v1142 = vunpack.c.h.b16 %v472
        %v1143 = vunpack.c.l.b16 %v473
        %v1144 = vunpack.c.h.b16 %v473
        %v1145 = vunpack.c.l.b16 %v474
        %v1146 = vunpack.c.h.b16 %v474
        %v1147 = vunpack.c.l.b16 %v475
        %v1148 = vunpack.c.h.b16 %v475
        %v1149 = vunpack.c.l.b16 %v476
        %v1150 = vunpack.c.h.b16 %v476
        %v1151 = vunpack.c.l.b16 %v477
        %v1152 = vunpack.c.h.b16 %v477
        %v1153 = vunpack.c.l.b16 %v478
        %v1154 = vunpack.c.h.b16 %v478
        %v1155 = vunpack.c.l.b16 %v479
        %v1156 = vunpack.c.h.b16 %v479
        %v1157 = vunpack.c.l.b16 %v480
        %v1158 = vunpack.c.h.b16 %v480
        %v1159 = vunpack.c.l.b16 %v481
        %v1160 = vunpack.c.h.b16 %v481
        %v1161 = vunpack.c.l.b16 %v482
        %v1162 = vunpack.c.h.b16 %v482
        %v1163 = vunpack.c.l.b16 %v483
        %v1164 = vunpack.c.h.b16 %v483
        %v1165 = vunpack.c.l.b16 %v484
        %v1166 = vunpack.c.h.b16 %v484
        %v1167 = vunpack.c.l.b16 %v485
        %v1168 = vunpack.c.h.b16 %v485
        %v1169 = vunpack.c.l.b16 %v486
        %v1170 = vunpack.c.h.b16 %v486
        %v1171 = vunpack.c.l.b16 %v487
        %v1172 = vunpack.c.h.b16 %v487
        %v1173 = vunpack.c.l.b16 %v488
        %v1174 = vunpack.c.h.b16 %v488
        %v1175 = vunpack.c.l.b16 %v489
        %v1176 = vunpack.c.h.b16 %v489
        %v1177 = vunpack.c.l.b16 %v490
        %v1178 = vunpack.c.h.b16 %v490
        %v1179 = vunpack.c.l.b16 %v491
        %v1180 = vunpack.c.h.b16 %v491
        %v1181 = vunpack.c.l.b16 %v492
        %v1182 = vunpack.c.h.b16 %v492
        %v1183 = vunpack.c.l.b16 %v493
        %v1184 = vunpack.c.h.b16 %v493
        %v1185 = vunpack.c.l.b16 %v494
        %v1186 = vunpack.c.h.b16 %v494
        %v1187 = vunpack.c.l.b16 %v495
        %v1188 = vunpack.c.h.b16 %v495
        %v1189 = vunpack.c.l.b16 %v496
        %v1190 = vunpack.c.h.b16 %v496
        %v1191 = vunpack.c.l.b16 %v497
        %v1192 = vunpack.c.h.b16 %v497
        %v1193 = vunpack.c.l.b16 %v498
        %v1194 = vunpack.c.h.b16 %v498
        %v1195 = vunpack.c.l.b16 %v499
        %v1196 = vunpack.c.h.b16 %v499
        %v1197 = vunpack.c.l.b16 %v500
        %v1198 = vunpack.c.h.b16 %v500
        %v1199 = vunpack.c.l.b16 %v501
        %v1200 = vunpack.c.h.b16 %v501
        %v1201 = vunpack.c.l.b16 %v502
        %v1202 = vunpack.c.h.b16 %v502
        %v1203 = vunpack.c.l.b16 %v503
        %v1204 = vunpack.c.h.b16 %v503
        %v1205 = vunpack.c.l.b16 %v504
        %v1206 = vunpack.c.h.b16 %v504
        %v1207 = vunpack.c.l.b16 %v505
        %v1208 = vunpack.c.h.b16 %v505
        %v1209 = vunpack.c.l.b16 %v506
        %v1210 = vunpack.c.h.b16 %v506
        %v1211 = vunpack.c.l.b16 %v507
        %v1212 = vunpack.c.h.b16 %v507
        %v1213 = vunpack.c.l.b16 %v508
        %v1214 = vunpack.c.h.b16 %v508
        %v1215 = vunpack.c.l.b16 %v509
        %v1216 = vunpack.c.h.b16 %v509
        %v1217 = vunpack.c.l.b16 %v510
        %v1218 = vunpack.c.h.b16 %v510
        %v1219 = vunpack.c.l.b16 %v511
        %v1220 = vunpack.c.h.b16 %v511
        %v1221 = vunpack.c.l.b16 %v512
        %v1222 = vunpack.c.h.b16 %v512
        %v1223 = vunpack.c.l.b16 %v513
        %v1224 = vunpack.c.h.b16 %v513
        %v1225 = vunpack.c.l.b16 %v514
        %v1226 = vunpack.c.h.b16 %v514
        %v1227 = vunpack.c.l.b16 %v515
        %v1228 = vunpack.c.h.b16 %v515
        %v1229 = vunpack.c.l.b16 %v516
        %v1230 = vunpack.c.h.b16 %v516
        %v1231 = vunpack.c.l.b16 %v517
        %v1232 = vunpack.c.h.b16 %v517
        %v1233 = vunpack.c.l.b16 %v518
        %v1234 = vunpack.c.h.b16 %v518
        %v1235 = vunpack.c.l.b16 %v519
        %v1236 = vunpack.c.h.b16 %v519
        %v1237 = vunpack.c.l.b16 %v520
        %v1238 = vunpack.c.h.b16 %v520
        %v1239 = vunpack.c.l.b16 %v521
        %v1240 = vunpack.c.h.b16 %v521
        %v1241 = vunpack.c.l.b16 %v522
        %v1242 = vunpack.c.h.b16 %v522
        %v1243 = vunpack.c.l.b16 %v523
        %v1244 = vunpack.c.h.b16 %v523
        %v1245 = vunpack.c.l.b16 %v524
        %v1246 = vunpack.c.h.b16 %v524
        %v1247 = vunpack.c.l.b16 %v525
        %v1248 = vunpack.c.h.b16 %v525
        %v1249 = vunpack.c.l.b16 %v526
        %v1250 = vunpack.c.h.b16 %v526
        %v1251 = vunpack.c.l.b16 %v527
        %v1252 = vunpack.c.h.b16 %v527
        %v1253 = vunpack.c.l.b16 %v528
        %v1254 = vunpack.c.h.b16 %v528
        %v1255 = vunpack.c.l.b16 %v529
        %v1256 = vunpack.c.h.b16 %v529
        %v1257 = vunpack.c.l.b16 %v530
        %v1258 = vunpack.c.h.b16 %v530
        %v1259 = vunpack.c.l.b16 %v531
        %v1260 = vunpack.c.h.b16 %v531
        %v1261 = vunpack.c.l.b16 %v532
        %v1262 = vunpack.c.h.b16 %v532
        %v1263 = vunpack.c.l.b16 %v533
        %v1264 = vunpack.c.h.b16 %v533
        %v1265 = vunpack.c.l.b16 %v534
        %v1266 = vunpack.c.h.b16 %v534
        %v1267 = vunpack.c.l.b16 %v535
        %v1268 = vunpack.c.h.b16 %v535
        %v1269 = vunpack.c.l.b16 %v536
        %v1270 = vunpack.c.h.b16 %v536
        %v1271 = vunpack.c.l.b16 %v537
        %v1272 = vunpack.c.h.b16 %v537
        %v1273 = vunpack.c.l.b16 %v538
        %v1274 = vunpack.c.h.b16 %v538
        %v1275 = vunpack.c.l.b16 %v539
        %v1276 = vunpack.c.h.b16 %v539
        %v1277 = vunpack.c.l.b16 %v540
        %v1278 = vunpack.c.h.b16 %v540
        %v1279 = vunpack.c.l.b16 %v541
        %v1280 = vunpack.c.h.b16 %v541
        %v1281 = vunpack.c.l.b16 %v542
        %v1282 = vunpack.c.h.b16 %v542
        %v1283 = vunpack.c.l.b16 %v543
        %v1284 = vunpack.c.h.b16 %v543
        %v1285 = vunpack.c.l.b16 %v544
        %v1286 = vunpack.c.h.b16 %v544
        %v1287 = vunpack.c.l.b16 %v545
        %v1288 = vunpack.c.h.b16 %v545
        %v1289 = vunpack.c.l.b16 %v546
        %v1290 = vunpack.c.h.b16 %v546
        %v1291 = vunpack.c.l.b16 %v547
        %v1292 = vunpack.c.h.b16 %v547
        %v1293 = vunpack.c.l.b16 %v548
        %v1294 = vunpack.c.h.b16 %v548
        %v1295 = vunpack.c.l.b16 %v549
        %v1296 = vunpack.c.h.b16 %v549
        %v1297 = vunpack.c.l.b16 %v550
        %v1298 = vunpack.c.h.b16 %v550
        %v1299 = vunpack.c.l.b16 %v551
        %v1300 = vunpack.c.h.b16 %v551
        %v1301 = vunpack.c.l.b16 %v552
        %v1302 = vunpack.c.h.b16 %v552
        %v1303 = vunpack.c.l.b16 %v553
        %v1304 = vunpack.c.h.b16 %v553
        %v1305 = vunpack.c.l.b16 %v554
        %v1306 = vunpack.c.h.b16 %v554
        %v1307 = vunpack.c.l.b16 %v555
        %v1308 = vunpack.c.h.b16 %v555
        %v1309 = vunpack.c.l.b16 %v556
        %v1310 = vunpack.c.h.b16 %v556
        %v1311 = vunpack.c.l.b16 %v557
        %v1312 = vunpack.c.h.b16 %v557
        %v1313 = vunpack.c.l.b16 %v558
        %v1314 = vunpack.c.h.b16 %v558
        %v1315 = vunpack.c.l.b16 %v559
        %v1316 = vunpack.c.h.b16 %v559
        %v1317 = vunpack.c.l.b16 %v560
        %v1318 = vunpack.c.h.b16 %v560
        %v1319 = vunpack.c.l.b16 %v561
        %v1320 = vunpack.c.h.b16 %v561
        %v1321 = vunpack.c.l.b16 %v562
        %v1322 = vunpack.c.h.b16 %v562
        %v1323 = vunpack.c.l.b16 %v563
        %v1324 = vunpack.c.h.b16 %v563
        %v1325 = vunpack.c.l.b16 %v564
        %v1326 = vunpack.c.h.b16 %v564
        %v1327 = vunpack.c.l.b16 %v565
        %v1328 = vunpack.c.h.b16 %v565
        %v1329 = vunpack.c.l.b16 %v566
        %v1330 = vunpack.c.h.b16 %v566
        %v1331 = vunpack.c.l.b16 %v567
        %v1332 = vunpack.c.h.b16 %v567
        %v1333 = vunpack.c.l.b16 %v568
        %v1334 = vunpack.c.h.b16 %v568
        %v1335 = vunpack.c.l.b16 %v569
        %v1336 = vunpack.c.h.b16 %v569
        %v1337 = vunpack.c.l.b16 %v570
        %v1338 = vunpack.c.h.b16 %v570
        %v1339 = vunpack.c.l.b16 %v571
        %v1340 = vunpack.c.h.b16 %v571
        %v1341 = vunpack.c.l.b16 %v572
        %v1342 = vunpack.c.h.b16 %v572
        %v1343 = vunpack.c.l.b16 %v573
        %v1344 = vunpack.c.h.b16 %v573
        %v1345 = vunpack.c.l.b16 %v574
        %v1346 = vunpack.c.h.b16 %v574
        %v1347 = vunpack.c.l.b16 %v575
        %v1348 = vunpack.c.h.b16 %v575
        %v1349 = vunpack.c.l.b16 %v576
        %v1350 = vunpack.c.h.b16 %v576
        %v1351 = vunpack.c.l.b16 %v577
        %v1352 = vunpack.c.h.b16 %v577
        %v1353 = vunpack.c.l.b16 %v578
        %v1354 = vunpack.c.h.b16 %v578
        %v1355 = vunpack.c.l.b16 %v579
        %v1356 = vunpack.c.h.b16 %v579
        %v1357 = vunpack.c.l.b16 %v580
        %v1358 = vunpack.c.h.b16 %v580
        %v1359 = vunpack.c.l.b16 %v581
        %v1360 = vunpack.c.h.b16 %v581
        %v1361 = vunpack.c.l.b16 %v582
        %v1362 = vunpack.c.h.b16 %v582
        %v1363 = vunpack.c.l.b16 %v583
        %v1364 = vunpack.c.h.b16 %v583
        %v1365 = vunpack.c.l.b16 %v584
        %v1366 = vunpack.c.h.b16 %v584
        %v1367 = vunpack.c.l.b16 %v585
        %v1368 = vunpack.c.h.b16 %v585
        %v1369 = vunpack.c.l.b16 %v586
        %v1370 = vunpack.c.h.b16 %v586
        %v1371 = vunpack.c.l.b16 %v587
        %v1372 = vunpack.c.h.b16 %v587
        %v1373 = vunpack.c.l.b16 %v588
        %v1374 = vunpack.c.h.b16 %v588
        %v1375 = vunpack.c.l.b16 %v589
        %v1376 = vunpack.c.h.b16 %v589
        %v1377 = vunpack.c.l.b16 %v590
        %v1378 = vunpack.c.h.b16 %v590
        %v1379 = vunpack.c.l.b16 %v591
        %v1380 = vunpack.c.h.b16 %v591
        %v1381 = vunpack.c.l.b16 %v592
        %v1382 = vunpack.c.h.b16 %v592
        %v1383 = vunpack.c.l.b16 %v593
        %v1384 = vunpack.c.h.b16 %v593
        %v1385 = vunpack.c.l.b16 %v594
        %v1386 = vunpack.c.h.b16 %v594
        %v1387 = vunpack.c.l.b16 %v595
        %v1388 = vunpack.c.h.b16 %v595
        %v1389 = vunpack.c.l.b16 %v596
        %v1390 = vunpack.c.h.b16 %v596
        %v1391 = vunpack.c.l.b16 %v597
        %v1392 = vunpack.c.h.b16 %v597
        %v1393 = vunpack.c.l.b16 %v598
        %v1394 = vunpack.c.h.b16 %v598
        %v1395 = vunpack.c.l.b16 %v599
        %v1396 = vunpack.c.h.b16 %v599
        %v1397 = vunpack.c.l.b16 %v600
        %v1398 = vunpack.c.h.b16 %v600
        %v1399 = vunpack.c.l.b16 %v601
        %v1400 = vunpack.c.h.b16 %v601
        %v1401 = vunpack.c.l.b16 %v602
        %v1402 = vunpack.c.h.b16 %v602
        %v1403 = vunpack.c.l.b16 %v603
        %v1404 = vunpack.c.h.b16 %v603
        %v1405 = vunpack.c.l.b16 %v604
        %v1406 = vunpack.c.h.b16 %v604
        %v1407 = vunpack.c.l.b16 %v605
        %v1408 = vunpack.c.h.b16 %v605
        %v1409 = vunpack.c.l.b16 %v606
        %v1410 = vunpack.c.h.b16 %v606
        %v1411 = vunpack.c.l.b16 %v607
        %v1412 = vunpack.c.h.b16 %v607
        %v1413 = vunpack.c.l.b16 %v608
        %v1414 = vunpack.c.h.b16 %v608
        %v1415 = vunpack.c.l.b16 %v609
        %v1416 = vunpack.c.h.b16 %v609
        %v1417 = vunpack.c.l.b16 %v610
        %v1418 = vunpack.c.h.b16 %v610
        %v1419 = vunpack.c.l.b16 %v611
        %v1420 = vunpack.c.h.b16 %v611
        %v1421 = vunpack.c.l.b16 %v612
        %v1422 = vunpack.c.h.b16 %v612
        %v1423 = vunpack.c.l.b16 %v613
        %v1424 = vunpack.c.h.b16 %v613
        %v1425 = vunpack.c.l.b16 %v614
        %v1426 = vunpack.c.h.b16 %v614
        %v1427 = vunpack.c.l.b16 %v615
        %v1428 = vunpack.c.h.b16 %v615
        %v1429 = vunpack.c.l.b16 %v616
        %v1430 = vunpack.c.h.b16 %v616
        %v1431 = vunpack.c.l.b16 %v617
        %v1432 = vunpack.c.h.b16 %v617
        %v1433 = vunpack.c.l.b16 %v618
        %v1434 = vunpack.c.h.b16 %v618
        %v1435 = vunpack.c.l.b16 %v619
        %v1436 = vunpack.c.h.b16 %v619
        %v1437 = vunpack.c.l.b16 %v620
        %v1438 = vunpack.c.h.b16 %v620
        %v1439 = vunpack.c.l.b16 %v621
        %v1440 = vunpack.c.h.b16 %v621
        %v1441 = vunpack.c.l.b16 %v622
        %v1442 = vunpack.c.h.b16 %v622
        %v1443 = vunpack.c.l.b16 %v623
        %v1444 = vunpack.c.h.b16 %v623
        %v1445 = vunpack.c.l.b16 %v624
        %v1446 = vunpack.c.h.b16 %v624
        %v1447 = vunpack.c.l.b16 %v625
        %v1448 = vunpack.c.h.b16 %v625
        %v1449 = vunpack.c.l.b16 %v626
        %v1450 = vunpack.c.h.b16 %v626
        %v1451 = vunpack.c.l.b16 %v627
        %v1452 = vunpack.c.h.b16 %v627
        %v1453 = vunpack.c.l.b16 %v628
        %v1454 = vunpack.c.h.b16 %v628
        %v1455 = vunpack.c.l.b16 %v629
        %v1456 = vunpack.c.h.b16 %v629
        %v1457 = vunpack.c.l.b16 %v630
        %v1458 = vunpack.c.h.b16 %v630
        %v1459 = vunpack.c.l.b16 %v631
        %v1460 = vunpack.c.h.b16 %v631
        %v1461 = vunpack.c.l.b16 %v632
        %v1462 = vunpack.c.h.b16 %v632
        %v1463 = vunpack.c.l.b16 %v633
        %v1464 = vunpack.c.h.b16 %v633
        %v1465 = vunpack.c.l.b16 %v634
        %v1466 = vunpack.c.h.b16 %v634
        %v1467 = vunpack.c.l.b16 %v635
        %v1468 = vunpack.c.h.b16 %v635
        %v1469 = vunpack.c.l.b16 %v636
        %v1470 = vunpack.c.h.b16 %v636
        %v1471 = vunpack.c.l.b16 %v637
        %v1472 = vunpack.c.h.b16 %v637
        %v1473 = vunpack.c.l.b16 %v638
        %v1474 = vunpack.c.h.b16 %v638
        %v1475 = vunpack.c.l.b16 %v639
        %v1476 = vunpack.c.h.b16 %v639
        %v1477 = vunpack.c.l.b16 %v640
        %v1478 = vunpack.c.h.b16 %v640
        %v1479 = vunpack.c.l.b16 %v641
        %v1480 = vunpack.c.h.b16 %v641
        %v1481 = vunpack.c.l.b16 %v642
        %v1482 = vunpack.c.h.b16 %v642
        %v1483 = vunpack.c.l.b16 %v643
        %v1484 = vunpack.c.h.b16 %v643
        %v1485 = vunpack.c.l.b16 %v644
        %v1486 = vunpack.c.h.b16 %v644
        %v1487 = vunpack.c.l.b16 %v645
        %v1488 = vunpack.c.h.b16 %v645
        %v1489 = vunpack.c.l.b16 %v646
        %v1490 = vunpack.c.h.b16 %v646
        %v1491 = vunpack.c.l.b16 %v647
        %v1492 = vunpack.c.h.b16 %v647
        %v1493 = vunpack.c.l.b16 %v648
        %v1494 = vunpack.c.h.b16 %v648
        %v1495 = vunpack.c.l.b16 %v649
        %v1496 = vunpack.c.h.b16 %v649
        %v1497 = vunpack.c.l.b16 %v650
        %v1498 = vunpack.c.h.b16 %v650
        %v1499 = vunpack.c.l.b16 %v651
        %v1500 = vunpack.c.h.b16 %v651
        %v1501 = vunpack.c.l.b16 %v652
        %v1502 = vunpack.c.h.b16 %v652
        %v1503 = vunpack.c.l.b16 %v653
        %v1504 = vunpack.c.h.b16 %v653
        %v1505 = vunpack.c.l.b16 %v654
        %v1506 = vunpack.c.h.b16 %v654
        %v1507 = vunpack.c.l.b16 %v655
        %v1508 = vunpack.c.h.b16 %v655
        %v1509 = vunpack.c.l.b16 %v656
        %v1510 = vunpack.c.h.b16 %v656
        %v1511 = vunpack.c.l.b16 %v657
        %v1512 = vunpack.c.h.b16 %v657
        %v1513 = vunpack.c.l.b16 %v658
        %v1514 = vunpack.c.h.b16 %v658
        %v1515 = vunpack.c.l.b16 %v659
        %v1516 = vunpack.c.h.b16 %v659
        %v1517 = vunpack.c.l.b16 %v660
        %v1518 = vunpack.c.h.b16 %v660
        %v1519 = vunpack.c.l.b16 %v661
        %v1520 = vunpack.c.h.b16 %v661
        %v1521 = vunpack.c.l.b16 %v662
        %v1522 = vunpack.c.h.b16 %v662
        %v1523 = vunpack.c.l.b16 %v663
        %v1524 = vunpack.c.h.b16 %v663
        %v1525 = vunpack.c.l.b16 %v664
        %v1526 = vunpack.c.h.b16 %v664
        %v1527 = vunpack.c.l.b16 %v665
        %v1528 = vunpack.c.h.b16 %v665
        %v1529 = vunpack.c.l.b16 %v666
        %v1530 = vunpack.c.h.b16 %v666
        %v1531 = vunpack.c.l.b16 %v667
        %v1532 = vunpack.c.h.b16 %v667
        %v1533 = vunpack.c.l.b16 %v668
        %v1534 = vunpack.c.h.b16 %v668
        %v1535 = vunpack.c.l.b16 %v669
        %v1536 = vunpack.c.h.b16 %v669
        %v1537 = vunpack.c.l.b16 %v670
        %v1538 = vunpack.c.h.b16 %v670
        %v1539 = vunpack.c.l.b16 %v671
        %v1540 = vunpack.c.h.b16 %v671
        %v1541 = vunpack.c.l.b16 %v672
        %v1542 = vunpack.c.h.b16 %v672
        %v1543 = vunpack.c.l.b16 %v673
        %v1544 = vunpack.c.h.b16 %v673
        %v1545 = vunpack.c.l.b16 %v674
        %v1546 = vunpack.c.h.b16 %v674
        %v1547 = vunpack.c.l.b16 %v675
        %v1548 = vunpack.c.h.b16 %v675
        %v1549 = vunpack.c.l.b16 %v676
        %v1550 = vunpack.c.h.b16 %v676
        %v1551 = vunpack.c.l.b16 %v677
        %v1552 = vunpack.c.h.b16 %v677
        %v1553 = vunpack.c.l.b16 %v678
        %v1554 = vunpack.c.h.b16 %v678
        %v1555 = vunpack.c.l.b16 %v679
        %v1556 = vunpack.c.h.b16 %v679
        %v1557 = vunpack.c.l.b16 %v680
        %v1558 = vunpack.c.h.b16 %v680
        %v1559 = vunpack.c.l.b16 %v681
        %v1560 = vunpack.c.h.b16 %v681
        %v1561 = vunpack.c.l.b16 %v682
        %v1562 = vunpack.c.h.b16 %v682
        %v1563 = vunpack.c.l.b16 %v683
        %v1564 = vunpack.c.h.b16 %v683
        %v1565 = vunpack.c.l.b16 %v684
        %v1566 = vunpack.c.h.b16 %v684
        %v1567 = vunpack.c.l.b16 %v685
        %v1568 = vunpack.c.h.b16 %v685
        %v1569 = vunpack.c.l.b16 %v686
        %v1570 = vunpack.c.h.b16 %v686
        %v1571 = vunpack.c.l.b16 %v687
        %v1572 = vunpack.c.h.b16 %v687
        %v1573 = vunpack.c.l.b16 %v688
        %v1574 = vunpack.c.h.b16 %v688
        %v1575 = vunpack.c.l.b16 %v689
        %v1576 = vunpack.c.h.b16 %v689
        %v1577 = vunpack.c.l.b16 %v690
        %v1578 = vunpack.c.h.b16 %v690
        %v1579 = vunpack.c.l.b16 %v691
        %v1580 = vunpack.c.h.b16 %v691
        %v1581 = vunpack.c.l.b16 %v692
        %v1582 = vunpack.c.h.b16 %v692
        %v1583 = vunpack.c.l.b16 %v693
        %v1584 = vunpack.c.h.b16 %v693
        %v1585 = vunpack.c.l.b16 %v694
        %v1586 = vunpack.c.h.b16 %v694
        %v1587 = vpack.c.b16 %v1023, %v1011
        %v1588 = vpack.c.b16 %v1024, %v1012
        %v1589 = vpack.c.b16 %v1025, %v1013
        %v1590 = vpack.c.b16 %v1026, %v1014
        %v1591 = vpack.c.b16 %v1027, %v1015
        %v1592 = vpack.c.b16 %v1028, %v1016
        %v1593 = vpack.c.b16 %v1029, %v1017
        %v1594 = vpack.c.b16 %v1030, %v1018
        %v1595 = vpack.c.b16 %v1031, %v1019
        %v1596 = vpack.c.b16 %v1032, %v1020
        %v1597 = vpack.c.b16 %v1033, %v1021
        %v1598 = vpack.c.b16 %v1034, %v1022
        %v1599 = vpack.c.b16 %v1047, %v1035
        %v1600 = vpack.c.b16 %v1048, %v1036
        %v1601 = vpack.c.b16 %v1049, %v1037
        %v1602 = vpack.c.b16 %v1050, %v1038
        %v1603 = vpack.c.b16 %v1051, %v1039
        %v1604 = vpack.c.b16 %v1052, %v1040
        %v1605 = vpack.c.b16 %v1053, %v1041
        %v1606 = vpack.c.b16 %v1054, %v1042
        %v1607 = vpack.c.b16 %v1055, %v1043
        %v1608 = vpack.c.b16 %v1056, %v1044
        %v1609 = vpack.c.b16 %v1057, %v1045
        %v1610 = vpack.c.b16 %v1058, %v1046
        %v1611 = vpack.c.b16 %v1071, %v1059
        %v1612 = vpack.c.b16 %v1072, %v1060
        %v1613 = vpack.c.b16 %v1073, %v1061
        %v1614 = vpack.c.b16 %v1074, %v1062
        %v1615 = vpack.c.b16 %v1075, %v1063
        %v1616 = vpack.c.b16 %v1076, %v1064
        %v1617 = vpack.c.b16 %v1077, %v1065
        %v1618 = vpack.c.b16 %v1078, %v1066
        %v1619 = vpack.c.b16 %v1079, %v1067
        %v1620 = vpack.c.b16 %v1080, %v1068
        %v1621 = vpack.c.b16 %v1081, %v1069
        %v1622 = vpack.c.b16 %v1082, %v1070
        %v1623 = vpack.c.b16 %v1095, %v1083
        %v1624 = vpack.c.b16 %v1096, %v1084
        %v1625 = vpack.c.b16 %v1097, %v1085
        %v1626 = vpack.c.b16 %v1098, %v1086
        %v1627 = vpack.c.b16 %v1099, %v1087
        %v1628 = vpack.c.b16 %v1100, %v1088
        %v1629 = vpack.c.b16 %v1101, %v1089
        %v1630 = vpack.c.b16 %v1102, %v1090
        %v1631 = vpack.c.b16 %v1103, %v1091
        %v1632 = vpack.c.b16 %v1104, %v1092
        %v1633 = vpack.c.b16 %v1105, %v1093
        %v1634 = vpack.c.b16 %v1106, %v1094
        %v1635 = vpack.c.b16 %v1119, %v1107
        %v1636 = vpack.c.b16 %v1120, %v1108
        %v1637 = vpack.c.b16 %v1121, %v1109
        %v1638 = vpack.c.b16 %v1122, %v1110
        %v1639 = vpack.c.b16 %v1123, %v1111
        %v1640 = vpack.c.b16 %v1124, %v1112
        %v1641 = vpack.c.b16 %v1125, %v1113
        %v1642 = vpack.c.b16 %v1126, %v1114
        %v1643 = vpack.c.b16 %v1127, %v1115
        %v1644 = vpack.c.b16 %v1128, %v1116
        %v1645 = vpack.c.b16 %v1129, %v1117
        %v1646 = vpack.c.b16 %v1130, %v1118
        %v1647 = vpack.c.b16 %v1143, %v1131
        %v1648 = vpack.c.b16 %v1144, %v1132
        %v1649 = vpack.c.b16 %v1145, %v1133
        %v1650 = vpack.c.b16 %v1146, %v1134
        %v1651 = vpack.c.b16 %v1147, %v1135
        %v1652 = vpack.c.b16 %v1148, %v1136
        %v1653 = vpack.c.b16 %v1149, %v1137
        %v1654 = vpack.c.b16 %v1150, %v1138
        %v1655 = vpack.c.b16 %v1151, %v1139
        %v1656 = vpack.c.b16 %v1152, %v1140
        %v1657 = vpack.c.b16 %v1153, %v1141
        %v1658 = vpack.c.b16 %v1154, %v1142
        %v1659 = vpack.c.b16 %v1167, %v1155
        %v1660 = vpack.c.b16 %v1168, %v1156
        %v1661 = vpack.c.b16 %v1169, %v1157
        %v1662 = vpack.c.b16 %v1170, %v1158
        %v1663 = vpack.c.b16 %v1171, %v1159
        %v1664 = vpack.c.b16 %v1172, %v1160
        %v1665 = vpack.c.b16 %v1173, %v1161
        %v1666 = vpack.c.b16 %v1174, %v1162
        %v1667 = vpack.c.b16 %v1175, %v1163
        %v1668 = vpack.c.b16 %v1176, %v1164
        %v1669 = vpack.c.b16 %v1177, %v1165
        %v1670 = vpack.c.b16 %v1178, %v1166
        %v1671 = vpack.c.b16 %v1191, %v1179
        %v1672 = vpack.c.b16 %v1192, %v1180
        %v1673 = vpack.c.b16 %v1193, %v1181
        %v1674 = vpack.c.b16 %v1194, %v1182
        %v1675 = vpack.c.b16 %v1195, %v1183
        %v1676 = vpack.c.b16 %v1196, %v1184
        %v1677 = vpack.c.b16 %v1197, %v1185
        %v1678 = vpack.c.b16 %v1198, %v1186
        %v1679 = vpack.c.b16 %v1199, %v1187
        %v1680 = vpack.c.b16 %v1200, %v1188
        %v1681 = vpack.c.b16 %v1201, %v1189
        %v1682 = vpack.c.b16 %v1202, %v1190
        %v1683 = vpack.c.b16 %v1215, %v1203
        %v1684 = vpack.c.b16 %v1216, %v1204
        %v1685 = vpack.c.b16 %v1217, %v1205
        %v1686 = vpack.c.b16 %v1218, %v1206
        %v1687 = vpack.c.b16 %v1219, %v1207
        %v1688 = vpack.c.b16 %v1220, %v1208
        %v1689 = vpack.c.b16 %v1221, %v1209
        %v1690 = vpack.c.b16 %v1222, %v1210
        %v1691 = vpack.c.b16 %v1223, %v1211
        %v1692 = vpack.c.b16 %v1224, %v1212
        %v1693 = vpack.c.b16 %v1225, %v1213
        %v1694 = vpack.c.b16 %v1226, %v1214
        %v1695 = vpack.c.b16 %v1239, %v1227
        %v1696 = vpack.c.b16 %v1240, %v1228
        %v1697 = vpack.c.b16 %v1241, %v1229
        %v1698 = vpack.c.b16 %v1242, %v1230
        %v1699 = vpack.c.b16 %v1243, %v1231
        %v1700 = vpack.c.b16 %v1244, %v1232
        %v1701 = vpack.c.b16 %v1245, %v1233
        %v1702 = vpack.c.b16 %v1246, %v1234
        %v1703 = vpack.c.b16 %v1247, %v1235
        %v1704 = vpack.c.b16 %v1248, %v1236
        %v1705 = vpack.c.b16 %v1249, %v1237
        %v1706 = vpack.c.b16 %v1250, %v1238
        %v1707 = vpack.c.b16 %v1263, %v1251
        %v1708 = vpack.c.b16 %v1264, %v1252
        %v1709 = vpack.c.b16 %v1265, %v1253
        %v1710 = vpack.c.b16 %v1266, %v1254
        %v1711 = vpack.c.b16 %v1267, %v1255
        %v1712 = vpack.c.b16 %v1268, %v1256
        %v1713 = vpack.c.b16 %v1269, %v1257
        %v1714 = vpack.c.b16 %v1270, %v1258
        %v1715 = vpack.c.b16 %v1271, %v1259
        %v1716 = vpack.c.b16 %v1272, %v1260
        %v1717 = vpack.c.b16 %v1273, %v1261
        %v1718 = vpack.c.b16 %v1274, %v1262
        %v1719 = vpack.c.b16 %v1287, %v1275
        %v1720 = vpack.c.b16 %v1288, %v1276
        %v1721 = vpack.c.b16 %v1289, %v1277
        %v1722 = vpack.c.b16 %v1290, %v1278
        %v1723 = vpack.c.b16 %v1291, %v1279
        %v1724 = vpack.c.b16 %v1292, %v1280
        %v1725 = vpack.c.b16 %v1293, %v1281
        %v1726 = vpack.c.b16 %v1294, %v1282
        %v1727 = vpack.c.b16 %v1295, %v1283
        %v1728 = vpack.c.b16 %v1296, %v1284
        %v1729 = vpack.c.b16 %v1297, %v1285
        %v1730 = vpack.c.b16 %v1298, %v1286
        %v1731 = vpack.c.b16 %v1311, %v1299
        %v1732 = vpack.c.b16 %v1312, %v1300
        %v1733 = vpack.c.b16 %v1313, %v1301
        %v1734 = vpack.c.b16 %v1314, %v1302
        %v1735 = vpack.c.b16 %v1315, %v1303
        %v1736 = vpack.c.b16 %v1316, %v1304
        %v1737 = vpack.c.b16 %v1317, %v1305
        %v1738 = vpack.c.b16 %v1318, %v1306
        %v1739 = vpack.c.b16 %v1319, %v1307
        %v1740 = vpack.c.b16 %v1320, %v1308
        %v1741 = vpack.c.b16 %v1321, %v1309
        %v1742 = vpack.c.b16 %v1322, %v1310
        %v1743 = vpack.c.b16 %v1335, %v1323
        %v1744 = vpack.c.b16 %v1336, %v1324
        %v1745 = vpack.c.b16 %v1337, %v1325
        %v1746 = vpack.c.b16 %v1338, %v1326
        %v1747 = vpack.c.b16 %v1339, %v1327
        %v1748 = vpack.c.b16 %v1340, %v1328
        %v1749 = vpack.c.b16 %v1341, %v1329
        %v1750 = vpack.c.b16 %v1342, %v1330
        %v1751 = vpack.c.b16 %v1343, %v1331
        %v1752 = vpack.c.b16 %v1344, %v1332
        %v1753 = vpack.c.b16 %v1345, %v1333
        %v1754 = vpack.c.b16 %v1346, %v1334
        %v1755 = vpack.c.b16 %v1359, %v1347
        %v1756 = vpack.c.b16 %v1360, %v1348
        %v1757 = vpack.c.b16 %v1361, %v1349
        %v1758 = vpack.c.b16 %v1362, %v1350
        %v1759 = vpack.c.b16 %v1363, %v1351
        %v1760 = vpack.c.b16 %v1364, %v1352
        %v1761 = vpack.c.b16 %v1365, %v1353
        %v1762 = vpack.c.b16 %v1366, %v1354
        %v1763 = vpack.c.b16 %v1367, %v1355
        %v1764 = vpack.c.b16 %v1368, %v1356
        %v1765 = vpack.c.b16 %v1369, %v1357
        %v1766 = vpack.c.b16 %v1370, %v1358
        %v1767 = vpack.c.b16 %v1383, %v1371
        %v1768 = vpack.c.b16 %v1384, %v1372
        %v1769 = vpack.c.b16 %v1385, %v1373
        %v1770 = vpack.c.b16 %v1386, %v1374
        %v1771 = vpack.c.b16 %v1387, %v1375
        %v1772 = vpack.c.b16 %v1388, %v1376
        %v1773 = vpack.c.b16 %v1389, %v1377
        %v1774 = vpack.c.b16 %v1390, %v1378
        %v1775 = vpack.c.b16 %v1391, %v1379
        %v1776 = vpack.c.b16 %v1392, %v1380
        %v1777 = vpack.c.b16 %v1393, %v1381
        %v1778 = vpack.c.b16 %v1394, %v1382
        %v1779 = vpack.c.b16 %v1407, %v1395
        %v1780 = vpack.c.b16 %v1408, %v1396
        %v1781 = vpack.c.b16 %v1409, %v1397
        %v1782 = vpack.c.b16 %v1410, %v1398
        %v1783 = vpack.c.b16 %v1411, %v1399
        %v1784 = vpack.c.b16 %v1412, %v1400
        %v1785 = vpack.c.b16 %v1413, %v1401
        %v1786 = vpack.c.b16 %v1414, %v1402
        %v1787 = vpack.c.b16 %v1415, %v1403
        %v1788 = vpack.c.b16 %v1416, %v1404
        %v1789 = vpack.c.b16 %v1417, %v1405
        %v1790 = vpack.c.b16 %v1418, %v1406
        %v1791 = vpack.c.b16 %v1431, %v1419
        %v1792 = vpack.c.b16 %v1432, %v1420
        %v1793 = vpack.c.b16 %v1433, %v1421
        %v1794 = vpack.c.b16 %v1434, %v1422
        %v1795 = vpack.c.b16 %v1435, %v1423
        %v1796 = vpack.c.b16 %v1436, %v1424
        %v1797 = vpack.c.b16 %v1437, %v1425
        %v1798 = vpack.c.b16 %v1438, %v1426
        %v1799 = vpack.c.b16 %v1439, %v1427
        %v1800 = vpack.c.b16 %v1440, %v1428
        %v1801 = vpack.c.b16 %v1441, %v1429
        %v1802 = vpack.c.b16 %v1442, %v1430
        %v1803 = vpack.c.b16 %v1455, %v1443
        %v1804 = vpack.c.b16 %v1456, %v1444
        %v1805 = vpack.c.b16 %v1457, %v1445
        %v1806 = vpack.c.b16 %v1458, %v1446
        %v1807 = vpack.c.b16 %v1459, %v1447
        %v1808 = vpack.c.b16 %v1460, %v1448
        %v1809 = vpack.c.b16 %v1461, %v1449
        %v1810 = vpack.c.b16 %v1462, %v1450
        %v1811 = vpack.c.b16 %v1463, %v1451
        %v1812 = vpack.c.b16 %v1464, %v1452
        %v1813 = vpack.c.b16 %v1465, %v1453
        %v1814 = vpack.c.b16 %v1466, %v1454
        %v1815 = vpack.c.b16 %v1479, %v1467
        %v1816 = vpack.c.b16 %v1480, %v1468
        %v1817 = vpack.c.b16 %v1481, %v1469
        %v1818 = vpack.c.b16 %v1482, %v1470
        %v1819 = vpack.c.b16 %v1483, %v1471
        %v1820 = vpack.c.b16 %v1484, %v1472
        %v1821 = vpack.c.b16 %v1485, %v1473
        %v1822 = vpack.c.b16 %v1486, %v1474
        %v1823 = vpack.c.b16 %v1487, %v1475
        %v1824 = vpack.c.b16 %v1488, %v1476
        %v1825 = vpack.c.b16 %v1489, %v1477
        %v1826 = vpack.c.b16 %v1490, %v1478
        %v1827 = vpack.c.b16 %v1503, %v1491
        %v1828 = vpack.c.b16 %v1504, %v1492
        %v1829 = vpack.c.b16 %v1505, %v1493
        %v1830 = vpack.c.b16 %v1506, %v1494
        %v1831 = vpack.c.b16 %v1507, %v1495
        %v1832 = vpack.c.b16 %v1508, %v1496
        %v1833 = vpack.c.b16 %v1509, %v1497
        %v1834 = vpack.c.b16 %v1510, %v1498
        %v1835 = vpack.c.b16 %v1511, %v1499
        %v1836 = vpack.c.b16 %v1512, %v1500
        %v1837 = vpack.c.b16 %v1513, %v1501
        %v1838 = vpack.c.b16 %v1514, %v1502
        %v1839 = vpack.c.b16 %v1527, %v1515
        %v1840 = vpack.c.b16 %v1528, %v1516
        %v1841 = vpack.c.b16 %v1529, %v1517
        %v1842 = vpack.c.b16 %v1530, %v1518
        %v1843 = vpack.c.b16 %v1531, %v1519
        %v1844 = vpack.c.b16 %v1532, %v1520
        %v1845 = vpack.c.b16 %v1533, %v1521
        %v1846 = vpack.c.b16 %v1534, %v1522
        %v1847 = vpack.c.b16 %v1535, %v1523
        %v1848 = vpack.c.b16 %v1536, %v1524
        %v1849 = vpack.c.b16 %v1537, %v1525
        %v1850 = vpack.c.b16 %v1538, %v1526
        %v1851 = vpack.c.b16 %v1551, %v1539
        %v1852 = vpack.c.b16 %v1552, %v1540
        %v1853 = vpack.c.b16 %v1553, %v1541
        %v1854 = vpack.c.b16 %v1554, %v1542
        %v1855 = vpack.c.b16 %v1555, %v1543
        %v1856 = vpack.c.b16 %v1556, %v1544
        %v1857 = vpack.c.b16 %v1557, %v1545
        %v1858 = vpack.c.b16 %v1558, %v1546
        %v1859 = vpack.c.b16 %v1559, %v1547
        %v1860 = vpack.c.b16 %v1560, %v1548
        %v1861 = vpack.c.b16 %v1561, %v1549
        %v1862 = vpack.c.b16 %v1562, %v1550
        %v1863 = vpack.c.b16 %v1575, %v1563
        %v1864 = vpack.c.b16 %v1576, %v1564
        %v1865 = vpack.c.b16 %v1577, %v1565
        %v1866 = vpack.c.b16 %v1578, %v1566
        %v1867 = vpack.c.b16 %v1579, %v1567
        %v1868 = vpack.c.b16 %v1580, %v1568
        %v1869 = vpack.c.b16 %v1581, %v1569
        %v1870 = vpack.c.b16 %v1582, %v1570
        %v1871 = vpack.c.b16 %v1583, %v1571
        %v1872 = vpack.c.b16 %v1584, %v1572
        %v1873 = vpack.c.b16 %v1585, %v1573
        %v1874 = vpack.c.b16 %v1586, %v1574
        %2163 = vmatpush.bf16.msra.mxu0 %v1671
        %2164 = vmatpush.bf16.msra.mxu0 %v1659
        %2165 = vmatpush.bf16.msra.mxu0 %v1647
        %2166 = vmatpush.bf16.msra.mxu0 %v1635
        %2167 = vmatpush.bf16.msra.mxu0 %v1623
        %2168 = vmatpush.bf16.msra.mxu0 %v1611
        %2169 = vmatpush.bf16.msra.mxu0 %v1599
        %2170 = vmatpush.bf16.msra.mxu0 %v1587
        %2171 = vmatmul.bf16.gmra.mxu0 %v404
        %v2172 = vpop.f32.mrf.mxu0
        %v2173 = vadd.f32 %v699, %v2172
        %v2174 = vpop.f32.mrf.mxu0
        %2175 = vdwg.mxu0
        %2176 = vmatpush.bf16.msra.mxu0 %v1767
        %2177 = vmatpush.bf16.msra.mxu0 %v1755
        %2178 = vmatpush.bf16.msra.mxu0 %v1743
        %2179 = vmatpush.bf16.msra.mxu0 %v1731
        %2180 = vmatpush.bf16.msra.mxu0 %v1719
        %2181 = vmatpush.bf16.msra.mxu0 %v1707
        %2182 = vmatpush.bf16.msra.mxu0 %v1695
        %2183 = vmatpush.bf16.msra.mxu0 %v1683
        %2184 = vmatmul.bf16.gmra.mxu0 %v405
        %v2185 = vpop.f32.mrf.mxu0
        %v2186 = vadd.f32 %v2173, %v2185
        %v2187 = vpop.f32.mrf.mxu0
        %2188 = vdwg.mxu0
        %2189 = vmatpush.bf16.msra.mxu0 %v1863
        %2190 = vmatpush.bf16.msra.mxu0 %v1851
        %2191 = vmatpush.bf16.msra.mxu0 %v1839
        %2192 = vmatpush.bf16.msra.mxu0 %v1827
        %2193 = vmatpush.bf16.msra.mxu0 %v1815
        %2194 = vmatpush.bf16.msra.mxu0 %v1803
        %2195 = vmatpush.bf16.msra.mxu0 %v1791
        %2196 = vmatpush.bf16.msra.mxu0 %v1779
        %2197 = vmatmul.bf16.gmra.mxu0 %v406
        %v2198 = vpop.f32.mrf.mxu0
        %v2199 = vadd.f32 %v2186, %v2198
        %v2200 = vpop.f32.mrf.mxu0
        %2201 = vdwg.mxu0
        %2202 = vmatpush.bf16.msra.mxu0 %v1672
        %2203 = vmatpush.bf16.msra.mxu0 %v1660
        %2204 = vmatpush.bf16.msra.mxu0 %v1648
        %2205 = vmatpush.bf16.msra.mxu0 %v1636
        %2206 = vmatpush.bf16.msra.mxu0 %v1624
        %2207 = vmatpush.bf16.msra.mxu0 %v1612
        %2208 = vmatpush.bf16.msra.mxu0 %v1600
        %2209 = vmatpush.bf16.msra.mxu0 %v1588
        %2210 = vmatmul.bf16.gmra.mxu0 %v404
        %v2211 = vpop.f32.mrf.mxu0
        %v2212 = vadd.f32 %v700, %v2211
        %v2213 = vpop.f32.mrf.mxu0
        %2214 = vdwg.mxu0
        %2215 = vmatpush.bf16.msra.mxu0 %v1768
        %2216 = vmatpush.bf16.msra.mxu0 %v1756
        %2217 = vmatpush.bf16.msra.mxu0 %v1744
        %2218 = vmatpush.bf16.msra.mxu0 %v1732
        %2219 = vmatpush.bf16.msra.mxu0 %v1720
        %2220 = vmatpush.bf16.msra.mxu0 %v1708
        %2221 = vmatpush.bf16.msra.mxu0 %v1696
        %2222 = vmatpush.bf16.msra.mxu0 %v1684
        %2223 = vmatmul.bf16.gmra.mxu0 %v405
        %v2224 = vpop.f32.mrf.mxu0
        %v2225 = vadd.f32 %v2212, %v2224
        %v2226 = vpop.f32.mrf.mxu0
        %2227 = vdwg.mxu0
        %2228 = vmatpush.bf16.msra.mxu0 %v1864
        %2229 = vmatpush.bf16.msra.mxu0 %v1852
        %2230 = vmatpush.bf16.msra.mxu0 %v1840
        %2231 = vmatpush.bf16.msra.mxu0 %v1828
        %2232 = vmatpush.bf16.msra.mxu0 %v1816
        %2233 = vmatpush.bf16.msra.mxu0 %v1804
        %2234 = vmatpush.bf16.msra.mxu0 %v1792
        %2235 = vmatpush.bf16.msra.mxu0 %v1780
        %2236 = vmatmul.bf16.gmra.mxu0 %v406
        %v2237 = vpop.f32.mrf.mxu0
        %v2238 = vadd.f32 %v2225, %v2237
        %v2239 = vpop.f32.mrf.mxu0
        %2240 = vdwg.mxu0
        %2241 = vmatpush.bf16.msra.mxu0 %v1673
        %2242 = vmatpush.bf16.msra.mxu0 %v1661
        %2243 = vmatpush.bf16.msra.mxu0 %v1649
        %2244 = vmatpush.bf16.msra.mxu0 %v1637
        %2245 = vmatpush.bf16.msra.mxu0 %v1625
        %2246 = vmatpush.bf16.msra.mxu0 %v1613
        %2247 = vmatpush.bf16.msra.mxu0 %v1601
        %2248 = vmatpush.bf16.msra.mxu0 %v1589
        %2249 = vmatmul.bf16.gmra.mxu0 %v404
        %v2250 = vpop.f32.mrf.mxu0
        %v2251 = vadd.f32 %v701, %v2250
        %v2252 = vpop.f32.mrf.mxu0
        %2253 = vdwg.mxu0
        %2254 = vmatpush.bf16.msra.mxu0 %v1769
        %2255 = vmatpush.bf16.msra.mxu0 %v1757
        %2256 = vmatpush.bf16.msra.mxu0 %v1745
        %2257 = vmatpush.bf16.msra.mxu0 %v1733
        %2258 = vmatpush.bf16.msra.mxu0 %v1721
        %2259 = vmatpush.bf16.msra.mxu0 %v1709
        %2260 = vmatpush.bf16.msra.mxu0 %v1697
        %2261 = vmatpush.bf16.msra.mxu0 %v1685
        %2262 = vmatmul.bf16.gmra.mxu0 %v405
        %v2263 = vpop.f32.mrf.mxu0
        %v2264 = vadd.f32 %v2251, %v2263
        %v2265 = vpop.f32.mrf.mxu0
        %2266 = vdwg.mxu0
        %2267 = vmatpush.bf16.msra.mxu0 %v1865
        %2268 = vmatpush.bf16.msra.mxu0 %v1853
        %2269 = vmatpush.bf16.msra.mxu0 %v1841
        %2270 = vmatpush.bf16.msra.mxu0 %v1829
        %2271 = vmatpush.bf16.msra.mxu0 %v1817
        %2272 = vmatpush.bf16.msra.mxu0 %v1805
        %2273 = vmatpush.bf16.msra.mxu0 %v1793
        %2274 = vmatpush.bf16.msra.mxu0 %v1781
        %2275 = vmatmul.bf16.gmra.mxu0 %v406
        %v2276 = vpop.f32.mrf.mxu0
        %v2277 = vadd.f32 %v2264, %v2276
        %v2278 = vpop.f32.mrf.mxu0
        %2279 = vdwg.mxu0
        %2280 = vmatpush.bf16.msra.mxu0 %v1674
        %2281 = vmatpush.bf16.msra.mxu0 %v1662
        %2282 = vmatpush.bf16.msra.mxu0 %v1650
        %2283 = vmatpush.bf16.msra.mxu0 %v1638
        %2284 = vmatpush.bf16.msra.mxu0 %v1626
        %2285 = vmatpush.bf16.msra.mxu0 %v1614
        %2286 = vmatpush.bf16.msra.mxu0 %v1602
        %2287 = vmatpush.bf16.msra.mxu0 %v1590
        %2288 = vmatmul.bf16.gmra.mxu0 %v404
        %v2289 = vpop.f32.mrf.mxu0
        %v2290 = vadd.f32 %v702, %v2289
        %v2291 = vpop.f32.mrf.mxu0
        %2292 = vdwg.mxu0
        %2293 = vmatpush.bf16.msra.mxu0 %v1770
        %2294 = vmatpush.bf16.msra.mxu0 %v1758
        %2295 = vmatpush.bf16.msra.mxu0 %v1746
        %2296 = vmatpush.bf16.msra.mxu0 %v1734
        %2297 = vmatpush.bf16.msra.mxu0 %v1722
        %2298 = vmatpush.bf16.msra.mxu0 %v1710
        %2299 = vmatpush.bf16.msra.mxu0 %v1698
        %2300 = vmatpush.bf16.msra.mxu0 %v1686
        %2301 = vmatmul.bf16.gmra.mxu0 %v405
        %v2302 = vpop.f32.mrf.mxu0
        %v2303 = vadd.f32 %v2290, %v2302
        %v2304 = vpop.f32.mrf.mxu0
        %2305 = vdwg.mxu0
        %2306 = vmatpush.bf16.msra.mxu0 %v1866
        %2307 = vmatpush.bf16.msra.mxu0 %v1854
        %2308 = vmatpush.bf16.msra.mxu0 %v1842
        %2309 = vmatpush.bf16.msra.mxu0 %v1830
        %2310 = vmatpush.bf16.msra.mxu0 %v1818
        %2311 = vmatpush.bf16.msra.mxu0 %v1806
        %2312 = vmatpush.bf16.msra.mxu0 %v1794
        %2313 = vmatpush.bf16.msra.mxu0 %v1782
        %2314 = vmatmul.bf16.gmra.mxu0 %v406
        %v2315 = vpop.f32.mrf.mxu0
        %v2316 = vadd.f32 %v2303, %v2315
        %v2317 = vpop.f32.mrf.mxu0
        %2318 = vdwg.mxu0
        %2319 = vmatpush.bf16.msra.mxu0 %v1675
        %2320 = vmatpush.bf16.msra.mxu0 %v1663
        %2321 = vmatpush.bf16.msra.mxu0 %v1651
        %2322 = vmatpush.bf16.msra.mxu0 %v1639
        %2323 = vmatpush.bf16.msra.mxu0 %v1627
        %2324 = vmatpush.bf16.msra.mxu0 %v1615
        %2325 = vmatpush.bf16.msra.mxu0 %v1603
        %2326 = vmatpush.bf16.msra.mxu0 %v1591
        %2327 = vmatmul.bf16.gmra.mxu0 %v404
        %v2328 = vpop.f32.mrf.mxu0
        %v2329 = vadd.f32 %v703, %v2328
        %v2330 = vpop.f32.mrf.mxu0
        %2331 = vdwg.mxu0
        %2332 = vmatpush.bf16.msra.mxu0 %v1771
        %2333 = vmatpush.bf16.msra.mxu0 %v1759
        %2334 = vmatpush.bf16.msra.mxu0 %v1747
        %2335 = vmatpush.bf16.msra.mxu0 %v1735
        %2336 = vmatpush.bf16.msra.mxu0 %v1723
        %2337 = vmatpush.bf16.msra.mxu0 %v1711
        %2338 = vmatpush.bf16.msra.mxu0 %v1699
        %2339 = vmatpush.bf16.msra.mxu0 %v1687
        %2340 = vmatmul.bf16.gmra.mxu0 %v405
        %v2341 = vpop.f32.mrf.mxu0
        %v2342 = vadd.f32 %v2329, %v2341
        %v2343 = vpop.f32.mrf.mxu0
        %2344 = vdwg.mxu0
        %2345 = vmatpush.bf16.msra.mxu0 %v1867
        %2346 = vmatpush.bf16.msra.mxu0 %v1855
        %2347 = vmatpush.bf16.msra.mxu0 %v1843
        %2348 = vmatpush.bf16.msra.mxu0 %v1831
        %2349 = vmatpush.bf16.msra.mxu0 %v1819
        %2350 = vmatpush.bf16.msra.mxu0 %v1807
        %2351 = vmatpush.bf16.msra.mxu0 %v1795
        %2352 = vmatpush.bf16.msra.mxu0 %v1783
        %2353 = vmatmul.bf16.gmra.mxu0 %v406
        %v2354 = vpop.f32.mrf.mxu0
        %v2355 = vadd.f32 %v2342, %v2354
        %v2356 = vpop.f32.mrf.mxu0
        %2357 = vdwg.mxu0
        %2358 = vmatpush.bf16.msra.mxu0 %v1676
        %2359 = vmatpush.bf16.msra.mxu0 %v1664
        %2360 = vmatpush.bf16.msra.mxu0 %v1652
        %2361 = vmatpush.bf16.msra.mxu0 %v1640
        %2362 = vmatpush.bf16.msra.mxu0 %v1628
        %2363 = vmatpush.bf16.msra.mxu0 %v1616
        %2364 = vmatpush.bf16.msra.mxu0 %v1604
        %2365 = vmatpush.bf16.msra.mxu0 %v1592
        %2366 = vmatmul.bf16.gmra.mxu0 %v404
        %v2367 = vpop.f32.mrf.mxu0
        %v2368 = vadd.f32 %v704, %v2367
        %v2369 = vpop.f32.mrf.mxu0
        %2370 = vdwg.mxu0
        %2371 = vmatpush.bf16.msra.mxu0 %v1772
        %2372 = vmatpush.bf16.msra.mxu0 %v1760
        %2373 = vmatpush.bf16.msra.mxu0 %v1748
        %2374 = vmatpush.bf16.msra.mxu0 %v1736
        %2375 = vmatpush.bf16.msra.mxu0 %v1724
        %2376 = vmatpush.bf16.msra.mxu0 %v1712
        %2377 = vmatpush.bf16.msra.mxu0 %v1700
        %2378 = vmatpush.bf16.msra.mxu0 %v1688
        %2379 = vmatmul.bf16.gmra.mxu0 %v405
        %v2380 = vpop.f32.mrf.mxu0
        %v2381 = vadd.f32 %v2368, %v2380
        %v2382 = vpop.f32.mrf.mxu0
        %2383 = vdwg.mxu0
        %2384 = vmatpush.bf16.msra.mxu0 %v1868
        %2385 = vmatpush.bf16.msra.mxu0 %v1856
        %2386 = vmatpush.bf16.msra.mxu0 %v1844
        %2387 = vmatpush.bf16.msra.mxu0 %v1832
        %2388 = vmatpush.bf16.msra.mxu0 %v1820
        %2389 = vmatpush.bf16.msra.mxu0 %v1808
        %2390 = vmatpush.bf16.msra.mxu0 %v1796
        %2391 = vmatpush.bf16.msra.mxu0 %v1784
        %2392 = vmatmul.bf16.gmra.mxu0 %v406
        %v2393 = vpop.f32.mrf.mxu0
        %v2394 = vadd.f32 %v2381, %v2393
        %v2395 = vpop.f32.mrf.mxu0
        %2396 = vdwg.mxu0
        %2397 = vmatpush.bf16.msra.mxu0 %v1677
        %2398 = vmatpush.bf16.msra.mxu0 %v1665
        %2399 = vmatpush.bf16.msra.mxu0 %v1653
        %2400 = vmatpush.bf16.msra.mxu0 %v1641
        %2401 = vmatpush.bf16.msra.mxu0 %v1629
        %2402 = vmatpush.bf16.msra.mxu0 %v1617
        %2403 = vmatpush.bf16.msra.mxu0 %v1605
        %2404 = vmatpush.bf16.msra.mxu0 %v1593
        %2405 = vmatmul.bf16.gmra.mxu0 %v404
        %v2406 = vpop.f32.mrf.mxu0
        %v2407 = vadd.f32 %v705, %v2406
        %v2408 = vpop.f32.mrf.mxu0
        %2409 = vdwg.mxu0
        %2410 = vmatpush.bf16.msra.mxu0 %v1773
        %2411 = vmatpush.bf16.msra.mxu0 %v1761
        %2412 = vmatpush.bf16.msra.mxu0 %v1749
        %2413 = vmatpush.bf16.msra.mxu0 %v1737
        %2414 = vmatpush.bf16.msra.mxu0 %v1725
        %2415 = vmatpush.bf16.msra.mxu0 %v1713
        %2416 = vmatpush.bf16.msra.mxu0 %v1701
        %2417 = vmatpush.bf16.msra.mxu0 %v1689
        %2418 = vmatmul.bf16.gmra.mxu0 %v405
        %v2419 = vpop.f32.mrf.mxu0
        %v2420 = vadd.f32 %v2407, %v2419
        %v2421 = vpop.f32.mrf.mxu0
        %2422 = vdwg.mxu0
        %2423 = vmatpush.bf16.msra.mxu0 %v1869
        %2424 = vmatpush.bf16.msra.mxu0 %v1857
        %2425 = vmatpush.bf16.msra.mxu0 %v1845
        %2426 = vmatpush.bf16.msra.mxu0 %v1833
        %2427 = vmatpush.bf16.msra.mxu0 %v1821
        %2428 = vmatpush.bf16.msra.mxu0 %v1809
        %2429 = vmatpush.bf16.msra.mxu0 %v1797
        %2430 = vmatpush.bf16.msra.mxu0 %v1785
        %2431 = vmatmul.bf16.gmra.mxu0 %v406
        %v2432 = vpop.f32.mrf.mxu0
        %v2433 = vadd.f32 %v2420, %v2432
        %v2434 = vpop.f32.mrf.mxu0
        %2435 = vdwg.mxu0
        %2436 = vmatpush.bf16.msra.mxu0 %v1678
        %2437 = vmatpush.bf16.msra.mxu0 %v1666
        %2438 = vmatpush.bf16.msra.mxu0 %v1654
        %2439 = vmatpush.bf16.msra.mxu0 %v1642
        %2440 = vmatpush.bf16.msra.mxu0 %v1630
        %2441 = vmatpush.bf16.msra.mxu0 %v1618
        %2442 = vmatpush.bf16.msra.mxu0 %v1606
        %2443 = vmatpush.bf16.msra.mxu0 %v1594
        %2444 = vmatmul.bf16.gmra.mxu0 %v404
        %v2445 = vpop.f32.mrf.mxu0
        %v2446 = vadd.f32 %v706, %v2445
        %v2447 = vpop.f32.mrf.mxu0
        %2448 = vdwg.mxu0
        %2449 = vmatpush.bf16.msra.mxu0 %v1774
        %2450 = vmatpush.bf16.msra.mxu0 %v1762
        %2451 = vmatpush.bf16.msra.mxu0 %v1750
        %2452 = vmatpush.bf16.msra.mxu0 %v1738
        %2453 = vmatpush.bf16.msra.mxu0 %v1726
        %2454 = vmatpush.bf16.msra.mxu0 %v1714
        %2455 = vmatpush.bf16.msra.mxu0 %v1702
        %2456 = vmatpush.bf16.msra.mxu0 %v1690
        %2457 = vmatmul.bf16.gmra.mxu0 %v405
        %v2458 = vpop.f32.mrf.mxu0
        %v2459 = vadd.f32 %v2446, %v2458
        %v2460 = vpop.f32.mrf.mxu0
        %2461 = vdwg.mxu0
        %2462 = vmatpush.bf16.msra.mxu0 %v1870
        %2463 = vmatpush.bf16.msra.mxu0 %v1858
        %2464 = vmatpush.bf16.msra.mxu0 %v1846
        %2465 = vmatpush.bf16.msra.mxu0 %v1834
        %2466 = vmatpush.bf16.msra.mxu0 %v1822
        %2467 = vmatpush.bf16.msra.mxu0 %v1810
        %2468 = vmatpush.bf16.msra.mxu0 %v1798
        %2469 = vmatpush.bf16.msra.mxu0 %v1786
        %2470 = vmatmul.bf16.gmra.mxu0 %v406
        %v2471 = vpop.f32.mrf.mxu0
        %v2472 = vadd.f32 %v2459, %v2471
        %v2473 = vpop.f32.mrf.mxu0
        %2474 = vdwg.mxu0
        %2475 = vmatpush.bf16.msra.mxu0 %v1679
        %2476 = vmatpush.bf16.msra.mxu0 %v1667
        %2477 = vmatpush.bf16.msra.mxu0 %v1655
        %2478 = vmatpush.bf16.msra.mxu0 %v1643
        %2479 = vmatpush.bf16.msra.mxu0 %v1631
        %2480 = vmatpush.bf16.msra.mxu0 %v1619
        %2481 = vmatpush.bf16.msra.mxu0 %v1607
        %2482 = vmatpush.bf16.msra.mxu0 %v1595
        %2483 = vmatmul.bf16.gmra.mxu0 %v404
        %v2484 = vpop.f32.mrf.mxu0
        %v2485 = vadd.f32 %v707, %v2484
        %v2486 = vpop.f32.mrf.mxu0
        %2487 = vdwg.mxu0
        %2488 = vmatpush.bf16.msra.mxu0 %v1775
        %2489 = vmatpush.bf16.msra.mxu0 %v1763
        %2490 = vmatpush.bf16.msra.mxu0 %v1751
        %2491 = vmatpush.bf16.msra.mxu0 %v1739
        %2492 = vmatpush.bf16.msra.mxu0 %v1727
        %2493 = vmatpush.bf16.msra.mxu0 %v1715
        %2494 = vmatpush.bf16.msra.mxu0 %v1703
        %2495 = vmatpush.bf16.msra.mxu0 %v1691
        %2496 = vmatmul.bf16.gmra.mxu0 %v405
        %v2497 = vpop.f32.mrf.mxu0
        %v2498 = vadd.f32 %v2485, %v2497
        %v2499 = vpop.f32.mrf.mxu0
        %2500 = vdwg.mxu0
        %2501 = vmatpush.bf16.msra.mxu0 %v1871
        %2502 = vmatpush.bf16.msra.mxu0 %v1859
        %2503 = vmatpush.bf16.msra.mxu0 %v1847
        %2504 = vmatpush.bf16.msra.mxu0 %v1835
        %2505 = vmatpush.bf16.msra.mxu0 %v1823
        %2506 = vmatpush.bf16.msra.mxu0 %v1811
        %2507 = vmatpush.bf16.msra.mxu0 %v1799
        %2508 = vmatpush.bf16.msra.mxu0 %v1787
        %2509 = vmatmul.bf16.gmra.mxu0 %v406
        %v2510 = vpop.f32.mrf.mxu0
        %v2511 = vadd.f32 %v2498, %v2510
        %v2512 = vpop.f32.mrf.mxu0
        %2513 = vdwg.mxu0
        %2514 = vmatpush.bf16.msra.mxu0 %v1680
        %2515 = vmatpush.bf16.msra.mxu0 %v1668
        %2516 = vmatpush.bf16.msra.mxu0 %v1656
        %2517 = vmatpush.bf16.msra.mxu0 %v1644
        %2518 = vmatpush.bf16.msra.mxu0 %v1632
        %2519 = vmatpush.bf16.msra.mxu0 %v1620
        %2520 = vmatpush.bf16.msra.mxu0 %v1608
        %2521 = vmatpush.bf16.msra.mxu0 %v1596
        %2522 = vmatmul.bf16.gmra.mxu0 %v404
        %v2523 = vpop.f32.mrf.mxu0
        %v2524 = vadd.f32 %v708, %v2523
        %v2525 = vpop.f32.mrf.mxu0
        %2526 = vdwg.mxu0
        %2527 = vmatpush.bf16.msra.mxu0 %v1776
        %2528 = vmatpush.bf16.msra.mxu0 %v1764
        %2529 = vmatpush.bf16.msra.mxu0 %v1752
        %2530 = vmatpush.bf16.msra.mxu0 %v1740
        %2531 = vmatpush.bf16.msra.mxu0 %v1728
        %2532 = vmatpush.bf16.msra.mxu0 %v1716
        %2533 = vmatpush.bf16.msra.mxu0 %v1704
        %2534 = vmatpush.bf16.msra.mxu0 %v1692
        %2535 = vmatmul.bf16.gmra.mxu0 %v405
        %v2536 = vpop.f32.mrf.mxu0
        %v2537 = vadd.f32 %v2524, %v2536
        %v2538 = vpop.f32.mrf.mxu0
        %2539 = vdwg.mxu0
        %2540 = vmatpush.bf16.msra.mxu0 %v1872
        %2541 = vmatpush.bf16.msra.mxu0 %v1860
        %2542 = vmatpush.bf16.msra.mxu0 %v1848
        %2543 = vmatpush.bf16.msra.mxu0 %v1836
        %2544 = vmatpush.bf16.msra.mxu0 %v1824
        %2545 = vmatpush.bf16.msra.mxu0 %v1812
        %2546 = vmatpush.bf16.msra.mxu0 %v1800
        %2547 = vmatpush.bf16.msra.mxu0 %v1788
        %2548 = vmatmul.bf16.gmra.mxu0 %v406
        %v2549 = vpop.f32.mrf.mxu0
        %v2550 = vadd.f32 %v2537, %v2549
        %v2551 = vpop.f32.mrf.mxu0
        %2552 = vdwg.mxu0
        %2553 = vmatpush.bf16.msra.mxu0 %v1681
        %2554 = vmatpush.bf16.msra.mxu0 %v1669
        %2555 = vmatpush.bf16.msra.mxu0 %v1657
        %2556 = vmatpush.bf16.msra.mxu0 %v1645
        %2557 = vmatpush.bf16.msra.mxu0 %v1633
        %2558 = vmatpush.bf16.msra.mxu0 %v1621
        %2559 = vmatpush.bf16.msra.mxu0 %v1609
        %2560 = vmatpush.bf16.msra.mxu0 %v1597
        %2561 = vmatmul.bf16.gmra.mxu0 %v404
        %v2562 = vpop.f32.mrf.mxu0
        %v2563 = vadd.f32 %v709, %v2562
        %v2564 = vpop.f32.mrf.mxu0
        %2565 = vdwg.mxu0
        %2566 = vmatpush.bf16.msra.mxu0 %v1777
        %2567 = vmatpush.bf16.msra.mxu0 %v1765
        %2568 = vmatpush.bf16.msra.mxu0 %v1753
        %2569 = vmatpush.bf16.msra.mxu0 %v1741
        %2570 = vmatpush.bf16.msra.mxu0 %v1729
        %2571 = vmatpush.bf16.msra.mxu0 %v1717
        %2572 = vmatpush.bf16.msra.mxu0 %v1705
        %2573 = vmatpush.bf16.msra.mxu0 %v1693
        %2574 = vmatmul.bf16.gmra.mxu0 %v405
        %v2575 = vpop.f32.mrf.mxu0
        %v2576 = vadd.f32 %v2563, %v2575
        %v2577 = vpop.f32.mrf.mxu0
        %2578 = vdwg.mxu0
        %2579 = vmatpush.bf16.msra.mxu0 %v1873
        %2580 = vmatpush.bf16.msra.mxu0 %v1861
        %2581 = vmatpush.bf16.msra.mxu0 %v1849
        %2582 = vmatpush.bf16.msra.mxu0 %v1837
        %2583 = vmatpush.bf16.msra.mxu0 %v1825
        %2584 = vmatpush.bf16.msra.mxu0 %v1813
        %2585 = vmatpush.bf16.msra.mxu0 %v1801
        %2586 = vmatpush.bf16.msra.mxu0 %v1789
        %2587 = vmatmul.bf16.gmra.mxu0 %v406
        %v2588 = vpop.f32.mrf.mxu0
        %v2589 = vadd.f32 %v2576, %v2588
        %v2590 = vpop.f32.mrf.mxu0
        %2591 = vdwg.mxu0
        %2592 = vmatpush.bf16.msra.mxu0 %v1682
        %2593 = vmatpush.bf16.msra.mxu0 %v1670
        %2594 = vmatpush.bf16.msra.mxu0 %v1658
        %2595 = vmatpush.bf16.msra.mxu0 %v1646
        %2596 = vmatpush.bf16.msra.mxu0 %v1634
        %2597 = vmatpush.bf16.msra.mxu0 %v1622
        %2598 = vmatpush.bf16.msra.mxu0 %v1610
        %2599 = vmatpush.bf16.msra.mxu0 %v1598
        %2600 = vmatmul.bf16.gmra.mxu0 %v404
        %v2601 = vpop.f32.mrf.mxu0
        %v2602 = vadd.f32 %v710, %v2601
        %v2603 = vpop.f32.mrf.mxu0
        %2604 = vdwg.mxu0
        %2605 = vmatpush.bf16.msra.mxu0 %v1778
        %2606 = vmatpush.bf16.msra.mxu0 %v1766
        %2607 = vmatpush.bf16.msra.mxu0 %v1754
        %2608 = vmatpush.bf16.msra.mxu0 %v1742
        %2609 = vmatpush.bf16.msra.mxu0 %v1730
        %2610 = vmatpush.bf16.msra.mxu0 %v1718
        %2611 = vmatpush.bf16.msra.mxu0 %v1706
        %2612 = vmatpush.bf16.msra.mxu0 %v1694
        %2613 = vmatmul.bf16.gmra.mxu0 %v405
        %v2614 = vpop.f32.mrf.mxu0
        %v2615 = vadd.f32 %v2602, %v2614
        %v2616 = vpop.f32.mrf.mxu0
        %2617 = vdwg.mxu0
        %2618 = vmatpush.bf16.msra.mxu0 %v1874
        %2619 = vmatpush.bf16.msra.mxu0 %v1862
        %2620 = vmatpush.bf16.msra.mxu0 %v1850
        %2621 = vmatpush.bf16.msra.mxu0 %v1838
        %2622 = vmatpush.bf16.msra.mxu0 %v1826
        %2623 = vmatpush.bf16.msra.mxu0 %v1814
        %2624 = vmatpush.bf16.msra.mxu0 %v1802
        %2625 = vmatpush.bf16.msra.mxu0 %v1790
        %2626 = vmatmul.bf16.gmra.mxu0 %v406
        %v2627 = vpop.f32.mrf.mxu0
        %v2628 = vadd.f32 %v2615, %v2627
        %v2629 = vpop.f32.mrf.mxu0
        %2630 = vdwg.mxu0
        %v2631 = vmul.f32 %v2199, %v2199
        %v2632 = vmul.f32 %v2238, %v2238
        %v2633 = vmul.f32 %v2277, %v2277
        %v2634 = vmul.f32 %v2316, %v2316
        %v2635 = vmul.f32 %v2355, %v2355
        %v2636 = vmul.f32 %v2394, %v2394
        %v2637 = vmul.f32 %v2433, %v2433
        %v2638 = vmul.f32 %v2472, %v2472
        %v2639 = vmul.f32 %v2511, %v2511
        %v2640 = vmul.f32 %v2550, %v2550
        %v2641 = vmul.f32 %v2589, %v2589
        %v2642 = vmul.f32 %v2628, %v2628
        %v2643 = vmul.f32 %v2199, %v2631
        %v2644 = vmul.f32 %v2238, %v2632
        %v2645 = vmul.f32 %v2277, %v2633
        %v2646 = vmul.f32 %v2316, %v2634
        %v2647 = vmul.f32 %v2355, %v2635
        %v2648 = vmul.f32 %v2394, %v2636
        %v2649 = vmul.f32 %v2433, %v2637
        %v2650 = vmul.f32 %v2472, %v2638
        %v2651 = vmul.f32 %v2511, %v2639
        %v2652 = vmul.f32 %v2550, %v2640
        %v2653 = vmul.f32 %v2589, %v2641
        %v2654 = vmul.f32 %v2628, %v2642
        %v2655 = vmul.f32 %v2643, 0.044715
        %v2656 = vmul.f32 %v2644, 0.044715
        %v2657 = vmul.f32 %v2645, 0.044715
        %v2658 = vmul.f32 %v2646, 0.044715
        %v2659 = vmul.f32 %v2647, 0.044715
        %v2660 = vmul.f32 %v2648, 0.044715
        %v2661 = vmul.f32 %v2649, 0.044715
        %v2662 = vmul.f32 %v2650, 0.044715
        %v2663 = vmul.f32 %v2651, 0.044715
        %v2664 = vmul.f32 %v2652, 0.044715
        %v2665 = vmul.f32 %v2653, 0.044715
        %v2666 = vmul.f32 %v2654, 0.044715
        %v2667 = vadd.f32 %v2199, %v2655
        %v2668 = vadd.f32 %v2238, %v2656
        %v2669 = vadd.f32 %v2277, %v2657
        %v2670 = vadd.f32 %v2316, %v2658
        %v2671 = vadd.f32 %v2355, %v2659
        %v2672 = vadd.f32 %v2394, %v2660
        %v2673 = vadd.f32 %v2433, %v2661
        %v2674 = vadd.f32 %v2472, %v2662
        %v2675 = vadd.f32 %v2511, %v2663
        %v2676 = vadd.f32 %v2550, %v2664
        %v2677 = vadd.f32 %v2589, %v2665
        %v2678 = vadd.f32 %v2628, %v2666
        %v2679 = vmul.f32 %v2667, 0.7978846
        %v2680 = vmul.f32 %v2668, 0.7978846
        %v2681 = vmul.f32 %v2669, 0.7978846
        %v2682 = vmul.f32 %v2670, 0.7978846
        %v2683 = vmul.f32 %v2671, 0.7978846
        %v2684 = vmul.f32 %v2672, 0.7978846
        %v2685 = vmul.f32 %v2673, 0.7978846
        %v2686 = vmul.f32 %v2674, 0.7978846
        %v2687 = vmul.f32 %v2675, 0.7978846
        %v2688 = vmul.f32 %v2676, 0.7978846
        %v2689 = vmul.f32 %v2677, 0.7978846
        %v2690 = vmul.f32 %v2678, 0.7978846
        %v2691 = vtanh.pop %v2679
        %v2692 = vtanh.pop %v2680
        %v2693 = vtanh.pop %v2681
        %v2694 = vtanh.pop %v2682
        %v2695 = vtanh.pop %v2683
        %v2696 = vtanh.pop %v2684
        %v2697 = vtanh.pop %v2685
        %v2698 = vtanh.pop %v2686
        %v2699 = vtanh.pop %v2687
        %v2700 = vtanh.pop %v2688
        %v2701 = vtanh.pop %v2689
        %v2702 = vtanh.pop %v2690
        %v2703 = vadd.f32 %v2691, 1.0
        %v2704 = vadd.f32 %v2692, 1.0
        %v2705 = vadd.f32 %v2693, 1.0
        %v2706 = vadd.f32 %v2694, 1.0
        %v2707 = vadd.f32 %v2695, 1.0
        %v2708 = vadd.f32 %v2696, 1.0
        %v2709 = vadd.f32 %v2697, 1.0
        %v2710 = vadd.f32 %v2698, 1.0
        %v2711 = vadd.f32 %v2699, 1.0
        %v2712 = vadd.f32 %v2700, 1.0
        %v2713 = vadd.f32 %v2701, 1.0
        %v2714 = vadd.f32 %v2702, 1.0
        %v2715 = vmul.f32 %v2703, 0.5
        %v2716 = vmul.f32 %v2704, 0.5
        %v2717 = vmul.f32 %v2705, 0.5
        %v2718 = vmul.f32 %v2706, 0.5
        %v2719 = vmul.f32 %v2707, 0.5
        %v2720 = vmul.f32 %v2708, 0.5
        %v2721 = vmul.f32 %v2709, 0.5
        %v2722 = vmul.f32 %v2710, 0.5
        %v2723 = vmul.f32 %v2711, 0.5
        %v2724 = vmul.f32 %v2712, 0.5
        %v2725 = vmul.f32 %v2713, 0.5
        %v2726 = vmul.f32 %v2714, 0.5
        %v2727 = vmul.f32 %v2199, %v2715
        %v2728 = vmul.f32 %v2238, %v2716
        %v2729 = vmul.f32 %v2277, %v2717
        %v2730 = vmul.f32 %v2316, %v2718
        %v2731 = vmul.f32 %v2355, %v2719
        %v2732 = vmul.f32 %v2394, %v2720
        %v2733 = vmul.f32 %v2433, %v2721
        %v2734 = vmul.f32 %v2472, %v2722
        %v2735 = vmul.f32 %v2511, %v2723
        %v2736 = vmul.f32 %v2550, %v2724
        %v2737 = vmul.f32 %v2589, %v2725
        %v2738 = vmul.f32 %v2628, %v2726
        %v2739 = vpack.c.bf16 %v2727, %v2727
        %v2740 = vpack.c.bf16 %v2728, %v2728
        %v2741 = vpack.c.bf16 %v2729, %v2729
        %v2742 = vpack.c.bf16 %v2730, %v2730
        %v2743 = vpack.c.bf16 %v2731, %v2731
        %v2744 = vpack.c.bf16 %v2732, %v2732
        %v2745 = vpack.c.bf16 %v2733, %v2733
        %v2746 = vpack.c.bf16 %v2734, %v2734
        %v2747 = vpack.c.bf16 %v2735, %v2735
        %v2748 = vpack.c.bf16 %v2736, %v2736
        %v2749 = vpack.c.bf16 %v2737, %v2737
        %v2750 = vpack.c.bf16 %v2738, %v2738
        %v2751 = vld [vmem:[#allocation4] sm:$0xff]
        %v2752 = vld [vmem:[#allocation4 + $0x8] sm:$0xf]
        %v2753 = vld [vmem:[#allocation4 + $0xc] sm:$0xff]
        %v2754 = vld [vmem:[#allocation4 + $0x14] sm:$0xf]
        %v2755 = vld [vmem:[#allocation4 + $0x18] sm:$0xff]
        %v2756 = vld [vmem:[#allocation4 + $0x20] sm:$0xf]
        %v2757 = vld [vmem:[#allocation4 + $0x24] sm:$0xff]
        %v2758 = vld [vmem:[#allocation4 + $0x2c] sm:$0xf]
        %v2759 = vld [vmem:[#allocation4 + $0x30] sm:$0xff]
        %v2760 = vld [vmem:[#allocation4 + $0x38] sm:$0xf]
        %v2761 = vld [vmem:[#allocation4 + $0x3c] sm:$0xff]
        %v2762 = vld [vmem:[#allocation4 + $0x44] sm:$0xf]
        %v2763 = vld [vmem:[#allocation4 + $0x48] sm:$0xff]
        %v2764 = vld [vmem:[#allocation4 + $0x50] sm:$0xf]
        %v2765 = vld [vmem:[#allocation4 + $0x54] sm:$0xff]
        %v2766 = vld [vmem:[#allocation4 + $0x5c] sm:$0xf]
        %v2767 = vld [vmem:[#allocation4 + $0x60] sm:$0xff]
        %v2768 = vld [vmem:[#allocation4 + $0x68] sm:$0xf]
        %v2769 = vld [vmem:[#allocation4 + $0x6c] sm:$0xff]
        %v2770 = vld [vmem:[#allocation4 + $0x74] sm:$0xf]
        %v2771 = vld [vmem:[#allocation4 + $0x78] sm:$0xff]
        %v2772 = vld [vmem:[#allocation4 + $0x80] sm:$0xf]
        %v2773 = vld [vmem:[#allocation4 + $0x84] sm:$0xff]
        %v2774 = vld [vmem:[#allocation4 + $0x8c] sm:$0xf]
        %v2775 = vld [vmem:[#allocation4 + $0x90] sm:$0xff]
        %v2776 = vld [vmem:[#allocation4 + $0x98] sm:$0xf]
        %v2777 = vld [vmem:[#allocation4 + $0x9c] sm:$0xff]
        %v2778 = vld [vmem:[#allocation4 + $0xa4] sm:$0xf]
        %v2779 = vld [vmem:[#allocation4 + $0xa8] sm:$0xff]
        %v2780 = vld [vmem:[#allocation4 + $0xb0] sm:$0xf]
        %v2781 = vld [vmem:[#allocation4 + $0xb4] sm:$0xff]
        %v2782 = vld [vmem:[#allocation4 + $0xbc] sm:$0xf]
        %v2783 = vld [vmem:[#allocation4 + $0xc0] sm:$0xff]
        %v2784 = vld [vmem:[#allocation4 + $0xc8] sm:$0xf]
        %v2785 = vld [vmem:[#allocation4 + $0xcc] sm:$0xff]
        %v2786 = vld [vmem:[#allocation4 + $0xd4] sm:$0xf]
        %v2787 = vld [vmem:[#allocation4 + $0xd8] sm:$0xff]
        %v2788 = vld [vmem:[#allocation4 + $0xe0] sm:$0xf]
        %v2789 = vld [vmem:[#allocation4 + $0xe4] sm:$0xff]
        %v2790 = vld [vmem:[#allocation4 + $0xec] sm:$0xf]
        %v2791 = vld [vmem:[#allocation4 + $0xf0] sm:$0xff]
        %v2792 = vld [vmem:[#allocation4 + $0xf8] sm:$0xf]
        %v2793 = vld [vmem:[#allocation4 + $0xfc] sm:$0xff]
        %v2794 = vld [vmem:[#allocation4 + $0x104] sm:$0xf]
        %v2795 = vld [vmem:[#allocation4 + $0x108] sm:$0xff]
        %v2796 = vld [vmem:[#allocation4 + $0x110] sm:$0xf]
        %v2797 = vld [vmem:[#allocation4 + $0x114] sm:$0xff]
        %v2798 = vld [vmem:[#allocation4 + $0x11c] sm:$0xf]
        %v2799 = vld [vmem:[#allocation4 + $0x120] sm:$0xff]
        %v2800 = vld [vmem:[#allocation4 + $0x128] sm:$0xf]
        %v2801 = vld [vmem:[#allocation4 + $0x12c] sm:$0xff]
        %v2802 = vld [vmem:[#allocation4 + $0x134] sm:$0xf]
        %v2803 = vld [vmem:[#allocation4 + $0x138] sm:$0xff]
        %v2804 = vld [vmem:[#allocation4 + $0x140] sm:$0xf]
        %v2805 = vld [vmem:[#allocation4 + $0x144] sm:$0xff]
        %v2806 = vld [vmem:[#allocation4 + $0x14c] sm:$0xf]
        %v2807 = vld [vmem:[#allocation4 + $0x150] sm:$0xff]
        %v2808 = vld [vmem:[#allocation4 + $0x158] sm:$0xf]
        %v2809 = vld [vmem:[#allocation4 + $0x15c] sm:$0xff]
        %v2810 = vld [vmem:[#allocation4 + $0x164] sm:$0xf]
        %v2811 = vld [vmem:[#allocation4 + $0x168] sm:$0xff]
        %v2812 = vld [vmem:[#allocation4 + $0x170] sm:$0xf]
        %v2813 = vld [vmem:[#allocation4 + $0x174] sm:$0xff]
        %v2814 = vld [vmem:[#allocation4 + $0x17c] sm:$0xf]
        %v2815 = vld [vmem:[#allocation4 + $0x180] sm:$0xff]
        %v2816 = vld [vmem:[#allocation4 + $0x188] sm:$0xf]
        %v2817 = vld [vmem:[#allocation4 + $0x18c] sm:$0xff]
        %v2818 = vld [vmem:[#allocation4 + $0x194] sm:$0xf]
        %v2819 = vld [vmem:[#allocation4 + $0x198] sm:$0xff]
        %v2820 = vld [vmem:[#allocation4 + $0x1a0] sm:$0xf]
        %v2821 = vld [vmem:[#allocation4 + $0x1a4] sm:$0xff]
        %v2822 = vld [vmem:[#allocation4 + $0x1ac] sm:$0xf]
        %v2823 = vld [vmem:[#allocation4 + $0x1b0] sm:$0xff]
        %v2824 = vld [vmem:[#allocation4 + $0x1b8] sm:$0xf]
        %v2825 = vld [vmem:[#allocation4 + $0x1bc] sm:$0xff]
        %v2826 = vld [vmem:[#allocation4 + $0x1c4] sm:$0xf]
        %v2827 = vld [vmem:[#allocation4 + $0x1c8] sm:$0xff]
        %v2828 = vld [vmem:[#allocation4 + $0x1d0] sm:$0xf]
        %v2829 = vld [vmem:[#allocation4 + $0x1d4] sm:$0xff]
        %v2830 = vld [vmem:[#allocation4 + $0x1dc] sm:$0xf]
        %v2831 = vld [vmem:[#allocation4 + $0x1e0] sm:$0xff]
        %v2832 = vld [vmem:[#allocation4 + $0x1e8] sm:$0xf]
        %v2833 = vld [vmem:[#allocation4 + $0x1ec] sm:$0xff]
        %v2834 = vld [vmem:[#allocation4 + $0x1f4] sm:$0xf]
        %v2835 = vld [vmem:[#allocation4 + $0x1f8] sm:$0xff]
        %v2836 = vld [vmem:[#allocation4 + $0x200] sm:$0xf]
        %v2837 = vld [vmem:[#allocation4 + $0x204] sm:$0xff]
        %v2838 = vld [vmem:[#allocation4 + $0x20c] sm:$0xf]
        %v2839 = vld [vmem:[#allocation4 + $0x210] sm:$0xff]
        %v2840 = vld [vmem:[#allocation4 + $0x218] sm:$0xf]
        %v2841 = vld [vmem:[#allocation4 + $0x21c] sm:$0xff]
        %v2842 = vld [vmem:[#allocation4 + $0x224] sm:$0xf]
        %v2843 = vld [vmem:[#allocation4 + $0x228] sm:$0xff]
        %v2844 = vld [vmem:[#allocation4 + $0x230] sm:$0xf]
        %v2845 = vld [vmem:[#allocation4 + $0x234] sm:$0xff]
        %v2846 = vld [vmem:[#allocation4 + $0x23c] sm:$0xf]
        %v2847 = vld [vmem:[#allocation4 + $0x240] sm:$0xff]
        %v2848 = vld [vmem:[#allocation4 + $0x248] sm:$0xf]
        %v2849 = vld [vmem:[#allocation4 + $0x24c] sm:$0xff]
        %v2850 = vld [vmem:[#allocation4 + $0x254] sm:$0xf]
        %v2851 = vld [vmem:[#allocation4 + $0x258] sm:$0xff]
        %v2852 = vld [vmem:[#allocation4 + $0x260] sm:$0xf]
        %v2853 = vld [vmem:[#allocation4 + $0x264] sm:$0xff]
        %v2854 = vld [vmem:[#allocation4 + $0x26c] sm:$0xf]
        %v2855 = vld [vmem:[#allocation4 + $0x270] sm:$0xff]
        %v2856 = vld [vmem:[#allocation4 + $0x278] sm:$0xf]
        %v2857 = vld [vmem:[#allocation4 + $0x27c] sm:$0xff]
        %v2858 = vld [vmem:[#allocation4 + $0x284] sm:$0xf]
        %v2859 = vld [vmem:[#allocation4 + $0x288] sm:$0xff]
        %v2860 = vld [vmem:[#allocation4 + $0x290] sm:$0xf]
        %v2861 = vld [vmem:[#allocation4 + $0x294] sm:$0xff]
        %v2862 = vld [vmem:[#allocation4 + $0x29c] sm:$0xf]
        %v2863 = vld [vmem:[#allocation4 + $0x2a0] sm:$0xff]
        %v2864 = vld [vmem:[#allocation4 + $0x2a8] sm:$0xf]
        %v2865 = vld [vmem:[#allocation4 + $0x2ac] sm:$0xff]
        %v2866 = vld [vmem:[#allocation4 + $0x2b4] sm:$0xf]
        %v2867 = vld [vmem:[#allocation4 + $0x2b8] sm:$0xff]
        %v2868 = vld [vmem:[#allocation4 + $0x2c0] sm:$0xf]
        %v2869 = vld [vmem:[#allocation4 + $0x2c4] sm:$0xff]
        %v2870 = vld [vmem:[#allocation4 + $0x2cc] sm:$0xf]
        %v2871 = vld [vmem:[#allocation4 + $0x2d0] sm:$0xff]
        %v2872 = vld [vmem:[#allocation4 + $0x2d8] sm:$0xf]
        %v2873 = vld [vmem:[#allocation4 + $0x2dc] sm:$0xff]
        %v2874 = vld [vmem:[#allocation4 + $0x2e4] sm:$0xf]
        %v2875 = vld [vmem:[#allocation4 + $0x2e8] sm:$0xff]
        %v2876 = vld [vmem:[#allocation4 + $0x2f0] sm:$0xf]
        %v2877 = vld [vmem:[#allocation4 + $0x2f4] sm:$0xff]
        %v2878 = vld [vmem:[#allocation4 + $0x2fc] sm:$0xf]
        %v2879 = vld [vmem:[#allocation4 + $0x300] sm:$0xff]
        %v2880 = vld [vmem:[#allocation4 + $0x308] sm:$0xf]
        %v2881 = vld [vmem:[#allocation4 + $0x30c] sm:$0xff]
        %v2882 = vld [vmem:[#allocation4 + $0x314] sm:$0xf]
        %v2883 = vld [vmem:[#allocation4 + $0x318] sm:$0xff]
        %v2884 = vld [vmem:[#allocation4 + $0x320] sm:$0xf]
        %v2885 = vld [vmem:[#allocation4 + $0x324] sm:$0xff]
        %v2886 = vld [vmem:[#allocation4 + $0x32c] sm:$0xf]
        %v2887 = vld [vmem:[#allocation4 + $0x330] sm:$0xff]
        %v2888 = vld [vmem:[#allocation4 + $0x338] sm:$0xf]
        %v2889 = vld [vmem:[#allocation4 + $0x33c] sm:$0xff]
        %v2890 = vld [vmem:[#allocation4 + $0x344] sm:$0xf]
        %v2891 = vld [vmem:[#allocation4 + $0x348] sm:$0xff]
        %v2892 = vld [vmem:[#allocation4 + $0x350] sm:$0xf]
        %v2893 = vld [vmem:[#allocation4 + $0x354] sm:$0xff]
        %v2894 = vld [vmem:[#allocation4 + $0x35c] sm:$0xf]
        %v2895 = vld [vmem:[#allocation4 + $0x360] sm:$0xff]
        %v2896 = vld [vmem:[#allocation4 + $0x368] sm:$0xf]
        %v2897 = vld [vmem:[#allocation4 + $0x36c] sm:$0xff]
        %v2898 = vld [vmem:[#allocation4 + $0x374] sm:$0xf]
        %v2899 = vld [vmem:[#allocation4 + $0x378] sm:$0xff]
        %v2900 = vld [vmem:[#allocation4 + $0x380] sm:$0xf]
        %v2901 = vld [vmem:[#allocation4 + $0x384] sm:$0xff]
        %v2902 = vld [vmem:[#allocation4 + $0x38c] sm:$0xf]
        %v2903 = vld [vmem:[#allocation4 + $0x390] sm:$0xff]
        %v2904 = vld [vmem:[#allocation4 + $0x398] sm:$0xf]
        %v2905 = vld [vmem:[#allocation4 + $0x39c] sm:$0xff]
        %v2906 = vld [vmem:[#allocation4 + $0x3a4] sm:$0xf]
        %v2907 = vld [vmem:[#allocation4 + $0x3a8] sm:$0xff]
        %v2908 = vld [vmem:[#allocation4 + $0x3b0] sm:$0xf]
        %v2909 = vld [vmem:[#allocation4 + $0x3b4] sm:$0xff]
        %v2910 = vld [vmem:[#allocation4 + $0x3bc] sm:$0xf]
        %v2911 = vld [vmem:[#allocation4 + $0x3c0] sm:$0xff]
        %v2912 = vld [vmem:[#allocation4 + $0x3c8] sm:$0xf]
        %v2913 = vld [vmem:[#allocation4 + $0x3cc] sm:$0xff]
        %v2914 = vld [vmem:[#allocation4 + $0x3d4] sm:$0xf]
        %v2915 = vld [vmem:[#allocation4 + $0x3d8] sm:$0xff]
        %v2916 = vld [vmem:[#allocation4 + $0x3e0] sm:$0xf]
        %v2917 = vld [vmem:[#allocation4 + $0x3e4] sm:$0xff]
        %v2918 = vld [vmem:[#allocation4 + $0x3ec] sm:$0xf]
        %v2919 = vld [vmem:[#allocation4 + $0x3f0] sm:$0xff]
        %v2920 = vld [vmem:[#allocation4 + $0x3f8] sm:$0xf]
        %v2921 = vld [vmem:[#allocation4 + $0x3fc] sm:$0xff]
        %v2922 = vld [vmem:[#allocation4 + $0x404] sm:$0xf]
        %v2923 = vld [vmem:[#allocation4 + $0x408] sm:$0xff]
        %v2924 = vld [vmem:[#allocation4 + $0x410] sm:$0xf]
        %v2925 = vld [vmem:[#allocation4 + $0x414] sm:$0xff]
        %v2926 = vld [vmem:[#allocation4 + $0x41c] sm:$0xf]
        %v2927 = vld [vmem:[#allocation4 + $0x420] sm:$0xff]
        %v2928 = vld [vmem:[#allocation4 + $0x428] sm:$0xf]
        %v2929 = vld [vmem:[#allocation4 + $0x42c] sm:$0xff]
        %v2930 = vld [vmem:[#allocation4 + $0x434] sm:$0xf]
        %v2931 = vld [vmem:[#allocation4 + $0x438] sm:$0xff]
        %v2932 = vld [vmem:[#allocation4 + $0x440] sm:$0xf]
        %v2933 = vld [vmem:[#allocation4 + $0x444] sm:$0xff]
        %v2934 = vld [vmem:[#allocation4 + $0x44c] sm:$0xf]
        %v2935 = vld [vmem:[#allocation4 + $0x450] sm:$0xff]
        %v2936 = vld [vmem:[#allocation4 + $0x458] sm:$0xf]
        %v2937 = vld [vmem:[#allocation4 + $0x45c] sm:$0xff]
        %v2938 = vld [vmem:[#allocation4 + $0x464] sm:$0xf]
        %v2939 = vld [vmem:[#allocation4 + $0x468] sm:$0xff]
        %v2940 = vld [vmem:[#allocation4 + $0x470] sm:$0xf]
        %v2941 = vld [vmem:[#allocation4 + $0x474] sm:$0xff]
        %v2942 = vld [vmem:[#allocation4 + $0x47c] sm:$0xf]
        %v2943 = vld [vmem:[#allocation4 + $0x480] sm:$0xff]
        %v2944 = vld [vmem:[#allocation4 + $0x488] sm:$0xf]
        %v2945 = vld [vmem:[#allocation4 + $0x48c] sm:$0xff]
        %v2946 = vld [vmem:[#allocation4 + $0x494] sm:$0xf]
        %v2947 = vld [vmem:[#allocation4 + $0x498] sm:$0xff]
        %v2948 = vld [vmem:[#allocation4 + $0x4a0] sm:$0xf]
        %v2949 = vld [vmem:[#allocation4 + $0x4a4] sm:$0xff]
        %v2950 = vld [vmem:[#allocation4 + $0x4ac] sm:$0xf]
        %v2951 = vld [vmem:[#allocation4 + $0x4b0] sm:$0xff]
        %v2952 = vld [vmem:[#allocation4 + $0x4b8] sm:$0xf]
        %v2953 = vld [vmem:[#allocation4 + $0x4bc] sm:$0xff]
        %v2954 = vld [vmem:[#allocation4 + $0x4c4] sm:$0xf]
        %v2955 = vld [vmem:[#allocation4 + $0x4c8] sm:$0xff]
        %v2956 = vld [vmem:[#allocation4 + $0x4d0] sm:$0xf]
        %v2957 = vld [vmem:[#allocation4 + $0x4d4] sm:$0xff]
        %v2958 = vld [vmem:[#allocation4 + $0x4dc] sm:$0xf]
        %v2959 = vld [vmem:[#allocation4 + $0x4e0] sm:$0xff]
        %v2960 = vld [vmem:[#allocation4 + $0x4e8] sm:$0xf]
        %v2961 = vld [vmem:[#allocation4 + $0x4ec] sm:$0xff]
        %v2962 = vld [vmem:[#allocation4 + $0x4f4] sm:$0xf]
        %v2963 = vld [vmem:[#allocation4 + $0x4f8] sm:$0xff]
        %v2964 = vld [vmem:[#allocation4 + $0x500] sm:$0xf]
        %v2965 = vld [vmem:[#allocation4 + $0x504] sm:$0xff]
        %v2966 = vld [vmem:[#allocation4 + $0x50c] sm:$0xf]
        %v2967 = vld [vmem:[#allocation4 + $0x510] sm:$0xff]
        %v2968 = vld [vmem:[#allocation4 + $0x518] sm:$0xf]
        %v2969 = vld [vmem:[#allocation4 + $0x51c] sm:$0xff]
        %v2970 = vld [vmem:[#allocation4 + $0x524] sm:$0xf]
        %v2971 = vld [vmem:[#allocation4 + $0x528] sm:$0xff]
        %v2972 = vld [vmem:[#allocation4 + $0x530] sm:$0xf]
        %v2973 = vld [vmem:[#allocation4 + $0x534] sm:$0xff]
        %v2974 = vld [vmem:[#allocation4 + $0x53c] sm:$0xf]
        %v2975 = vld [vmem:[#allocation4 + $0x540] sm:$0xff]
        %v2976 = vld [vmem:[#allocation4 + $0x548] sm:$0xf]
        %v2977 = vld [vmem:[#allocation4 + $0x54c] sm:$0xff]
        %v2978 = vld [vmem:[#allocation4 + $0x554] sm:$0xf]
        %v2979 = vld [vmem:[#allocation4 + $0x558] sm:$0xff]
        %v2980 = vld [vmem:[#allocation4 + $0x560] sm:$0xf]
        %v2981 = vld [vmem:[#allocation4 + $0x564] sm:$0xff]
        %v2982 = vld [vmem:[#allocation4 + $0x56c] sm:$0xf]
        %v2983 = vld [vmem:[#allocation4 + $0x570] sm:$0xff]
        %v2984 = vld [vmem:[#allocation4 + $0x578] sm:$0xf]
        %v2985 = vld [vmem:[#allocation4 + $0x57c] sm:$0xff]
        %v2986 = vld [vmem:[#allocation4 + $0x584] sm:$0xf]
        %v2987 = vld [vmem:[#allocation4 + $0x588] sm:$0xff]
        %v2988 = vld [vmem:[#allocation4 + $0x590] sm:$0xf]
        %v2989 = vld [vmem:[#allocation4 + $0x594] sm:$0xff]
        %v2990 = vld [vmem:[#allocation4 + $0x59c] sm:$0xf]
        %v2991 = vld [vmem:[#allocation4 + $0x5a0] sm:$0xff]
        %v2992 = vld [vmem:[#allocation4 + $0x5a8] sm:$0xf]
        %v2993 = vld [vmem:[#allocation4 + $0x5ac] sm:$0xff]
        %v2994 = vld [vmem:[#allocation4 + $0x5b4] sm:$0xf]
        %v2995 = vld [vmem:[#allocation4 + $0x5b8] sm:$0xff]
        %v2996 = vld [vmem:[#allocation4 + $0x5c0] sm:$0xf]
        %v2997 = vld [vmem:[#allocation4 + $0x5c4] sm:$0xff]
        %v2998 = vld [vmem:[#allocation4 + $0x5cc] sm:$0xf]
        %v2999 = vld [vmem:[#allocation4 + $0x5d0] sm:$0xff]
        %v3000 = vld [vmem:[#allocation4 + $0x5d8] sm:$0xf]
        %v3001 = vld [vmem:[#allocation4 + $0x5dc] sm:$0xff]
        %v3002 = vld [vmem:[#allocation4 + $0x5e4] sm:$0xf]
        %v3003 = vld [vmem:[#allocation4 + $0x5e8] sm:$0xff]
        %v3004 = vld [vmem:[#allocation4 + $0x5f0] sm:$0xf]
        %v3005 = vld [vmem:[#allocation4 + $0x5f4] sm:$0xff]
        %v3006 = vld [vmem:[#allocation4 + $0x5fc] sm:$0xf]
        %v3007 = vld [vmem:[#allocation4 + $0x600] sm:$0xff]
        %v3008 = vld [vmem:[#allocation4 + $0x608] sm:$0xf]
        %v3009 = vld [vmem:[#allocation4 + $0x60c] sm:$0xff]
        %v3010 = vld [vmem:[#allocation4 + $0x614] sm:$0xf]
        %v3011 = vld [vmem:[#allocation4 + $0x618] sm:$0xff]
        %v3012 = vld [vmem:[#allocation4 + $0x620] sm:$0xf]
        %v3013 = vld [vmem:[#allocation4 + $0x624] sm:$0xff]
        %v3014 = vld [vmem:[#allocation4 + $0x62c] sm:$0xf]
        %v3015 = vld [vmem:[#allocation4 + $0x630] sm:$0xff]
        %v3016 = vld [vmem:[#allocation4 + $0x638] sm:$0xf]
        %v3017 = vld [vmem:[#allocation4 + $0x63c] sm:$0xff]
        %v3018 = vld [vmem:[#allocation4 + $0x644] sm:$0xf]
        %v3019 = vld [vmem:[#allocation4 + $0x648] sm:$0xff]
        %v3020 = vld [vmem:[#allocation4 + $0x650] sm:$0xf]
        %v3021 = vld [vmem:[#allocation4 + $0x654] sm:$0xff]
        %v3022 = vld [vmem:[#allocation4 + $0x65c] sm:$0xf]
        %v3023 = vld [vmem:[#allocation4 + $0x660] sm:$0xff]
        %v3024 = vld [vmem:[#allocation4 + $0x668] sm:$0xf]
        %v3025 = vld [vmem:[#allocation4 + $0x66c] sm:$0xff]
        %v3026 = vld [vmem:[#allocation4 + $0x674] sm:$0xf]
        %v3027 = vld [vmem:[#allocation4 + $0x678] sm:$0xff]
        %v3028 = vld [vmem:[#allocation4 + $0x680] sm:$0xf]
        %v3029 = vld [vmem:[#allocation4 + $0x684] sm:$0xff]
        %v3030 = vld [vmem:[#allocation4 + $0x68c] sm:$0xf]
        %v3031 = vld [vmem:[#allocation4 + $0x690] sm:$0xff]
        %v3032 = vld [vmem:[#allocation4 + $0x698] sm:$0xf]
        %v3033 = vld [vmem:[#allocation4 + $0x69c] sm:$0xff]
        %v3034 = vld [vmem:[#allocation4 + $0x6a4] sm:$0xf]
        %v3035 = vld [vmem:[#allocation4 + $0x6a8] sm:$0xff]
        %v3036 = vld [vmem:[#allocation4 + $0x6b0] sm:$0xf]
        %v3037 = vld [vmem:[#allocation4 + $0x6b4] sm:$0xff]
        %v3038 = vld [vmem:[#allocation4 + $0x6bc] sm:$0xf]
        %v3039 = vld [vmem:[#allocation4 + $0x6c0] sm:$0xff]
        %v3040 = vld [vmem:[#allocation4 + $0x6c8] sm:$0xf]
        %v3041 = vld [vmem:[#allocation4 + $0x6cc] sm:$0xff]
        %v3042 = vld [vmem:[#allocation4 + $0x6d4] sm:$0xf]
        %v3043 = vld [vmem:[#allocation4 + $0x6d8] sm:$0xff]
        %v3044 = vld [vmem:[#allocation4 + $0x6e0] sm:$0xf]
        %v3045 = vld [vmem:[#allocation4 + $0x6e4] sm:$0xff]
        %v3046 = vld [vmem:[#allocation4 + $0x6ec] sm:$0xf]
        %v3047 = vld [vmem:[#allocation4 + $0x6f0] sm:$0xff]
        %v3048 = vld [vmem:[#allocation4 + $0x6f8] sm:$0xf]
        %v3049 = vld [vmem:[#allocation4 + $0x6fc] sm:$0xff]
        %v3050 = vld [vmem:[#allocation4 + $0x704] sm:$0xf]
        %v3051 = vld [vmem:[#allocation4 + $0x708] sm:$0xff]
        %v3052 = vld [vmem:[#allocation4 + $0x710] sm:$0xf]
        %v3053 = vld [vmem:[#allocation4 + $0x714] sm:$0xff]
        %v3054 = vld [vmem:[#allocation4 + $0x71c] sm:$0xf]
        %v3055 = vld [vmem:[#allocation4 + $0x720] sm:$0xff]
        %v3056 = vld [vmem:[#allocation4 + $0x728] sm:$0xf]
        %v3057 = vld [vmem:[#allocation4 + $0x72c] sm:$0xff]
        %v3058 = vld [vmem:[#allocation4 + $0x734] sm:$0xf]
        %v3059 = vld [vmem:[#allocation4 + $0x738] sm:$0xff]
        %v3060 = vld [vmem:[#allocation4 + $0x740] sm:$0xf]
        %v3061 = vld [vmem:[#allocation4 + $0x744] sm:$0xff]
        %v3062 = vld [vmem:[#allocation4 + $0x74c] sm:$0xf]
        %v3063 = vld [vmem:[#allocation4 + $0x750] sm:$0xff]
        %v3064 = vld [vmem:[#allocation4 + $0x758] sm:$0xf]
        %v3065 = vld [vmem:[#allocation4 + $0x75c] sm:$0xff]
        %v3066 = vld [vmem:[#allocation4 + $0x764] sm:$0xf]
        %v3067 = vld [vmem:[#allocation4 + $0x768] sm:$0xff]
        %v3068 = vld [vmem:[#allocation4 + $0x770] sm:$0xf]
        %v3069 = vld [vmem:[#allocation4 + $0x774] sm:$0xff]
        %v3070 = vld [vmem:[#allocation4 + $0x77c] sm:$0xf]
        %v3071 = vld [vmem:[#allocation4 + $0x780] sm:$0xff]
        %v3072 = vld [vmem:[#allocation4 + $0x788] sm:$0xf]
        %v3073 = vld [vmem:[#allocation4 + $0x78c] sm:$0xff]
        %v3074 = vld [vmem:[#allocation4 + $0x794] sm:$0xf]
        %v3075 = vld [vmem:[#allocation4 + $0x798] sm:$0xff]
        %v3076 = vld [vmem:[#allocation4 + $0x7a0] sm:$0xf]
        %v3077 = vld [vmem:[#allocation4 + $0x7a4] sm:$0xff]
        %v3078 = vld [vmem:[#allocation4 + $0x7ac] sm:$0xf]
        %v3079 = vld [vmem:[#allocation4 + $0x7b0] sm:$0xff]
        %v3080 = vld [vmem:[#allocation4 + $0x7b8] sm:$0xf]
        %v3081 = vld [vmem:[#allocation4 + $0x7bc] sm:$0xff]
        %v3082 = vld [vmem:[#allocation4 + $0x7c4] sm:$0xf]
        %v3083 = vld [vmem:[#allocation4 + $0x7c8] sm:$0xff]
        %v3084 = vld [vmem:[#allocation4 + $0x7d0] sm:$0xf]
        %v3085 = vld [vmem:[#allocation4 + $0x7d4] sm:$0xff]
        %v3086 = vld [vmem:[#allocation4 + $0x7dc] sm:$0xf]
        %v3087 = vld [vmem:[#allocation4 + $0x7e0] sm:$0xff]
        %v3088 = vld [vmem:[#allocation4 + $0x7e8] sm:$0xf]
        %v3089 = vld [vmem:[#allocation4 + $0x7ec] sm:$0xff]
        %v3090 = vld [vmem:[#allocation4 + $0x7f4] sm:$0xf]
        %v3091 = vld [vmem:[#allocation4 + $0x7f8] sm:$0xff]
        %v3092 = vld [vmem:[#allocation4 + $0x800] sm:$0xf]
        %v3093 = vld [vmem:[#allocation4 + $0x804] sm:$0xff]
        %v3094 = vld [vmem:[#allocation4 + $0x80c] sm:$0xf]
        %v3095 = vld [vmem:[#allocation4 + $0x810] sm:$0xff]
        %v3096 = vld [vmem:[#allocation4 + $0x818] sm:$0xf]
        %v3097 = vld [vmem:[#allocation4 + $0x81c] sm:$0xff]
        %v3098 = vld [vmem:[#allocation4 + $0x824] sm:$0xf]
        %v3099 = vld [vmem:[#allocation4 + $0x828] sm:$0xff]
        %v3100 = vld [vmem:[#allocation4 + $0x830] sm:$0xf]
        %v3101 = vld [vmem:[#allocation4 + $0x834] sm:$0xff]
        %v3102 = vld [vmem:[#allocation4 + $0x83c] sm:$0xf]
        %v3103 = vld [vmem:[#allocation4 + $0x840] sm:$0xff]
        %v3104 = vld [vmem:[#allocation4 + $0x848] sm:$0xf]
        %v3105 = vld [vmem:[#allocation4 + $0x84c] sm:$0xff]
        %v3106 = vld [vmem:[#allocation4 + $0x854] sm:$0xf]
        %v3107 = vld [vmem:[#allocation4 + $0x858] sm:$0xff]
        %v3108 = vld [vmem:[#allocation4 + $0x860] sm:$0xf]
        %v3109 = vld [vmem:[#allocation4 + $0x864] sm:$0xff]
        %v3110 = vld [vmem:[#allocation4 + $0x86c] sm:$0xf]
        %v3111 = vld [vmem:[#allocation4 + $0x870] sm:$0xff]
        %v3112 = vld [vmem:[#allocation4 + $0x878] sm:$0xf]
        %v3113 = vld [vmem:[#allocation4 + $0x87c] sm:$0xff]
        %v3114 = vld [vmem:[#allocation4 + $0x884] sm:$0xf]
        %v3115 = vld [vmem:[#allocation4 + $0x888] sm:$0xff]
        %v3116 = vld [vmem:[#allocation4 + $0x890] sm:$0xf]
        %v3117 = vld [vmem:[#allocation4 + $0x894] sm:$0xff]
        %v3118 = vld [vmem:[#allocation4 + $0x89c] sm:$0xf]
        %v3119 = vld [vmem:[#allocation4 + $0x8a0] sm:$0xff]
        %v3120 = vld [vmem:[#allocation4 + $0x8a8] sm:$0xf]
        %v3121 = vld [vmem:[#allocation4 + $0x8ac] sm:$0xff]
        %v3122 = vld [vmem:[#allocation4 + $0x8b4] sm:$0xf]
        %v3123 = vld [vmem:[#allocation4 + $0x8b8] sm:$0xff]
        %v3124 = vld [vmem:[#allocation4 + $0x8c0] sm:$0xf]
        %v3125 = vld [vmem:[#allocation4 + $0x8c4] sm:$0xff]
        %v3126 = vld [vmem:[#allocation4 + $0x8cc] sm:$0xf]
        %v3127 = vld [vmem:[#allocation4 + $0x8d0] sm:$0xff]
        %v3128 = vld [vmem:[#allocation4 + $0x8d8] sm:$0xf]
        %v3129 = vld [vmem:[#allocation4 + $0x8dc] sm:$0xff]
        %v3130 = vld [vmem:[#allocation4 + $0x8e4] sm:$0xf]
        %v3131 = vld [vmem:[#allocation4 + $0x8e8] sm:$0xff]
        %v3132 = vld [vmem:[#allocation4 + $0x8f0] sm:$0xf]
        %v3133 = vld [vmem:[#allocation4 + $0x8f4] sm:$0xff]
        %v3134 = vld [vmem:[#allocation4 + $0x8fc] sm:$0xf]
        %v3135 = vld [vmem:[%s6] sm:$0x7]
        %v3137 = vperm.slane %v3135, 0
        %v3138 = vperm.slane %v3135, 1
        %v3139 = vperm.slane %v3135, 2
        %v3527 = vunpack.c.l.b16 %v2751
        %v3528 = vunpack.c.h.b16 %v2751
        %v3529 = vunpack.c.l.b16 %v2752
        %v3530 = vunpack.c.l.b16 %v2753
        %v3531 = vunpack.c.h.b16 %v2753
        %v3532 = vunpack.c.l.b16 %v2754
        %v3533 = vunpack.c.l.b16 %v2755
        %v3534 = vunpack.c.h.b16 %v2755
        %v3535 = vunpack.c.l.b16 %v2756
        %v3536 = vunpack.c.l.b16 %v2757
        %v3537 = vunpack.c.h.b16 %v2757
        %v3538 = vunpack.c.l.b16 %v2758
        %v3539 = vunpack.c.l.b16 %v2759
        %v3540 = vunpack.c.h.b16 %v2759
        %v3541 = vunpack.c.l.b16 %v2760
        %v3542 = vunpack.c.l.b16 %v2761
        %v3543 = vunpack.c.h.b16 %v2761
        %v3544 = vunpack.c.l.b16 %v2762
        %v3545 = vunpack.c.l.b16 %v2763
        %v3546 = vunpack.c.h.b16 %v2763
        %v3547 = vunpack.c.l.b16 %v2764
        %v3548 = vunpack.c.l.b16 %v2765
        %v3549 = vunpack.c.h.b16 %v2765
        %v3550 = vunpack.c.l.b16 %v2766
        %v3551 = vunpack.c.l.b16 %v2767
        %v3552 = vunpack.c.h.b16 %v2767
        %v3553 = vunpack.c.l.b16 %v2768
        %v3554 = vunpack.c.l.b16 %v2769
        %v3555 = vunpack.c.h.b16 %v2769
        %v3556 = vunpack.c.l.b16 %v2770
        %v3557 = vunpack.c.l.b16 %v2771
        %v3558 = vunpack.c.h.b16 %v2771
        %v3559 = vunpack.c.l.b16 %v2772
        %v3560 = vunpack.c.l.b16 %v2773
        %v3561 = vunpack.c.h.b16 %v2773
        %v3562 = vunpack.c.l.b16 %v2774
        %v3563 = vunpack.c.l.b16 %v2775
        %v3564 = vunpack.c.h.b16 %v2775
        %v3565 = vunpack.c.l.b16 %v2776
        %v3566 = vunpack.c.l.b16 %v2777
        %v3567 = vunpack.c.h.b16 %v2777
        %v3568 = vunpack.c.l.b16 %v2778
        %v3569 = vunpack.c.l.b16 %v2779
        %v3570 = vunpack.c.h.b16 %v2779
        %v3571 = vunpack.c.l.b16 %v2780
        %v3572 = vunpack.c.l.b16 %v2781
        %v3573 = vunpack.c.h.b16 %v2781
        %v3574 = vunpack.c.l.b16 %v2782
        %v3575 = vunpack.c.l.b16 %v2783
        %v3576 = vunpack.c.h.b16 %v2783
        %v3577 = vunpack.c.l.b16 %v2784
        %v3578 = vunpack.c.l.b16 %v2785
        %v3579 = vunpack.c.h.b16 %v2785
        %v3580 = vunpack.c.l.b16 %v2786
        %v3581 = vunpack.c.l.b16 %v2787
        %v3582 = vunpack.c.h.b16 %v2787
        %v3583 = vunpack.c.l.b16 %v2788
        %v3584 = vunpack.c.l.b16 %v2789
        %v3585 = vunpack.c.h.b16 %v2789
        %v3586 = vunpack.c.l.b16 %v2790
        %v3587 = vunpack.c.l.b16 %v2791
        %v3588 = vunpack.c.h.b16 %v2791
        %v3589 = vunpack.c.l.b16 %v2792
        %v3590 = vunpack.c.l.b16 %v2793
        %v3591 = vunpack.c.h.b16 %v2793
        %v3592 = vunpack.c.l.b16 %v2794
        %v3593 = vunpack.c.l.b16 %v2795
        %v3594 = vunpack.c.h.b16 %v2795
        %v3595 = vunpack.c.l.b16 %v2796
        %v3596 = vunpack.c.l.b16 %v2797
        %v3597 = vunpack.c.h.b16 %v2797
        %v3598 = vunpack.c.l.b16 %v2798
        %v3599 = vunpack.c.l.b16 %v2799
        %v3600 = vunpack.c.h.b16 %v2799
        %v3601 = vunpack.c.l.b16 %v2800
        %v3602 = vunpack.c.l.b16 %v2801
        %v3603 = vunpack.c.h.b16 %v2801
        %v3604 = vunpack.c.l.b16 %v2802
        %v3605 = vunpack.c.l.b16 %v2803
        %v3606 = vunpack.c.h.b16 %v2803
        %v3607 = vunpack.c.l.b16 %v2804
        %v3608 = vunpack.c.l.b16 %v2805
        %v3609 = vunpack.c.h.b16 %v2805
        %v3610 = vunpack.c.l.b16 %v2806
        %v3611 = vunpack.c.l.b16 %v2807
        %v3612 = vunpack.c.h.b16 %v2807
        %v3613 = vunpack.c.l.b16 %v2808
        %v3614 = vunpack.c.l.b16 %v2809
        %v3615 = vunpack.c.h.b16 %v2809
        %v3616 = vunpack.c.l.b16 %v2810
        %v3617 = vunpack.c.l.b16 %v2811
        %v3618 = vunpack.c.h.b16 %v2811
        %v3619 = vunpack.c.l.b16 %v2812
        %v3620 = vunpack.c.l.b16 %v2813
        %v3621 = vunpack.c.h.b16 %v2813
        %v3622 = vunpack.c.l.b16 %v2814
        %v3623 = vunpack.c.l.b16 %v2815
        %v3624 = vunpack.c.h.b16 %v2815
        %v3625 = vunpack.c.l.b16 %v2816
        %v3626 = vunpack.c.l.b16 %v2817
        %v3627 = vunpack.c.h.b16 %v2817
        %v3628 = vunpack.c.l.b16 %v2818
        %v3629 = vunpack.c.l.b16 %v2819
        %v3630 = vunpack.c.h.b16 %v2819
        %v3631 = vunpack.c.l.b16 %v2820
        %v3632 = vunpack.c.l.b16 %v2821
        %v3633 = vunpack.c.h.b16 %v2821
        %v3634 = vunpack.c.l.b16 %v2822
        %v3635 = vunpack.c.l.b16 %v2823
        %v3636 = vunpack.c.h.b16 %v2823
        %v3637 = vunpack.c.l.b16 %v2824
        %v3638 = vunpack.c.l.b16 %v2825
        %v3639 = vunpack.c.h.b16 %v2825
        %v3640 = vunpack.c.l.b16 %v2826
        %v3641 = vunpack.c.l.b16 %v2827
        %v3642 = vunpack.c.h.b16 %v2827
        %v3643 = vunpack.c.l.b16 %v2828
        %v3644 = vunpack.c.l.b16 %v2829
        %v3645 = vunpack.c.h.b16 %v2829
        %v3646 = vunpack.c.l.b16 %v2830
        %v3647 = vunpack.c.l.b16 %v2831
        %v3648 = vunpack.c.h.b16 %v2831
        %v3649 = vunpack.c.l.b16 %v2832
        %v3650 = vunpack.c.l.b16 %v2833
        %v3651 = vunpack.c.h.b16 %v2833
        %v3652 = vunpack.c.l.b16 %v2834
        %v3653 = vunpack.c.l.b16 %v2835
        %v3654 = vunpack.c.h.b16 %v2835
        %v3655 = vunpack.c.l.b16 %v2836
        %v3656 = vunpack.c.l.b16 %v2837
        %v3657 = vunpack.c.h.b16 %v2837
        %v3658 = vunpack.c.l.b16 %v2838
        %v3659 = vunpack.c.l.b16 %v2839
        %v3660 = vunpack.c.h.b16 %v2839
        %v3661 = vunpack.c.l.b16 %v2840
        %v3662 = vunpack.c.l.b16 %v2841
        %v3663 = vunpack.c.h.b16 %v2841
        %v3664 = vunpack.c.l.b16 %v2842
        %v3665 = vunpack.c.l.b16 %v2843
        %v3666 = vunpack.c.h.b16 %v2843
        %v3667 = vunpack.c.l.b16 %v2844
        %v3668 = vunpack.c.l.b16 %v2845
        %v3669 = vunpack.c.h.b16 %v2845
        %v3670 = vunpack.c.l.b16 %v2846
        %v3671 = vunpack.c.l.b16 %v2847
        %v3672 = vunpack.c.h.b16 %v2847
        %v3673 = vunpack.c.l.b16 %v2848
        %v3674 = vunpack.c.l.b16 %v2849
        %v3675 = vunpack.c.h.b16 %v2849
        %v3676 = vunpack.c.l.b16 %v2850
        %v3677 = vunpack.c.l.b16 %v2851
        %v3678 = vunpack.c.h.b16 %v2851
        %v3679 = vunpack.c.l.b16 %v2852
        %v3680 = vunpack.c.l.b16 %v2853
        %v3681 = vunpack.c.h.b16 %v2853
        %v3682 = vunpack.c.l.b16 %v2854
        %v3683 = vunpack.c.l.b16 %v2855
        %v3684 = vunpack.c.h.b16 %v2855
        %v3685 = vunpack.c.l.b16 %v2856
        %v3686 = vunpack.c.l.b16 %v2857
        %v3687 = vunpack.c.h.b16 %v2857
        %v3688 = vunpack.c.l.b16 %v2858
        %v3689 = vunpack.c.l.b16 %v2859
        %v3690 = vunpack.c.h.b16 %v2859
        %v3691 = vunpack.c.l.b16 %v2860
        %v3692 = vunpack.c.l.b16 %v2861
        %v3693 = vunpack.c.h.b16 %v2861
        %v3694 = vunpack.c.l.b16 %v2862
        %v3695 = vunpack.c.l.b16 %v2863
        %v3696 = vunpack.c.h.b16 %v2863
        %v3697 = vunpack.c.l.b16 %v2864
        %v3698 = vunpack.c.l.b16 %v2865
        %v3699 = vunpack.c.h.b16 %v2865
        %v3700 = vunpack.c.l.b16 %v2866
        %v3701 = vunpack.c.l.b16 %v2867
        %v3702 = vunpack.c.h.b16 %v2867
        %v3703 = vunpack.c.l.b16 %v2868
        %v3704 = vunpack.c.l.b16 %v2869
        %v3705 = vunpack.c.h.b16 %v2869
        %v3706 = vunpack.c.l.b16 %v2870
        %v3707 = vunpack.c.l.b16 %v2871
        %v3708 = vunpack.c.h.b16 %v2871
        %v3709 = vunpack.c.l.b16 %v2872
        %v3710 = vunpack.c.l.b16 %v2873
        %v3711 = vunpack.c.h.b16 %v2873
        %v3712 = vunpack.c.l.b16 %v2874
        %v3713 = vunpack.c.l.b16 %v2875
        %v3714 = vunpack.c.h.b16 %v2875
        %v3715 = vunpack.c.l.b16 %v2876
        %v3716 = vunpack.c.l.b16 %v2877
        %v3717 = vunpack.c.h.b16 %v2877
        %v3718 = vunpack.c.l.b16 %v2878
        %v3719 = vunpack.c.l.b16 %v2879
        %v3720 = vunpack.c.h.b16 %v2879
        %v3721 = vunpack.c.l.b16 %v2880
        %v3722 = vunpack.c.l.b16 %v2881
        %v3723 = vunpack.c.h.b16 %v2881
        %v3724 = vunpack.c.l.b16 %v2882
        %v3725 = vunpack.c.l.b16 %v2883
        %v3726 = vunpack.c.h.b16 %v2883
        %v3727 = vunpack.c.l.b16 %v2884
        %v3728 = vunpack.c.l.b16 %v2885
        %v3729 = vunpack.c.h.b16 %v2885
        %v3730 = vunpack.c.l.b16 %v2886
        %v3731 = vunpack.c.l.b16 %v2887
        %v3732 = vunpack.c.h.b16 %v2887
        %v3733 = vunpack.c.l.b16 %v2888
        %v3734 = vunpack.c.l.b16 %v2889
        %v3735 = vunpack.c.h.b16 %v2889
        %v3736 = vunpack.c.l.b16 %v2890
        %v3737 = vunpack.c.l.b16 %v2891
        %v3738 = vunpack.c.h.b16 %v2891
        %v3739 = vunpack.c.l.b16 %v2892
        %v3740 = vunpack.c.l.b16 %v2893
        %v3741 = vunpack.c.h.b16 %v2893
        %v3742 = vunpack.c.l.b16 %v2894
        %v3743 = vunpack.c.l.b16 %v2895
        %v3744 = vunpack.c.h.b16 %v2895
        %v3745 = vunpack.c.l.b16 %v2896
        %v3746 = vunpack.c.l.b16 %v2897
        %v3747 = vunpack.c.h.b16 %v2897
        %v3748 = vunpack.c.l.b16 %v2898
        %v3749 = vunpack.c.l.b16 %v2899
        %v3750 = vunpack.c.h.b16 %v2899
        %v3751 = vunpack.c.l.b16 %v2900
        %v3752 = vunpack.c.l.b16 %v2901
        %v3753 = vunpack.c.h.b16 %v2901
        %v3754 = vunpack.c.l.b16 %v2902
        %v3755 = vunpack.c.l.b16 %v2903
        %v3756 = vunpack.c.h.b16 %v2903
        %v3757 = vunpack.c.l.b16 %v2904
        %v3758 = vunpack.c.l.b16 %v2905
        %v3759 = vunpack.c.h.b16 %v2905
        %v3760 = vunpack.c.l.b16 %v2906
        %v3761 = vunpack.c.l.b16 %v2907
        %v3762 = vunpack.c.h.b16 %v2907
        %v3763 = vunpack.c.l.b16 %v2908
        %v3764 = vunpack.c.l.b16 %v2909
        %v3765 = vunpack.c.h.b16 %v2909
        %v3766 = vunpack.c.l.b16 %v2910
        %v3767 = vunpack.c.l.b16 %v2911
        %v3768 = vunpack.c.h.b16 %v2911
        %v3769 = vunpack.c.l.b16 %v2912
        %v3770 = vunpack.c.l.b16 %v2913
        %v3771 = vunpack.c.h.b16 %v2913
        %v3772 = vunpack.c.l.b16 %v2914
        %v3773 = vunpack.c.l.b16 %v2915
        %v3774 = vunpack.c.h.b16 %v2915
        %v3775 = vunpack.c.l.b16 %v2916
        %v3776 = vunpack.c.l.b16 %v2917
        %v3777 = vunpack.c.h.b16 %v2917
        %v3778 = vunpack.c.l.b16 %v2918
        %v3779 = vunpack.c.l.b16 %v2919
        %v3780 = vunpack.c.h.b16 %v2919
        %v3781 = vunpack.c.l.b16 %v2920
        %v3782 = vunpack.c.l.b16 %v2921
        %v3783 = vunpack.c.h.b16 %v2921
        %v3784 = vunpack.c.l.b16 %v2922
        %v3785 = vunpack.c.l.b16 %v2923
        %v3786 = vunpack.c.h.b16 %v2923
        %v3787 = vunpack.c.l.b16 %v2924
        %v3788 = vunpack.c.l.b16 %v2925
        %v3789 = vunpack.c.h.b16 %v2925
        %v3790 = vunpack.c.l.b16 %v2926
        %v3791 = vunpack.c.l.b16 %v2927
        %v3792 = vunpack.c.h.b16 %v2927
        %v3793 = vunpack.c.l.b16 %v2928
        %v3794 = vunpack.c.l.b16 %v2929
        %v3795 = vunpack.c.h.b16 %v2929
        %v3796 = vunpack.c.l.b16 %v2930
        %v3797 = vunpack.c.l.b16 %v2931
        %v3798 = vunpack.c.h.b16 %v2931
        %v3799 = vunpack.c.l.b16 %v2932
        %v3800 = vunpack.c.l.b16 %v2933
        %v3801 = vunpack.c.h.b16 %v2933
        %v3802 = vunpack.c.l.b16 %v2934
        %v3803 = vunpack.c.l.b16 %v2935
        %v3804 = vunpack.c.h.b16 %v2935
        %v3805 = vunpack.c.l.b16 %v2936
        %v3806 = vunpack.c.l.b16 %v2937
        %v3807 = vunpack.c.h.b16 %v2937
        %v3808 = vunpack.c.l.b16 %v2938
        %v3809 = vunpack.c.l.b16 %v2939
        %v3810 = vunpack.c.h.b16 %v2939
        %v3811 = vunpack.c.l.b16 %v2940
        %v3812 = vunpack.c.l.b16 %v2941
        %v3813 = vunpack.c.h.b16 %v2941
        %v3814 = vunpack.c.l.b16 %v2942
        %v3815 = vunpack.c.l.b16 %v2943
        %v3816 = vunpack.c.h.b16 %v2943
        %v3817 = vunpack.c.l.b16 %v2944
        %v3818 = vunpack.c.l.b16 %v2945
        %v3819 = vunpack.c.h.b16 %v2945
        %v3820 = vunpack.c.l.b16 %v2946
        %v3821 = vunpack.c.l.b16 %v2947
        %v3822 = vunpack.c.h.b16 %v2947
        %v3823 = vunpack.c.l.b16 %v2948
        %v3824 = vunpack.c.l.b16 %v2949
        %v3825 = vunpack.c.h.b16 %v2949
        %v3826 = vunpack.c.l.b16 %v2950
        %v3827 = vunpack.c.l.b16 %v2951
        %v3828 = vunpack.c.h.b16 %v2951
        %v3829 = vunpack.c.l.b16 %v2952
        %v3830 = vunpack.c.l.b16 %v2953
        %v3831 = vunpack.c.h.b16 %v2953
        %v3832 = vunpack.c.l.b16 %v2954
        %v3833 = vunpack.c.l.b16 %v2955
        %v3834 = vunpack.c.h.b16 %v2955
        %v3835 = vunpack.c.l.b16 %v2956
        %v3836 = vunpack.c.l.b16 %v2957
        %v3837 = vunpack.c.h.b16 %v2957
        %v3838 = vunpack.c.l.b16 %v2958
        %v3839 = vunpack.c.l.b16 %v2959
        %v3840 = vunpack.c.h.b16 %v2959
        %v3841 = vunpack.c.l.b16 %v2960
        %v3842 = vunpack.c.l.b16 %v2961
        %v3843 = vunpack.c.h.b16 %v2961
        %v3844 = vunpack.c.l.b16 %v2962
        %v3845 = vunpack.c.l.b16 %v2963
        %v3846 = vunpack.c.h.b16 %v2963
        %v3847 = vunpack.c.l.b16 %v2964
        %v3848 = vunpack.c.l.b16 %v2965
        %v3849 = vunpack.c.h.b16 %v2965
        %v3850 = vunpack.c.l.b16 %v2966
        %v3851 = vunpack.c.l.b16 %v2967
        %v3852 = vunpack.c.h.b16 %v2967
        %v3853 = vunpack.c.l.b16 %v2968
        %v3854 = vunpack.c.l.b16 %v2969
        %v3855 = vunpack.c.h.b16 %v2969
        %v3856 = vunpack.c.l.b16 %v2970
        %v3857 = vunpack.c.l.b16 %v2971
        %v3858 = vunpack.c.h.b16 %v2971
        %v3859 = vunpack.c.l.b16 %v2972
        %v3860 = vunpack.c.l.b16 %v2973
        %v3861 = vunpack.c.h.b16 %v2973
        %v3862 = vunpack.c.l.b16 %v2974
        %v3863 = vunpack.c.l.b16 %v2975
        %v3864 = vunpack.c.h.b16 %v2975
        %v3865 = vunpack.c.l.b16 %v2976
        %v3866 = vunpack.c.l.b16 %v2977
        %v3867 = vunpack.c.h.b16 %v2977
        %v3868 = vunpack.c.l.b16 %v2978
        %v3869 = vunpack.c.l.b16 %v2979
        %v3870 = vunpack.c.h.b16 %v2979
        %v3871 = vunpack.c.l.b16 %v2980
        %v3872 = vunpack.c.l.b16 %v2981
        %v3873 = vunpack.c.h.b16 %v2981
        %v3874 = vunpack.c.l.b16 %v2982
        %v3875 = vunpack.c.l.b16 %v2983
        %v3876 = vunpack.c.h.b16 %v2983
        %v3877 = vunpack.c.l.b16 %v2984
        %v3878 = vunpack.c.l.b16 %v2985
        %v3879 = vunpack.c.h.b16 %v2985
        %v3880 = vunpack.c.l.b16 %v2986
        %v3881 = vunpack.c.l.b16 %v2987
        %v3882 = vunpack.c.h.b16 %v2987
        %v3883 = vunpack.c.l.b16 %v2988
        %v3884 = vunpack.c.l.b16 %v2989
        %v3885 = vunpack.c.h.b16 %v2989
        %v3886 = vunpack.c.l.b16 %v2990
        %v3887 = vunpack.c.l.b16 %v2991
        %v3888 = vunpack.c.h.b16 %v2991
        %v3889 = vunpack.c.l.b16 %v2992
        %v3890 = vunpack.c.l.b16 %v2993
        %v3891 = vunpack.c.h.b16 %v2993
        %v3892 = vunpack.c.l.b16 %v2994
        %v3893 = vunpack.c.l.b16 %v2995
        %v3894 = vunpack.c.h.b16 %v2995
        %v3895 = vunpack.c.l.b16 %v2996
        %v3896 = vunpack.c.l.b16 %v2997
        %v3897 = vunpack.c.h.b16 %v2997
        %v3898 = vunpack.c.l.b16 %v2998
        %v3899 = vunpack.c.l.b16 %v2999
        %v3900 = vunpack.c.h.b16 %v2999
        %v3901 = vunpack.c.l.b16 %v3000
        %v3902 = vunpack.c.l.b16 %v3001
        %v3903 = vunpack.c.h.b16 %v3001
        %v3904 = vunpack.c.l.b16 %v3002
        %v3905 = vunpack.c.l.b16 %v3003
        %v3906 = vunpack.c.h.b16 %v3003
        %v3907 = vunpack.c.l.b16 %v3004
        %v3908 = vunpack.c.l.b16 %v3005
        %v3909 = vunpack.c.h.b16 %v3005
        %v3910 = vunpack.c.l.b16 %v3006
        %v3911 = vunpack.c.l.b16 %v3007
        %v3912 = vunpack.c.h.b16 %v3007
        %v3913 = vunpack.c.l.b16 %v3008
        %v3914 = vunpack.c.l.b16 %v3009
        %v3915 = vunpack.c.h.b16 %v3009
        %v3916 = vunpack.c.l.b16 %v3010
        %v3917 = vunpack.c.l.b16 %v3011
        %v3918 = vunpack.c.h.b16 %v3011
        %v3919 = vunpack.c.l.b16 %v3012
        %v3920 = vunpack.c.l.b16 %v3013
        %v3921 = vunpack.c.h.b16 %v3013
        %v3922 = vunpack.c.l.b16 %v3014
        %v3923 = vunpack.c.l.b16 %v3015
        %v3924 = vunpack.c.h.b16 %v3015
        %v3925 = vunpack.c.l.b16 %v3016
        %v3926 = vunpack.c.l.b16 %v3017
        %v3927 = vunpack.c.h.b16 %v3017
        %v3928 = vunpack.c.l.b16 %v3018
        %v3929 = vunpack.c.l.b16 %v3019
        %v3930 = vunpack.c.h.b16 %v3019
        %v3931 = vunpack.c.l.b16 %v3020
        %v3932 = vunpack.c.l.b16 %v3021
        %v3933 = vunpack.c.h.b16 %v3021
        %v3934 = vunpack.c.l.b16 %v3022
        %v3935 = vunpack.c.l.b16 %v3023
        %v3936 = vunpack.c.h.b16 %v3023
        %v3937 = vunpack.c.l.b16 %v3024
        %v3938 = vunpack.c.l.b16 %v3025
        %v3939 = vunpack.c.h.b16 %v3025
        %v3940 = vunpack.c.l.b16 %v3026
        %v3941 = vunpack.c.l.b16 %v3027
        %v3942 = vunpack.c.h.b16 %v3027
        %v3943 = vunpack.c.l.b16 %v3028
        %v3944 = vunpack.c.l.b16 %v3029
        %v3945 = vunpack.c.h.b16 %v3029
        %v3946 = vunpack.c.l.b16 %v3030
        %v3947 = vunpack.c.l.b16 %v3031
        %v3948 = vunpack.c.h.b16 %v3031
        %v3949 = vunpack.c.l.b16 %v3032
        %v3950 = vunpack.c.l.b16 %v3033
        %v3951 = vunpack.c.h.b16 %v3033
        %v3952 = vunpack.c.l.b16 %v3034
        %v3953 = vunpack.c.l.b16 %v3035
        %v3954 = vunpack.c.h.b16 %v3035
        %v3955 = vunpack.c.l.b16 %v3036
        %v3956 = vunpack.c.l.b16 %v3037
        %v3957 = vunpack.c.h.b16 %v3037
        %v3958 = vunpack.c.l.b16 %v3038
        %v3959 = vunpack.c.l.b16 %v3039
        %v3960 = vunpack.c.h.b16 %v3039
        %v3961 = vunpack.c.l.b16 %v3040
        %v3962 = vunpack.c.l.b16 %v3041
        %v3963 = vunpack.c.h.b16 %v3041
        %v3964 = vunpack.c.l.b16 %v3042
        %v3965 = vunpack.c.l.b16 %v3043
        %v3966 = vunpack.c.h.b16 %v3043
        %v3967 = vunpack.c.l.b16 %v3044
        %v3968 = vunpack.c.l.b16 %v3045
        %v3969 = vunpack.c.h.b16 %v3045
        %v3970 = vunpack.c.l.b16 %v3046
        %v3971 = vunpack.c.l.b16 %v3047
        %v3972 = vunpack.c.h.b16 %v3047
        %v3973 = vunpack.c.l.b16 %v3048
        %v3974 = vunpack.c.l.b16 %v3049
        %v3975 = vunpack.c.h.b16 %v3049
        %v3976 = vunpack.c.l.b16 %v3050
        %v3977 = vunpack.c.l.b16 %v3051
        %v3978 = vunpack.c.h.b16 %v3051
        %v3979 = vunpack.c.l.b16 %v3052
        %v3980 = vunpack.c.l.b16 %v3053
        %v3981 = vunpack.c.h.b16 %v3053
        %v3982 = vunpack.c.l.b16 %v3054
        %v3983 = vunpack.c.l.b16 %v3055
        %v3984 = vunpack.c.h.b16 %v3055
        %v3985 = vunpack.c.l.b16 %v3056
        %v3986 = vunpack.c.l.b16 %v3057
        %v3987 = vunpack.c.h.b16 %v3057
        %v3988 = vunpack.c.l.b16 %v3058
        %v3989 = vunpack.c.l.b16 %v3059
        %v3990 = vunpack.c.h.b16 %v3059
        %v3991 = vunpack.c.l.b16 %v3060
        %v3992 = vunpack.c.l.b16 %v3061
        %v3993 = vunpack.c.h.b16 %v3061
        %v3994 = vunpack.c.l.b16 %v3062
        %v3995 = vunpack.c.l.b16 %v3063
        %v3996 = vunpack.c.h.b16 %v3063
        %v3997 = vunpack.c.l.b16 %v3064
        %v3998 = vunpack.c.l.b16 %v3065
        %v3999 = vunpack.c.h.b16 %v3065
        %v4000 = vunpack.c.l.b16 %v3066
        %v4001 = vunpack.c.l.b16 %v3067
        %v4002 = vunpack.c.h.b16 %v3067
        %v4003 = vunpack.c.l.b16 %v3068
        %v4004 = vunpack.c.l.b16 %v3069
        %v4005 = vunpack.c.h.b16 %v3069
        %v4006 = vunpack.c.l.b16 %v3070
        %v4007 = vunpack.c.l.b16 %v3071
        %v4008 = vunpack.c.h.b16 %v3071
        %v4009 = vunpack.c.l.b16 %v3072
        %v4010 = vunpack.c.l.b16 %v3073
        %v4011 = vunpack.c.h.b16 %v3073
        %v4012 = vunpack.c.l.b16 %v3074
        %v4013 = vunpack.c.l.b16 %v3075
        %v4014 = vunpack.c.h.b16 %v3075
        %v4015 = vunpack.c.l.b16 %v3076
        %v4016 = vunpack.c.l.b16 %v3077
        %v4017 = vunpack.c.h.b16 %v3077
        %v4018 = vunpack.c.l.b16 %v3078
        %v4019 = vunpack.c.l.b16 %v3079
        %v4020 = vunpack.c.h.b16 %v3079
        %v4021 = vunpack.c.l.b16 %v3080
        %v4022 = vunpack.c.l.b16 %v3081
        %v4023 = vunpack.c.h.b16 %v3081
        %v4024 = vunpack.c.l.b16 %v3082
        %v4025 = vunpack.c.l.b16 %v3083
        %v4026 = vunpack.c.h.b16 %v3083
        %v4027 = vunpack.c.l.b16 %v3084
        %v4028 = vunpack.c.l.b16 %v3085
        %v4029 = vunpack.c.h.b16 %v3085
        %v4030 = vunpack.c.l.b16 %v3086
        %v4031 = vunpack.c.l.b16 %v3087
        %v4032 = vunpack.c.h.b16 %v3087
        %v4033 = vunpack.c.l.b16 %v3088
        %v4034 = vunpack.c.l.b16 %v3089
        %v4035 = vunpack.c.h.b16 %v3089
        %v4036 = vunpack.c.l.b16 %v3090
        %v4037 = vunpack.c.l.b16 %v3091
        %v4038 = vunpack.c.h.b16 %v3091
        %v4039 = vunpack.c.l.b16 %v3092
        %v4040 = vunpack.c.l.b16 %v3093
        %v4041 = vunpack.c.h.b16 %v3093
        %v4042 = vunpack.c.l.b16 %v3094
        %v4043 = vunpack.c.l.b16 %v3095
        %v4044 = vunpack.c.h.b16 %v3095
        %v4045 = vunpack.c.l.b16 %v3096
        %v4046 = vunpack.c.l.b16 %v3097
        %v4047 = vunpack.c.h.b16 %v3097
        %v4048 = vunpack.c.l.b16 %v3098
        %v4049 = vunpack.c.l.b16 %v3099
        %v4050 = vunpack.c.h.b16 %v3099
        %v4051 = vunpack.c.l.b16 %v3100
        %v4052 = vunpack.c.l.b16 %v3101
        %v4053 = vunpack.c.h.b16 %v3101
        %v4054 = vunpack.c.l.b16 %v3102
        %v4055 = vunpack.c.l.b16 %v3103
        %v4056 = vunpack.c.h.b16 %v3103
        %v4057 = vunpack.c.l.b16 %v3104
        %v4058 = vunpack.c.l.b16 %v3105
        %v4059 = vunpack.c.h.b16 %v3105
        %v4060 = vunpack.c.l.b16 %v3106
        %v4061 = vunpack.c.l.b16 %v3107
        %v4062 = vunpack.c.h.b16 %v3107
        %v4063 = vunpack.c.l.b16 %v3108
        %v4064 = vunpack.c.l.b16 %v3109
        %v4065 = vunpack.c.h.b16 %v3109
        %v4066 = vunpack.c.l.b16 %v3110
        %v4067 = vunpack.c.l.b16 %v3111
        %v4068 = vunpack.c.h.b16 %v3111
        %v4069 = vunpack.c.l.b16 %v3112
        %v4070 = vunpack.c.l.b16 %v3113
        %v4071 = vunpack.c.h.b16 %v3113
        %v4072 = vunpack.c.l.b16 %v3114
        %v4073 = vunpack.c.l.b16 %v3115
        %v4074 = vunpack.c.h.b16 %v3115
        %v4075 = vunpack.c.l.b16 %v3116
        %v4076 = vunpack.c.l.b16 %v3117
        %v4077 = vunpack.c.h.b16 %v3117
        %v4078 = vunpack.c.l.b16 %v3118
        %v4079 = vunpack.c.l.b16 %v3119
        %v4080 = vunpack.c.h.b16 %v3119
        %v4081 = vunpack.c.l.b16 %v3120
        %v4082 = vunpack.c.l.b16 %v3121
        %v4083 = vunpack.c.h.b16 %v3121
        %v4084 = vunpack.c.l.b16 %v3122
        %v4085 = vunpack.c.l.b16 %v3123
        %v4086 = vunpack.c.h.b16 %v3123
        %v4087 = vunpack.c.l.b16 %v3124
        %v4088 = vunpack.c.l.b16 %v3125
        %v4089 = vunpack.c.h.b16 %v3125
        %v4090 = vunpack.c.l.b16 %v3126
        %v4091 = vunpack.c.l.b16 %v3127
        %v4092 = vunpack.c.h.b16 %v3127
        %v4093 = vunpack.c.l.b16 %v3128
        %v4094 = vunpack.c.l.b16 %v3129
        %v4095 = vunpack.c.h.b16 %v3129
        %v4096 = vunpack.c.l.b16 %v3130
        %v4097 = vunpack.c.l.b16 %v3131
        %v4098 = vunpack.c.h.b16 %v3131
        %v4099 = vunpack.c.l.b16 %v3132
        %v4100 = vunpack.c.l.b16 %v3133
        %v4101 = vunpack.c.h.b16 %v3133
        %v4102 = vunpack.c.l.b16 %v3134
        %v4103 = vpack.c.b16 %v3530, %v3527
        %v4104 = vpack.c.b16 %v3531, %v3528
        %v4105 = vpack.c.b16 %v3532, %v3529
        %v4106 = vpack.c.b16 %v3536, %v3533
        %v4107 = vpack.c.b16 %v3537, %v3534
        %v4108 = vpack.c.b16 %v3538, %v3535
        %v4109 = vpack.c.b16 %v3542, %v3539
        %v4110 = vpack.c.b16 %v3543, %v3540
        %v4111 = vpack.c.b16 %v3544, %v3541
        %v4112 = vpack.c.b16 %v3548, %v3545
        %v4113 = vpack.c.b16 %v3549, %v3546
        %v4114 = vpack.c.b16 %v3550, %v3547
        %v4115 = vpack.c.b16 %v3554, %v3551
        %v4116 = vpack.c.b16 %v3555, %v3552
        %v4117 = vpack.c.b16 %v3556, %v3553
        %v4118 = vpack.c.b16 %v3560, %v3557
        %v4119 = vpack.c.b16 %v3561, %v3558
        %v4120 = vpack.c.b16 %v3562, %v3559
        %v4121 = vpack.c.b16 %v3566, %v3563
        %v4122 = vpack.c.b16 %v3567, %v3564
        %v4123 = vpack.c.b16 %v3568, %v3565
        %v4124 = vpack.c.b16 %v3572, %v3569
        %v4125 = vpack.c.b16 %v3573, %v3570
        %v4126 = vpack.c.b16 %v3574, %v3571
        %v4127 = vpack.c.b16 %v3578, %v3575
        %v4128 = vpack.c.b16 %v3579, %v3576
        %v4129 = vpack.c.b16 %v3580, %v3577
        %v4130 = vpack.c.b16 %v3584, %v3581
        %v4131 = vpack.c.b16 %v3585, %v3582
        %v4132 = vpack.c.b16 %v3586, %v3583
        %v4133 = vpack.c.b16 %v3590, %v3587
        %v4134 = vpack.c.b16 %v3591, %v3588
        %v4135 = vpack.c.b16 %v3592, %v3589
        %v4136 = vpack.c.b16 %v3596, %v3593
        %v4137 = vpack.c.b16 %v3597, %v3594
        %v4138 = vpack.c.b16 %v3598, %v3595
        %v4139 = vpack.c.b16 %v3602, %v3599
        %v4140 = vpack.c.b16 %v3603, %v3600
        %v4141 = vpack.c.b16 %v3604, %v3601
        %v4142 = vpack.c.b16 %v3608, %v3605
        %v4143 = vpack.c.b16 %v3609, %v3606
        %v4144 = vpack.c.b16 %v3610, %v3607
        %v4145 = vpack.c.b16 %v3614, %v3611
        %v4146 = vpack.c.b16 %v3615, %v3612
        %v4147 = vpack.c.b16 %v3616, %v3613
        %v4148 = vpack.c.b16 %v3620, %v3617
        %v4149 = vpack.c.b16 %v3621, %v3618
        %v4150 = vpack.c.b16 %v3622, %v3619
        %v4151 = vpack.c.b16 %v3626, %v3623
        %v4152 = vpack.c.b16 %v3627, %v3624
        %v4153 = vpack.c.b16 %v3628, %v3625
        %v4154 = vpack.c.b16 %v3632, %v3629
        %v4155 = vpack.c.b16 %v3633, %v3630
        %v4156 = vpack.c.b16 %v3634, %v3631
        %v4157 = vpack.c.b16 %v3638, %v3635
        %v4158 = vpack.c.b16 %v3639, %v3636
        %v4159 = vpack.c.b16 %v3640, %v3637
        %v4160 = vpack.c.b16 %v3644, %v3641
        %v4161 = vpack.c.b16 %v3645, %v3642
        %v4162 = vpack.c.b16 %v3646, %v3643
        %v4163 = vpack.c.b16 %v3650, %v3647
        %v4164 = vpack.c.b16 %v3651, %v3648
        %v4165 = vpack.c.b16 %v3652, %v3649
        %v4166 = vpack.c.b16 %v3656, %v3653
        %v4167 = vpack.c.b16 %v3657, %v3654
        %v4168 = vpack.c.b16 %v3658, %v3655
        %v4169 = vpack.c.b16 %v3662, %v3659
        %v4170 = vpack.c.b16 %v3663, %v3660
        %v4171 = vpack.c.b16 %v3664, %v3661
        %v4172 = vpack.c.b16 %v3668, %v3665
        %v4173 = vpack.c.b16 %v3669, %v3666
        %v4174 = vpack.c.b16 %v3670, %v3667
        %v4175 = vpack.c.b16 %v3674, %v3671
        %v4176 = vpack.c.b16 %v3675, %v3672
        %v4177 = vpack.c.b16 %v3676, %v3673
        %v4178 = vpack.c.b16 %v3680, %v3677
        %v4179 = vpack.c.b16 %v3681, %v3678
        %v4180 = vpack.c.b16 %v3682, %v3679
        %v4181 = vpack.c.b16 %v3686, %v3683
        %v4182 = vpack.c.b16 %v3687, %v3684
        %v4183 = vpack.c.b16 %v3688, %v3685
        %v4184 = vpack.c.b16 %v3692, %v3689
        %v4185 = vpack.c.b16 %v3693, %v3690
        %v4186 = vpack.c.b16 %v3694, %v3691
        %v4187 = vpack.c.b16 %v3698, %v3695
        %v4188 = vpack.c.b16 %v3699, %v3696
        %v4189 = vpack.c.b16 %v3700, %v3697
        %v4190 = vpack.c.b16 %v3704, %v3701
        %v4191 = vpack.c.b16 %v3705, %v3702
        %v4192 = vpack.c.b16 %v3706, %v3703
        %v4193 = vpack.c.b16 %v3710, %v3707
        %v4194 = vpack.c.b16 %v3711, %v3708
        %v4195 = vpack.c.b16 %v3712, %v3709
        %v4196 = vpack.c.b16 %v3716, %v3713
        %v4197 = vpack.c.b16 %v3717, %v3714
        %v4198 = vpack.c.b16 %v3718, %v3715
        %v4199 = vpack.c.b16 %v3722, %v3719
        %v4200 = vpack.c.b16 %v3723, %v3720
        %v4201 = vpack.c.b16 %v3724, %v3721
        %v4202 = vpack.c.b16 %v3728, %v3725
        %v4203 = vpack.c.b16 %v3729, %v3726
        %v4204 = vpack.c.b16 %v3730, %v3727
        %v4205 = vpack.c.b16 %v3734, %v3731
        %v4206 = vpack.c.b16 %v3735, %v3732
        %v4207 = vpack.c.b16 %v3736, %v3733
        %v4208 = vpack.c.b16 %v3740, %v3737
        %v4209 = vpack.c.b16 %v3741, %v3738
        %v4210 = vpack.c.b16 %v3742, %v3739
        %v4211 = vpack.c.b16 %v3746, %v3743
        %v4212 = vpack.c.b16 %v3747, %v3744
        %v4213 = vpack.c.b16 %v3748, %v3745
        %v4214 = vpack.c.b16 %v3752, %v3749
        %v4215 = vpack.c.b16 %v3753, %v3750
        %v4216 = vpack.c.b16 %v3754, %v3751
        %v4217 = vpack.c.b16 %v3758, %v3755
        %v4218 = vpack.c.b16 %v3759, %v3756
        %v4219 = vpack.c.b16 %v3760, %v3757
        %v4220 = vpack.c.b16 %v3764, %v3761
        %v4221 = vpack.c.b16 %v3765, %v3762
        %v4222 = vpack.c.b16 %v3766, %v3763
        %v4223 = vpack.c.b16 %v3770, %v3767
        %v4224 = vpack.c.b16 %v3771, %v3768
        %v4225 = vpack.c.b16 %v3772, %v3769
        %v4226 = vpack.c.b16 %v3776, %v3773
        %v4227 = vpack.c.b16 %v3777, %v3774
        %v4228 = vpack.c.b16 %v3778, %v3775
        %v4229 = vpack.c.b16 %v3782, %v3779
        %v4230 = vpack.c.b16 %v3783, %v3780
        %v4231 = vpack.c.b16 %v3784, %v3781
        %v4232 = vpack.c.b16 %v3788, %v3785
        %v4233 = vpack.c.b16 %v3789, %v3786
        %v4234 = vpack.c.b16 %v3790, %v3787
        %v4235 = vpack.c.b16 %v3794, %v3791
        %v4236 = vpack.c.b16 %v3795, %v3792
        %v4237 = vpack.c.b16 %v3796, %v3793
        %v4238 = vpack.c.b16 %v3800, %v3797
        %v4239 = vpack.c.b16 %v3801, %v3798
        %v4240 = vpack.c.b16 %v3802, %v3799
        %v4241 = vpack.c.b16 %v3806, %v3803
        %v4242 = vpack.c.b16 %v3807, %v3804
        %v4243 = vpack.c.b16 %v3808, %v3805
        %v4244 = vpack.c.b16 %v3812, %v3809
        %v4245 = vpack.c.b16 %v3813, %v3810
        %v4246 = vpack.c.b16 %v3814, %v3811
        %v4247 = vpack.c.b16 %v3818, %v3815
        %v4248 = vpack.c.b16 %v3819, %v3816
        %v4249 = vpack.c.b16 %v3820, %v3817
        %v4250 = vpack.c.b16 %v3824, %v3821
        %v4251 = vpack.c.b16 %v3825, %v3822
        %v4252 = vpack.c.b16 %v3826, %v3823
        %v4253 = vpack.c.b16 %v3830, %v3827
        %v4254 = vpack.c.b16 %v3831, %v3828
        %v4255 = vpack.c.b16 %v3832, %v3829
        %v4256 = vpack.c.b16 %v3836, %v3833
        %v4257 = vpack.c.b16 %v3837, %v3834
        %v4258 = vpack.c.b16 %v3838, %v3835
        %v4259 = vpack.c.b16 %v3842, %v3839
        %v4260 = vpack.c.b16 %v3843, %v3840
        %v4261 = vpack.c.b16 %v3844, %v3841
        %v4262 = vpack.c.b16 %v3848, %v3845
        %v4263 = vpack.c.b16 %v3849, %v3846
        %v4264 = vpack.c.b16 %v3850, %v3847
        %v4265 = vpack.c.b16 %v3854, %v3851
        %v4266 = vpack.c.b16 %v3855, %v3852
        %v4267 = vpack.c.b16 %v3856, %v3853
        %v4268 = vpack.c.b16 %v3860, %v3857
        %v4269 = vpack.c.b16 %v3861, %v3858
        %v4270 = vpack.c.b16 %v3862, %v3859
        %v4271 = vpack.c.b16 %v3866, %v3863
        %v4272 = vpack.c.b16 %v3867, %v3864
        %v4273 = vpack.c.b16 %v3868, %v3865
        %v4274 = vpack.c.b16 %v3872, %v3869
        %v4275 = vpack.c.b16 %v3873, %v3870
        %v4276 = vpack.c.b16 %v3874, %v3871
        %v4277 = vpack.c.b16 %v3878, %v3875
        %v4278 = vpack.c.b16 %v3879, %v3876
        %v4279 = vpack.c.b16 %v3880, %v3877
        %v4280 = vpack.c.b16 %v3884, %v3881
        %v4281 = vpack.c.b16 %v3885, %v3882
        %v4282 = vpack.c.b16 %v3886, %v3883
        %v4283 = vpack.c.b16 %v3890, %v3887
        %v4284 = vpack.c.b16 %v3891, %v3888
        %v4285 = vpack.c.b16 %v3892, %v3889
        %v4286 = vpack.c.b16 %v3896, %v3893
        %v4287 = vpack.c.b16 %v3897, %v3894
        %v4288 = vpack.c.b16 %v3898, %v3895
        %v4289 = vpack.c.b16 %v3902, %v3899
        %v4290 = vpack.c.b16 %v3903, %v3900
        %v4291 = vpack.c.b16 %v3904, %v3901
        %v4292 = vpack.c.b16 %v3908, %v3905
        %v4293 = vpack.c.b16 %v3909, %v3906
        %v4294 = vpack.c.b16 %v3910, %v3907
        %v4295 = vpack.c.b16 %v3914, %v3911
        %v4296 = vpack.c.b16 %v3915, %v3912
        %v4297 = vpack.c.b16 %v3916, %v3913
        %v4298 = vpack.c.b16 %v3920, %v3917
        %v4299 = vpack.c.b16 %v3921, %v3918
        %v4300 = vpack.c.b16 %v3922, %v3919
        %v4301 = vpack.c.b16 %v3926, %v3923
        %v4302 = vpack.c.b16 %v3927, %v3924
        %v4303 = vpack.c.b16 %v3928, %v3925
        %v4304 = vpack.c.b16 %v3932, %v3929
        %v4305 = vpack.c.b16 %v3933, %v3930
        %v4306 = vpack.c.b16 %v3934, %v3931
        %v4307 = vpack.c.b16 %v3938, %v3935
        %v4308 = vpack.c.b16 %v3939, %v3936
        %v4309 = vpack.c.b16 %v3940, %v3937
        %v4310 = vpack.c.b16 %v3944, %v3941
        %v4311 = vpack.c.b16 %v3945, %v3942
        %v4312 = vpack.c.b16 %v3946, %v3943
        %v4313 = vpack.c.b16 %v3950, %v3947
        %v4314 = vpack.c.b16 %v3951, %v3948
        %v4315 = vpack.c.b16 %v3952, %v3949
        %v4316 = vpack.c.b16 %v3956, %v3953
        %v4317 = vpack.c.b16 %v3957, %v3954
        %v4318 = vpack.c.b16 %v3958, %v3955
        %v4319 = vpack.c.b16 %v3962, %v3959
        %v4320 = vpack.c.b16 %v3963, %v3960
        %v4321 = vpack.c.b16 %v3964, %v3961
        %v4322 = vpack.c.b16 %v3968, %v3965
        %v4323 = vpack.c.b16 %v3969, %v3966
        %v4324 = vpack.c.b16 %v3970, %v3967
        %v4325 = vpack.c.b16 %v3974, %v3971
        %v4326 = vpack.c.b16 %v3975, %v3972
        %v4327 = vpack.c.b16 %v3976, %v3973
        %v4328 = vpack.c.b16 %v3980, %v3977
        %v4329 = vpack.c.b16 %v3981, %v3978
        %v4330 = vpack.c.b16 %v3982, %v3979
        %v4331 = vpack.c.b16 %v3986, %v3983
        %v4332 = vpack.c.b16 %v3987, %v3984
        %v4333 = vpack.c.b16 %v3988, %v3985
        %v4334 = vpack.c.b16 %v3992, %v3989
        %v4335 = vpack.c.b16 %v3993, %v3990
        %v4336 = vpack.c.b16 %v3994, %v3991
        %v4337 = vpack.c.b16 %v3998, %v3995
        %v4338 = vpack.c.b16 %v3999, %v3996
        %v4339 = vpack.c.b16 %v4000, %v3997
        %v4340 = vpack.c.b16 %v4004, %v4001
        %v4341 = vpack.c.b16 %v4005, %v4002
        %v4342 = vpack.c.b16 %v4006, %v4003
        %v4343 = vpack.c.b16 %v4010, %v4007
        %v4344 = vpack.c.b16 %v4011, %v4008
        %v4345 = vpack.c.b16 %v4012, %v4009
        %v4346 = vpack.c.b16 %v4016, %v4013
        %v4347 = vpack.c.b16 %v4017, %v4014
        %v4348 = vpack.c.b16 %v4018, %v4015
        %v4349 = vpack.c.b16 %v4022, %v4019
        %v4350 = vpack.c.b16 %v4023, %v4020
        %v4351 = vpack.c.b16 %v4024, %v4021
        %v4352 = vpack.c.b16 %v4028, %v4025
        %v4353 = vpack.c.b16 %v4029, %v4026
        %v4354 = vpack.c.b16 %v4030, %v4027
        %v4355 = vpack.c.b16 %v4034, %v4031
        %v4356 = vpack.c.b16 %v4035, %v4032
        %v4357 = vpack.c.b16 %v4036, %v4033
        %v4358 = vpack.c.b16 %v4040, %v4037
        %v4359 = vpack.c.b16 %v4041, %v4038
        %v4360 = vpack.c.b16 %v4042, %v4039
        %v4361 = vpack.c.b16 %v4046, %v4043
        %v4362 = vpack.c.b16 %v4047, %v4044
        %v4363 = vpack.c.b16 %v4048, %v4045
        %v4364 = vpack.c.b16 %v4052, %v4049
        %v4365 = vpack.c.b16 %v4053, %v4050
        %v4366 = vpack.c.b16 %v4054, %v4051
        %v4367 = vpack.c.b16 %v4058, %v4055
        %v4368 = vpack.c.b16 %v4059, %v4056
        %v4369 = vpack.c.b16 %v4060, %v4057
        %v4370 = vpack.c.b16 %v4064, %v4061
        %v4371 = vpack.c.b16 %v4065, %v4062
        %v4372 = vpack.c.b16 %v4066, %v4063
        %v4373 = vpack.c.b16 %v4070, %v4067
        %v4374 = vpack.c.b16 %v4071, %v4068
        %v4375 = vpack.c.b16 %v4072, %v4069
        %v4376 = vpack.c.b16 %v4076, %v4073
        %v4377 = vpack.c.b16 %v4077, %v4074
        %v4378 = vpack.c.b16 %v4078, %v4075
        %v4379 = vpack.c.b16 %v4082, %v4079
        %v4380 = vpack.c.b16 %v4083, %v4080
        %v4381 = vpack.c.b16 %v4084, %v4081
        %v4382 = vpack.c.b16 %v4088, %v4085
        %v4383 = vpack.c.b16 %v4089, %v4086
        %v4384 = vpack.c.b16 %v4090, %v4087
        %v4385 = vpack.c.b16 %v4094, %v4091
        %v4386 = vpack.c.b16 %v4095, %v4092
        %v4387 = vpack.c.b16 %v4096, %v4093
        %v4388 = vpack.c.b16 %v4100, %v4097
        %v4389 = vpack.c.b16 %v4101, %v4098
        %v4390 = vpack.c.b16 %v4102, %v4099
        %4679 = vmatpush.bf16.msra.mxu0 %v4124
        %4680 = vmatpush.bf16.msra.mxu0 %v4121
        %4681 = vmatpush.bf16.msra.mxu0 %v4118
        %4682 = vmatpush.bf16.msra.mxu0 %v4115
        %4683 = vmatpush.bf16.msra.mxu0 %v4112
        %4684 = vmatpush.bf16.msra.mxu0 %v4109
        %4685 = vmatpush.bf16.msra.mxu0 %v4106
        %4686 = vmatpush.bf16.msra.mxu0 %v4103
        %4687 = vmatmul.bf16.gmra.mxu0 %v2739
        %v4688 = vpop.f32.mrf.mxu0
        %v4689 = vadd.f32 %v3137, %v4688
        %v4690 = vpop.f32.mrf.mxu0
        %4691 = vdwg.mxu0
        %4692 = vmatpush.bf16.msra.mxu0 %v4148
        %4693 = vmatpush.bf16.msra.mxu0 %v4145
        %4694 = vmatpush.bf16.msra.mxu0 %v4142
        %4695 = vmatpush.bf16.msra.mxu0 %v4139
        %4696 = vmatpush.bf16.msra.mxu0 %v4136
        %4697 = vmatpush.bf16.msra.mxu0 %v4133
        %4698 = vmatpush.bf16.msra.mxu0 %v4130
        %4699 = vmatpush.bf16.msra.mxu0 %v4127
        %4700 = vmatmul.bf16.gmra.mxu0 %v2740
        %v4701 = vpop.f32.mrf.mxu0
        %v4702 = vadd.f32 %v4689, %v4701
        %v4703 = vpop.f32.mrf.mxu0
        %4704 = vdwg.mxu0
        %4705 = vmatpush.bf16.msra.mxu0 %v4172
        %4706 = vmatpush.bf16.msra.mxu0 %v4169
        %4707 = vmatpush.bf16.msra.mxu0 %v4166
        %4708 = vmatpush.bf16.msra.mxu0 %v4163
        %4709 = vmatpush.bf16.msra.mxu0 %v4160
        %4710 = vmatpush.bf16.msra.mxu0 %v4157
        %4711 = vmatpush.bf16.msra.mxu0 %v4154
        %4712 = vmatpush.bf16.msra.mxu0 %v4151
        %4713 = vmatmul.bf16.gmra.mxu0 %v2741
        %v4714 = vpop.f32.mrf.mxu0
        %v4715 = vadd.f32 %v4702, %v4714
        %v4716 = vpop.f32.mrf.mxu0
        %4717 = vdwg.mxu0
        %4718 = vmatpush.bf16.msra.mxu0 %v4196
        %4719 = vmatpush.bf16.msra.mxu0 %v4193
        %4720 = vmatpush.bf16.msra.mxu0 %v4190
        %4721 = vmatpush.bf16.msra.mxu0 %v4187
        %4722 = vmatpush.bf16.msra.mxu0 %v4184
        %4723 = vmatpush.bf16.msra.mxu0 %v4181
        %4724 = vmatpush.bf16.msra.mxu0 %v4178
        %4725 = vmatpush.bf16.msra.mxu0 %v4175
        %4726 = vmatmul.bf16.gmra.mxu0 %v2742
        %v4727 = vpop.f32.mrf.mxu0
        %v4728 = vadd.f32 %v4715, %v4727
        %v4729 = vpop.f32.mrf.mxu0
        %4730 = vdwg.mxu0
        %4731 = vmatpush.bf16.msra.mxu0 %v4220
        %4732 = vmatpush.bf16.msra.mxu0 %v4217
        %4733 = vmatpush.bf16.msra.mxu0 %v4214
        %4734 = vmatpush.bf16.msra.mxu0 %v4211
        %4735 = vmatpush.bf16.msra.mxu0 %v4208
        %4736 = vmatpush.bf16.msra.mxu0 %v4205
        %4737 = vmatpush.bf16.msra.mxu0 %v4202
        %4738 = vmatpush.bf16.msra.mxu0 %v4199
        %4739 = vmatmul.bf16.gmra.mxu0 %v2743
        %v4740 = vpop.f32.mrf.mxu0
        %v4741 = vadd.f32 %v4728, %v4740
        %v4742 = vpop.f32.mrf.mxu0
        %4743 = vdwg.mxu0
        %4744 = vmatpush.bf16.msra.mxu0 %v4244
        %4745 = vmatpush.bf16.msra.mxu0 %v4241
        %4746 = vmatpush.bf16.msra.mxu0 %v4238
        %4747 = vmatpush.bf16.msra.mxu0 %v4235
        %4748 = vmatpush.bf16.msra.mxu0 %v4232
        %4749 = vmatpush.bf16.msra.mxu0 %v4229
        %4750 = vmatpush.bf16.msra.mxu0 %v4226
        %4751 = vmatpush.bf16.msra.mxu0 %v4223
        %4752 = vmatmul.bf16.gmra.mxu0 %v2744
        %v4753 = vpop.f32.mrf.mxu0
        %v4754 = vadd.f32 %v4741, %v4753
        %v4755 = vpop.f32.mrf.mxu0
        %4756 = vdwg.mxu0
        %4757 = vmatpush.bf16.msra.mxu0 %v4268
        %4758 = vmatpush.bf16.msra.mxu0 %v4265
        %4759 = vmatpush.bf16.msra.mxu0 %v4262
        %4760 = vmatpush.bf16.msra.mxu0 %v4259
        %4761 = vmatpush.bf16.msra.mxu0 %v4256
        %4762 = vmatpush.bf16.msra.mxu0 %v4253
        %4763 = vmatpush.bf16.msra.mxu0 %v4250
        %4764 = vmatpush.bf16.msra.mxu0 %v4247
        %4765 = vmatmul.bf16.gmra.mxu0 %v2745
        %v4766 = vpop.f32.mrf.mxu0
        %v4767 = vadd.f32 %v4754, %v4766
        %v4768 = vpop.f32.mrf.mxu0
        %4769 = vdwg.mxu0
        %4770 = vmatpush.bf16.msra.mxu0 %v4292
        %4771 = vmatpush.bf16.msra.mxu0 %v4289
        %4772 = vmatpush.bf16.msra.mxu0 %v4286
        %4773 = vmatpush.bf16.msra.mxu0 %v4283
        %4774 = vmatpush.bf16.msra.mxu0 %v4280
        %4775 = vmatpush.bf16.msra.mxu0 %v4277
        %4776 = vmatpush.bf16.msra.mxu0 %v4274
        %4777 = vmatpush.bf16.msra.mxu0 %v4271
        %4778 = vmatmul.bf16.gmra.mxu0 %v2746
        %v4779 = vpop.f32.mrf.mxu0
        %v4780 = vadd.f32 %v4767, %v4779
        %v4781 = vpop.f32.mrf.mxu0
        %4782 = vdwg.mxu0
        %4783 = vmatpush.bf16.msra.mxu0 %v4316
        %4784 = vmatpush.bf16.msra.mxu0 %v4313
        %4785 = vmatpush.bf16.msra.mxu0 %v4310
        %4786 = vmatpush.bf16.msra.mxu0 %v4307
        %4787 = vmatpush.bf16.msra.mxu0 %v4304
        %4788 = vmatpush.bf16.msra.mxu0 %v4301
        %4789 = vmatpush.bf16.msra.mxu0 %v4298
        %4790 = vmatpush.bf16.msra.mxu0 %v4295
        %4791 = vmatmul.bf16.gmra.mxu0 %v2747
        %v4792 = vpop.f32.mrf.mxu0
        %v4793 = vadd.f32 %v4780, %v4792
        %v4794 = vpop.f32.mrf.mxu0
        %4795 = vdwg.mxu0
        %4796 = vmatpush.bf16.msra.mxu0 %v4340
        %4797 = vmatpush.bf16.msra.mxu0 %v4337
        %4798 = vmatpush.bf16.msra.mxu0 %v4334
        %4799 = vmatpush.bf16.msra.mxu0 %v4331
        %4800 = vmatpush.bf16.msra.mxu0 %v4328
        %4801 = vmatpush.bf16.msra.mxu0 %v4325
        %4802 = vmatpush.bf16.msra.mxu0 %v4322
        %4803 = vmatpush.bf16.msra.mxu0 %v4319
        %4804 = vmatmul.bf16.gmra.mxu0 %v2748
        %v4805 = vpop.f32.mrf.mxu0
        %v4806 = vadd.f32 %v4793, %v4805
        %v4807 = vpop.f32.mrf.mxu0
        %4808 = vdwg.mxu0
        %4809 = vmatpush.bf16.msra.mxu0 %v4364
        %4810 = vmatpush.bf16.msra.mxu0 %v4361
        %4811 = vmatpush.bf16.msra.mxu0 %v4358
        %4812 = vmatpush.bf16.msra.mxu0 %v4355
        %4813 = vmatpush.bf16.msra.mxu0 %v4352
        %4814 = vmatpush.bf16.msra.mxu0 %v4349
        %4815 = vmatpush.bf16.msra.mxu0 %v4346
        %4816 = vmatpush.bf16.msra.mxu0 %v4343
        %4817 = vmatmul.bf16.gmra.mxu0 %v2749
        %v4818 = vpop.f32.mrf.mxu0
        %v4819 = vadd.f32 %v4806, %v4818
        %v4820 = vpop.f32.mrf.mxu0
        %4821 = vdwg.mxu0
        %4822 = vmatpush.bf16.msra.mxu0 %v4388
        %4823 = vmatpush.bf16.msra.mxu0 %v4385
        %4824 = vmatpush.bf16.msra.mxu0 %v4382
        %4825 = vmatpush.bf16.msra.mxu0 %v4379
        %4826 = vmatpush.bf16.msra.mxu0 %v4376
        %4827 = vmatpush.bf16.msra.mxu0 %v4373
        %4828 = vmatpush.bf16.msra.mxu0 %v4370
        %4829 = vmatpush.bf16.msra.mxu0 %v4367
        %4830 = vmatmul.bf16.gmra.mxu0 %v2750
        %v4831 = vpop.f32.mrf.mxu0
        %v4832 = vadd.f32 %v4819, %v4831
        %v4833 = vpop.f32.mrf.mxu0
        %4834 = vdwg.mxu0
        %4835 = vmatpush.bf16.msra.mxu0 %v4125
        %4836 = vmatpush.bf16.msra.mxu0 %v4122
        %4837 = vmatpush.bf16.msra.mxu0 %v4119
        %4838 = vmatpush.bf16.msra.mxu0 %v4116
        %4839 = vmatpush.bf16.msra.mxu0 %v4113
        %4840 = vmatpush.bf16.msra.mxu0 %v4110
        %4841 = vmatpush.bf16.msra.mxu0 %v4107
        %4842 = vmatpush.bf16.msra.mxu0 %v4104
        %4843 = vmatmul.bf16.gmra.mxu0 %v2739
        %v4844 = vpop.f32.mrf.mxu0
        %v4845 = vadd.f32 %v3138, %v4844
        %v4846 = vpop.f32.mrf.mxu0
        %4847 = vdwg.mxu0
        %4848 = vmatpush.bf16.msra.mxu0 %v4149
        %4849 = vmatpush.bf16.msra.mxu0 %v4146
        %4850 = vmatpush.bf16.msra.mxu0 %v4143
        %4851 = vmatpush.bf16.msra.mxu0 %v4140
        %4852 = vmatpush.bf16.msra.mxu0 %v4137
        %4853 = vmatpush.bf16.msra.mxu0 %v4134
        %4854 = vmatpush.bf16.msra.mxu0 %v4131
        %4855 = vmatpush.bf16.msra.mxu0 %v4128
        %4856 = vmatmul.bf16.gmra.mxu0 %v2740
        %v4857 = vpop.f32.mrf.mxu0
        %v4858 = vadd.f32 %v4845, %v4857
        %v4859 = vpop.f32.mrf.mxu0
        %4860 = vdwg.mxu0
        %4861 = vmatpush.bf16.msra.mxu0 %v4173
        %4862 = vmatpush.bf16.msra.mxu0 %v4170
        %4863 = vmatpush.bf16.msra.mxu0 %v4167
        %4864 = vmatpush.bf16.msra.mxu0 %v4164
        %4865 = vmatpush.bf16.msra.mxu0 %v4161
        %4866 = vmatpush.bf16.msra.mxu0 %v4158
        %4867 = vmatpush.bf16.msra.mxu0 %v4155
        %4868 = vmatpush.bf16.msra.mxu0 %v4152
        %4869 = vmatmul.bf16.gmra.mxu0 %v2741
        %v4870 = vpop.f32.mrf.mxu0
        %v4871 = vadd.f32 %v4858, %v4870
        %v4872 = vpop.f32.mrf.mxu0
        %4873 = vdwg.mxu0
        %4874 = vmatpush.bf16.msra.mxu0 %v4197
        %4875 = vmatpush.bf16.msra.mxu0 %v4194
        %4876 = vmatpush.bf16.msra.mxu0 %v4191
        %4877 = vmatpush.bf16.msra.mxu0 %v4188
        %4878 = vmatpush.bf16.msra.mxu0 %v4185
        %4879 = vmatpush.bf16.msra.mxu0 %v4182
        %4880 = vmatpush.bf16.msra.mxu0 %v4179
        %4881 = vmatpush.bf16.msra.mxu0 %v4176
        %4882 = vmatmul.bf16.gmra.mxu0 %v2742
        %v4883 = vpop.f32.mrf.mxu0
        %v4884 = vadd.f32 %v4871, %v4883
        %v4885 = vpop.f32.mrf.mxu0
        %4886 = vdwg.mxu0
        %4887 = vmatpush.bf16.msra.mxu0 %v4221
        %4888 = vmatpush.bf16.msra.mxu0 %v4218
        %4889 = vmatpush.bf16.msra.mxu0 %v4215
        %4890 = vmatpush.bf16.msra.mxu0 %v4212
        %4891 = vmatpush.bf16.msra.mxu0 %v4209
        %4892 = vmatpush.bf16.msra.mxu0 %v4206
        %4893 = vmatpush.bf16.msra.mxu0 %v4203
        %4894 = vmatpush.bf16.msra.mxu0 %v4200
        %4895 = vmatmul.bf16.gmra.mxu0 %v2743
        %v4896 = vpop.f32.mrf.mxu0
        %v4897 = vadd.f32 %v4884, %v4896
        %v4898 = vpop.f32.mrf.mxu0
        %4899 = vdwg.mxu0
        %4900 = vmatpush.bf16.msra.mxu0 %v4245
        %4901 = vmatpush.bf16.msra.mxu0 %v4242
        %4902 = vmatpush.bf16.msra.mxu0 %v4239
        %4903 = vmatpush.bf16.msra.mxu0 %v4236
        %4904 = vmatpush.bf16.msra.mxu0 %v4233
        %4905 = vmatpush.bf16.msra.mxu0 %v4230
        %4906 = vmatpush.bf16.msra.mxu0 %v4227
        %4907 = vmatpush.bf16.msra.mxu0 %v4224
        %4908 = vmatmul.bf16.gmra.mxu0 %v2744
        %v4909 = vpop.f32.mrf.mxu0
        %v4910 = vadd.f32 %v4897, %v4909
        %v4911 = vpop.f32.mrf.mxu0
        %4912 = vdwg.mxu0
        %4913 = vmatpush.bf16.msra.mxu0 %v4269
        %4914 = vmatpush.bf16.msra.mxu0 %v4266
        %4915 = vmatpush.bf16.msra.mxu0 %v4263
        %4916 = vmatpush.bf16.msra.mxu0 %v4260
        %4917 = vmatpush.bf16.msra.mxu0 %v4257
        %4918 = vmatpush.bf16.msra.mxu0 %v4254
        %4919 = vmatpush.bf16.msra.mxu0 %v4251
        %4920 = vmatpush.bf16.msra.mxu0 %v4248
        %4921 = vmatmul.bf16.gmra.mxu0 %v2745
        %v4922 = vpop.f32.mrf.mxu0
        %v4923 = vadd.f32 %v4910, %v4922
        %v4924 = vpop.f32.mrf.mxu0
        %4925 = vdwg.mxu0
        %4926 = vmatpush.bf16.msra.mxu0 %v4293
        %4927 = vmatpush.bf16.msra.mxu0 %v4290
        %4928 = vmatpush.bf16.msra.mxu0 %v4287
        %4929 = vmatpush.bf16.msra.mxu0 %v4284
        %4930 = vmatpush.bf16.msra.mxu0 %v4281
        %4931 = vmatpush.bf16.msra.mxu0 %v4278
        %4932 = vmatpush.bf16.msra.mxu0 %v4275
        %4933 = vmatpush.bf16.msra.mxu0 %v4272
        %4934 = vmatmul.bf16.gmra.mxu0 %v2746
        %v4935 = vpop.f32.mrf.mxu0
        %v4936 = vadd.f32 %v4923, %v4935
        %v4937 = vpop.f32.mrf.mxu0
        %4938 = vdwg.mxu0
        %4939 = vmatpush.bf16.msra.mxu0 %v4317
        %4940 = vmatpush.bf16.msra.mxu0 %v4314
        %4941 = vmatpush.bf16.msra.mxu0 %v4311
        %4942 = vmatpush.bf16.msra.mxu0 %v4308
        %4943 = vmatpush.bf16.msra.mxu0 %v4305
        %4944 = vmatpush.bf16.msra.mxu0 %v4302
        %4945 = vmatpush.bf16.msra.mxu0 %v4299
        %4946 = vmatpush.bf16.msra.mxu0 %v4296
        %4947 = vmatmul.bf16.gmra.mxu0 %v2747
        %v4948 = vpop.f32.mrf.mxu0
        %v4949 = vadd.f32 %v4936, %v4948
        %v4950 = vpop.f32.mrf.mxu0
        %4951 = vdwg.mxu0
        %4952 = vmatpush.bf16.msra.mxu0 %v4341
        %4953 = vmatpush.bf16.msra.mxu0 %v4338
        %4954 = vmatpush.bf16.msra.mxu0 %v4335
        %4955 = vmatpush.bf16.msra.mxu0 %v4332
        %4956 = vmatpush.bf16.msra.mxu0 %v4329
        %4957 = vmatpush.bf16.msra.mxu0 %v4326
        %4958 = vmatpush.bf16.msra.mxu0 %v4323
        %4959 = vmatpush.bf16.msra.mxu0 %v4320
        %4960 = vmatmul.bf16.gmra.mxu0 %v2748
        %v4961 = vpop.f32.mrf.mxu0
        %v4962 = vadd.f32 %v4949, %v4961
        %v4963 = vpop.f32.mrf.mxu0
        %4964 = vdwg.mxu0
        %4965 = vmatpush.bf16.msra.mxu0 %v4365
        %4966 = vmatpush.bf16.msra.mxu0 %v4362
        %4967 = vmatpush.bf16.msra.mxu0 %v4359
        %4968 = vmatpush.bf16.msra.mxu0 %v4356
        %4969 = vmatpush.bf16.msra.mxu0 %v4353
        %4970 = vmatpush.bf16.msra.mxu0 %v4350
        %4971 = vmatpush.bf16.msra.mxu0 %v4347
        %4972 = vmatpush.bf16.msra.mxu0 %v4344
        %4973 = vmatmul.bf16.gmra.mxu0 %v2749
        %v4974 = vpop.f32.mrf.mxu0
        %v4975 = vadd.f32 %v4962, %v4974
        %v4976 = vpop.f32.mrf.mxu0
        %4977 = vdwg.mxu0
        %4978 = vmatpush.bf16.msra.mxu0 %v4389
        %4979 = vmatpush.bf16.msra.mxu0 %v4386
        %4980 = vmatpush.bf16.msra.mxu0 %v4383
        %4981 = vmatpush.bf16.msra.mxu0 %v4380
        %4982 = vmatpush.bf16.msra.mxu0 %v4377
        %4983 = vmatpush.bf16.msra.mxu0 %v4374
        %4984 = vmatpush.bf16.msra.mxu0 %v4371
        %4985 = vmatpush.bf16.msra.mxu0 %v4368
        %4986 = vmatmul.bf16.gmra.mxu0 %v2750
        %v4987 = vpop.f32.mrf.mxu0
        %v4988 = vadd.f32 %v4975, %v4987
        %v4989 = vpop.f32.mrf.mxu0
        %4990 = vdwg.mxu0
        %4991 = vmatpush.bf16.msra.mxu0 %v4126
        %4992 = vmatpush.bf16.msra.mxu0 %v4123
        %4993 = vmatpush.bf16.msra.mxu0 %v4120
        %4994 = vmatpush.bf16.msra.mxu0 %v4117
        %4995 = vmatpush.bf16.msra.mxu0 %v4114
        %4996 = vmatpush.bf16.msra.mxu0 %v4111
        %4997 = vmatpush.bf16.msra.mxu0 %v4108
        %4998 = vmatpush.bf16.msra.mxu0 %v4105
        %4999 = vmatmul.bf16.gmra.mxu0 %v2739
        %v5000 = vpop.f32.mrf.mxu0
        %v5001 = vadd.f32 %v3139, %v5000
        %v5002 = vpop.f32.mrf.mxu0
        %5003 = vdwg.mxu0
        %5004 = vmatpush.bf16.msra.mxu0 %v4150
        %5005 = vmatpush.bf16.msra.mxu0 %v4147
        %5006 = vmatpush.bf16.msra.mxu0 %v4144
        %5007 = vmatpush.bf16.msra.mxu0 %v4141
        %5008 = vmatpush.bf16.msra.mxu0 %v4138
        %5009 = vmatpush.bf16.msra.mxu0 %v4135
        %5010 = vmatpush.bf16.msra.mxu0 %v4132
        %5011 = vmatpush.bf16.msra.mxu0 %v4129
        %5012 = vmatmul.bf16.gmra.mxu0 %v2740
        %v5013 = vpop.f32.mrf.mxu0
        %v5014 = vadd.f32 %v5001, %v5013
        %v5015 = vpop.f32.mrf.mxu0
        %5016 = vdwg.mxu0
        %5017 = vmatpush.bf16.msra.mxu0 %v4174
        %5018 = vmatpush.bf16.msra.mxu0 %v4171
        %5019 = vmatpush.bf16.msra.mxu0 %v4168
        %5020 = vmatpush.bf16.msra.mxu0 %v4165
        %5021 = vmatpush.bf16.msra.mxu0 %v4162
        %5022 = vmatpush.bf16.msra.mxu0 %v4159
        %5023 = vmatpush.bf16.msra.mxu0 %v4156
        %5024 = vmatpush.bf16.msra.mxu0 %v4153
        %5025 = vmatmul.bf16.gmra.mxu0 %v2741
        %v5026 = vpop.f32.mrf.mxu0
        %v5027 = vadd.f32 %v5014, %v5026
        %v5028 = vpop.f32.mrf.mxu0
        %5029 = vdwg.mxu0
        %5030 = vmatpush.bf16.msra.mxu0 %v4198
        %5031 = vmatpush.bf16.msra.mxu0 %v4195
        %5032 = vmatpush.bf16.msra.mxu0 %v4192
        %5033 = vmatpush.bf16.msra.mxu0 %v4189
        %5034 = vmatpush.bf16.msra.mxu0 %v4186
        %5035 = vmatpush.bf16.msra.mxu0 %v4183
        %5036 = vmatpush.bf16.msra.mxu0 %v4180
        %5037 = vmatpush.bf16.msra.mxu0 %v4177
        %5038 = vmatmul.bf16.gmra.mxu0 %v2742
        %v5039 = vpop.f32.mrf.mxu0
        %v5040 = vadd.f32 %v5027, %v5039
        %v5041 = vpop.f32.mrf.mxu0
        %5042 = vdwg.mxu0
        %5043 = vmatpush.bf16.msra.mxu0 %v4222
        %5044 = vmatpush.bf16.msra.mxu0 %v4219
        %5045 = vmatpush.bf16.msra.mxu0 %v4216
        %5046 = vmatpush.bf16.msra.mxu0 %v4213
        %5047 = vmatpush.bf16.msra.mxu0 %v4210
        %5048 = vmatpush.bf16.msra.mxu0 %v4207
        %5049 = vmatpush.bf16.msra.mxu0 %v4204
        %5050 = vmatpush.bf16.msra.mxu0 %v4201
        %5051 = vmatmul.bf16.gmra.mxu0 %v2743
        %v5052 = vpop.f32.mrf.mxu0
        %v5053 = vadd.f32 %v5040, %v5052
        %v5054 = vpop.f32.mrf.mxu0
        %5055 = vdwg.mxu0
        %5056 = vmatpush.bf16.msra.mxu0 %v4246
        %5057 = vmatpush.bf16.msra.mxu0 %v4243
        %5058 = vmatpush.bf16.msra.mxu0 %v4240
        %5059 = vmatpush.bf16.msra.mxu0 %v4237
        %5060 = vmatpush.bf16.msra.mxu0 %v4234
        %5061 = vmatpush.bf16.msra.mxu0 %v4231
        %5062 = vmatpush.bf16.msra.mxu0 %v4228
        %5063 = vmatpush.bf16.msra.mxu0 %v4225
        %5064 = vmatmul.bf16.gmra.mxu0 %v2744
        %v5065 = vpop.f32.mrf.mxu0
        %v5066 = vadd.f32 %v5053, %v5065
        %v5067 = vpop.f32.mrf.mxu0
        %5068 = vdwg.mxu0
        %5069 = vmatpush.bf16.msra.mxu0 %v4270
        %5070 = vmatpush.bf16.msra.mxu0 %v4267
        %5071 = vmatpush.bf16.msra.mxu0 %v4264
        %5072 = vmatpush.bf16.msra.mxu0 %v4261
        %5073 = vmatpush.bf16.msra.mxu0 %v4258
        %5074 = vmatpush.bf16.msra.mxu0 %v4255
        %5075 = vmatpush.bf16.msra.mxu0 %v4252
        %5076 = vmatpush.bf16.msra.mxu0 %v4249
        %5077 = vmatmul.bf16.gmra.mxu0 %v2745
        %v5078 = vpop.f32.mrf.mxu0
        %v5079 = vadd.f32 %v5066, %v5078
        %v5080 = vpop.f32.mrf.mxu0
        %5081 = vdwg.mxu0
        %5082 = vmatpush.bf16.msra.mxu0 %v4294
        %5083 = vmatpush.bf16.msra.mxu0 %v4291
        %5084 = vmatpush.bf16.msra.mxu0 %v4288
        %5085 = vmatpush.bf16.msra.mxu0 %v4285
        %5086 = vmatpush.bf16.msra.mxu0 %v4282
        %5087 = vmatpush.bf16.msra.mxu0 %v4279
        %5088 = vmatpush.bf16.msra.mxu0 %v4276
        %5089 = vmatpush.bf16.msra.mxu0 %v4273
        %5090 = vmatmul.bf16.gmra.mxu0 %v2746
        %v5091 = vpop.f32.mrf.mxu0
        %v5092 = vadd.f32 %v5079, %v5091
        %v5093 = vpop.f32.mrf.mxu0
        %5094 = vdwg.mxu0
        %5095 = vmatpush.bf16.msra.mxu0 %v4318
        %5096 = vmatpush.bf16.msra.mxu0 %v4315
        %5097 = vmatpush.bf16.msra.mxu0 %v4312
        %5098 = vmatpush.bf16.msra.mxu0 %v4309
        %5099 = vmatpush.bf16.msra.mxu0 %v4306
        %5100 = vmatpush.bf16.msra.mxu0 %v4303
        %5101 = vmatpush.bf16.msra.mxu0 %v4300
        %5102 = vmatpush.bf16.msra.mxu0 %v4297
        %5103 = vmatmul.bf16.gmra.mxu0 %v2747
        %v5104 = vpop.f32.mrf.mxu0
        %v5105 = vadd.f32 %v5092, %v5104
        %v5106 = vpop.f32.mrf.mxu0
        %5107 = vdwg.mxu0
        %5108 = vmatpush.bf16.msra.mxu0 %v4342
        %5109 = vmatpush.bf16.msra.mxu0 %v4339
        %5110 = vmatpush.bf16.msra.mxu0 %v4336
        %5111 = vmatpush.bf16.msra.mxu0 %v4333
        %5112 = vmatpush.bf16.msra.mxu0 %v4330
        %5113 = vmatpush.bf16.msra.mxu0 %v4327
        %5114 = vmatpush.bf16.msra.mxu0 %v4324
        %5115 = vmatpush.bf16.msra.mxu0 %v4321
        %5116 = vmatmul.bf16.gmra.mxu0 %v2748
        %v5117 = vpop.f32.mrf.mxu0
        %v5118 = vadd.f32 %v5105, %v5117
        %v5119 = vpop.f32.mrf.mxu0
        %5120 = vdwg.mxu0
        %5121 = vmatpush.bf16.msra.mxu0 %v4366
        %5122 = vmatpush.bf16.msra.mxu0 %v4363
        %5123 = vmatpush.bf16.msra.mxu0 %v4360
        %5124 = vmatpush.bf16.msra.mxu0 %v4357
        %5125 = vmatpush.bf16.msra.mxu0 %v4354
        %5126 = vmatpush.bf16.msra.mxu0 %v4351
        %5127 = vmatpush.bf16.msra.mxu0 %v4348
        %5128 = vmatpush.bf16.msra.mxu0 %v4345
        %5129 = vmatmul.bf16.gmra.mxu0 %v2749
        %v5130 = vpop.f32.mrf.mxu0
        %v5131 = vadd.f32 %v5118, %v5130
        %v5132 = vpop.f32.mrf.mxu0
        %5133 = vdwg.mxu0
        %5134 = vmatpush.bf16.msra.mxu0 %v4390
        %5135 = vmatpush.bf16.msra.mxu0 %v4387
        %5136 = vmatpush.bf16.msra.mxu0 %v4384
        %5137 = vmatpush.bf16.msra.mxu0 %v4381
        %5138 = vmatpush.bf16.msra.mxu0 %v4378
        %5139 = vmatpush.bf16.msra.mxu0 %v4375
        %5140 = vmatpush.bf16.msra.mxu0 %v4372
        %5141 = vmatpush.bf16.msra.mxu0 %v4369
        %5142 = vmatmul.bf16.gmra.mxu0 %v2750
        %v5143 = vpop.f32.mrf.mxu0
        %v5144 = vadd.f32 %v5131, %v5143
        %v5145 = vpop.f32.mrf.mxu0
        %5146 = vdwg.mxu0
        %v5147 = vld [vmem:[%s7] sm:$0x7]
        %v5149 = vperm.slane %v5147, 0
        %v5150 = vperm.slane %v5147, 1
        %v5151 = vperm.slane %v5147, 2
        %v5155 = vmul.f32 %v4832, %v5149
        %v5156 = vmul.f32 %v4988, %v5150
        %v5157 = vmul.f32 %v5144, %v5151
        %v5158 = vadd.f32 %v342, %v5155
        %v5159 = vadd.f32 %v343, %v5156
        %v5160 = vadd.f32 %v344, %v5157
        %v5161 = vpack.c.bf16 %v5159, %v5158
        %v5162 = vpack.c.bf16 %v5160, %v5160
        %5163 = vst [vmem:[%s339] sm:$0xff] %v5161
        %5164 = vst [vmem:[%s339 + $0x8] sm:$0xf] %v5162
        %p5165 = scmp.lt.s32.totalorder %s21, 1
        %s5166 = scalar_select %p5165, %s21, 1
        %s5167 = smul.addr %s5166, 3
        %s5168 = smul.addr %s5167, 4
        %s5169 = scalar_lea.vmem %s8, %s5168
        // Predicated region
        $region61: #{brain_tumor_classifier.28} parent=51 // pred_check
          %p5170 = pneg %p212
        $region62: #{brain_tumor_classifier.28} parent=51 // pred_check_branch
          %5172 = sbr.rel (%p5170) target = $region64
        $region63: #{brain_tumor_classifier.28} parent=51 // pred_region
          _
        $region64: #{brain_tumor_classifier.28} parent=51 // pred_fallthru
          _
      $region52: #{brain_tumor_classifier.28} parent=5 // pred_fallthru
        _
      %p5173 = scmp.le.s32.totalorder 2, %s16
      // Predicated region
      $region65: #{brain_tumor_classifier.28} parent=5 // pred_check
        %p5174 = pneg %p5173
      $region66: #{brain_tumor_classifier.28} parent=5 // pred_check_branch
        %5176 = sbr.rel (%p5174) target = $region68
      $region67: #{brain_tumor_classifier.28} parent=5 // pred_region
        %s5177 = ssub.s32 %s16, 2
        // Predicated region
        $region69: #{brain_tumor_classifier.28} parent=67 // pred_check
          %p5178 = pneg %p218
        $region70: #{brain_tumor_classifier.28} parent=67 // pred_check_branch
          %5180 = sbr.rel (%p5178) target = $region72
        $region71: #{brain_tumor_classifier.28} parent=67 // pred_region
          %p5181 = scmp.lt.s32.totalorder %s22, 1
          %s5182 = scalar_select %p5181, %s22, 1
          %s5183 = smul.addr %s5182, 3
          %s5184 = smul.addr %s5183, 4
          %s5185 = scalar_lea.vmem %s8, %s5184
        $region72: #{brain_tumor_classifier.28} parent=67 // pred_fallthru
          _
      $region68: #{brain_tumor_classifier.28} parent=5 // pred_fallthru
        _
    $region6: #{brain_tumor_classifier.28} parent=1 // loop_footer
      %s20 = sadd.s32 1, %s16
    $region7: #{brain_tumor_classifier.28} parent=1 // loop_footer_branch
      %15 = sbr.rel target = $region3
    $region8: #{brain_tumor_classifier.28} parent=1 // loop_exit
      _
    %5186 = vsyncpa [#allocation3], 1
    %s5187 = scalar_lea.sflag [#allocation3], 1
    %5188 = vsyncpa %s5187, 1
    %5189 = vsyncpa [#allocation5], 1

</llo_original>
